<compile_context>
chip_gen: v7x
topology: tpu7x:2x2x1
jax: 0.10.0
libtpu: 0.0.40
codegen_flags: <defaults>
</compile_context>

<pallas_src>
import jax
import jax.numpy as jnp
from jax.experimental import pallas as pl
from jax.experimental.pallas import tpu as pltpu


# ----------------------------- module hyper-params ---------------------------
DIM = 32          # model dim
DIM_CONTEXT = 24  # context dim
HEADS = 4
DIM_HEAD = 16
INNER_DIM = HEADS * DIM_HEAD
NUM_NULL_KV = 2
NORM_CONTEXT = True
EPS = 1e-5        # F.layer_norm default eps
NEG_BIG = -1e30   # additive mask bias (null-KV columns are always attended)


# ------------------------------ kernel ----------------------------------------
def _attention_kernel(x_ref, ctx_ref, bias_ref,
                      gx_ref, gc_ref,
                      wq_ref, wk_ref, wv_ref,
                      nullk_ref, nullv_ref, wout_ref,
                      o_ref):
    # x_ref: (Bt*N, DIM)   ctx_ref: (Bt*M, DIM_CONTEXT)   bias_ref: (Bt, 1, M_tot)
    Bt = bias_ref.shape[0]
    BN = x_ref.shape[0]
    BM = ctx_ref.shape[0]
    N = BN // Bt
    M = BM // Bt

    def layer_norm(t, gamma):
        mu = jnp.mean(t, axis=-1, keepdims=True)
        var = jnp.mean(jnp.square(t - mu), axis=-1, keepdims=True)
        return (t - mu) * jax.lax.rsqrt(var + EPS) * gamma   # beta == 0 (gamma-only LN)

    x_n = layer_norm(x_ref[...], gx_ref[...])
    ctx_n = layer_norm(ctx_ref[...], gc_ref[...]) if NORM_CONTEXT else ctx_ref[...]

    # Projections: single 2-D MXU matmuls on the flattened slabs
    # (the 1/sqrt(dim_head) scale is already folded into W_q).
    q = jnp.dot(x_n, wq_ref[...], preferred_element_type=jnp.float32)    # (Bt*N, H*DH)
    k = jnp.dot(ctx_n, wk_ref[...], preferred_element_type=jnp.float32)  # (Bt*M, DH)
    v = jnp.dot(ctx_n, wv_ref[...], preferred_element_type=jnp.float32)  # (Bt*M, DH)

    # Per-batch K/V with the learned null rows prepended (value-level concat,
    # no VMEM scratch round trip, no misaligned stores).
    nk = jnp.broadcast_to(nullk_ref[...][None], (Bt, NUM_NULL_KV, DIM_HEAD))
    nv = jnp.broadcast_to(nullv_ref[...][None], (Bt, NUM_NULL_KV, DIM_HEAD))
    k_all = jnp.concatenate([nk, k.reshape(Bt, M, DIM_HEAD)], axis=1)    # (Bt, M_tot, DH)
    v_all = jnp.concatenate([nv, v.reshape(Bt, M, DIM_HEAD)], axis=1)    # (Bt, M_tot, DH)

    bias = bias_ref[...]       # (Bt, 1, M_tot) additive mask (0 keep / -1e30 drop)
    w_out = wout_ref[...]      # (H*DH, DIM)

    # Heads: static unroll. Each head is a batched QK^T / PV over the batch dim.
    # Only static lane slices + row-regrouping reshapes — no lane-split reshapes.
    o_acc = jnp.zeros((BN, DIM), jnp.float32)
    for h in range(HEADS):
        lo = h * DIM_HEAD
        q_h = q[:, lo:lo + DIM_HEAD].reshape(Bt, N, DIM_HEAD)            # (Bt, N, DH)

        sim = jnp.einsum('bnd,bjd->bnj', q_h, k_all,
                         preferred_element_type=jnp.float32) + bias      # (Bt, N, M_tot)
        sim = sim - jnp.max(sim, axis=-1, keepdims=True)
        p = jnp.exp(sim)
        p = p / jnp.sum(p, axis=-1, keepdims=True)                       # exact softmax

        out_h = jnp.einsum('bnj,bjd->bnd', p, v_all,
                           preferred_element_type=jnp.float32)           # (Bt, N, DH)

        # to_out is linear -> accumulate per-head slice of W_out (no lane concat).
        o_acc = o_acc + jnp.dot(out_h.reshape(BN, DIM_HEAD),
                                w_out[lo:lo + DIM_HEAD, :],
                                preferred_element_type=jnp.float32)

    o_ref[...] = o_acc                                                   # full-tile 2-D store


# ------------------------------ wrappers ---------------------------------------
def prepare_params(raw):
    """One-time parameter prep: fold attention scale into W_q, split W_kv, 2-D gammas."""
    scale = DIM_HEAD ** (-0.5)
    return {
        "gamma_x": raw["gamma_x"].reshape(1, DIM).astype(jnp.float32),
        "gamma_ctx": raw["gamma_ctx"].reshape(1, DIM_CONTEXT).astype(jnp.float32),
        "w_q_scaled": (raw["w_q"] * scale).astype(jnp.float32),
        "w_k": raw["w_kv"][:, :DIM_HEAD].astype(jnp.float32),
        "w_v": raw["w_kv"][:, DIM_HEAD:].astype(jnp.float32),
        "null_k": raw["null_k"].astype(jnp.float32),
        "null_v": raw["null_v"].astype(jnp.float32),
        "w_out": raw["w_out"].astype(jnp.float32),
    }


def attention_forward(x, context, mask, prep, *, block_b=None):
    """x: (B, N, DIM) f32; context: (B, M, DIM_CONTEXT) f32; mask: (B, M) bool (True=attend)."""
    B, N, _ = x.shape
    M = context.shape[1]
    M_tot = NUM_NULL_KV + M

    # Single grid step by default (v5e/v6e have one TensorCore and the whole problem
    # is a few KB).  On v7x pass block_b < B only once per-TC work is big enough.
    if block_b is None:
        block_b = B
    Bt = block_b
    assert B % Bt == 0, "batch must be divisible by the batch block"
    if Bt != B:
        assert (Bt * N) % 8 == 0 and (Bt * M) % 8 == 0, "sub-block must stay sublane aligned"

    # Flatten once in XLA (free metadata reshape on contiguous HBM).
    x2 = x.reshape(B * N, DIM).astype(jnp.float32)
    c2 = context.reshape(B * M, DIM_CONTEXT).astype(jnp.float32)

    # Additive mask bias; null-kv columns (always attended) come first, same order as K.
    mask_pad = jnp.concatenate([jnp.ones((B, NUM_NULL_KV), dtype=bool), mask], axis=-1)
    bias = jnp.where(mask_pad, 0.0, NEG_BIG).astype(jnp.float32).reshape(B, 1, M_tot)

    def full_spec(arr):
        ndim = arr.ndim
        return pl.BlockSpec(arr.shape, lambda b: (0,) * ndim)

    out2 = pl.pallas_call(
        _attention_kernel,
        out_shape=jax.ShapeDtypeStruct((B * N, DIM), jnp.float32),
        grid_spec=pltpu.PrefetchScalarGridSpec(
            num_scalar_prefetch=0,
            grid=(B // Bt,),
            in_specs=[
                pl.BlockSpec((Bt * N, DIM), lambda b: (b, 0)),            # x (flattened)
                pl.BlockSpec((Bt * M, DIM_CONTEXT), lambda b: (b, 0)),    # context (flattened)
                pl.BlockSpec((Bt, 1, M_tot), lambda b: (b, 0, 0)),        # additive mask bias
                full_spec(prep["gamma_x"]),
                full_spec(prep["gamma_ctx"]),
                full_spec(prep["w_q_scaled"]),
                full_spec(prep["w_k"]),
                full_spec(prep["w_v"]),
                full_spec(prep["null_k"]),
                full_spec(prep["null_v"]),
                full_spec(prep["w_out"]),
            ],
            out_specs=pl.BlockSpec((Bt * N, DIM), lambda b: (b, 0)),
        ),
        compiler_params=pltpu.CompilerParams(
            dimension_semantics=("parallel",)),  # only matters if block_b < B (v7x megacore)
    )(x2, c2, bias,
      prep["gamma_x"], prep["gamma_ctx"],
      prep["w_q_scaled"], prep["w_k"], prep["w_v"],
      prep["null_k"], prep["null_v"], prep["w_out"])

    return out2.reshape(B, N, DIM)


# ------------------------------ reference (plain JAX) --------------------------
def attention_reference(x, context, mask, params):
    def ln(t, g):
        mu = jnp.mean(t, axis=-1, keepdims=True)
        var = jnp.mean(jnp.square(t - mu), axis=-1, keepdims=True)
        return (t - mu) / jnp.sqrt(var + EPS) * g

    B = x.shape[0]
    ctx_n = ln(context, params["gamma_ctx"]) if NORM_CONTEXT else context
    x_n = ln(x, params["gamma_x"])
    q = x_n @ params["w_q"]                      # (B, N, INNER)
    kv = ctx_n @ params["w_kv"]                  # (B, M, 2*DH)
    k, v = kv[..., :DIM_HEAD], kv[..., DIM_HEAD:]
    null_k = jnp.broadcast_to(params["null_k"], (B,) + params["null_k"].shape)
    null_v = jnp.broadcast_to(params["null_v"], (B,) + params["null_v"].shape)
    k = jnp.concatenate([null_k, k], axis=1)
    v = jnp.concatenate([null_v, v], axis=1)
    q = q.reshape(B, -1, HEADS, DIM_HEAD).transpose(0, 2, 1, 3) * (DIM_HEAD ** -0.5)
    sim = jnp.einsum("bhid,bjd->bhij", q, k)
    m = jnp.concatenate([jnp.ones((B, NUM_NULL_KV), bool), mask], axis=-1)
    sim = jnp.where(m[:, None, None, :], sim, -jnp.finfo(jnp.float32).max)
    attn = jax.nn.softmax(sim, axis=-1)
    out = jnp.einsum("bhij,bjd->bhid", attn, v)
    out = out.transpose(0, 2, 1, 3).reshape(B, -1, INNER_DIM)
    return out @ params["w_out"]


# ------------------------------ main -------------------------------------------
if __name__ == "__main__":
    key = jax.random.PRNGKey(0)
    ks = jax.random.split(key, 8)

    B, N, M = 8, 8, 6

    raw_params = {
        "gamma_x": jnp.ones((DIM,), jnp.float32),              # LayerNorm gamma (beta == 0)
        "gamma_ctx": jnp.ones((DIM_CONTEXT,), jnp.float32),
        "w_q": jax.random.normal(ks[0], (DIM, INNER_DIM), jnp.float32) * 0.1,
        "w_kv": jax.random.normal(ks[1], (DIM_CONTEXT, 2 * DIM_HEAD), jnp.float32) * 0.1,
        "w_out": jax.random.normal(ks[2], (INNER_DIM, DIM), jnp.float32) * 0.1,
        "null_k": jax.random.normal(ks[3], (NUM_NULL_KV, DIM_HEAD), jnp.float32),
        "null_v": jax.random.normal(ks[4], (NUM_NULL_KV, DIM_HEAD), jnp.float32),
    }
    prep = prepare_params(raw_params)   # one-time: fold scale into W_q, split W_kv

    x = jax.random.normal(ks[5], (B, N, DIM), jnp.float32)
    context = jax.random.normal(ks[6], (B, M, DIM_CONTEXT), jnp.float32)
    mask = jax.random.bernoulli(ks[7], 0.7, (B, M))

    out = attention_forward(x, context, mask, prep)
    out = jax.block_until_ready(out)

    ref = attention_reference(x, context, mask, raw_params)
    assert out.shape == (B, N, DIM)
    assert jnp.allclose(out, ref, atol=1e-3, rtol=1e-3), (
        "mismatch vs reference: max abs err = "
        f"{float(jnp.max(jnp.abs(out - ref)))}")

    print("KERNEL_OK")
</pallas_src>

<mosaic_0001>
module attributes {stable_mosaic.version = 11 : i64} {
  func.func @_attention_kernel(%arg0: i32, %arg1: memref<64x32xf32, #tpu.memory_space<vmem>>, %arg2: memref<48x24xf32, #tpu.memory_space<vmem>>, %arg3: memref<8x1x8xf32, #tpu.memory_space<vmem>>, %arg4: memref<1x32xf32, #tpu.memory_space<vmem>>, %arg5: memref<1x24xf32, #tpu.memory_space<vmem>>, %arg6: memref<32x64xf32, #tpu.memory_space<vmem>>, %arg7: memref<24x16xf32, #tpu.memory_space<vmem>>, %arg8: memref<24x16xf32, #tpu.memory_space<vmem>>, %arg9: memref<2x16xf32, #tpu.memory_space<vmem>>, %arg10: memref<2x16xf32, #tpu.memory_space<vmem>>, %arg11: memref<64x32xf32, #tpu.memory_space<vmem>>, %arg12: memref<64x32xf32, #tpu.memory_space<vmem>>) attributes {dimension_semantics = [#tpu.dimension_semantics<parallel>], iteration_bounds = array<i64: 1>, scalar_prefetch = 0 : i64, scratch_operands = 0 : i64, tpu.core_type = #tpu.core_type<tc>, window_params = [{transform_indices = @transform_0, window_bounds = array<i64: 64, 32>}, {transform_indices = @transform_1, window_bounds = array<i64: 48, 24>}, {transform_indices = @transform_2, window_bounds = array<i64: 8, 1, 8>}, {pipeline_mode = #tpu.pipeline_mode<synchronous>, transform_indices = @transform_3, window_bounds = array<i64: 1, 32>}, {pipeline_mode = #tpu.pipeline_mode<synchronous>, transform_indices = @transform_4, window_bounds = array<i64: 1, 24>}, {pipeline_mode = #tpu.pipeline_mode<synchronous>, transform_indices = @transform_5, window_bounds = array<i64: 32, 64>}, {pipeline_mode = #tpu.pipeline_mode<synchronous>, transform_indices = @transform_6, window_bounds = array<i64: 24, 16>}, {pipeline_mode = #tpu.pipeline_mode<synchronous>, transform_indices = @transform_7, window_bounds = array<i64: 24, 16>}, {pipeline_mode = #tpu.pipeline_mode<synchronous>, transform_indices = @transform_8, window_bounds = array<i64: 2, 16>}, {pipeline_mode = #tpu.pipeline_mode<synchronous>, transform_indices = @transform_9, window_bounds = array<i64: 2, 16>}, {pipeline_mode = #tpu.pipeline_mode<synchronous>, transform_indices = @transform_10, window_bounds = array<i64: 64, 32>}, {transform_indices = @transform_11, window_bounds = array<i64: 64, 32>}]} {
    %c0 = arith.constant 0 : index
    %c0_0 = arith.constant 0 : index
    %0 = vector.load %arg1[%c0, %c0_0] : memref<64x32xf32, #tpu.memory_space<vmem>>, vector<64x32xf32>
    %c0_1 = arith.constant 0 : index
    %c0_2 = arith.constant 0 : index
    %1 = vector.load %arg4[%c0_1, %c0_2] : memref<1x32xf32, #tpu.memory_space<vmem>>, vector<1x32xf32>
    %cst = arith.constant dense<0.000000e+00> : vector<64xf32>
    %2 = vector.multi_reduction <add>, %0, %cst [1] : vector<64x32xf32> to vector<64xf32>
    %3 = vector.shape_cast %2 : vector<64xf32> to vector<64x1xf32>
    %cst_3 = arith.constant 3.200000e+01 : f32
    %4 = vector.broadcast %cst_3 : f32 to vector<64x1xf32>
    %5 = arith.divf %3, %4 : vector<64x1xf32>
    %6 = vector.broadcast %5 : vector<64x1xf32> to vector<64x32xf32>
    %7 = arith.subf %0, %6 : vector<64x32xf32>
    %8 = arith.mulf %7, %7 : vector<64x32xf32>
    %cst_4 = arith.constant dense<0.000000e+00> : vector<64xf32>
    %9 = vector.multi_reduction <add>, %8, %cst_4 [1] : vector<64x32xf32> to vector<64xf32>
    %10 = vector.shape_cast %9 : vector<64xf32> to vector<64x1xf32>
    %cst_5 = arith.constant 3.200000e+01 : f32
    %11 = vector.broadcast %cst_5 : f32 to vector<64x1xf32>
    %12 = arith.divf %10, %11 : vector<64x1xf32>
    %13 = vector.broadcast %5 : vector<64x1xf32> to vector<64x32xf32>
    %14 = arith.subf %0, %13 : vector<64x32xf32>
    %cst_6 = arith.constant 9.99999974E-6 : f32
    %15 = vector.broadcast %cst_6 : f32 to vector<64x1xf32>
    %16 = arith.addf %12, %15 : vector<64x1xf32>
    %17 = math.rsqrt %16 : vector<64x1xf32>
    %18 = vector.broadcast %17 : vector<64x1xf32> to vector<64x32xf32>
    %19 = arith.mulf %14, %18 : vector<64x32xf32>
    %20 = vector.broadcast %1 : vector<1x32xf32> to vector<64x32xf32>
    %21 = arith.mulf %19, %20 : vector<64x32xf32>
    %c0_7 = arith.constant 0 : index
    %c0_8 = arith.constant 0 : index
    %22 = vector.load %arg2[%c0_7, %c0_8] : memref<48x24xf32, #tpu.memory_space<vmem>>, vector<48x24xf32>
    %c0_9 = arith.constant 0 : index
    %c0_10 = arith.constant 0 : index
    %23 = vector.load %arg5[%c0_9, %c0_10] : memref<1x24xf32, #tpu.memory_space<vmem>>, vector<1x24xf32>
    %cst_11 = arith.constant dense<0.000000e+00> : vector<48xf32>
    %24 = vector.multi_reduction <add>, %22, %cst_11 [1] : vector<48x24xf32> to vector<48xf32>
    %25 = vector.shape_cast %24 : vector<48xf32> to vector<48x1xf32>
    %cst_12 = arith.constant 2.400000e+01 : f32
    %26 = vector.broadcast %cst_12 : f32 to vector<48x1xf32>
    %27 = arith.divf %25, %26 : vector<48x1xf32>
    %28 = vector.broadcast %27 : vector<48x1xf32> to vector<48x24xf32>
    %29 = arith.subf %22, %28 : vector<48x24xf32>
    %30 = arith.mulf %29, %29 : vector<48x24xf32>
    %cst_13 = arith.constant dense<0.000000e+00> : vector<48xf32>
    %31 = vector.multi_reduction <add>, %30, %cst_13 [1] : vector<48x24xf32> to vector<48xf32>
    %32 = vector.shape_cast %31 : vector<48xf32> to vector<48x1xf32>
    %cst_14 = arith.constant 2.400000e+01 : f32
    %33 = vector.broadcast %cst_14 : f32 to vector<48x1xf32>
    %34 = arith.divf %32, %33 : vector<48x1xf32>
    %35 = vector.broadcast %27 : vector<48x1xf32> to vector<48x24xf32>
    %36 = arith.subf %22, %35 : vector<48x24xf32>
    %cst_15 = arith.constant 9.99999974E-6 : f32
    %37 = vector.broadcast %cst_15 : f32 to vector<48x1xf32>
    %38 = arith.addf %34, %37 : vector<48x1xf32>
    %39 = math.rsqrt %38 : vector<48x1xf32>
    %40 = vector.broadcast %39 : vector<48x1xf32> to vector<48x24xf32>
    %41 = arith.mulf %36, %40 : vector<48x24xf32>
    %42 = vector.broadcast %23 : vector<1x24xf32> to vector<48x24xf32>
    %43 = arith.mulf %41, %42 : vector<48x24xf32>
    %c0_16 = arith.constant 0 : index
    %c0_17 = arith.constant 0 : index
    %44 = vector.load %arg6[%c0_16, %c0_17] : memref<32x64xf32, #tpu.memory_space<vmem>>, vector<32x64xf32>
    %cst_18 = arith.constant dense<0.000000e+00> : vector<64x64xf32>
    %45 = tpu.matmul %21, %44, %cst_18 {dimension_numbers = #tpu.dot_dimension_numbers<[1], [0], [0], [1], [0, 0, 1, 1], [], []>} : vector<64x32xf32>, vector<32x64xf32>, vector<64x64xf32> -> vector<64x64xf32>
    %c0_19 = arith.constant 0 : index
    %c0_20 = arith.constant 0 : index
    %46 = vector.load %arg7[%c0_19, %c0_20] : memref<24x16xf32, #tpu.memory_space<vmem>>, vector<24x16xf32>
    %cst_21 = arith.constant dense<0.000000e+00> : vector<48x16xf32>
    %47 = tpu.matmul %43, %46, %cst_21 {dimension_numbers = #tpu.dot_dimension_numbers<[1], [0], [0], [1], [0, 0, 1, 1], [], []>} : vector<48x24xf32>, vector<24x16xf32>, vector<48x16xf32> -> vector<48x16xf32>
    %c0_22 = arith.constant 0 : index
    %c0_23 = arith.constant 0 : index
    %48 = vector.load %arg8[%c0_22, %c0_23] : memref<24x16xf32, #tpu.memory_space<vmem>>, vector<24x16xf32>
    %cst_24 = arith.constant dense<0.000000e+00> : vector<48x16xf32>
    %49 = tpu.matmul %43, %48, %cst_24 {dimension_numbers = #tpu.dot_dimension_numbers<[1], [0], [0], [1], [0, 0, 1, 1], [], []>} : vector<48x24xf32>, vector<24x16xf32>, vector<48x16xf32> -> vector<48x16xf32>
    %c0_25 = arith.constant 0 : index
    %c0_26 = arith.constant 0 : index
    %50 = vector.load %arg9[%c0_25, %c0_26] : memref<2x16xf32, #tpu.memory_space<vmem>>, vector<2x16xf32>
    %51 = vector.shape_cast %50 : vector<2x16xf32> to vector<1x2x16xf32>
    %52 = vector.shape_cast %51 : vector<1x2x16xf32> to vector<1x2x16xf32>
    %53 = vector.broadcast %52 : vector<1x2x16xf32> to vector<8x2x16xf32>
    %c0_27 = arith.constant 0 : index
    %c0_28 = arith.constant 0 : index
    %54 = vector.load %arg10[%c0_27, %c0_28] : memref<2x16xf32, #tpu.memory_space<vmem>>, vector<2x16xf32>
    %55 = vector.shape_cast %54 : vector<2x16xf32> to vector<1x2x16xf32>
    %56 = vector.shape_cast %55 : vector<1x2x16xf32> to vector<1x2x16xf32>
    %57 = vector.broadcast %56 : vector<1x2x16xf32> to vector<8x2x16xf32>
    %58 = vector.shape_cast %47 : vector<48x16xf32> to vector<8x6x16xf32>
    %59 = tpu.concatenate %53, %58 in 1 : vector<8x2x16xf32>, vector<8x6x16xf32> -> vector<8x8x16xf32>
    %60 = vector.shape_cast %49 : vector<48x16xf32> to vector<8x6x16xf32>
    %61 = tpu.concatenate %57, %60 in 1 : vector<8x2x16xf32>, vector<8x6x16xf32> -> vector<8x8x16xf32>
    %c0_29 = arith.constant 0 : index
    %c0_30 = arith.constant 0 : index
    %c0_31 = arith.constant 0 : index
    %62 = vector.load %arg3[%c0_29, %c0_30, %c0_31] : memref<8x1x8xf32, #tpu.memory_space<vmem>>, vector<8x1x8xf32>
    %c0_32 = arith.constant 0 : index
    %c0_33 = arith.constant 0 : index
    %63 = vector.load %arg11[%c0_32, %c0_33] : memref<64x32xf32, #tpu.memory_space<vmem>>, vector<64x32xf32>
    %cst_34 = arith.constant 0.000000e+00 : f32
    %64 = vector.broadcast %cst_34 : f32 to vector<64x32xf32>
    %65 = vector.extract_strided_slice %45 {offsets = [0, 0], sizes = [64, 16], strides = [1, 1]} : vector<64x64xf32> to vector<64x16xf32>
    %66 = vector.shape_cast %65 : vector<64x16xf32> to vector<8x8x16xf32>
    "tpu.trace_start"() <{level = 10 : i32, message = "bnd,bjd->bnj"}> : () -> ()
    %cst_35 = arith.constant dense<0.000000e+00> : vector<8x8x8xf32>
    %67 = tpu.matmul %66, %59, %cst_35 {dimension_numbers = #tpu.dot_dimension_numbers<[2], [2], [1], [1], [0, 0, 0, 1, 1, 1], [0], [0]>} : vector<8x8x16xf32>, vector<8x8x16xf32>, vector<8x8x8xf32> -> vector<8x8x8xf32>
    "tpu.trace_stop"() : () -> ()
    %68 = vector.broadcast %62 : vector<8x1x8xf32> to vector<8x8x8xf32>
    %69 = arith.addf %67, %68 : vector<8x8x8xf32>
    %cst_36 = arith.constant dense<0xFF800000> : vector<8x8xf32>
    %70 = vector.multi_reduction <maximumf>, %69, %cst_36 [2] : vector<8x8x8xf32> to vector<8x8xf32>
    %71 = vector.shape_cast %70 : vector<8x8xf32> to vector<8x8x1xf32>
    %72 = vector.broadcast %71 : vector<8x8x1xf32> to vector<8x8x8xf32>
    %73 = arith.subf %69, %72 : vector<8x8x8xf32>
    %74 = math.exp %73 : vector<8x8x8xf32>
    %cst_37 = arith.constant dense<0.000000e+00> : vector<8x8xf32>
    %75 = vector.multi_reduction <add>, %74, %cst_37 [2] : vector<8x8x8xf32> to vector<8x8xf32>
    %76 = vector.shape_cast %75 : vector<8x8xf32> to vector<8x8x1xf32>
    %77 = vector.broadcast %76 : vector<8x8x1xf32> to vector<8x8x8xf32>
    %78 = arith.divf %74, %77 : vector<8x8x8xf32>
    "tpu.trace_start"() <{level = 10 : i32, message = "bnj,bjd->bnd"}> : () -> ()
    %cst_38 = arith.constant dense<0.000000e+00> : vector<8x8x16xf32>
    %79 = tpu.matmul %78, %61, %cst_38 {dimension_numbers = #tpu.dot_dimension_numbers<[2], [1], [1], [2], [0, 0, 0, 1, 1, 2], [0], [0]>} : vector<8x8x8xf32>, vector<8x8x16xf32>, vector<8x8x16xf32> -> vector<8x8x16xf32>
    "tpu.trace_stop"() : () -> ()
    %80 = vector.shape_cast %79 : vector<8x8x16xf32> to vector<64x16xf32>
    %81 = vector.extract_strided_slice %63 {offsets = [0, 0], sizes = [16, 32], strides = [1, 1]} : vector<64x32xf32> to vector<16x32xf32>
    %cst_39 = arith.constant dense<0.000000e+00> : vector<64x32xf32>
    %82 = tpu.matmul %80, %81, %cst_39 {dimension_numbers = #tpu.dot_dimension_numbers<[1], [0], [0], [1], [0, 0, 1, 1], [], []>} : vector<64x16xf32>, vector<16x32xf32>, vector<64x32xf32> -> vector<64x32xf32>
    %83 = arith.addf %64, %82 : vector<64x32xf32>
    %84 = vector.extract_strided_slice %45 {offsets = [0, 16], sizes = [64, 16], strides = [1, 1]} : vector<64x64xf32> to vector<64x16xf32>
    %85 = vector.shape_cast %84 : vector<64x16xf32> to vector<8x8x16xf32>
    "tpu.trace_start"() <{level = 10 : i32, message = "bnd,bjd->bnj"}> : () -> ()
    %cst_40 = arith.constant dense<0.000000e+00> : vector<8x8x8xf32>
    %86 = tpu.matmul %85, %59, %cst_40 {dimension_numbers = #tpu.dot_dimension_numbers<[2], [2], [1], [1], [0, 0, 0, 1, 1, 1], [0], [0]>} : vector<8x8x16xf32>, vector<8x8x16xf32>, vector<8x8x8xf32> -> vector<8x8x8xf32>
    "tpu.trace_stop"() : () -> ()
    %87 = vector.broadcast %62 : vector<8x1x8xf32> to vector<8x8x8xf32>
    %88 = arith.addf %86, %87 : vector<8x8x8xf32>
    %cst_41 = arith.constant dense<0xFF800000> : vector<8x8xf32>
    %89 = vector.multi_reduction <maximumf>, %88, %cst_41 [2] : vector<8x8x8xf32> to vector<8x8xf32>
    %90 = vector.shape_cast %89 : vector<8x8xf32> to vector<8x8x1xf32>
    %91 = vector.broadcast %90 : vector<8x8x1xf32> to vector<8x8x8xf32>
    %92 = arith.subf %88, %91 : vector<8x8x8xf32>
    %93 = math.exp %92 : vector<8x8x8xf32>
    %cst_42 = arith.constant dense<0.000000e+00> : vector<8x8xf32>
    %94 = vector.multi_reduction <add>, %93, %cst_42 [2] : vector<8x8x8xf32> to vector<8x8xf32>
    %95 = vector.shape_cast %94 : vector<8x8xf32> to vector<8x8x1xf32>
    %96 = vector.broadcast %95 : vector<8x8x1xf32> to vector<8x8x8xf32>
    %97 = arith.divf %93, %96 : vector<8x8x8xf32>
    "tpu.trace_start"() <{level = 10 : i32, message = "bnj,bjd->bnd"}> : () -> ()
    %cst_43 = arith.constant dense<0.000000e+00> : vector<8x8x16xf32>
    %98 = tpu.matmul %97, %61, %cst_43 {dimension_numbers = #tpu.dot_dimension_numbers<[2], [1], [1], [2], [0, 0, 0, 1, 1, 2], [0], [0]>} : vector<8x8x8xf32>, vector<8x8x16xf32>, vector<8x8x16xf32> -> vector<8x8x16xf32>
    "tpu.trace_stop"() : () -> ()
    %99 = vector.shape_cast %98 : vector<8x8x16xf32> to vector<64x16xf32>
    %100 = vector.extract_strided_slice %63 {offsets = [16, 0], sizes = [16, 32], strides = [1, 1]} : vector<64x32xf32> to vector<16x32xf32>
    %cst_44 = arith.constant dense<0.000000e+00> : vector<64x32xf32>
    %101 = tpu.matmul %99, %100, %cst_44 {dimension_numbers = #tpu.dot_dimension_numbers<[1], [0], [0], [1], [0, 0, 1, 1], [], []>} : vector<64x16xf32>, vector<16x32xf32>, vector<64x32xf32> -> vector<64x32xf32>
    %102 = arith.addf %83, %101 : vector<64x32xf32>
    %103 = vector.extract_strided_slice %45 {offsets = [0, 32], sizes = [64, 16], strides = [1, 1]} : vector<64x64xf32> to vector<64x16xf32>
    %104 = vector.shape_cast %103 : vector<64x16xf32> to vector<8x8x16xf32>
    "tpu.trace_start"() <{level = 10 : i32, message = "bnd,bjd->bnj"}> : () -> ()
    %cst_45 = arith.constant dense<0.000000e+00> : vector<8x8x8xf32>
    %105 = tpu.matmul %104, %59, %cst_45 {dimension_numbers = #tpu.dot_dimension_numbers<[2], [2], [1], [1], [0, 0, 0, 1, 1, 1], [0], [0]>} : vector<8x8x16xf32>, vector<8x8x16xf32>, vector<8x8x8xf32> -> vector<8x8x8xf32>
    "tpu.trace_stop"() : () -> ()
    %106 = vector.broadcast %62 : vector<8x1x8xf32> to vector<8x8x8xf32>
    %107 = arith.addf %105, %106 : vector<8x8x8xf32>
    %cst_46 = arith.constant dense<0xFF800000> : vector<8x8xf32>
    %108 = vector.multi_reduction <maximumf>, %107, %cst_46 [2] : vector<8x8x8xf32> to vector<8x8xf32>
    %109 = vector.shape_cast %108 : vector<8x8xf32> to vector<8x8x1xf32>
    %110 = vector.broadcast %109 : vector<8x8x1xf32> to vector<8x8x8xf32>
    %111 = arith.subf %107, %110 : vector<8x8x8xf32>
    %112 = math.exp %111 : vector<8x8x8xf32>
    %cst_47 = arith.constant dense<0.000000e+00> : vector<8x8xf32>
    %113 = vector.multi_reduction <add>, %112, %cst_47 [2] : vector<8x8x8xf32> to vector<8x8xf32>
    %114 = vector.shape_cast %113 : vector<8x8xf32> to vector<8x8x1xf32>
    %115 = vector.broadcast %114 : vector<8x8x1xf32> to vector<8x8x8xf32>
    %116 = arith.divf %112, %115 : vector<8x8x8xf32>
    "tpu.trace_start"() <{level = 10 : i32, message = "bnj,bjd->bnd"}> : () -> ()
    %cst_48 = arith.constant dense<0.000000e+00> : vector<8x8x16xf32>
    %117 = tpu.matmul %116, %61, %cst_48 {dimension_numbers = #tpu.dot_dimension_numbers<[2], [1], [1], [2], [0, 0, 0, 1, 1, 2], [0], [0]>} : vector<8x8x8xf32>, vector<8x8x16xf32>, vector<8x8x16xf32> -> vector<8x8x16xf32>
    "tpu.trace_stop"() : () -> ()
    %118 = vector.shape_cast %117 : vector<8x8x16xf32> to vector<64x16xf32>
    %119 = vector.extract_strided_slice %63 {offsets = [32, 0], sizes = [16, 32], strides = [1, 1]} : vector<64x32xf32> to vector<16x32xf32>
    %cst_49 = arith.constant dense<0.000000e+00> : vector<64x32xf32>
    %120 = tpu.matmul %118, %119, %cst_49 {dimension_numbers = #tpu.dot_dimension_numbers<[1], [0], [0], [1], [0, 0, 1, 1], [], []>} : vector<64x16xf32>, vector<16x32xf32>, vector<64x32xf32> -> vector<64x32xf32>
    %121 = arith.addf %102, %120 : vector<64x32xf32>
    %122 = vector.extract_strided_slice %45 {offsets = [0, 48], sizes = [64, 16], strides = [1, 1]} : vector<64x64xf32> to vector<64x16xf32>
    %123 = vector.shape_cast %122 : vector<64x16xf32> to vector<8x8x16xf32>
    "tpu.trace_start"() <{level = 10 : i32, message = "bnd,bjd->bnj"}> : () -> ()
    %cst_50 = arith.constant dense<0.000000e+00> : vector<8x8x8xf32>
    %124 = tpu.matmul %123, %59, %cst_50 {dimension_numbers = #tpu.dot_dimension_numbers<[2], [2], [1], [1], [0, 0, 0, 1, 1, 1], [0], [0]>} : vector<8x8x16xf32>, vector<8x8x16xf32>, vector<8x8x8xf32> -> vector<8x8x8xf32>
    "tpu.trace_stop"() : () -> ()
    %125 = vector.broadcast %62 : vector<8x1x8xf32> to vector<8x8x8xf32>
    %126 = arith.addf %124, %125 : vector<8x8x8xf32>
    %cst_51 = arith.constant dense<0xFF800000> : vector<8x8xf32>
    %127 = vector.multi_reduction <maximumf>, %126, %cst_51 [2] : vector<8x8x8xf32> to vector<8x8xf32>
    %128 = vector.shape_cast %127 : vector<8x8xf32> to vector<8x8x1xf32>
    %129 = vector.broadcast %128 : vector<8x8x1xf32> to vector<8x8x8xf32>
    %130 = arith.subf %126, %129 : vector<8x8x8xf32>
    %131 = math.exp %130 : vector<8x8x8xf32>
    %cst_52 = arith.constant dense<0.000000e+00> : vector<8x8xf32>
    %132 = vector.multi_reduction <add>, %131, %cst_52 [2] : vector<8x8x8xf32> to vector<8x8xf32>
    %133 = vector.shape_cast %132 : vector<8x8xf32> to vector<8x8x1xf32>
    %134 = vector.broadcast %133 : vector<8x8x1xf32> to vector<8x8x8xf32>
    %135 = arith.divf %131, %134 : vector<8x8x8xf32>
    "tpu.trace_start"() <{level = 10 : i32, message = "bnj,bjd->bnd"}> : () -> ()
    %cst_53 = arith.constant dense<0.000000e+00> : vector<8x8x16xf32>
    %136 = tpu.matmul %135, %61, %cst_53 {dimension_numbers = #tpu.dot_dimension_numbers<[2], [1], [1], [2], [0, 0, 0, 1, 1, 2], [0], [0]>} : vector<8x8x8xf32>, vector<8x8x16xf32>, vector<8x8x16xf32> -> vector<8x8x16xf32>
    "tpu.trace_stop"() : () -> ()
    %137 = vector.shape_cast %136 : vector<8x8x16xf32> to vector<64x16xf32>
    %138 = vector.extract_strided_slice %63 {offsets = [48, 0], sizes = [16, 32], strides = [1, 1]} : vector<64x32xf32> to vector<16x32xf32>
    %cst_54 = arith.constant dense<0.000000e+00> : vector<64x32xf32>
    %139 = tpu.matmul %137, %138, %cst_54 {dimension_numbers = #tpu.dot_dimension_numbers<[1], [0], [0], [1], [0, 0, 1, 1], [], []>} : vector<64x16xf32>, vector<16x32xf32>, vector<64x32xf32> -> vector<64x32xf32>
    %140 = arith.addf %121, %139 : vector<64x32xf32>
    %c0_55 = arith.constant 0 : index
    %c0_56 = arith.constant 0 : index
    %141 = vector.load %arg12[%c0_55, %c0_56] : memref<64x32xf32, #tpu.memory_space<vmem>>, vector<64x32xf32>
    tpu.vector_store %arg12[%c0_55, %c0_56], %140 {strides = array<i32>} : memref<64x32xf32, #tpu.memory_space<vmem>>, vector<64x32xf32>,
    return
  }
  func.func @transform_0(%arg0: i32) -> (i32, i32) {
    %c0_i32 = arith.constant 0 : i32
    %c0_i32_0 = arith.constant 0 : i32
    return %arg0, %c0_i32 : i32, i32
  }
  func.func @transform_1(%arg0: i32) -> (i32, i32) {
    %c0_i32 = arith.constant 0 : i32
    %c0_i32_0 = arith.constant 0 : i32
    return %arg0, %c0_i32 : i32, i32
  }
  func.func @transform_2(%arg0: i32) -> (i32, i32, i32) {
    %c0_i32 = arith.constant 0 : i32
    %c0_i32_0 = arith.constant 0 : i32
    %c0_i32_1 = arith.constant 0 : i32
    return %arg0, %c0_i32, %c0_i32_0 : i32, i32, i32
  }
  func.func @transform_3(%arg0: i32) -> (i32, i32) {
    %c0_i32 = arith.constant 0 : i32
    %c0_i32_0 = arith.constant 0 : i32
    %c0_i32_1 = arith.constant 0 : i32
    return %c0_i32, %c0_i32_0 : i32, i32
  }
  func.func @transform_4(%arg0: i32) -> (i32, i32) {
    %c0_i32 = arith.constant 0 : i32
    %c0_i32_0 = arith.constant 0 : i32
    %c0_i32_1 = arith.constant 0 : i32
    return %c0_i32, %c0_i32_0 : i32, i32
  }
  func.func @transform_5(%arg0: i32) -> (i32, i32) {
    %c0_i32 = arith.constant 0 : i32
    %c0_i32_0 = arith.constant 0 : i32
    %c0_i32_1 = arith.constant 0 : i32
    return %c0_i32, %c0_i32_0 : i32, i32
  }
  func.func @transform_6(%arg0: i32) -> (i32, i32) {
    %c0_i32 = arith.constant 0 : i32
    %c0_i32_0 = arith.constant 0 : i32
    %c0_i32_1 = arith.constant 0 : i32
    return %c0_i32, %c0_i32_0 : i32, i32
  }
  func.func @transform_7(%arg0: i32) -> (i32, i32) {
    %c0_i32 = arith.constant 0 : i32
    %c0_i32_0 = arith.constant 0 : i32
    %c0_i32_1 = arith.constant 0 : i32
    return %c0_i32, %c0_i32_0 : i32, i32
  }
  func.func @transform_8(%arg0: i32) -> (i32, i32) {
    %c0_i32 = arith.constant 0 : i32
    %c0_i32_0 = arith.constant 0 : i32
    %c0_i32_1 = arith.constant 0 : i32
    return %c0_i32, %c0_i32_0 : i32, i32
  }
  func.func @transform_9(%arg0: i32) -> (i32, i32) {
    %c0_i32 = arith.constant 0 : i32
    %c0_i32_0 = arith.constant 0 : i32
    %c0_i32_1 = arith.constant 0 : i32
    return %c0_i32, %c0_i32_0 : i32, i32
  }
  func.func @transform_10(%arg0: i32) -> (i32, i32) {
    %c0_i32 = arith.constant 0 : i32
    %c0_i32_0 = arith.constant 0 : i32
    %c0_i32_1 = arith.constant 0 : i32
    return %c0_i32, %c0_i32_0 : i32, i32
  }
  func.func @transform_11(%arg0: i32) -> (i32, i32) {
    %c0_i32 = arith.constant 0 : i32
    %c0_i32_0 = arith.constant 0 : i32
    return %arg0, %c0_i32 : i32, i32
  }
}

</mosaic_0001>

<llo_original>
// kernel: tpu_custom_call.1
$region0: #{tpu_custom_call.1}
  #allocation0 [shape = 'u32[]', space=smem, size = 0x4, offset = 0x4, fixed_abs, tag = 'smem constant byte address 0x4 - core index']
  #allocation1 [shape = 'u32[144,128]{1,0:T(1,128)}', space=vmem, size = 0x12000, scoped, tag = 'internal scratch']
  %s0 = inlined_call_operand.vmem [shape: f32[64,32], index: 0, kind: input, shape index: {}]
  %s1 = inlined_call_operand.vmem [shape: f32[48,24], index: 1, kind: input, shape index: {}]
  %s2 = inlined_call_operand.vmem [shape: f32[8,1,8], index: 2, kind: input, shape index: {}]
  %s3 = inlined_call_operand.vmem [shape: f32[1,32], index: 3, kind: input, shape index: {}]
  %s4 = inlined_call_operand.vmem [shape: f32[1,24], index: 4, kind: input, shape index: {}]
  %s5 = inlined_call_operand.vmem [shape: f32[32,64], index: 5, kind: input, shape index: {}]
  %s6 = inlined_call_operand.vmem [shape: f32[24,16], index: 6, kind: input, shape index: {}]
  %s7 = inlined_call_operand.vmem [shape: f32[24,16], index: 7, kind: input, shape index: {}]
  %s8 = inlined_call_operand.vmem [shape: f32[2,16], index: 8, kind: input, shape index: {}]
  %s9 = inlined_call_operand.vmem [shape: f32[2,16], index: 9, kind: input, shape index: {}]
  %s10 = inlined_call_operand.vmem [shape: f32[64,32], index: 10, kind: input, shape index: {}]
  %s11 = inlined_call_operand.vmem [shape: f32[64,32], index: 11, kind: output, shape index: {}]
  %s12 = sld [smem:[#allocation0]]
  $region54: #{tpu_custom_call.1} parent=0
    _
  %s14 = ssub.s32 1, %s12
  %s15 = scalar_select 0, %s14, %s12
  // Predicated region
  $region2: #{tpu_custom_call.1} parent=0 // pred_check
    _
  $region3: #{tpu_custom_call.1} parent=0 // pred_check_branch
    %17 = sbr.rel (0) target = $region5
  $region4: #{tpu_custom_call.1} parent=0 // pred_region
    _
  $region5: #{tpu_custom_call.1} parent=0 // pred_fallthru
    _
  // Predicated region
  $region6: #{tpu_custom_call.1} parent=0 // pred_check
    _
  $region7: #{tpu_custom_call.1} parent=0 // pred_check_branch
    %19 = sbr.rel (0) target = $region9
  $region8: #{tpu_custom_call.1} parent=0 // pred_region
    _
  $region9: #{tpu_custom_call.1} parent=0 // pred_fallthru
    _
  // Predicated region
  $region10: #{tpu_custom_call.1} parent=0 // pred_check
    _
  $region11: #{tpu_custom_call.1} parent=0 // pred_check_branch
    %21 = sbr.rel (0) target = $region13
  $region12: #{tpu_custom_call.1} parent=0 // pred_region
    _
  $region13: #{tpu_custom_call.1} parent=0 // pred_fallthru
    _
  // Predicated region
  $region14: #{tpu_custom_call.1} parent=0 // pred_check
    _
  $region15: #{tpu_custom_call.1} parent=0 // pred_check_branch
    %23 = sbr.rel (0) target = $region17
  $region16: #{tpu_custom_call.1} parent=0 // pred_region
    _
  $region17: #{tpu_custom_call.1} parent=0 // pred_fallthru
    _
  // Predicated region
  $region18: #{tpu_custom_call.1} parent=0 // pred_check
    _
  $region19: #{tpu_custom_call.1} parent=0 // pred_check_branch
    %25 = sbr.rel (0) target = $region21
  $region20: #{tpu_custom_call.1} parent=0 // pred_region
    _
  $region21: #{tpu_custom_call.1} parent=0 // pred_fallthru
    _
  // Predicated region
  $region22: #{tpu_custom_call.1} parent=0 // pred_check
    _
  $region23: #{tpu_custom_call.1} parent=0 // pred_check_branch
    %27 = sbr.rel (0) target = $region25
  $region24: #{tpu_custom_call.1} parent=0 // pred_region
    _
  $region25: #{tpu_custom_call.1} parent=0 // pred_fallthru
    _
  // Predicated region
  $region26: #{tpu_custom_call.1} parent=0 // pred_check
    _
  $region27: #{tpu_custom_call.1} parent=0 // pred_check_branch
    %29 = sbr.rel (0) target = $region29
  $region28: #{tpu_custom_call.1} parent=0 // pred_region
    _
  $region29: #{tpu_custom_call.1} parent=0 // pred_fallthru
    _
  // Predicated region
  $region30: #{tpu_custom_call.1} parent=0 // pred_check
    _
  $region31: #{tpu_custom_call.1} parent=0 // pred_check_branch
    %31 = sbr.rel (0) target = $region33
  $region32: #{tpu_custom_call.1} parent=0 // pred_region
    _
  $region33: #{tpu_custom_call.1} parent=0 // pred_fallthru
    _
  // Predicated region
  $region34: #{tpu_custom_call.1} parent=0 // pred_check
    _
  $region35: #{tpu_custom_call.1} parent=0 // pred_check_branch
    %33 = sbr.rel (0) target = $region37
  $region36: #{tpu_custom_call.1} parent=0 // pred_region
    _
  $region37: #{tpu_custom_call.1} parent=0 // pred_fallthru
    _
  // Predicated region
  $region38: #{tpu_custom_call.1} parent=0 // pred_check
    _
  $region39: #{tpu_custom_call.1} parent=0 // pred_check_branch
    %35 = sbr.rel (0) target = $region41
  $region40: #{tpu_custom_call.1} parent=0 // pred_region
    _
  $region41: #{tpu_custom_call.1} parent=0 // pred_fallthru
    _
  // Predicated region
  $region42: #{tpu_custom_call.1} parent=0 // pred_check
    _
  $region43: #{tpu_custom_call.1} parent=0 // pred_check_branch
    %37 = sbr.rel (0) target = $region45
  $region44: #{tpu_custom_call.1} parent=0 // pred_region
    _
  $region45: #{tpu_custom_call.1} parent=0 // pred_fallthru
    _
  %v38 = vld [vmem:[%s0] sm:$0xff]
  %v39 = vld [vmem:[%s0 + $0x8] sm:$0xff]
  %v40 = vld [vmem:[%s0 + $0x10] sm:$0xff]
  %v41 = vld [vmem:[%s0 + $0x18] sm:$0xff]
  %v42 = vld [vmem:[%s0 + $0x20] sm:$0xff]
  %v43 = vld [vmem:[%s0 + $0x28] sm:$0xff]
  %v44 = vld [vmem:[%s0 + $0x30] sm:$0xff]
  %v45 = vld [vmem:[%s0 + $0x38] sm:$0xff]
  %v46 = vld [vmem:[%s3] sm:$0x1]
  %vm47 = vcmask 261120
  %v48 = vsel %vm47, %v38, 0.0
  %49 = vadd.xlane.f32.xlu0 %v48
  %v50 = vpop.xlane.xlu0 %49
  %v51 = vsel %vm47, %v39, 0.0
  %52 = vadd.xlane.f32.xlu0 %v51
  %v53 = vpop.xlane.xlu0 %52
  %v54 = vsel %vm47, %v40, 0.0
  %55 = vadd.xlane.f32.xlu0 %v54
  %v56 = vpop.xlane.xlu0 %55
  %v57 = vsel %vm47, %v41, 0.0
  %58 = vadd.xlane.f32.xlu0 %v57
  %v59 = vpop.xlane.xlu0 %58
  %v60 = vsel %vm47, %v42, 0.0
  %61 = vadd.xlane.f32.xlu0 %v60
  %v62 = vpop.xlane.xlu0 %61
  %v63 = vsel %vm47, %v43, 0.0
  %64 = vadd.xlane.f32.xlu0 %v63
  %v65 = vpop.xlane.xlu0 %64
  %v66 = vsel %vm47, %v44, 0.0
  %67 = vadd.xlane.f32.xlu0 %v66
  %v68 = vpop.xlane.xlu0 %67
  %v69 = vsel %vm47, %v45, 0.0
  %70 = vadd.xlane.f32.xlu0 %v69
  %v71 = vpop.xlane.xlu0 %70
  %v72 = vrcp.pop 32.0
  %v73 = vmul.f32 %v50, %v72
  %v74 = vmul.f32 %v53, %v72
  %v75 = vmul.f32 %v56, %v72
  %v76 = vmul.f32 %v59, %v72
  %v77 = vmul.f32 %v62, %v72
  %v78 = vmul.f32 %v65, %v72
  %v79 = vmul.f32 %v68, %v72
  %v80 = vmul.f32 %v71, %v72
  %v81 = vsub.f32 %v38, %v73
  %v82 = vsub.f32 %v39, %v74
  %v83 = vsub.f32 %v40, %v75
  %v84 = vsub.f32 %v41, %v76
  %v85 = vsub.f32 %v42, %v77
  %v86 = vsub.f32 %v43, %v78
  %v87 = vsub.f32 %v44, %v79
  %v88 = vsub.f32 %v45, %v80
  %v89 = vmul.f32 %v81, %v81
  %v90 = vmul.f32 %v82, %v82
  %v91 = vmul.f32 %v83, %v83
  %v92 = vmul.f32 %v84, %v84
  %v93 = vmul.f32 %v85, %v85
  %v94 = vmul.f32 %v86, %v86
  %v95 = vmul.f32 %v87, %v87
  %v96 = vmul.f32 %v88, %v88
  %v97 = vsel %vm47, %v89, 0.0
  %98 = vadd.xlane.f32.xlu0 %v97
  %v99 = vpop.xlane.xlu0 %98
  %v100 = vsel %vm47, %v90, 0.0
  %101 = vadd.xlane.f32.xlu0 %v100
  %v102 = vpop.xlane.xlu0 %101
  %v103 = vsel %vm47, %v91, 0.0
  %104 = vadd.xlane.f32.xlu0 %v103
  %v105 = vpop.xlane.xlu0 %104
  %v106 = vsel %vm47, %v92, 0.0
  %107 = vadd.xlane.f32.xlu0 %v106
  %v108 = vpop.xlane.xlu0 %107
  %v109 = vsel %vm47, %v93, 0.0
  %110 = vadd.xlane.f32.xlu0 %v109
  %v111 = vpop.xlane.xlu0 %110
  %v112 = vsel %vm47, %v94, 0.0
  %113 = vadd.xlane.f32.xlu0 %v112
  %v114 = vpop.xlane.xlu0 %113
  %v115 = vsel %vm47, %v95, 0.0
  %116 = vadd.xlane.f32.xlu0 %v115
  %v117 = vpop.xlane.xlu0 %116
  %v118 = vsel %vm47, %v96, 0.0
  %119 = vadd.xlane.f32.xlu0 %v118
  %v120 = vpop.xlane.xlu0 %119
  %v121 = vmul.f32 %v99, %v72
  %v122 = vmul.f32 %v102, %v72
  %v123 = vmul.f32 %v105, %v72
  %v124 = vmul.f32 %v108, %v72
  %v125 = vmul.f32 %v111, %v72
  %v126 = vmul.f32 %v114, %v72
  %v127 = vmul.f32 %v117, %v72
  %v128 = vmul.f32 %v120, %v72
  %v129 = vadd.f32 %v121, 1e-05
  %v130 = vadd.f32 %v122, 1e-05
  %v131 = vadd.f32 %v123, 1e-05
  %v132 = vadd.f32 %v124, 1e-05
  %v133 = vadd.f32 %v125, 1e-05
  %v134 = vadd.f32 %v126, 1e-05
  %v135 = vadd.f32 %v127, 1e-05
  %v136 = vadd.f32 %v128, 1e-05
  %v137 = vrsqrt.pop %v129
  %v138 = vrsqrt.pop %v130
  %v139 = vrsqrt.pop %v131
  %v140 = vrsqrt.pop %v132
  %v141 = vrsqrt.pop %v133
  %v142 = vrsqrt.pop %v134
  %v143 = vrsqrt.pop %v135
  %v144 = vrsqrt.pop %v136
  %v145 = vmul.f32 %v81, %v137
  %v146 = vmul.f32 %v82, %v138
  %v147 = vmul.f32 %v83, %v139
  %v148 = vmul.f32 %v84, %v140
  %v149 = vmul.f32 %v85, %v141
  %v150 = vmul.f32 %v86, %v142
  %v151 = vmul.f32 %v87, %v143
  %v152 = vmul.f32 %v88, %v144
  %v154 = vlaneseq
  %v155 = vshrl.u32 %v154, 7
  %v156 = vsub.s32 0, %v155
  %v157 = vrot.slane %v46, %v156
  %v159 = vmul.f32 %v145, %v157
  %v160 = vmul.f32 %v146, %v157
  %v161 = vmul.f32 %v147, %v157
  %v162 = vmul.f32 %v148, %v157
  %v163 = vmul.f32 %v149, %v157
  %v164 = vmul.f32 %v150, %v157
  %v165 = vmul.f32 %v151, %v157
  %v166 = vmul.f32 %v152, %v157
  %v167 = vld [vmem:[%s1] sm:$0xff]
  %v168 = vld [vmem:[%s1 + $0x8] sm:$0xff]
  %v169 = vld [vmem:[%s1 + $0x10] sm:$0xff]
  %v170 = vld [vmem:[%s1 + $0x18] sm:$0xff]
  %v171 = vld [vmem:[%s1 + $0x20] sm:$0xff]
  %v172 = vld [vmem:[%s1 + $0x28] sm:$0xff]
  %v173 = vld [vmem:[%s4] sm:$0x1]
  %vm174 = vcmask 195584
  %v175 = vsel %vm174, %v167, 0.0
  %176 = vadd.xlane.f32.xlu0 %v175
  %v177 = vpop.xlane.xlu0 %176
  %v178 = vsel %vm174, %v168, 0.0
  %179 = vadd.xlane.f32.xlu0 %v178
  %v180 = vpop.xlane.xlu0 %179
  %v181 = vsel %vm174, %v169, 0.0
  %182 = vadd.xlane.f32.xlu0 %v181
  %v183 = vpop.xlane.xlu0 %182
  %v184 = vsel %vm174, %v170, 0.0
  %185 = vadd.xlane.f32.xlu0 %v184
  %v186 = vpop.xlane.xlu0 %185
  %v187 = vsel %vm174, %v171, 0.0
  %188 = vadd.xlane.f32.xlu0 %v187
  %v189 = vpop.xlane.xlu0 %188
  %v190 = vsel %vm174, %v172, 0.0
  %191 = vadd.xlane.f32.xlu0 %v190
  %v192 = vpop.xlane.xlu0 %191
  %v193 = vrcp.pop 24.0
  %v194 = vmul.f32 %v177, %v193
  %v195 = vmul.f32 %v180, %v193
  %v196 = vmul.f32 %v183, %v193
  %v197 = vmul.f32 %v186, %v193
  %v198 = vmul.f32 %v189, %v193
  %v199 = vmul.f32 %v192, %v193
  %v200 = vsub.f32 %v167, %v194
  %v201 = vsub.f32 %v168, %v195
  %v202 = vsub.f32 %v169, %v196
  %v203 = vsub.f32 %v170, %v197
  %v204 = vsub.f32 %v171, %v198
  %v205 = vsub.f32 %v172, %v199
  %v206 = vmul.f32 %v200, %v200
  %v207 = vmul.f32 %v201, %v201
  %v208 = vmul.f32 %v202, %v202
  %v209 = vmul.f32 %v203, %v203
  %v210 = vmul.f32 %v204, %v204
  %v211 = vmul.f32 %v205, %v205
  %v212 = vsel %vm174, %v206, 0.0
  %213 = vadd.xlane.f32.xlu0 %v212
  %v214 = vpop.xlane.xlu0 %213
  %v215 = vsel %vm174, %v207, 0.0
  %216 = vadd.xlane.f32.xlu0 %v215
  %v217 = vpop.xlane.xlu0 %216
  %v218 = vsel %vm174, %v208, 0.0
  %219 = vadd.xlane.f32.xlu0 %v218
  %v220 = vpop.xlane.xlu0 %219
  %v221 = vsel %vm174, %v209, 0.0
  %222 = vadd.xlane.f32.xlu0 %v221
  %v223 = vpop.xlane.xlu0 %222
  %v224 = vsel %vm174, %v210, 0.0
  %225 = vadd.xlane.f32.xlu0 %v224
  %v226 = vpop.xlane.xlu0 %225
  %v227 = vsel %vm174, %v211, 0.0
  %228 = vadd.xlane.f32.xlu0 %v227
  %v229 = vpop.xlane.xlu0 %228
  %v230 = vmul.f32 %v214, %v193
  %v231 = vmul.f32 %v217, %v193
  %v232 = vmul.f32 %v220, %v193
  %v233 = vmul.f32 %v223, %v193
  %v234 = vmul.f32 %v226, %v193
  %v235 = vmul.f32 %v229, %v193
  %v236 = vadd.f32 %v230, 1e-05
  %v237 = vadd.f32 %v231, 1e-05
  %v238 = vadd.f32 %v232, 1e-05
  %v239 = vadd.f32 %v233, 1e-05
  %v240 = vadd.f32 %v234, 1e-05
  %v241 = vadd.f32 %v235, 1e-05
  %v242 = vrsqrt.pop %v236
  %v243 = vrsqrt.pop %v237
  %v244 = vrsqrt.pop %v238
  %v245 = vrsqrt.pop %v239
  %v246 = vrsqrt.pop %v240
  %v247 = vrsqrt.pop %v241
  %v248 = vmul.f32 %v200, %v242
  %v249 = vmul.f32 %v201, %v243
  %v250 = vmul.f32 %v202, %v244
  %v251 = vmul.f32 %v203, %v245
  %v252 = vmul.f32 %v204, %v246
  %v253 = vmul.f32 %v205, %v247
  %v255 = vlaneseq
  %v256 = vshrl.u32 %v255, 7
  %v257 = vsub.s32 0, %v256
  %v258 = vrot.slane %v173, %v257
  %v260 = vmul.f32 %v248, %v258
  %v261 = vmul.f32 %v249, %v258
  %v262 = vmul.f32 %v250, %v258
  %v263 = vmul.f32 %v251, %v258
  %v264 = vmul.f32 %v252, %v258
  %v265 = vmul.f32 %v253, %v258
  %v266 = vld [vmem:[%s5] sm:$0xff]
  %v267 = vld [vmem:[%s5 + $0x8] sm:$0xff]
  %v268 = vld [vmem:[%s5 + $0x10] sm:$0xff]
  %v269 = vld [vmem:[%s5 + $0x18] sm:$0xff]
  %v271 = vsel %vm47, %v159, 0
  %v274 = vsel %vm47, %v160, 0
  %v277 = vsel %vm47, %v161, 0
  %v280 = vsel %vm47, %v162, 0
  %v283 = vsel %vm47, %v163, 0
  %v286 = vsel %vm47, %v164, 0
  %v289 = vsel %vm47, %v165, 0
  %v292 = vsel %vm47, %v166, 0
  %294 = vmatprep.subr.mxu0 0.0
  %295 = vmatpush1.msra.mxu0 %v266
  %296 = vmatprep.subr.mxu0 0.0
  %297 = vmatpush1.msra.mxu0 %v267
  %298 = vmatprep.subr.mxu0 0.0
  %299 = vmatpush1.msra.mxu0 %v268
  %300 = vmatprep.subr.mxu0 0.0
  %301 = vmatpush1.msra.mxu0 %v269
  %302 = vmatprep.subr.mxu0 0.0
  %303 = vmatpush1.msra.mxu0 0.0
  %304 = vmatprep.subr.mxu0 0.0
  %305 = vmatpush1.msra.mxu0 0.0
  %306 = vmatprep.subr.mxu0 0.0
  %307 = vmatpush1.msra.mxu0 0.0
  %308 = vmatprep.subr.mxu0 0.0
  %309 = vmatpush1.msra.mxu0 0.0
  %310 = vmatprep.subr.mxu0 0.0
  %311 = vmatpush1.msra.mxu0 0.0
  %312 = vmatprep.subr.mxu0 0.0
  %313 = vmatpush1.msra.mxu0 0.0
  %314 = vmatprep.subr.mxu0 0.0
  %315 = vmatpush1.msra.mxu0 0.0
  %316 = vmatprep.subr.mxu0 0.0
  %317 = vmatpush1.msra.mxu0 0.0
  %318 = vmatprep.subr.mxu0 0.0
  %319 = vmatpush1.msra.mxu0 0.0
  %320 = vmatprep.subr.mxu0 0.0
  %321 = vmatpush1.msra.mxu0 0.0
  %322 = vmatprep.subr.mxu0 0.0
  %323 = vmatpush1.msra.mxu0 0.0
  %324 = vmatprep.subr.mxu0 0.0
  %325 = vmatpush1.msra.mxu0 0.0
  %326 = vmatprep.subr.mxu0 0.0
  %327 = vmatpush1.msra.mxu0 0.0
  %328 = vmatprep.subr.mxu0 0.0
  %329 = vmatpush1.msra.mxu0 0.0
  %330 = vmatprep.subr.mxu0 0.0
  %331 = vmatpush1.msra.mxu0 0.0
  %332 = vmatprep.subr.mxu0 0.0
  %333 = vmatpush1.msra.mxu0 0.0
  %334 = vmatprep.subr.mxu0 0.0
  %335 = vmatpush1.msra.mxu0 0.0
  %336 = vmatprep.subr.mxu0 0.0
  %337 = vmatpush1.msra.mxu0 0.0
  %338 = vmatprep.subr.mxu0 0.0
  %339 = vmatpush1.msra.mxu0 0.0
  %340 = vmatprep.subr.mxu0 0.0
  %341 = vmatpush1.msra.mxu0 0.0
  %342 = vmatprep.subr.mxu0 0.0
  %343 = vmatpush1.msra.mxu0 0.0
  %344 = vmatprep.subr.mxu0 0.0
  %345 = vmatpush1.msra.mxu0 0.0
  %346 = vmatprep.subr.mxu0 0.0
  %347 = vmatpush1.msra.mxu0 0.0
  %348 = vmatprep.subr.mxu0 0.0
  %349 = vmatpush1.msra.mxu0 0.0
  %350 = vmatprep.subr.mxu0 0.0
  %351 = vmatpush1.msra.mxu0 0.0
  %352 = vmatprep.subr.mxu0 0.0
  %353 = vmatpush1.msra.mxu0 0.0
  %354 = vmatprep.subr.mxu0 0.0
  %355 = vmatpush1.msra.mxu0 0.0
  %356 = vmatprep.subr.mxu0 0.0
  %357 = vmatpush1.msra.mxu0 0.0
  %358 = vmatprep.mubr.f32.mxu0 0.0
  %359 = vmatmul.mubr.f32.gmra.mrb[0].mxu0 %v271
  %v360 = vpop.f32.mrb[0].mxu0
  %v361 = vadd.f32 0.0, %v360
  %v362 = vpop.f32.mrb[0].mxu0
  %363 = vmatprep.mubr.f32.mxu0 0.0
  %364 = vmatmul.mubr.f32.gmra.mrb[0].mxu0 %v274
  %v365 = vpop.f32.mrb[0].mxu0
  %v366 = vadd.f32 0.0, %v365
  %v367 = vpop.f32.mrb[0].mxu0
  %368 = vmatprep.mubr.f32.mxu0 0.0
  %369 = vmatmul.mubr.f32.gmra.mrb[0].mxu0 %v277
  %v370 = vpop.f32.mrb[0].mxu0
  %v371 = vadd.f32 0.0, %v370
  %v372 = vpop.f32.mrb[0].mxu0
  %373 = vmatprep.mubr.f32.mxu0 0.0
  %374 = vmatmul.mubr.f32.gmra.mrb[0].mxu0 %v280
  %v375 = vpop.f32.mrb[0].mxu0
  %v376 = vadd.f32 0.0, %v375
  %v377 = vpop.f32.mrb[0].mxu0
  %378 = vmatprep.mubr.f32.mxu0 0.0
  %379 = vmatmul.mubr.f32.gmra.mrb[0].mxu0 %v283
  %v380 = vpop.f32.mrb[0].mxu0
  %v381 = vadd.f32 0.0, %v380
  %v382 = vpop.f32.mrb[0].mxu0
  %383 = vmatprep.mubr.f32.mxu0 0.0
  %384 = vmatmul.mubr.f32.gmra.mrb[0].mxu0 %v286
  %v385 = vpop.f32.mrb[0].mxu0
  %v386 = vadd.f32 0.0, %v385
  %v387 = vpop.f32.mrb[0].mxu0
  %388 = vmatprep.mubr.f32.mxu0 0.0
  %389 = vmatmul.mubr.f32.gmra.mrb[0].mxu0 %v289
  %v390 = vpop.f32.mrb[0].mxu0
  %v391 = vadd.f32 0.0, %v390
  %v392 = vpop.f32.mrb[0].mxu0
  %393 = vmatprep.mubr.f32.mxu0 0.0
  %394 = vmatmul.mubr.f32.gmra.mrb[0].mxu0 %v292
  %v395 = vpop.f32.mrb[0].mxu0
  %v396 = vadd.f32 0.0, %v395
  %v397 = vpop.f32.mrb[0].mxu0
  %398 = vdwg.mxu0
  %v399 = vld [vmem:[%s6] sm:$0xff]
  %v400 = vld [vmem:[%s6 + $0x8] sm:$0xff]
  %v401 = vld [vmem:[%s6 + $0x10] sm:$0xff]
  %v403 = vsel %vm174, %v260, 0
  %v406 = vsel %vm174, %v261, 0
  %v409 = vsel %vm174, %v262, 0
  %v412 = vsel %vm174, %v263, 0
  %v415 = vsel %vm174, %v264, 0
  %v418 = vsel %vm174, %v265, 0
  %420 = vmatprep.subr.mxu0 0.0
  %421 = vmatpush1.msra.mxu0 %v399
  %422 = vmatprep.subr.mxu0 0.0
  %423 = vmatpush1.msra.mxu0 %v400
  %424 = vmatprep.subr.mxu0 0.0
  %425 = vmatpush1.msra.mxu0 %v401
  %426 = vmatprep.subr.mxu0 0.0
  %427 = vmatpush1.msra.mxu0 0.0
  %428 = vmatprep.subr.mxu0 0.0
  %429 = vmatpush1.msra.mxu0 0.0
  %430 = vmatprep.subr.mxu0 0.0
  %431 = vmatpush1.msra.mxu0 0.0
  %432 = vmatprep.subr.mxu0 0.0
  %433 = vmatpush1.msra.mxu0 0.0
  %434 = vmatprep.subr.mxu0 0.0
  %435 = vmatpush1.msra.mxu0 0.0
  %436 = vmatprep.subr.mxu0 0.0
  %437 = vmatpush1.msra.mxu0 0.0
  %438 = vmatprep.subr.mxu0 0.0
  %439 = vmatpush1.msra.mxu0 0.0
  %440 = vmatprep.subr.mxu0 0.0
  %441 = vmatpush1.msra.mxu0 0.0
  %442 = vmatprep.subr.mxu0 0.0
  %443 = vmatpush1.msra.mxu0 0.0
  %444 = vmatprep.subr.mxu0 0.0
  %445 = vmatpush1.msra.mxu0 0.0
  %446 = vmatprep.subr.mxu0 0.0
  %447 = vmatpush1.msra.mxu0 0.0
  %448 = vmatprep.subr.mxu0 0.0
  %449 = vmatpush1.msra.mxu0 0.0
  %450 = vmatprep.subr.mxu0 0.0
  %451 = vmatpush1.msra.mxu0 0.0
  %452 = vmatprep.subr.mxu0 0.0
  %453 = vmatpush1.msra.mxu0 0.0
  %454 = vmatprep.subr.mxu0 0.0
  %455 = vmatpush1.msra.mxu0 0.0
  %456 = vmatprep.subr.mxu0 0.0
  %457 = vmatpush1.msra.mxu0 0.0
  %458 = vmatprep.subr.mxu0 0.0
  %459 = vmatpush1.msra.mxu0 0.0
  %460 = vmatprep.subr.mxu0 0.0
  %461 = vmatpush1.msra.mxu0 0.0
  %462 = vmatprep.subr.mxu0 0.0
  %463 = vmatpush1.msra.mxu0 0.0
  %464 = vmatprep.subr.mxu0 0.0
  %465 = vmatpush1.msra.mxu0 0.0
  %466 = vmatprep.subr.mxu0 0.0
  %467 = vmatpush1.msra.mxu0 0.0
  %468 = vmatprep.subr.mxu0 0.0
  %469 = vmatpush1.msra.mxu0 0.0
  %470 = vmatprep.subr.mxu0 0.0
  %471 = vmatpush1.msra.mxu0 0.0
  %472 = vmatprep.subr.mxu0 0.0
  %473 = vmatpush1.msra.mxu0 0.0
  %474 = vmatprep.subr.mxu0 0.0
  %475 = vmatpush1.msra.mxu0 0.0
  %476 = vmatprep.subr.mxu0 0.0
  %477 = vmatpush1.msra.mxu0 0.0
  %478 = vmatprep.subr.mxu0 0.0
  %479 = vmatpush1.msra.mxu0 0.0
  %480 = vmatprep.subr.mxu0 0.0
  %481 = vmatpush1.msra.mxu0 0.0
  %482 = vmatprep.subr.mxu0 0.0
  %483 = vmatpush1.msra.mxu0 0.0
  %484 = vmatprep.mubr.f32.mxu0 0.0
  %485 = vmatmul.mubr.f32.gmra.mrb[0].mxu0 %v403
  %v486 = vpop.f32.mrb[0].mxu0
  %v487 = vadd.f32 0.0, %v486
  %v488 = vpop.f32.mrb[0].mxu0
  %489 = vmatprep.mubr.f32.mxu0 0.0
  %490 = vmatmul.mubr.f32.gmra.mrb[0].mxu0 %v406
  %v491 = vpop.f32.mrb[0].mxu0
  %v492 = vadd.f32 0.0, %v491
  %v493 = vpop.f32.mrb[0].mxu0
  %494 = vmatprep.mubr.f32.mxu0 0.0
  %495 = vmatmul.mubr.f32.gmra.mrb[0].mxu0 %v409
  %v496 = vpop.f32.mrb[0].mxu0
  %v497 = vadd.f32 0.0, %v496
  %v498 = vpop.f32.mrb[0].mxu0
  %499 = vmatprep.mubr.f32.mxu0 0.0
  %500 = vmatmul.mubr.f32.gmra.mrb[0].mxu0 %v412
  %v501 = vpop.f32.mrb[0].mxu0
  %v502 = vadd.f32 0.0, %v501
  %v503 = vpop.f32.mrb[0].mxu0
  %504 = vmatprep.mubr.f32.mxu0 0.0
  %505 = vmatmul.mubr.f32.gmra.mrb[0].mxu0 %v415
  %v506 = vpop.f32.mrb[0].mxu0
  %v507 = vadd.f32 0.0, %v506
  %v508 = vpop.f32.mrb[0].mxu0
  %509 = vmatprep.mubr.f32.mxu0 0.0
  %510 = vmatmul.mubr.f32.gmra.mrb[0].mxu0 %v418
  %v511 = vpop.f32.mrb[0].mxu0
  %v512 = vadd.f32 0.0, %v511
  %v513 = vpop.f32.mrb[0].mxu0
  %514 = vdwg.mxu0
  %v515 = vld [vmem:[%s7] sm:$0xff]
  %v516 = vld [vmem:[%s7 + $0x8] sm:$0xff]
  %v517 = vld [vmem:[%s7 + $0x10] sm:$0xff]
  %518 = vmatprep.subr.mxu0 0.0
  %519 = vmatpush1.msra.mxu0 %v515
  %520 = vmatprep.subr.mxu0 0.0
  %521 = vmatpush1.msra.mxu0 %v516
  %522 = vmatprep.subr.mxu0 0.0
  %523 = vmatpush1.msra.mxu0 %v517
  %524 = vmatprep.subr.mxu0 0.0
  %525 = vmatpush1.msra.mxu0 0.0
  %526 = vmatprep.subr.mxu0 0.0
  %527 = vmatpush1.msra.mxu0 0.0
  %528 = vmatprep.subr.mxu0 0.0
  %529 = vmatpush1.msra.mxu0 0.0
  %530 = vmatprep.subr.mxu0 0.0
  %531 = vmatpush1.msra.mxu0 0.0
  %532 = vmatprep.subr.mxu0 0.0
  %533 = vmatpush1.msra.mxu0 0.0
  %534 = vmatprep.subr.mxu0 0.0
  %535 = vmatpush1.msra.mxu0 0.0
  %536 = vmatprep.subr.mxu0 0.0
  %537 = vmatpush1.msra.mxu0 0.0
  %538 = vmatprep.subr.mxu0 0.0
  %539 = vmatpush1.msra.mxu0 0.0
  %540 = vmatprep.subr.mxu0 0.0
  %541 = vmatpush1.msra.mxu0 0.0
  %542 = vmatprep.subr.mxu0 0.0
  %543 = vmatpush1.msra.mxu0 0.0
  %544 = vmatprep.subr.mxu0 0.0
  %545 = vmatpush1.msra.mxu0 0.0
  %546 = vmatprep.subr.mxu0 0.0
  %547 = vmatpush1.msra.mxu0 0.0
  %548 = vmatprep.subr.mxu0 0.0
  %549 = vmatpush1.msra.mxu0 0.0
  %550 = vmatprep.subr.mxu0 0.0
  %551 = vmatpush1.msra.mxu0 0.0
  %552 = vmatprep.subr.mxu0 0.0
  %553 = vmatpush1.msra.mxu0 0.0
  %554 = vmatprep.subr.mxu0 0.0
  %555 = vmatpush1.msra.mxu0 0.0
  %556 = vmatprep.subr.mxu0 0.0
  %557 = vmatpush1.msra.mxu0 0.0
  %558 = vmatprep.subr.mxu0 0.0
  %559 = vmatpush1.msra.mxu0 0.0
  %560 = vmatprep.subr.mxu0 0.0
  %561 = vmatpush1.msra.mxu0 0.0
  %562 = vmatprep.subr.mxu0 0.0
  %563 = vmatpush1.msra.mxu0 0.0
  %564 = vmatprep.subr.mxu0 0.0
  %565 = vmatpush1.msra.mxu0 0.0
  %566 = vmatprep.subr.mxu0 0.0
  %567 = vmatpush1.msra.mxu0 0.0
  %568 = vmatprep.subr.mxu0 0.0
  %569 = vmatpush1.msra.mxu0 0.0
  %570 = vmatprep.subr.mxu0 0.0
  %571 = vmatpush1.msra.mxu0 0.0
  %572 = vmatprep.subr.mxu0 0.0
  %573 = vmatpush1.msra.mxu0 0.0
  %574 = vmatprep.subr.mxu0 0.0
  %575 = vmatpush1.msra.mxu0 0.0
  %576 = vmatprep.subr.mxu0 0.0
  %577 = vmatpush1.msra.mxu0 0.0
  %578 = vmatprep.subr.mxu0 0.0
  %579 = vmatpush1.msra.mxu0 0.0
  %580 = vmatprep.subr.mxu0 0.0
  %581 = vmatpush1.msra.mxu0 0.0
  %582 = vmatprep.mubr.f32.mxu0 0.0
  %583 = vmatmul.mubr.f32.gmra.mrb[0].mxu0 %v403
  %v584 = vpop.f32.mrb[0].mxu0
  %v585 = vadd.f32 0.0, %v584
  %v586 = vpop.f32.mrb[0].mxu0
  %587 = vmatprep.mubr.f32.mxu0 0.0
  %588 = vmatmul.mubr.f32.gmra.mrb[0].mxu0 %v406
  %v589 = vpop.f32.mrb[0].mxu0
  %v590 = vadd.f32 0.0, %v589
  %v591 = vpop.f32.mrb[0].mxu0
  %592 = vmatprep.mubr.f32.mxu0 0.0
  %593 = vmatmul.mubr.f32.gmra.mrb[0].mxu0 %v409
  %v594 = vpop.f32.mrb[0].mxu0
  %v595 = vadd.f32 0.0, %v594
  %v596 = vpop.f32.mrb[0].mxu0
  %597 = vmatprep.mubr.f32.mxu0 0.0
  %598 = vmatmul.mubr.f32.gmra.mrb[0].mxu0 %v412
  %v599 = vpop.f32.mrb[0].mxu0
  %v600 = vadd.f32 0.0, %v599
  %v601 = vpop.f32.mrb[0].mxu0
  %602 = vmatprep.mubr.f32.mxu0 0.0
  %603 = vmatmul.mubr.f32.gmra.mrb[0].mxu0 %v415
  %v604 = vpop.f32.mrb[0].mxu0
  %v605 = vadd.f32 0.0, %v604
  %v606 = vpop.f32.mrb[0].mxu0
  %607 = vmatprep.mubr.f32.mxu0 0.0
  %608 = vmatmul.mubr.f32.gmra.mrb[0].mxu0 %v418
  %v609 = vpop.f32.mrb[0].mxu0
  %v610 = vadd.f32 0.0, %v609
  %v611 = vpop.f32.mrb[0].mxu0
  %612 = vdwg.mxu0
  %v613 = vld [vmem:[%s8] sm:$0x3]
  %v614 = vld [vmem:[%s9] sm:$0x3]
  %v621 = vcombine.high %v487, %v487
  %v623 = vunpack.c.l.s4 1983009808
  %v624 = vunpack.c.0.s8 %v623
  %v625 = vlaneseq
  %v626 = vshrl.u32 %v625, 7
  %v627 = vsub.s32 %v624, %v626
  %v628 = vrot.slane %v487, %v627
  %v630 = vunpack.c.l.s4 1983009808
  %v631 = vunpack.c.0.s8 %v630
  %v632 = vlaneseq
  %v633 = vshrl.u32 %v632, 7
  %v634 = vsub.s32 %v631, %v633
  %v635 = vrot.slane %v621, %v634
  %v636 = vcombine.high %v628, %v628
  %v637 = vcombine.high %v635, %v635
  %v638 = vcombine.high %v492, %v492
  %v640 = vunpack.c.l.s4 1983009808
  %v641 = vunpack.c.0.s8 %v640
  %v642 = vlaneseq
  %v643 = vshrl.u32 %v642, 7
  %v644 = vsub.s32 %v641, %v643
  %v645 = vrot.slane %v492, %v644
  %v647 = vunpack.c.l.s4 1983009808
  %v648 = vunpack.c.0.s8 %v647
  %v649 = vlaneseq
  %v650 = vshrl.u32 %v649, 7
  %v651 = vsub.s32 %v648, %v650
  %v652 = vrot.slane %v638, %v651
  %v653 = vcombine.high %v645, %v645
  %v654 = vcombine.high %v652, %v652
  %v655 = vcombine.high %v497, %v497
  %v657 = vunpack.c.l.s4 1983009808
  %v658 = vunpack.c.0.s8 %v657
  %v659 = vlaneseq
  %v660 = vshrl.u32 %v659, 7
  %v661 = vsub.s32 %v658, %v660
  %v662 = vrot.slane %v497, %v661
  %v664 = vunpack.c.l.s4 1983009808
  %v665 = vunpack.c.0.s8 %v664
  %v666 = vlaneseq
  %v667 = vshrl.u32 %v666, 7
  %v668 = vsub.s32 %v665, %v667
  %v669 = vrot.slane %v655, %v668
  %v670 = vcombine.high %v662, %v662
  %v671 = vcombine.high %v669, %v669
  %v672 = vcombine.high %v502, %v502
  %v674 = vunpack.c.l.s4 1983009808
  %v675 = vunpack.c.0.s8 %v674
  %v676 = vlaneseq
  %v677 = vshrl.u32 %v676, 7
  %v678 = vsub.s32 %v675, %v677
  %v679 = vrot.slane %v502, %v678
  %v681 = vunpack.c.l.s4 1983009808
  %v682 = vunpack.c.0.s8 %v681
  %v683 = vlaneseq
  %v684 = vshrl.u32 %v683, 7
  %v685 = vsub.s32 %v682, %v684
  %v686 = vrot.slane %v672, %v685
  %v687 = vcombine.high %v679, %v679
  %v688 = vcombine.high %v686, %v686
  %v689 = vcombine.high %v507, %v507
  %v691 = vunpack.c.l.s4 1983009808
  %v692 = vunpack.c.0.s8 %v691
  %v693 = vlaneseq
  %v694 = vshrl.u32 %v693, 7
  %v695 = vsub.s32 %v692, %v694
  %v696 = vrot.slane %v507, %v695
  %v698 = vunpack.c.l.s4 1983009808
  %v699 = vunpack.c.0.s8 %v698
  %v700 = vlaneseq
  %v701 = vshrl.u32 %v700, 7
  %v702 = vsub.s32 %v699, %v701
  %v703 = vrot.slane %v689, %v702
  %v704 = vcombine.high %v696, %v696
  %v705 = vcombine.high %v703, %v703
  %v706 = vcombine.high %v512, %v512
  %v708 = vunpack.c.l.s4 1983009808
  %v709 = vunpack.c.0.s8 %v708
  %v710 = vlaneseq
  %v711 = vshrl.u32 %v710, 7
  %v712 = vsub.s32 %v709, %v711
  %v713 = vrot.slane %v512, %v712
  %v715 = vunpack.c.l.s4 1983009808
  %v716 = vunpack.c.0.s8 %v715
  %v717 = vlaneseq
  %v718 = vshrl.u32 %v717, 7
  %v719 = vsub.s32 %v716, %v718
  %v720 = vrot.slane %v706, %v719
  %v721 = vcombine.high %v713, %v713
  %v722 = vcombine.high %v720, %v720
  %v723 = vcombine.low %v628, %v628
  %v724 = vcombine.low %v636, %v635
  %v726 = vunpack.c.l.s4 1983009808
  %v727 = vunpack.c.0.s8 %v726
  %v728 = vlaneseq
  %v729 = vshrl.u32 %v728, 7
  %v730 = vsub.s32 %v727, %v729
  %v731 = vrot.slane %v723, %v730
  %v733 = vunpack.c.l.s4 1983009808
  %v734 = vunpack.c.0.s8 %v733
  %v735 = vlaneseq
  %v736 = vshrl.u32 %v735, 7
  %v737 = vsub.s32 %v734, %v736
  %v738 = vrot.slane %v724, %v737
  %v739 = vcombine.low %v731, %v738
  %v740 = vcombine.low %v637, %v637
  %v741 = vcombine.low %v645, %v653
  %v743 = vunpack.c.l.s4 1983009808
  %v744 = vunpack.c.0.s8 %v743
  %v745 = vlaneseq
  %v746 = vshrl.u32 %v745, 7
  %v747 = vsub.s32 %v744, %v746
  %v748 = vrot.slane %v740, %v747
  %v750 = vunpack.c.l.s4 1983009808
  %v751 = vunpack.c.0.s8 %v750
  %v752 = vlaneseq
  %v753 = vshrl.u32 %v752, 7
  %v754 = vsub.s32 %v751, %v753
  %v755 = vrot.slane %v741, %v754
  %v756 = vcombine.low %v748, %v755
  %v757 = vcombine.low %v652, %v652
  %v758 = vcombine.low %v654, %v662
  %v760 = vunpack.c.l.s4 1983009808
  %v761 = vunpack.c.0.s8 %v760
  %v762 = vlaneseq
  %v763 = vshrl.u32 %v762, 7
  %v764 = vsub.s32 %v761, %v763
  %v765 = vrot.slane %v757, %v764
  %v767 = vunpack.c.l.s4 1983009808
  %v768 = vunpack.c.0.s8 %v767
  %v769 = vlaneseq
  %v770 = vshrl.u32 %v769, 7
  %v771 = vsub.s32 %v768, %v770
  %v772 = vrot.slane %v758, %v771
  %v773 = vcombine.low %v765, %v772
  %v774 = vcombine.low %v670, %v670
  %v775 = vcombine.low %v669, %v671
  %v777 = vunpack.c.l.s4 1983009808
  %v778 = vunpack.c.0.s8 %v777
  %v779 = vlaneseq
  %v780 = vshrl.u32 %v779, 7
  %v781 = vsub.s32 %v778, %v780
  %v782 = vrot.slane %v774, %v781
  %v784 = vunpack.c.l.s4 1983009808
  %v785 = vunpack.c.0.s8 %v784
  %v786 = vlaneseq
  %v787 = vshrl.u32 %v786, 7
  %v788 = vsub.s32 %v785, %v787
  %v789 = vrot.slane %v775, %v788
  %v790 = vcombine.low %v782, %v789
  %v791 = vcombine.low %v679, %v679
  %v792 = vcombine.low %v687, %v686
  %v794 = vunpack.c.l.s4 1983009808
  %v795 = vunpack.c.0.s8 %v794
  %v796 = vlaneseq
  %v797 = vshrl.u32 %v796, 7
  %v798 = vsub.s32 %v795, %v797
  %v799 = vrot.slane %v791, %v798
  %v801 = vunpack.c.l.s4 1983009808
  %v802 = vunpack.c.0.s8 %v801
  %v803 = vlaneseq
  %v804 = vshrl.u32 %v803, 7
  %v805 = vsub.s32 %v802, %v804
  %v806 = vrot.slane %v792, %v805
  %v807 = vcombine.low %v799, %v806
  %v808 = vcombine.low %v688, %v688
  %v809 = vcombine.low %v696, %v704
  %v811 = vunpack.c.l.s4 1983009808
  %v812 = vunpack.c.0.s8 %v811
  %v813 = vlaneseq
  %v814 = vshrl.u32 %v813, 7
  %v815 = vsub.s32 %v812, %v814
  %v816 = vrot.slane %v808, %v815
  %v818 = vunpack.c.l.s4 1983009808
  %v819 = vunpack.c.0.s8 %v818
  %v820 = vlaneseq
  %v821 = vshrl.u32 %v820, 7
  %v822 = vsub.s32 %v819, %v821
  %v823 = vrot.slane %v809, %v822
  %v824 = vcombine.low %v816, %v823
  %v825 = vcombine.low %v703, %v703
  %v826 = vcombine.low %v705, %v713
  %v828 = vunpack.c.l.s4 1983009808
  %v829 = vunpack.c.0.s8 %v828
  %v830 = vlaneseq
  %v831 = vshrl.u32 %v830, 7
  %v832 = vsub.s32 %v829, %v831
  %v833 = vrot.slane %v825, %v832
  %v835 = vunpack.c.l.s4 1983009808
  %v836 = vunpack.c.0.s8 %v835
  %v837 = vlaneseq
  %v838 = vshrl.u32 %v837, 7
  %v839 = vsub.s32 %v836, %v838
  %v840 = vrot.slane %v826, %v839
  %v841 = vcombine.low %v833, %v840
  %v842 = vcombine.low %v721, %v721
  %v843 = vcombine.low %v720, %v722
  %v845 = vunpack.c.l.s4 1983009808
  %v846 = vunpack.c.0.s8 %v845
  %v847 = vlaneseq
  %v848 = vshrl.u32 %v847, 7
  %v849 = vsub.s32 %v846, %v848
  %v850 = vrot.slane %v842, %v849
  %v852 = vunpack.c.l.s4 1983009808
  %v853 = vunpack.c.0.s8 %v852
  %v854 = vlaneseq
  %v855 = vshrl.u32 %v854, 7
  %v856 = vsub.s32 %v853, %v855
  %v857 = vrot.slane %v843, %v856
  %v858 = vcombine.low %v850, %v857
  %vm867 = vcmask 1041408
  %v868 = vsel %vm867, %v613, %v739
  %v869 = vsel %vm867, %v613, %v756
  %v870 = vsel %vm867, %v613, %v773
  %v871 = vsel %vm867, %v613, %v790
  %v872 = vsel %vm867, %v613, %v807
  %v873 = vsel %vm867, %v613, %v824
  %v874 = vsel %vm867, %v613, %v841
  %v875 = vsel %vm867, %v613, %v858
  %v882 = vcombine.high %v585, %v585
  %v884 = vunpack.c.l.s4 1983009808
  %v885 = vunpack.c.0.s8 %v884
  %v886 = vlaneseq
  %v887 = vshrl.u32 %v886, 7
  %v888 = vsub.s32 %v885, %v887
  %v889 = vrot.slane %v585, %v888
  %v891 = vunpack.c.l.s4 1983009808
  %v892 = vunpack.c.0.s8 %v891
  %v893 = vlaneseq
  %v894 = vshrl.u32 %v893, 7
  %v895 = vsub.s32 %v892, %v894
  %v896 = vrot.slane %v882, %v895
  %v897 = vcombine.high %v889, %v889
  %v898 = vcombine.high %v896, %v896
  %v899 = vcombine.high %v590, %v590
  %v901 = vunpack.c.l.s4 1983009808
  %v902 = vunpack.c.0.s8 %v901
  %v903 = vlaneseq
  %v904 = vshrl.u32 %v903, 7
  %v905 = vsub.s32 %v902, %v904
  %v906 = vrot.slane %v590, %v905
  %v908 = vunpack.c.l.s4 1983009808
  %v909 = vunpack.c.0.s8 %v908
  %v910 = vlaneseq
  %v911 = vshrl.u32 %v910, 7
  %v912 = vsub.s32 %v909, %v911
  %v913 = vrot.slane %v899, %v912
  %v914 = vcombine.high %v906, %v906
  %v915 = vcombine.high %v913, %v913
  %v916 = vcombine.high %v595, %v595
  %v918 = vunpack.c.l.s4 1983009808
  %v919 = vunpack.c.0.s8 %v918
  %v920 = vlaneseq
  %v921 = vshrl.u32 %v920, 7
  %v922 = vsub.s32 %v919, %v921
  %v923 = vrot.slane %v595, %v922
  %v925 = vunpack.c.l.s4 1983009808
  %v926 = vunpack.c.0.s8 %v925
  %v927 = vlaneseq
  %v928 = vshrl.u32 %v927, 7
  %v929 = vsub.s32 %v926, %v928
  %v930 = vrot.slane %v916, %v929
  %v931 = vcombine.high %v923, %v923
  %v932 = vcombine.high %v930, %v930
  %v933 = vcombine.high %v600, %v600
  %v935 = vunpack.c.l.s4 1983009808
  %v936 = vunpack.c.0.s8 %v935
  %v937 = vlaneseq
  %v938 = vshrl.u32 %v937, 7
  %v939 = vsub.s32 %v936, %v938
  %v940 = vrot.slane %v600, %v939
  %v942 = vunpack.c.l.s4 1983009808
  %v943 = vunpack.c.0.s8 %v942
  %v944 = vlaneseq
  %v945 = vshrl.u32 %v944, 7
  %v946 = vsub.s32 %v943, %v945
  %v947 = vrot.slane %v933, %v946
  %v948 = vcombine.high %v940, %v940
  %v949 = vcombine.high %v947, %v947
  %v950 = vcombine.high %v605, %v605
  %v952 = vunpack.c.l.s4 1983009808
  %v953 = vunpack.c.0.s8 %v952
  %v954 = vlaneseq
  %v955 = vshrl.u32 %v954, 7
  %v956 = vsub.s32 %v953, %v955
  %v957 = vrot.slane %v605, %v956
  %v959 = vunpack.c.l.s4 1983009808
  %v960 = vunpack.c.0.s8 %v959
  %v961 = vlaneseq
  %v962 = vshrl.u32 %v961, 7
  %v963 = vsub.s32 %v960, %v962
  %v964 = vrot.slane %v950, %v963
  %v965 = vcombine.high %v957, %v957
  %v966 = vcombine.high %v964, %v964
  %v967 = vcombine.high %v610, %v610
  %v969 = vunpack.c.l.s4 1983009808
  %v970 = vunpack.c.0.s8 %v969
  %v971 = vlaneseq
  %v972 = vshrl.u32 %v971, 7
  %v973 = vsub.s32 %v970, %v972
  %v974 = vrot.slane %v610, %v973
  %v976 = vunpack.c.l.s4 1983009808
  %v977 = vunpack.c.0.s8 %v976
  %v978 = vlaneseq
  %v979 = vshrl.u32 %v978, 7
  %v980 = vsub.s32 %v977, %v979
  %v981 = vrot.slane %v967, %v980
  %v982 = vcombine.high %v974, %v974
  %v983 = vcombine.high %v981, %v981
  %v984 = vcombine.low %v889, %v889
  %v985 = vcombine.low %v897, %v896
  %v987 = vunpack.c.l.s4 1983009808
  %v988 = vunpack.c.0.s8 %v987
  %v989 = vlaneseq
  %v990 = vshrl.u32 %v989, 7
  %v991 = vsub.s32 %v988, %v990
  %v992 = vrot.slane %v984, %v991
  %v994 = vunpack.c.l.s4 1983009808
  %v995 = vunpack.c.0.s8 %v994
  %v996 = vlaneseq
  %v997 = vshrl.u32 %v996, 7
  %v998 = vsub.s32 %v995, %v997
  %v999 = vrot.slane %v985, %v998
  %v1000 = vcombine.low %v992, %v999
  %v1001 = vcombine.low %v898, %v898
  %v1002 = vcombine.low %v906, %v914
  %v1004 = vunpack.c.l.s4 1983009808
  %v1005 = vunpack.c.0.s8 %v1004
  %v1006 = vlaneseq
  %v1007 = vshrl.u32 %v1006, 7
  %v1008 = vsub.s32 %v1005, %v1007
  %v1009 = vrot.slane %v1001, %v1008
  %v1011 = vunpack.c.l.s4 1983009808
  %v1012 = vunpack.c.0.s8 %v1011
  %v1013 = vlaneseq
  %v1014 = vshrl.u32 %v1013, 7
  %v1015 = vsub.s32 %v1012, %v1014
  %v1016 = vrot.slane %v1002, %v1015
  %v1017 = vcombine.low %v1009, %v1016
  %v1018 = vcombine.low %v913, %v913
  %v1019 = vcombine.low %v915, %v923
  %v1021 = vunpack.c.l.s4 1983009808
  %v1022 = vunpack.c.0.s8 %v1021
  %v1023 = vlaneseq
  %v1024 = vshrl.u32 %v1023, 7
  %v1025 = vsub.s32 %v1022, %v1024
  %v1026 = vrot.slane %v1018, %v1025
  %v1028 = vunpack.c.l.s4 1983009808
  %v1029 = vunpack.c.0.s8 %v1028
  %v1030 = vlaneseq
  %v1031 = vshrl.u32 %v1030, 7
  %v1032 = vsub.s32 %v1029, %v1031
  %v1033 = vrot.slane %v1019, %v1032
  %v1034 = vcombine.low %v1026, %v1033
  %v1035 = vcombine.low %v931, %v931
  %v1036 = vcombine.low %v930, %v932
  %v1038 = vunpack.c.l.s4 1983009808
  %v1039 = vunpack.c.0.s8 %v1038
  %v1040 = vlaneseq
  %v1041 = vshrl.u32 %v1040, 7
  %v1042 = vsub.s32 %v1039, %v1041
  %v1043 = vrot.slane %v1035, %v1042
  %v1045 = vunpack.c.l.s4 1983009808
  %v1046 = vunpack.c.0.s8 %v1045
  %v1047 = vlaneseq
  %v1048 = vshrl.u32 %v1047, 7
  %v1049 = vsub.s32 %v1046, %v1048
  %v1050 = vrot.slane %v1036, %v1049
  %v1051 = vcombine.low %v1043, %v1050
  %v1052 = vcombine.low %v940, %v940
  %v1053 = vcombine.low %v948, %v947
  %v1055 = vunpack.c.l.s4 1983009808
  %v1056 = vunpack.c.0.s8 %v1055
  %v1057 = vlaneseq
  %v1058 = vshrl.u32 %v1057, 7
  %v1059 = vsub.s32 %v1056, %v1058
  %v1060 = vrot.slane %v1052, %v1059
  %v1062 = vunpack.c.l.s4 1983009808
  %v1063 = vunpack.c.0.s8 %v1062
  %v1064 = vlaneseq
  %v1065 = vshrl.u32 %v1064, 7
  %v1066 = vsub.s32 %v1063, %v1065
  %v1067 = vrot.slane %v1053, %v1066
  %v1068 = vcombine.low %v1060, %v1067
  %v1069 = vcombine.low %v949, %v949
  %v1070 = vcombine.low %v957, %v965
  %v1072 = vunpack.c.l.s4 1983009808
  %v1073 = vunpack.c.0.s8 %v1072
  %v1074 = vlaneseq
  %v1075 = vshrl.u32 %v1074, 7
  %v1076 = vsub.s32 %v1073, %v1075
  %v1077 = vrot.slane %v1069, %v1076
  %v1079 = vunpack.c.l.s4 1983009808
  %v1080 = vunpack.c.0.s8 %v1079
  %v1081 = vlaneseq
  %v1082 = vshrl.u32 %v1081, 7
  %v1083 = vsub.s32 %v1080, %v1082
  %v1084 = vrot.slane %v1070, %v1083
  %v1085 = vcombine.low %v1077, %v1084
  %v1086 = vcombine.low %v964, %v964
  %v1087 = vcombine.low %v966, %v974
  %v1089 = vunpack.c.l.s4 1983009808
  %v1090 = vunpack.c.0.s8 %v1089
  %v1091 = vlaneseq
  %v1092 = vshrl.u32 %v1091, 7
  %v1093 = vsub.s32 %v1090, %v1092
  %v1094 = vrot.slane %v1086, %v1093
  %v1096 = vunpack.c.l.s4 1983009808
  %v1097 = vunpack.c.0.s8 %v1096
  %v1098 = vlaneseq
  %v1099 = vshrl.u32 %v1098, 7
  %v1100 = vsub.s32 %v1097, %v1099
  %v1101 = vrot.slane %v1087, %v1100
  %v1102 = vcombine.low %v1094, %v1101
  %v1103 = vcombine.low %v982, %v982
  %v1104 = vcombine.low %v981, %v983
  %v1106 = vunpack.c.l.s4 1983009808
  %v1107 = vunpack.c.0.s8 %v1106
  %v1108 = vlaneseq
  %v1109 = vshrl.u32 %v1108, 7
  %v1110 = vsub.s32 %v1107, %v1109
  %v1111 = vrot.slane %v1103, %v1110
  %v1113 = vunpack.c.l.s4 1983009808
  %v1114 = vunpack.c.0.s8 %v1113
  %v1115 = vlaneseq
  %v1116 = vshrl.u32 %v1115, 7
  %v1117 = vsub.s32 %v1114, %v1116
  %v1118 = vrot.slane %v1104, %v1117
  %v1119 = vcombine.low %v1111, %v1118
  %v1128 = vsel %vm867, %v614, %v1000
  %v1129 = vsel %vm867, %v614, %v1017
  %v1130 = vsel %vm867, %v614, %v1034
  %v1131 = vsel %vm867, %v614, %v1051
  %v1132 = vsel %vm867, %v614, %v1068
  %v1133 = vsel %vm867, %v614, %v1085
  %v1134 = vsel %vm867, %v614, %v1102
  %v1135 = vsel %vm867, %v614, %v1119
  %v1136 = vld [vmem:[%s2] sm:$0x1]
  %v1137 = vld [vmem:[%s2 + $0x1] sm:$0x1]
  %v1138 = vld [vmem:[%s2 + $0x2] sm:$0x1]
  %v1139 = vld [vmem:[%s2 + $0x3] sm:$0x1]
  %v1140 = vld [vmem:[%s2 + $0x4] sm:$0x1]
  %v1141 = vld [vmem:[%s2 + $0x5] sm:$0x1]
  %v1142 = vld [vmem:[%s2 + $0x6] sm:$0x1]
  %v1143 = vld [vmem:[%s2 + $0x7] sm:$0x1]
  %v1144 = vld [vmem:[%s10] sm:$0xff]
  %v1145 = vld [vmem:[%s10 + $0x8] sm:$0xff]
  %v1146 = vld [vmem:[%s10 + $0x10] sm:$0xff]
  %v1147 = vld [vmem:[%s10 + $0x18] sm:$0xff]
  %v1148 = vld [vmem:[%s10 + $0x20] sm:$0xff]
  %v1149 = vld [vmem:[%s10 + $0x28] sm:$0xff]
  %v1150 = vld [vmem:[%s10 + $0x30] sm:$0xff]
  %v1151 = vld [vmem:[%s10 + $0x38] sm:$0xff]
  %v1160 = vlaneseq
  %v1161 = vshrl.u32 %v1160, 7
  %v1162 = vsub.s32 0, %v1161
  %v1163 = vrot.slane %v1136, %v1162
  %v1164 = vlaneseq
  %v1165 = vshrl.u32 %v1164, 7
  %v1166 = vsub.s32 0, %v1165
  %v1167 = vrot.slane %v1137, %v1166
  %v1168 = vlaneseq
  %v1169 = vshrl.u32 %v1168, 7
  %v1170 = vsub.s32 0, %v1169
  %v1171 = vrot.slane %v1138, %v1170
  %v1172 = vlaneseq
  %v1173 = vshrl.u32 %v1172, 7
  %v1174 = vsub.s32 0, %v1173
  %v1175 = vrot.slane %v1139, %v1174
  %v1176 = vlaneseq
  %v1177 = vshrl.u32 %v1176, 7
  %v1178 = vsub.s32 0, %v1177
  %v1179 = vrot.slane %v1140, %v1178
  %v1180 = vlaneseq
  %v1181 = vshrl.u32 %v1180, 7
  %v1182 = vsub.s32 0, %v1181
  %v1183 = vrot.slane %v1141, %v1182
  %v1184 = vlaneseq
  %v1185 = vshrl.u32 %v1184, 7
  %v1186 = vsub.s32 0, %v1185
  %v1187 = vrot.slane %v1142, %v1186
  %v1188 = vlaneseq
  %v1189 = vshrl.u32 %v1188, 7
  %v1190 = vsub.s32 0, %v1189
  %v1191 = vrot.slane %v1143, %v1190
  %vm1200 = vcmask 130048
  %v1202 = vsel %vm1200, %v361, 0
  %v1205 = vsel %vm1200, %v868, 0
  %1207 = vmatprep.subr.mxu0 0.0
  %1208 = vmatpush1.xpose.msra.mxu0 %v1205
  %1209 = vmatprep.subr.mxu0 0.0
  %1210 = vmatpush1.xpose.msra.mxu0 0.0
  %1211 = vmatprep.subr.mxu0 0.0
  %1212 = vmatpush1.xpose.msra.mxu0 0.0
  %1213 = vmatprep.subr.mxu0 0.0
  %1214 = vmatpush1.xpose.msra.mxu0 0.0
  %1215 = vmatprep.subr.mxu0 0.0
  %1216 = vmatpush1.xpose.msra.mxu0 0.0
  %1217 = vmatprep.subr.mxu0 0.0
  %1218 = vmatpush1.xpose.msra.mxu0 0.0
  %1219 = vmatprep.subr.mxu0 0.0
  %1220 = vmatpush1.xpose.msra.mxu0 0.0
  %1221 = vmatprep.subr.mxu0 0.0
  %1222 = vmatpush1.xpose.msra.mxu0 0.0
  %1223 = vmatprep.subr.mxu0 0.0
  %1224 = vmatpush1.xpose.msra.mxu0 0.0
  %1225 = vmatprep.subr.mxu0 0.0
  %1226 = vmatpush1.xpose.msra.mxu0 0.0
  %1227 = vmatprep.subr.mxu0 0.0
  %1228 = vmatpush1.xpose.msra.mxu0 0.0
  %1229 = vmatprep.subr.mxu0 0.0
  %1230 = vmatpush1.xpose.msra.mxu0 0.0
  %1231 = vmatprep.subr.mxu0 0.0
  %1232 = vmatpush1.xpose.msra.mxu0 0.0
  %1233 = vmatprep.subr.mxu0 0.0
  %1234 = vmatpush1.xpose.msra.mxu0 0.0
  %1235 = vmatprep.subr.mxu0 0.0
  %1236 = vmatpush1.xpose.msra.mxu0 0.0
  %1237 = vmatprep.subr.mxu0 0.0
  %1238 = vmatpush1.xpose.msra.mxu0 0.0
  %1239 = vmatprep.subr.mxu0 0.0
  %1240 = vmatpush1.xpose.msra.mxu0 0.0
  %1241 = vmatprep.subr.mxu0 0.0
  %1242 = vmatpush1.xpose.msra.mxu0 0.0
  %1243 = vmatprep.subr.mxu0 0.0
  %1244 = vmatpush1.xpose.msra.mxu0 0.0
  %1245 = vmatprep.subr.mxu0 0.0
  %1246 = vmatpush1.xpose.msra.mxu0 0.0
  %1247 = vmatprep.subr.mxu0 0.0
  %1248 = vmatpush1.xpose.msra.mxu0 0.0
  %1249 = vmatprep.subr.mxu0 0.0
  %1250 = vmatpush1.xpose.msra.mxu0 0.0
  %1251 = vmatprep.subr.mxu0 0.0
  %1252 = vmatpush1.xpose.msra.mxu0 0.0
  %1253 = vmatprep.subr.mxu0 0.0
  %1254 = vmatpush1.xpose.msra.mxu0 0.0
  %1255 = vmatprep.subr.mxu0 0.0
  %1256 = vmatpush1.xpose.msra.mxu0 0.0
  %1257 = vmatprep.subr.mxu0 0.0
  %1258 = vmatpush1.xpose.msra.mxu0 0.0
  %1259 = vmatprep.subr.mxu0 0.0
  %1260 = vmatpush1.xpose.msra.mxu0 0.0
  %1261 = vmatprep.subr.mxu0 0.0
  %1262 = vmatpush1.xpose.msra.mxu0 0.0
  %1263 = vmatprep.subr.mxu0 0.0
  %1264 = vmatpush1.xpose.msra.mxu0 0.0
  %1265 = vmatprep.subr.mxu0 0.0
  %1266 = vmatpush1.xpose.msra.mxu0 0.0
  %1267 = vmatprep.subr.mxu0 0.0
  %1268 = vmatpush1.xpose.msra.mxu0 0.0
  %1269 = vmatprep.subr.mxu0 0.0
  %1270 = vmatpush1.xpose.msra.mxu0 0.0
  %1271 = vmatprep.mubr.f32.mxu0 0.0
  %1272 = vmatmul.mubr.f32.gmra.mrb[0].mxu0 %v1202
  %v1273 = vpop.f32.mrb[0].mxu0
  %v1274 = vadd.f32 %v1163, %v1273
  %v1275 = vpop.f32.mrb[0].mxu0
  %1276 = vdwg.mxu0
  %v1278 = vsel %vm1200, %v366, 0
  %v1281 = vsel %vm1200, %v869, 0
  %1283 = vmatprep.subr.mxu0 0.0
  %1284 = vmatpush1.xpose.msra.mxu0 %v1281
  %1285 = vmatprep.subr.mxu0 0.0
  %1286 = vmatpush1.xpose.msra.mxu0 0.0
  %1287 = vmatprep.subr.mxu0 0.0
  %1288 = vmatpush1.xpose.msra.mxu0 0.0
  %1289 = vmatprep.subr.mxu0 0.0
  %1290 = vmatpush1.xpose.msra.mxu0 0.0
  %1291 = vmatprep.subr.mxu0 0.0
  %1292 = vmatpush1.xpose.msra.mxu0 0.0
  %1293 = vmatprep.subr.mxu0 0.0
  %1294 = vmatpush1.xpose.msra.mxu0 0.0
  %1295 = vmatprep.subr.mxu0 0.0
  %1296 = vmatpush1.xpose.msra.mxu0 0.0
  %1297 = vmatprep.subr.mxu0 0.0
  %1298 = vmatpush1.xpose.msra.mxu0 0.0
  %1299 = vmatprep.subr.mxu0 0.0
  %1300 = vmatpush1.xpose.msra.mxu0 0.0
  %1301 = vmatprep.subr.mxu0 0.0
  %1302 = vmatpush1.xpose.msra.mxu0 0.0
  %1303 = vmatprep.subr.mxu0 0.0
  %1304 = vmatpush1.xpose.msra.mxu0 0.0
  %1305 = vmatprep.subr.mxu0 0.0
  %1306 = vmatpush1.xpose.msra.mxu0 0.0
  %1307 = vmatprep.subr.mxu0 0.0
  %1308 = vmatpush1.xpose.msra.mxu0 0.0
  %1309 = vmatprep.subr.mxu0 0.0
  %1310 = vmatpush1.xpose.msra.mxu0 0.0
  %1311 = vmatprep.subr.mxu0 0.0
  %1312 = vmatpush1.xpose.msra.mxu0 0.0
  %1313 = vmatprep.subr.mxu0 0.0
  %1314 = vmatpush1.xpose.msra.mxu0 0.0
  %1315 = vmatprep.subr.mxu0 0.0
  %1316 = vmatpush1.xpose.msra.mxu0 0.0
  %1317 = vmatprep.subr.mxu0 0.0
  %1318 = vmatpush1.xpose.msra.mxu0 0.0
  %1319 = vmatprep.subr.mxu0 0.0
  %1320 = vmatpush1.xpose.msra.mxu0 0.0
  %1321 = vmatprep.subr.mxu0 0.0
  %1322 = vmatpush1.xpose.msra.mxu0 0.0
  %1323 = vmatprep.subr.mxu0 0.0
  %1324 = vmatpush1.xpose.msra.mxu0 0.0
  %1325 = vmatprep.subr.mxu0 0.0
  %1326 = vmatpush1.xpose.msra.mxu0 0.0
  %1327 = vmatprep.subr.mxu0 0.0
  %1328 = vmatpush1.xpose.msra.mxu0 0.0
  %1329 = vmatprep.subr.mxu0 0.0
  %1330 = vmatpush1.xpose.msra.mxu0 0.0
  %1331 = vmatprep.subr.mxu0 0.0
  %1332 = vmatpush1.xpose.msra.mxu0 0.0
  %1333 = vmatprep.subr.mxu0 0.0
  %1334 = vmatpush1.xpose.msra.mxu0 0.0
  %1335 = vmatprep.subr.mxu0 0.0
  %1336 = vmatpush1.xpose.msra.mxu0 0.0
  %1337 = vmatprep.subr.mxu0 0.0
  %1338 = vmatpush1.xpose.msra.mxu0 0.0
  %1339 = vmatprep.subr.mxu0 0.0
  %1340 = vmatpush1.xpose.msra.mxu0 0.0
  %1341 = vmatprep.subr.mxu0 0.0
  %1342 = vmatpush1.xpose.msra.mxu0 0.0
  %1343 = vmatprep.subr.mxu0 0.0
  %1344 = vmatpush1.xpose.msra.mxu0 0.0
  %1345 = vmatprep.subr.mxu0 0.0
  %1346 = vmatpush1.xpose.msra.mxu0 0.0
  %1347 = vmatprep.mubr.f32.mxu0 0.0
  %1348 = vmatmul.mubr.f32.gmra.mrb[0].mxu0 %v1278
  %v1349 = vpop.f32.mrb[0].mxu0
  %v1350 = vadd.f32 %v1167, %v1349
  %v1351 = vpop.f32.mrb[0].mxu0
  %1352 = vdwg.mxu0
  %v1354 = vsel %vm1200, %v371, 0
  %v1357 = vsel %vm1200, %v870, 0
  %1359 = vmatprep.subr.mxu0 0.0
  %1360 = vmatpush1.xpose.msra.mxu0 %v1357
  %1361 = vmatprep.subr.mxu0 0.0
  %1362 = vmatpush1.xpose.msra.mxu0 0.0
  %1363 = vmatprep.subr.mxu0 0.0
  %1364 = vmatpush1.xpose.msra.mxu0 0.0
  %1365 = vmatprep.subr.mxu0 0.0
  %1366 = vmatpush1.xpose.msra.mxu0 0.0
  %1367 = vmatprep.subr.mxu0 0.0
  %1368 = vmatpush1.xpose.msra.mxu0 0.0
  %1369 = vmatprep.subr.mxu0 0.0
  %1370 = vmatpush1.xpose.msra.mxu0 0.0
  %1371 = vmatprep.subr.mxu0 0.0
  %1372 = vmatpush1.xpose.msra.mxu0 0.0
  %1373 = vmatprep.subr.mxu0 0.0
  %1374 = vmatpush1.xpose.msra.mxu0 0.0
  %1375 = vmatprep.subr.mxu0 0.0
  %1376 = vmatpush1.xpose.msra.mxu0 0.0
  %1377 = vmatprep.subr.mxu0 0.0
  %1378 = vmatpush1.xpose.msra.mxu0 0.0
  %1379 = vmatprep.subr.mxu0 0.0
  %1380 = vmatpush1.xpose.msra.mxu0 0.0
  %1381 = vmatprep.subr.mxu0 0.0
  %1382 = vmatpush1.xpose.msra.mxu0 0.0
  %1383 = vmatprep.subr.mxu0 0.0
  %1384 = vmatpush1.xpose.msra.mxu0 0.0
  %1385 = vmatprep.subr.mxu0 0.0
  %1386 = vmatpush1.xpose.msra.mxu0 0.0
  %1387 = vmatprep.subr.mxu0 0.0
  %1388 = vmatpush1.xpose.msra.mxu0 0.0
  %1389 = vmatprep.subr.mxu0 0.0
  %1390 = vmatpush1.xpose.msra.mxu0 0.0
  %1391 = vmatprep.subr.mxu0 0.0
  %1392 = vmatpush1.xpose.msra.mxu0 0.0
  %1393 = vmatprep.subr.mxu0 0.0
  %1394 = vmatpush1.xpose.msra.mxu0 0.0
  %1395 = vmatprep.subr.mxu0 0.0
  %1396 = vmatpush1.xpose.msra.mxu0 0.0
  %1397 = vmatprep.subr.mxu0 0.0
  %1398 = vmatpush1.xpose.msra.mxu0 0.0
  %1399 = vmatprep.subr.mxu0 0.0
  %1400 = vmatpush1.xpose.msra.mxu0 0.0
  %1401 = vmatprep.subr.mxu0 0.0
  %1402 = vmatpush1.xpose.msra.mxu0 0.0
  %1403 = vmatprep.subr.mxu0 0.0
  %1404 = vmatpush1.xpose.msra.mxu0 0.0
  %1405 = vmatprep.subr.mxu0 0.0
  %1406 = vmatpush1.xpose.msra.mxu0 0.0
  %1407 = vmatprep.subr.mxu0 0.0
  %1408 = vmatpush1.xpose.msra.mxu0 0.0
  %1409 = vmatprep.subr.mxu0 0.0
  %1410 = vmatpush1.xpose.msra.mxu0 0.0
  %1411 = vmatprep.subr.mxu0 0.0
  %1412 = vmatpush1.xpose.msra.mxu0 0.0
  %1413 = vmatprep.subr.mxu0 0.0
  %1414 = vmatpush1.xpose.msra.mxu0 0.0
  %1415 = vmatprep.subr.mxu0 0.0
  %1416 = vmatpush1.xpose.msra.mxu0 0.0
  %1417 = vmatprep.subr.mxu0 0.0
  %1418 = vmatpush1.xpose.msra.mxu0 0.0
  %1419 = vmatprep.subr.mxu0 0.0
  %1420 = vmatpush1.xpose.msra.mxu0 0.0
  %1421 = vmatprep.subr.mxu0 0.0
  %1422 = vmatpush1.xpose.msra.mxu0 0.0
  %1423 = vmatprep.mubr.f32.mxu0 0.0
  %1424 = vmatmul.mubr.f32.gmra.mrb[0].mxu0 %v1354
  %v1425 = vpop.f32.mrb[0].mxu0
  %v1426 = vadd.f32 %v1171, %v1425
  %v1427 = vpop.f32.mrb[0].mxu0
  %1428 = vdwg.mxu0
  %v1430 = vsel %vm1200, %v376, 0
  %v1433 = vsel %vm1200, %v871, 0
  %1435 = vmatprep.subr.mxu0 0.0
  %1436 = vmatpush1.xpose.msra.mxu0 %v1433
  %1437 = vmatprep.subr.mxu0 0.0
  %1438 = vmatpush1.xpose.msra.mxu0 0.0
  %1439 = vmatprep.subr.mxu0 0.0
  %1440 = vmatpush1.xpose.msra.mxu0 0.0
  %1441 = vmatprep.subr.mxu0 0.0
  %1442 = vmatpush1.xpose.msra.mxu0 0.0
  %1443 = vmatprep.subr.mxu0 0.0
  %1444 = vmatpush1.xpose.msra.mxu0 0.0
  %1445 = vmatprep.subr.mxu0 0.0
  %1446 = vmatpush1.xpose.msra.mxu0 0.0
  %1447 = vmatprep.subr.mxu0 0.0
  %1448 = vmatpush1.xpose.msra.mxu0 0.0
  %1449 = vmatprep.subr.mxu0 0.0
  %1450 = vmatpush1.xpose.msra.mxu0 0.0
  %1451 = vmatprep.subr.mxu0 0.0
  %1452 = vmatpush1.xpose.msra.mxu0 0.0
  %1453 = vmatprep.subr.mxu0 0.0
  %1454 = vmatpush1.xpose.msra.mxu0 0.0
  %1455 = vmatprep.subr.mxu0 0.0
  %1456 = vmatpush1.xpose.msra.mxu0 0.0
  %1457 = vmatprep.subr.mxu0 0.0
  %1458 = vmatpush1.xpose.msra.mxu0 0.0
  %1459 = vmatprep.subr.mxu0 0.0
  %1460 = vmatpush1.xpose.msra.mxu0 0.0
  %1461 = vmatprep.subr.mxu0 0.0
  %1462 = vmatpush1.xpose.msra.mxu0 0.0
  %1463 = vmatprep.subr.mxu0 0.0
  %1464 = vmatpush1.xpose.msra.mxu0 0.0
  %1465 = vmatprep.subr.mxu0 0.0
  %1466 = vmatpush1.xpose.msra.mxu0 0.0
  %1467 = vmatprep.subr.mxu0 0.0
  %1468 = vmatpush1.xpose.msra.mxu0 0.0
  %1469 = vmatprep.subr.mxu0 0.0
  %1470 = vmatpush1.xpose.msra.mxu0 0.0
  %1471 = vmatprep.subr.mxu0 0.0
  %1472 = vmatpush1.xpose.msra.mxu0 0.0
  %1473 = vmatprep.subr.mxu0 0.0
  %1474 = vmatpush1.xpose.msra.mxu0 0.0
  %1475 = vmatprep.subr.mxu0 0.0
  %1476 = vmatpush1.xpose.msra.mxu0 0.0
  %1477 = vmatprep.subr.mxu0 0.0
  %1478 = vmatpush1.xpose.msra.mxu0 0.0
  %1479 = vmatprep.subr.mxu0 0.0
  %1480 = vmatpush1.xpose.msra.mxu0 0.0
  %1481 = vmatprep.subr.mxu0 0.0
  %1482 = vmatpush1.xpose.msra.mxu0 0.0
  %1483 = vmatprep.subr.mxu0 0.0
  %1484 = vmatpush1.xpose.msra.mxu0 0.0
  %1485 = vmatprep.subr.mxu0 0.0
  %1486 = vmatpush1.xpose.msra.mxu0 0.0
  %1487 = vmatprep.subr.mxu0 0.0
  %1488 = vmatpush1.xpose.msra.mxu0 0.0
  %1489 = vmatprep.subr.mxu0 0.0
  %1490 = vmatpush1.xpose.msra.mxu0 0.0
  %1491 = vmatprep.subr.mxu0 0.0
  %1492 = vmatpush1.xpose.msra.mxu0 0.0
  %1493 = vmatprep.subr.mxu0 0.0
  %1494 = vmatpush1.xpose.msra.mxu0 0.0
  %1495 = vmatprep.subr.mxu0 0.0
  %1496 = vmatpush1.xpose.msra.mxu0 0.0
  %1497 = vmatprep.subr.mxu0 0.0
  %1498 = vmatpush1.xpose.msra.mxu0 0.0
  %1499 = vmatprep.mubr.f32.mxu0 0.0
  %1500 = vmatmul.mubr.f32.gmra.mrb[0].mxu0 %v1430
  %v1501 = vpop.f32.mrb[0].mxu0
  %v1502 = vadd.f32 %v1175, %v1501
  %v1503 = vpop.f32.mrb[0].mxu0
  %1504 = vdwg.mxu0
  %v1506 = vsel %vm1200, %v381, 0
  %v1509 = vsel %vm1200, %v872, 0
  %1511 = vmatprep.subr.mxu0 0.0
  %1512 = vmatpush1.xpose.msra.mxu0 %v1509
  %1513 = vmatprep.subr.mxu0 0.0
  %1514 = vmatpush1.xpose.msra.mxu0 0.0
  %1515 = vmatprep.subr.mxu0 0.0
  %1516 = vmatpush1.xpose.msra.mxu0 0.0
  %1517 = vmatprep.subr.mxu0 0.0
  %1518 = vmatpush1.xpose.msra.mxu0 0.0
  %1519 = vmatprep.subr.mxu0 0.0
  %1520 = vmatpush1.xpose.msra.mxu0 0.0
  %1521 = vmatprep.subr.mxu0 0.0
  %1522 = vmatpush1.xpose.msra.mxu0 0.0
  %1523 = vmatprep.subr.mxu0 0.0
  %1524 = vmatpush1.xpose.msra.mxu0 0.0
  %1525 = vmatprep.subr.mxu0 0.0
  %1526 = vmatpush1.xpose.msra.mxu0 0.0
  %1527 = vmatprep.subr.mxu0 0.0
  %1528 = vmatpush1.xpose.msra.mxu0 0.0
  %1529 = vmatprep.subr.mxu0 0.0
  %1530 = vmatpush1.xpose.msra.mxu0 0.0
  %1531 = vmatprep.subr.mxu0 0.0
  %1532 = vmatpush1.xpose.msra.mxu0 0.0
  %1533 = vmatprep.subr.mxu0 0.0
  %1534 = vmatpush1.xpose.msra.mxu0 0.0
  %1535 = vmatprep.subr.mxu0 0.0
  %1536 = vmatpush1.xpose.msra.mxu0 0.0
  %1537 = vmatprep.subr.mxu0 0.0
  %1538 = vmatpush1.xpose.msra.mxu0 0.0
  %1539 = vmatprep.subr.mxu0 0.0
  %1540 = vmatpush1.xpose.msra.mxu0 0.0
  %1541 = vmatprep.subr.mxu0 0.0
  %1542 = vmatpush1.xpose.msra.mxu0 0.0
  %1543 = vmatprep.subr.mxu0 0.0
  %1544 = vmatpush1.xpose.msra.mxu0 0.0
  %1545 = vmatprep.subr.mxu0 0.0
  %1546 = vmatpush1.xpose.msra.mxu0 0.0
  %1547 = vmatprep.subr.mxu0 0.0
  %1548 = vmatpush1.xpose.msra.mxu0 0.0
  %1549 = vmatprep.subr.mxu0 0.0
  %1550 = vmatpush1.xpose.msra.mxu0 0.0
  %1551 = vmatprep.subr.mxu0 0.0
  %1552 = vmatpush1.xpose.msra.mxu0 0.0
  %1553 = vmatprep.subr.mxu0 0.0
  %1554 = vmatpush1.xpose.msra.mxu0 0.0
  %1555 = vmatprep.subr.mxu0 0.0
  %1556 = vmatpush1.xpose.msra.mxu0 0.0
  %1557 = vmatprep.subr.mxu0 0.0
  %1558 = vmatpush1.xpose.msra.mxu0 0.0
  %1559 = vmatprep.subr.mxu0 0.0
  %1560 = vmatpush1.xpose.msra.mxu0 0.0
  %1561 = vmatprep.subr.mxu0 0.0
  %1562 = vmatpush1.xpose.msra.mxu0 0.0
  %1563 = vmatprep.subr.mxu0 0.0
  %1564 = vmatpush1.xpose.msra.mxu0 0.0
  %1565 = vmatprep.subr.mxu0 0.0
  %1566 = vmatpush1.xpose.msra.mxu0 0.0
  %1567 = vmatprep.subr.mxu0 0.0
  %1568 = vmatpush1.xpose.msra.mxu0 0.0
  %1569 = vmatprep.subr.mxu0 0.0
  %1570 = vmatpush1.xpose.msra.mxu0 0.0
  %1571 = vmatprep.subr.mxu0 0.0
  %1572 = vmatpush1.xpose.msra.mxu0 0.0
  %1573 = vmatprep.subr.mxu0 0.0
  %1574 = vmatpush1.xpose.msra.mxu0 0.0
  %1575 = vmatprep.mubr.f32.mxu0 0.0
  %1576 = vmatmul.mubr.f32.gmra.mrb[0].mxu0 %v1506
  %v1577 = vpop.f32.mrb[0].mxu0
  %v1578 = vadd.f32 %v1179, %v1577
  %v1579 = vpop.f32.mrb[0].mxu0
  %1580 = vdwg.mxu0
  %v1582 = vsel %vm1200, %v386, 0
  %v1585 = vsel %vm1200, %v873, 0
  %1587 = vmatprep.subr.mxu0 0.0
  %1588 = vmatpush1.xpose.msra.mxu0 %v1585
  %1589 = vmatprep.subr.mxu0 0.0
  %1590 = vmatpush1.xpose.msra.mxu0 0.0
  %1591 = vmatprep.subr.mxu0 0.0
  %1592 = vmatpush1.xpose.msra.mxu0 0.0
  %1593 = vmatprep.subr.mxu0 0.0
  %1594 = vmatpush1.xpose.msra.mxu0 0.0
  %1595 = vmatprep.subr.mxu0 0.0
  %1596 = vmatpush1.xpose.msra.mxu0 0.0
  %1597 = vmatprep.subr.mxu0 0.0
  %1598 = vmatpush1.xpose.msra.mxu0 0.0
  %1599 = vmatprep.subr.mxu0 0.0
  %1600 = vmatpush1.xpose.msra.mxu0 0.0
  %1601 = vmatprep.subr.mxu0 0.0
  %1602 = vmatpush1.xpose.msra.mxu0 0.0
  %1603 = vmatprep.subr.mxu0 0.0
  %1604 = vmatpush1.xpose.msra.mxu0 0.0
  %1605 = vmatprep.subr.mxu0 0.0
  %1606 = vmatpush1.xpose.msra.mxu0 0.0
  %1607 = vmatprep.subr.mxu0 0.0
  %1608 = vmatpush1.xpose.msra.mxu0 0.0
  %1609 = vmatprep.subr.mxu0 0.0
  %1610 = vmatpush1.xpose.msra.mxu0 0.0
  %1611 = vmatprep.subr.mxu0 0.0
  %1612 = vmatpush1.xpose.msra.mxu0 0.0
  %1613 = vmatprep.subr.mxu0 0.0
  %1614 = vmatpush1.xpose.msra.mxu0 0.0
  %1615 = vmatprep.subr.mxu0 0.0
  %1616 = vmatpush1.xpose.msra.mxu0 0.0
  %1617 = vmatprep.subr.mxu0 0.0
  %1618 = vmatpush1.xpose.msra.mxu0 0.0
  %1619 = vmatprep.subr.mxu0 0.0
  %1620 = vmatpush1.xpose.msra.mxu0 0.0
  %1621 = vmatprep.subr.mxu0 0.0
  %1622 = vmatpush1.xpose.msra.mxu0 0.0
  %1623 = vmatprep.subr.mxu0 0.0
  %1624 = vmatpush1.xpose.msra.mxu0 0.0
  %1625 = vmatprep.subr.mxu0 0.0
  %1626 = vmatpush1.xpose.msra.mxu0 0.0
  %1627 = vmatprep.subr.mxu0 0.0
  %1628 = vmatpush1.xpose.msra.mxu0 0.0
  %1629 = vmatprep.subr.mxu0 0.0
  %1630 = vmatpush1.xpose.msra.mxu0 0.0
  %1631 = vmatprep.subr.mxu0 0.0
  %1632 = vmatpush1.xpose.msra.mxu0 0.0
  %1633 = vmatprep.subr.mxu0 0.0
  %1634 = vmatpush1.xpose.msra.mxu0 0.0
  %1635 = vmatprep.subr.mxu0 0.0
  %1636 = vmatpush1.xpose.msra.mxu0 0.0
  %1637 = vmatprep.subr.mxu0 0.0
  %1638 = vmatpush1.xpose.msra.mxu0 0.0
  %1639 = vmatprep.subr.mxu0 0.0
  %1640 = vmatpush1.xpose.msra.mxu0 0.0
  %1641 = vmatprep.subr.mxu0 0.0
  %1642 = vmatpush1.xpose.msra.mxu0 0.0
  %1643 = vmatprep.subr.mxu0 0.0
  %1644 = vmatpush1.xpose.msra.mxu0 0.0
  %1645 = vmatprep.subr.mxu0 0.0
  %1646 = vmatpush1.xpose.msra.mxu0 0.0
  %1647 = vmatprep.subr.mxu0 0.0
  %1648 = vmatpush1.xpose.msra.mxu0 0.0
  %1649 = vmatprep.subr.mxu0 0.0
  %1650 = vmatpush1.xpose.msra.mxu0 0.0
  %1651 = vmatprep.mubr.f32.mxu0 0.0
  %1652 = vmatmul.mubr.f32.gmra.mrb[0].mxu0 %v1582
  %v1653 = vpop.f32.mrb[0].mxu0
  %v1654 = vadd.f32 %v1183, %v1653
  %v1655 = vpop.f32.mrb[0].mxu0
  %1656 = vdwg.mxu0
  %v1658 = vsel %vm1200, %v391, 0
  %v1661 = vsel %vm1200, %v874, 0
  %1663 = vmatprep.subr.mxu0 0.0
  %1664 = vmatpush1.xpose.msra.mxu0 %v1661
  %1665 = vmatprep.subr.mxu0 0.0
  %1666 = vmatpush1.xpose.msra.mxu0 0.0
  %1667 = vmatprep.subr.mxu0 0.0
  %1668 = vmatpush1.xpose.msra.mxu0 0.0
  %1669 = vmatprep.subr.mxu0 0.0
  %1670 = vmatpush1.xpose.msra.mxu0 0.0
  %1671 = vmatprep.subr.mxu0 0.0
  %1672 = vmatpush1.xpose.msra.mxu0 0.0
  %1673 = vmatprep.subr.mxu0 0.0
  %1674 = vmatpush1.xpose.msra.mxu0 0.0
  %1675 = vmatprep.subr.mxu0 0.0
  %1676 = vmatpush1.xpose.msra.mxu0 0.0
  %1677 = vmatprep.subr.mxu0 0.0
  %1678 = vmatpush1.xpose.msra.mxu0 0.0
  %1679 = vmatprep.subr.mxu0 0.0
  %1680 = vmatpush1.xpose.msra.mxu0 0.0
  %1681 = vmatprep.subr.mxu0 0.0
  %1682 = vmatpush1.xpose.msra.mxu0 0.0
  %1683 = vmatprep.subr.mxu0 0.0
  %1684 = vmatpush1.xpose.msra.mxu0 0.0
  %1685 = vmatprep.subr.mxu0 0.0
  %1686 = vmatpush1.xpose.msra.mxu0 0.0
  %1687 = vmatprep.subr.mxu0 0.0
  %1688 = vmatpush1.xpose.msra.mxu0 0.0
  %1689 = vmatprep.subr.mxu0 0.0
  %1690 = vmatpush1.xpose.msra.mxu0 0.0
  %1691 = vmatprep.subr.mxu0 0.0
  %1692 = vmatpush1.xpose.msra.mxu0 0.0
  %1693 = vmatprep.subr.mxu0 0.0
  %1694 = vmatpush1.xpose.msra.mxu0 0.0
  %1695 = vmatprep.subr.mxu0 0.0
  %1696 = vmatpush1.xpose.msra.mxu0 0.0
  %1697 = vmatprep.subr.mxu0 0.0
  %1698 = vmatpush1.xpose.msra.mxu0 0.0
  %1699 = vmatprep.subr.mxu0 0.0
  %1700 = vmatpush1.xpose.msra.mxu0 0.0
  %1701 = vmatprep.subr.mxu0 0.0
  %1702 = vmatpush1.xpose.msra.mxu0 0.0
  %1703 = vmatprep.subr.mxu0 0.0
  %1704 = vmatpush1.xpose.msra.mxu0 0.0
  %1705 = vmatprep.subr.mxu0 0.0
  %1706 = vmatpush1.xpose.msra.mxu0 0.0
  %1707 = vmatprep.subr.mxu0 0.0
  %1708 = vmatpush1.xpose.msra.mxu0 0.0
  %1709 = vmatprep.subr.mxu0 0.0
  %1710 = vmatpush1.xpose.msra.mxu0 0.0
  %1711 = vmatprep.subr.mxu0 0.0
  %1712 = vmatpush1.xpose.msra.mxu0 0.0
  %1713 = vmatprep.subr.mxu0 0.0
  %1714 = vmatpush1.xpose.msra.mxu0 0.0
  %1715 = vmatprep.subr.mxu0 0.0
  %1716 = vmatpush1.xpose.msra.mxu0 0.0
  %1717 = vmatprep.subr.mxu0 0.0
  %1718 = vmatpush1.xpose.msra.mxu0 0.0
  %1719 = vmatprep.subr.mxu0 0.0
  %1720 = vmatpush1.xpose.msra.mxu0 0.0
  %1721 = vmatprep.subr.mxu0 0.0
  %1722 = vmatpush1.xpose.msra.mxu0 0.0
  %1723 = vmatprep.subr.mxu0 0.0
  %1724 = vmatpush1.xpose.msra.mxu0 0.0
  %1725 = vmatprep.subr.mxu0 0.0
  %1726 = vmatpush1.xpose.msra.mxu0 0.0
  %1727 = vmatprep.mubr.f32.mxu0 0.0
  %1728 = vmatmul.mubr.f32.gmra.mrb[0].mxu0 %v1658
  %v1729 = vpop.f32.mrb[0].mxu0
  %v1730 = vadd.f32 %v1187, %v1729
  %v1731 = vpop.f32.mrb[0].mxu0
  %1732 = vdwg.mxu0
  %v1734 = vsel %vm1200, %v396, 0
  %v1737 = vsel %vm1200, %v875, 0
  %1739 = vmatprep.subr.mxu0 0.0
  %1740 = vmatpush1.xpose.msra.mxu0 %v1737
  %1741 = vmatprep.subr.mxu0 0.0
  %1742 = vmatpush1.xpose.msra.mxu0 0.0
  %1743 = vmatprep.subr.mxu0 0.0
  %1744 = vmatpush1.xpose.msra.mxu0 0.0
  %1745 = vmatprep.subr.mxu0 0.0
  %1746 = vmatpush1.xpose.msra.mxu0 0.0
  %1747 = vmatprep.subr.mxu0 0.0
  %1748 = vmatpush1.xpose.msra.mxu0 0.0
  %1749 = vmatprep.subr.mxu0 0.0
  %1750 = vmatpush1.xpose.msra.mxu0 0.0
  %1751 = vmatprep.subr.mxu0 0.0
  %1752 = vmatpush1.xpose.msra.mxu0 0.0
  %1753 = vmatprep.subr.mxu0 0.0
  %1754 = vmatpush1.xpose.msra.mxu0 0.0
  %1755 = vmatprep.subr.mxu0 0.0
  %1756 = vmatpush1.xpose.msra.mxu0 0.0
  %1757 = vmatprep.subr.mxu0 0.0
  %1758 = vmatpush1.xpose.msra.mxu0 0.0
  %1759 = vmatprep.subr.mxu0 0.0
  %1760 = vmatpush1.xpose.msra.mxu0 0.0
  %1761 = vmatprep.subr.mxu0 0.0
  %1762 = vmatpush1.xpose.msra.mxu0 0.0
  %1763 = vmatprep.subr.mxu0 0.0
  %1764 = vmatpush1.xpose.msra.mxu0 0.0
  %1765 = vmatprep.subr.mxu0 0.0
  %1766 = vmatpush1.xpose.msra.mxu0 0.0
  %1767 = vmatprep.subr.mxu0 0.0
  %1768 = vmatpush1.xpose.msra.mxu0 0.0
  %1769 = vmatprep.subr.mxu0 0.0
  %1770 = vmatpush1.xpose.msra.mxu0 0.0
  %1771 = vmatprep.subr.mxu0 0.0
  %1772 = vmatpush1.xpose.msra.mxu0 0.0
  %1773 = vmatprep.subr.mxu0 0.0
  %1774 = vmatpush1.xpose.msra.mxu0 0.0
  %1775 = vmatprep.subr.mxu0 0.0
  %1776 = vmatpush1.xpose.msra.mxu0 0.0
  %1777 = vmatprep.subr.mxu0 0.0
  %1778 = vmatpush1.xpose.msra.mxu0 0.0
  %1779 = vmatprep.subr.mxu0 0.0
  %1780 = vmatpush1.xpose.msra.mxu0 0.0
  %1781 = vmatprep.subr.mxu0 0.0
  %1782 = vmatpush1.xpose.msra.mxu0 0.0
  %1783 = vmatprep.subr.mxu0 0.0
  %1784 = vmatpush1.xpose.msra.mxu0 0.0
  %1785 = vmatprep.subr.mxu0 0.0
  %1786 = vmatpush1.xpose.msra.mxu0 0.0
  %1787 = vmatprep.subr.mxu0 0.0
  %1788 = vmatpush1.xpose.msra.mxu0 0.0
  %1789 = vmatprep.subr.mxu0 0.0
  %1790 = vmatpush1.xpose.msra.mxu0 0.0
  %1791 = vmatprep.subr.mxu0 0.0
  %1792 = vmatpush1.xpose.msra.mxu0 0.0
  %1793 = vmatprep.subr.mxu0 0.0
  %1794 = vmatpush1.xpose.msra.mxu0 0.0
  %1795 = vmatprep.subr.mxu0 0.0
  %1796 = vmatpush1.xpose.msra.mxu0 0.0
  %1797 = vmatprep.subr.mxu0 0.0
  %1798 = vmatpush1.xpose.msra.mxu0 0.0
  %1799 = vmatprep.subr.mxu0 0.0
  %1800 = vmatpush1.xpose.msra.mxu0 0.0
  %1801 = vmatprep.subr.mxu0 0.0
  %1802 = vmatpush1.xpose.msra.mxu0 0.0
  %1803 = vmatprep.mubr.f32.mxu0 0.0
  %1804 = vmatmul.mubr.f32.gmra.mrb[0].mxu0 %v1734
  %v1805 = vpop.f32.mrb[0].mxu0
  %v1806 = vadd.f32 %v1191, %v1805
  %v1807 = vpop.f32.mrb[0].mxu0
  %1808 = vdwg.mxu0
  %vm1809 = vcmask 64512
  %v1810 = vsel %vm1809, %v1274, -inf
  %1811 = vmax.xlane.f32.xlu0 %v1810
  %v1812 = vpop.xlane.xlu0 %1811
  %v1813 = vsel %vm1809, %v1350, -inf
  %1814 = vmax.xlane.f32.xlu0 %v1813
  %v1815 = vpop.xlane.xlu0 %1814
  %v1816 = vsel %vm1809, %v1426, -inf
  %1817 = vmax.xlane.f32.xlu0 %v1816
  %v1818 = vpop.xlane.xlu0 %1817
  %v1819 = vsel %vm1809, %v1502, -inf
  %1820 = vmax.xlane.f32.xlu0 %v1819
  %v1821 = vpop.xlane.xlu0 %1820
  %v1822 = vsel %vm1809, %v1578, -inf
  %1823 = vmax.xlane.f32.xlu0 %v1822
  %v1824 = vpop.xlane.xlu0 %1823
  %v1825 = vsel %vm1809, %v1654, -inf
  %1826 = vmax.xlane.f32.xlu0 %v1825
  %v1827 = vpop.xlane.xlu0 %1826
  %v1828 = vsel %vm1809, %v1730, -inf
  %1829 = vmax.xlane.f32.xlu0 %v1828
  %v1830 = vpop.xlane.xlu0 %1829
  %v1831 = vsel %vm1809, %v1806, -inf
  %1832 = vmax.xlane.f32.xlu0 %v1831
  %v1833 = vpop.xlane.xlu0 %1832
  %v1834 = vsub.f32 %v1274, %v1812
  %v1835 = vsub.f32 %v1350, %v1815
  %v1836 = vsub.f32 %v1426, %v1818
  %v1837 = vsub.f32 %v1502, %v1821
  %v1838 = vsub.f32 %v1578, %v1824
  %v1839 = vsub.f32 %v1654, %v1827
  %v1840 = vsub.f32 %v1730, %v1830
  %v1841 = vsub.f32 %v1806, %v1833
  %v1842 = vmul.f32 %v1834, 1.442695
  %v1843 = vpow.pop %v1842
  %v1844 = vmul.f32 %v1835, 1.442695
  %v1845 = vpow.pop %v1844
  %v1846 = vmul.f32 %v1836, 1.442695
  %v1847 = vpow.pop %v1846
  %v1848 = vmul.f32 %v1837, 1.442695
  %v1849 = vpow.pop %v1848
  %v1850 = vmul.f32 %v1838, 1.442695
  %v1851 = vpow.pop %v1850
  %v1852 = vmul.f32 %v1839, 1.442695
  %v1853 = vpow.pop %v1852
  %v1854 = vmul.f32 %v1840, 1.442695
  %v1855 = vpow.pop %v1854
  %v1856 = vmul.f32 %v1841, 1.442695
  %v1857 = vpow.pop %v1856
  %v1858 = vsel %vm1809, %v1843, 0.0
  %1859 = vadd.xlane.f32.xlu0 %v1858
  %v1860 = vpop.xlane.xlu0 %1859
  %v1861 = vsel %vm1809, %v1845, 0.0
  %1862 = vadd.xlane.f32.xlu0 %v1861
  %v1863 = vpop.xlane.xlu0 %1862
  %v1864 = vsel %vm1809, %v1847, 0.0
  %1865 = vadd.xlane.f32.xlu0 %v1864
  %v1866 = vpop.xlane.xlu0 %1865
  %v1867 = vsel %vm1809, %v1849, 0.0
  %1868 = vadd.xlane.f32.xlu0 %v1867
  %v1869 = vpop.xlane.xlu0 %1868
  %v1870 = vsel %vm1809, %v1851, 0.0
  %1871 = vadd.xlane.f32.xlu0 %v1870
  %v1872 = vpop.xlane.xlu0 %1871
  %v1873 = vsel %vm1809, %v1853, 0.0
  %1874 = vadd.xlane.f32.xlu0 %v1873
  %v1875 = vpop.xlane.xlu0 %1874
  %v1876 = vsel %vm1809, %v1855, 0.0
  %1877 = vadd.xlane.f32.xlu0 %v1876
  %v1878 = vpop.xlane.xlu0 %1877
  %v1879 = vsel %vm1809, %v1857, 0.0
  %1880 = vadd.xlane.f32.xlu0 %v1879
  %v1881 = vpop.xlane.xlu0 %1880
  %v1882 = vrcp.pop %v1860
  %v1883 = vmul.f32 %v1843, %v1882
  %v1884 = vrcp.pop %v1863
  %v1885 = vmul.f32 %v1845, %v1884
  %v1886 = vrcp.pop %v1866
  %v1887 = vmul.f32 %v1847, %v1886
  %v1888 = vrcp.pop %v1869
  %v1889 = vmul.f32 %v1849, %v1888
  %v1890 = vrcp.pop %v1872
  %v1891 = vmul.f32 %v1851, %v1890
  %v1892 = vrcp.pop %v1875
  %v1893 = vmul.f32 %v1853, %v1892
  %v1894 = vrcp.pop %v1878
  %v1895 = vmul.f32 %v1855, %v1894
  %v1896 = vrcp.pop %v1881
  %v1897 = vmul.f32 %v1857, %v1896
  %v1899 = vsel %vm1809, %v1883, 0
  %1901 = vmatprep.subr.mxu0 0.0
  %1902 = vmatpush1.msra.mxu0 %v1128
  %1903 = vmatprep.subr.mxu0 0.0
  %1904 = vmatpush1.msra.mxu0 0.0
  %1905 = vmatprep.subr.mxu0 0.0
  %1906 = vmatpush1.msra.mxu0 0.0
  %1907 = vmatprep.subr.mxu0 0.0
  %1908 = vmatpush1.msra.mxu0 0.0
  %1909 = vmatprep.subr.mxu0 0.0
  %1910 = vmatpush1.msra.mxu0 0.0
  %1911 = vmatprep.subr.mxu0 0.0
  %1912 = vmatpush1.msra.mxu0 0.0
  %1913 = vmatprep.subr.mxu0 0.0
  %1914 = vmatpush1.msra.mxu0 0.0
  %1915 = vmatprep.subr.mxu0 0.0
  %1916 = vmatpush1.msra.mxu0 0.0
  %1917 = vmatprep.subr.mxu0 0.0
  %1918 = vmatpush1.msra.mxu0 0.0
  %1919 = vmatprep.subr.mxu0 0.0
  %1920 = vmatpush1.msra.mxu0 0.0
  %1921 = vmatprep.subr.mxu0 0.0
  %1922 = vmatpush1.msra.mxu0 0.0
  %1923 = vmatprep.subr.mxu0 0.0
  %1924 = vmatpush1.msra.mxu0 0.0
  %1925 = vmatprep.subr.mxu0 0.0
  %1926 = vmatpush1.msra.mxu0 0.0
  %1927 = vmatprep.subr.mxu0 0.0
  %1928 = vmatpush1.msra.mxu0 0.0
  %1929 = vmatprep.subr.mxu0 0.0
  %1930 = vmatpush1.msra.mxu0 0.0
  %1931 = vmatprep.subr.mxu0 0.0
  %1932 = vmatpush1.msra.mxu0 0.0
  %1933 = vmatprep.subr.mxu0 0.0
  %1934 = vmatpush1.msra.mxu0 0.0
  %1935 = vmatprep.subr.mxu0 0.0
  %1936 = vmatpush1.msra.mxu0 0.0
  %1937 = vmatprep.subr.mxu0 0.0
  %1938 = vmatpush1.msra.mxu0 0.0
  %1939 = vmatprep.subr.mxu0 0.0
  %1940 = vmatpush1.msra.mxu0 0.0
  %1941 = vmatprep.subr.mxu0 0.0
  %1942 = vmatpush1.msra.mxu0 0.0
  %1943 = vmatprep.subr.mxu0 0.0
  %1944 = vmatpush1.msra.mxu0 0.0
  %1945 = vmatprep.subr.mxu0 0.0
  %1946 = vmatpush1.msra.mxu0 0.0
  %1947 = vmatprep.subr.mxu0 0.0
  %1948 = vmatpush1.msra.mxu0 0.0
  %1949 = vmatprep.subr.mxu0 0.0
  %1950 = vmatpush1.msra.mxu0 0.0
  %1951 = vmatprep.subr.mxu0 0.0
  %1952 = vmatpush1.msra.mxu0 0.0
  %1953 = vmatprep.subr.mxu0 0.0
  %1954 = vmatpush1.msra.mxu0 0.0
  %1955 = vmatprep.subr.mxu0 0.0
  %1956 = vmatpush1.msra.mxu0 0.0
  %1957 = vmatprep.subr.mxu0 0.0
  %1958 = vmatpush1.msra.mxu0 0.0
  %1959 = vmatprep.subr.mxu0 0.0
  %1960 = vmatpush1.msra.mxu0 0.0
  %1961 = vmatprep.subr.mxu0 0.0
  %1962 = vmatpush1.msra.mxu0 0.0
  %1963 = vmatprep.subr.mxu0 0.0
  %1964 = vmatpush1.msra.mxu0 0.0
  %1965 = vmatprep.mubr.f32.mxu0 0.0
  %1966 = vmatmul.mubr.f32.gmra.mrb[0].mxu0 %v1899
  %v1967 = vpop.f32.mrb[0].mxu0
  %v1968 = vadd.f32 0.0, %v1967
  %v1969 = vpop.f32.mrb[0].mxu0
  %1970 = vdwg.mxu0
  %v1972 = vsel %vm1809, %v1885, 0
  %1974 = vmatprep.subr.mxu0 0.0
  %1975 = vmatpush1.msra.mxu0 %v1129
  %1976 = vmatprep.subr.mxu0 0.0
  %1977 = vmatpush1.msra.mxu0 0.0
  %1978 = vmatprep.subr.mxu0 0.0
  %1979 = vmatpush1.msra.mxu0 0.0
  %1980 = vmatprep.subr.mxu0 0.0
  %1981 = vmatpush1.msra.mxu0 0.0
  %1982 = vmatprep.subr.mxu0 0.0
  %1983 = vmatpush1.msra.mxu0 0.0
  %1984 = vmatprep.subr.mxu0 0.0
  %1985 = vmatpush1.msra.mxu0 0.0
  %1986 = vmatprep.subr.mxu0 0.0
  %1987 = vmatpush1.msra.mxu0 0.0
  %1988 = vmatprep.subr.mxu0 0.0
  %1989 = vmatpush1.msra.mxu0 0.0
  %1990 = vmatprep.subr.mxu0 0.0
  %1991 = vmatpush1.msra.mxu0 0.0
  %1992 = vmatprep.subr.mxu0 0.0
  %1993 = vmatpush1.msra.mxu0 0.0
  %1994 = vmatprep.subr.mxu0 0.0
  %1995 = vmatpush1.msra.mxu0 0.0
  %1996 = vmatprep.subr.mxu0 0.0
  %1997 = vmatpush1.msra.mxu0 0.0
  %1998 = vmatprep.subr.mxu0 0.0
  %1999 = vmatpush1.msra.mxu0 0.0
  %2000 = vmatprep.subr.mxu0 0.0
  %2001 = vmatpush1.msra.mxu0 0.0
  %2002 = vmatprep.subr.mxu0 0.0
  %2003 = vmatpush1.msra.mxu0 0.0
  %2004 = vmatprep.subr.mxu0 0.0
  %2005 = vmatpush1.msra.mxu0 0.0
  %2006 = vmatprep.subr.mxu0 0.0
  %2007 = vmatpush1.msra.mxu0 0.0
  %2008 = vmatprep.subr.mxu0 0.0
  %2009 = vmatpush1.msra.mxu0 0.0
  %2010 = vmatprep.subr.mxu0 0.0
  %2011 = vmatpush1.msra.mxu0 0.0
  %2012 = vmatprep.subr.mxu0 0.0
  %2013 = vmatpush1.msra.mxu0 0.0
  %2014 = vmatprep.subr.mxu0 0.0
  %2015 = vmatpush1.msra.mxu0 0.0
  %2016 = vmatprep.subr.mxu0 0.0
  %2017 = vmatpush1.msra.mxu0 0.0
  %2018 = vmatprep.subr.mxu0 0.0
  %2019 = vmatpush1.msra.mxu0 0.0
  %2020 = vmatprep.subr.mxu0 0.0
  %2021 = vmatpush1.msra.mxu0 0.0
  %2022 = vmatprep.subr.mxu0 0.0
  %2023 = vmatpush1.msra.mxu0 0.0
  %2024 = vmatprep.subr.mxu0 0.0
  %2025 = vmatpush1.msra.mxu0 0.0
  %2026 = vmatprep.subr.mxu0 0.0
  %2027 = vmatpush1.msra.mxu0 0.0
  %2028 = vmatprep.subr.mxu0 0.0
  %2029 = vmatpush1.msra.mxu0 0.0
  %2030 = vmatprep.subr.mxu0 0.0
  %2031 = vmatpush1.msra.mxu0 0.0
  %2032 = vmatprep.subr.mxu0 0.0
  %2033 = vmatpush1.msra.mxu0 0.0
  %2034 = vmatprep.subr.mxu0 0.0
  %2035 = vmatpush1.msra.mxu0 0.0
  %2036 = vmatprep.subr.mxu0 0.0
  %2037 = vmatpush1.msra.mxu0 0.0
  %2038 = vmatprep.mubr.f32.mxu0 0.0
  %2039 = vmatmul.mubr.f32.gmra.mrb[0].mxu0 %v1972
  %v2040 = vpop.f32.mrb[0].mxu0
  %v2041 = vadd.f32 0.0, %v2040
  %v2042 = vpop.f32.mrb[0].mxu0
  %2043 = vdwg.mxu0
  %v2045 = vsel %vm1809, %v1887, 0
  %2047 = vmatprep.subr.mxu0 0.0
  %2048 = vmatpush1.msra.mxu0 %v1130
  %2049 = vmatprep.subr.mxu0 0.0
  %2050 = vmatpush1.msra.mxu0 0.0
  %2051 = vmatprep.subr.mxu0 0.0
  %2052 = vmatpush1.msra.mxu0 0.0
  %2053 = vmatprep.subr.mxu0 0.0
  %2054 = vmatpush1.msra.mxu0 0.0
  %2055 = vmatprep.subr.mxu0 0.0
  %2056 = vmatpush1.msra.mxu0 0.0
  %2057 = vmatprep.subr.mxu0 0.0
  %2058 = vmatpush1.msra.mxu0 0.0
  %2059 = vmatprep.subr.mxu0 0.0
  %2060 = vmatpush1.msra.mxu0 0.0
  %2061 = vmatprep.subr.mxu0 0.0
  %2062 = vmatpush1.msra.mxu0 0.0
  %2063 = vmatprep.subr.mxu0 0.0
  %2064 = vmatpush1.msra.mxu0 0.0
  %2065 = vmatprep.subr.mxu0 0.0
  %2066 = vmatpush1.msra.mxu0 0.0
  %2067 = vmatprep.subr.mxu0 0.0
  %2068 = vmatpush1.msra.mxu0 0.0
  %2069 = vmatprep.subr.mxu0 0.0
  %2070 = vmatpush1.msra.mxu0 0.0
  %2071 = vmatprep.subr.mxu0 0.0
  %2072 = vmatpush1.msra.mxu0 0.0
  %2073 = vmatprep.subr.mxu0 0.0
  %2074 = vmatpush1.msra.mxu0 0.0
  %2075 = vmatprep.subr.mxu0 0.0
  %2076 = vmatpush1.msra.mxu0 0.0
  %2077 = vmatprep.subr.mxu0 0.0
  %2078 = vmatpush1.msra.mxu0 0.0
  %2079 = vmatprep.subr.mxu0 0.0
  %2080 = vmatpush1.msra.mxu0 0.0
  %2081 = vmatprep.subr.mxu0 0.0
  %2082 = vmatpush1.msra.mxu0 0.0
  %2083 = vmatprep.subr.mxu0 0.0
  %2084 = vmatpush1.msra.mxu0 0.0
  %2085 = vmatprep.subr.mxu0 0.0
  %2086 = vmatpush1.msra.mxu0 0.0
  %2087 = vmatprep.subr.mxu0 0.0
  %2088 = vmatpush1.msra.mxu0 0.0
  %2089 = vmatprep.subr.mxu0 0.0
  %2090 = vmatpush1.msra.mxu0 0.0
  %2091 = vmatprep.subr.mxu0 0.0
  %2092 = vmatpush1.msra.mxu0 0.0
  %2093 = vmatprep.subr.mxu0 0.0
  %2094 = vmatpush1.msra.mxu0 0.0
  %2095 = vmatprep.subr.mxu0 0.0
  %2096 = vmatpush1.msra.mxu0 0.0
  %2097 = vmatprep.subr.mxu0 0.0
  %2098 = vmatpush1.msra.mxu0 0.0
  %2099 = vmatprep.subr.mxu0 0.0
  %2100 = vmatpush1.msra.mxu0 0.0
  %2101 = vmatprep.subr.mxu0 0.0
  %2102 = vmatpush1.msra.mxu0 0.0
  %2103 = vmatprep.subr.mxu0 0.0
  %2104 = vmatpush1.msra.mxu0 0.0
  %2105 = vmatprep.subr.mxu0 0.0
  %2106 = vmatpush1.msra.mxu0 0.0
  %2107 = vmatprep.subr.mxu0 0.0
  %2108 = vmatpush1.msra.mxu0 0.0
  %2109 = vmatprep.subr.mxu0 0.0
  %2110 = vmatpush1.msra.mxu0 0.0
  %2111 = vmatprep.mubr.f32.mxu0 0.0
  %2112 = vmatmul.mubr.f32.gmra.mrb[0].mxu0 %v2045
  %v2113 = vpop.f32.mrb[0].mxu0
  %v2114 = vadd.f32 0.0, %v2113
  %v2115 = vpop.f32.mrb[0].mxu0
  %2116 = vdwg.mxu0
  %v2118 = vsel %vm1809, %v1889, 0
  %2120 = vmatprep.subr.mxu0 0.0
  %2121 = vmatpush1.msra.mxu0 %v1131
  %2122 = vmatprep.subr.mxu0 0.0
  %2123 = vmatpush1.msra.mxu0 0.0
  %2124 = vmatprep.subr.mxu0 0.0
  %2125 = vmatpush1.msra.mxu0 0.0
  %2126 = vmatprep.subr.mxu0 0.0
  %2127 = vmatpush1.msra.mxu0 0.0
  %2128 = vmatprep.subr.mxu0 0.0
  %2129 = vmatpush1.msra.mxu0 0.0
  %2130 = vmatprep.subr.mxu0 0.0
  %2131 = vmatpush1.msra.mxu0 0.0
  %2132 = vmatprep.subr.mxu0 0.0
  %2133 = vmatpush1.msra.mxu0 0.0
  %2134 = vmatprep.subr.mxu0 0.0
  %2135 = vmatpush1.msra.mxu0 0.0
  %2136 = vmatprep.subr.mxu0 0.0
  %2137 = vmatpush1.msra.mxu0 0.0
  %2138 = vmatprep.subr.mxu0 0.0
  %2139 = vmatpush1.msra.mxu0 0.0
  %2140 = vmatprep.subr.mxu0 0.0
  %2141 = vmatpush1.msra.mxu0 0.0
  %2142 = vmatprep.subr.mxu0 0.0
  %2143 = vmatpush1.msra.mxu0 0.0
  %2144 = vmatprep.subr.mxu0 0.0
  %2145 = vmatpush1.msra.mxu0 0.0
  %2146 = vmatprep.subr.mxu0 0.0
  %2147 = vmatpush1.msra.mxu0 0.0
  %2148 = vmatprep.subr.mxu0 0.0
  %2149 = vmatpush1.msra.mxu0 0.0
  %2150 = vmatprep.subr.mxu0 0.0
  %2151 = vmatpush1.msra.mxu0 0.0
  %2152 = vmatprep.subr.mxu0 0.0
  %2153 = vmatpush1.msra.mxu0 0.0
  %2154 = vmatprep.subr.mxu0 0.0
  %2155 = vmatpush1.msra.mxu0 0.0
  %2156 = vmatprep.subr.mxu0 0.0
  %2157 = vmatpush1.msra.mxu0 0.0
  %2158 = vmatprep.subr.mxu0 0.0
  %2159 = vmatpush1.msra.mxu0 0.0
  %2160 = vmatprep.subr.mxu0 0.0
  %2161 = vmatpush1.msra.mxu0 0.0
  %2162 = vmatprep.subr.mxu0 0.0
  %2163 = vmatpush1.msra.mxu0 0.0
  %2164 = vmatprep.subr.mxu0 0.0
  %2165 = vmatpush1.msra.mxu0 0.0
  %2166 = vmatprep.subr.mxu0 0.0
  %2167 = vmatpush1.msra.mxu0 0.0
  %2168 = vmatprep.subr.mxu0 0.0
  %2169 = vmatpush1.msra.mxu0 0.0
  %2170 = vmatprep.subr.mxu0 0.0
  %2171 = vmatpush1.msra.mxu0 0.0
  %2172 = vmatprep.subr.mxu0 0.0
  %2173 = vmatpush1.msra.mxu0 0.0
  %2174 = vmatprep.subr.mxu0 0.0
  %2175 = vmatpush1.msra.mxu0 0.0
  %2176 = vmatprep.subr.mxu0 0.0
  %2177 = vmatpush1.msra.mxu0 0.0
  %2178 = vmatprep.subr.mxu0 0.0
  %2179 = vmatpush1.msra.mxu0 0.0
  %2180 = vmatprep.subr.mxu0 0.0
  %2181 = vmatpush1.msra.mxu0 0.0
  %2182 = vmatprep.subr.mxu0 0.0
  %2183 = vmatpush1.msra.mxu0 0.0
  %2184 = vmatprep.mubr.f32.mxu0 0.0
  %2185 = vmatmul.mubr.f32.gmra.mrb[0].mxu0 %v2118
  %v2186 = vpop.f32.mrb[0].mxu0
  %v2187 = vadd.f32 0.0, %v2186
  %v2188 = vpop.f32.mrb[0].mxu0
  %2189 = vdwg.mxu0
  %v2191 = vsel %vm1809, %v1891, 0
  %2193 = vmatprep.subr.mxu0 0.0
  %2194 = vmatpush1.msra.mxu0 %v1132
  %2195 = vmatprep.subr.mxu0 0.0
  %2196 = vmatpush1.msra.mxu0 0.0
  %2197 = vmatprep.subr.mxu0 0.0
  %2198 = vmatpush1.msra.mxu0 0.0
  %2199 = vmatprep.subr.mxu0 0.0
  %2200 = vmatpush1.msra.mxu0 0.0
  %2201 = vmatprep.subr.mxu0 0.0
  %2202 = vmatpush1.msra.mxu0 0.0
  %2203 = vmatprep.subr.mxu0 0.0
  %2204 = vmatpush1.msra.mxu0 0.0
  %2205 = vmatprep.subr.mxu0 0.0
  %2206 = vmatpush1.msra.mxu0 0.0
  %2207 = vmatprep.subr.mxu0 0.0
  %2208 = vmatpush1.msra.mxu0 0.0
  %2209 = vmatprep.subr.mxu0 0.0
  %2210 = vmatpush1.msra.mxu0 0.0
  %2211 = vmatprep.subr.mxu0 0.0
  %2212 = vmatpush1.msra.mxu0 0.0
  %2213 = vmatprep.subr.mxu0 0.0
  %2214 = vmatpush1.msra.mxu0 0.0
  %2215 = vmatprep.subr.mxu0 0.0
  %2216 = vmatpush1.msra.mxu0 0.0
  %2217 = vmatprep.subr.mxu0 0.0
  %2218 = vmatpush1.msra.mxu0 0.0
  %2219 = vmatprep.subr.mxu0 0.0
  %2220 = vmatpush1.msra.mxu0 0.0
  %2221 = vmatprep.subr.mxu0 0.0
  %2222 = vmatpush1.msra.mxu0 0.0
  %2223 = vmatprep.subr.mxu0 0.0
  %2224 = vmatpush1.msra.mxu0 0.0
  %2225 = vmatprep.subr.mxu0 0.0
  %2226 = vmatpush1.msra.mxu0 0.0
  %2227 = vmatprep.subr.mxu0 0.0
  %2228 = vmatpush1.msra.mxu0 0.0
  %2229 = vmatprep.subr.mxu0 0.0
  %2230 = vmatpush1.msra.mxu0 0.0
  %2231 = vmatprep.subr.mxu0 0.0
  %2232 = vmatpush1.msra.mxu0 0.0
  %2233 = vmatprep.subr.mxu0 0.0
  %2234 = vmatpush1.msra.mxu0 0.0
  %2235 = vmatprep.subr.mxu0 0.0
  %2236 = vmatpush1.msra.mxu0 0.0
  %2237 = vmatprep.subr.mxu0 0.0
  %2238 = vmatpush1.msra.mxu0 0.0
  %2239 = vmatprep.subr.mxu0 0.0
  %2240 = vmatpush1.msra.mxu0 0.0
  %2241 = vmatprep.subr.mxu0 0.0
  %2242 = vmatpush1.msra.mxu0 0.0
  %2243 = vmatprep.subr.mxu0 0.0
  %2244 = vmatpush1.msra.mxu0 0.0
  %2245 = vmatprep.subr.mxu0 0.0
  %2246 = vmatpush1.msra.mxu0 0.0
  %2247 = vmatprep.subr.mxu0 0.0
  %2248 = vmatpush1.msra.mxu0 0.0
  %2249 = vmatprep.subr.mxu0 0.0
  %2250 = vmatpush1.msra.mxu0 0.0
  %2251 = vmatprep.subr.mxu0 0.0
  %2252 = vmatpush1.msra.mxu0 0.0
  %2253 = vmatprep.subr.mxu0 0.0
  %2254 = vmatpush1.msra.mxu0 0.0
  %2255 = vmatprep.subr.mxu0 0.0
  %2256 = vmatpush1.msra.mxu0 0.0
  %2257 = vmatprep.mubr.f32.mxu0 0.0
  %2258 = vmatmul.mubr.f32.gmra.mrb[0].mxu0 %v2191
  %v2259 = vpop.f32.mrb[0].mxu0
  %v2260 = vadd.f32 0.0, %v2259
  %v2261 = vpop.f32.mrb[0].mxu0
  %2262 = vdwg.mxu0
  %v2264 = vsel %vm1809, %v1893, 0
  %2266 = vmatprep.subr.mxu0 0.0
  %2267 = vmatpush1.msra.mxu0 %v1133
  %2268 = vmatprep.subr.mxu0 0.0
  %2269 = vmatpush1.msra.mxu0 0.0
  %2270 = vmatprep.subr.mxu0 0.0
  %2271 = vmatpush1.msra.mxu0 0.0
  %2272 = vmatprep.subr.mxu0 0.0
  %2273 = vmatpush1.msra.mxu0 0.0
  %2274 = vmatprep.subr.mxu0 0.0
  %2275 = vmatpush1.msra.mxu0 0.0
  %2276 = vmatprep.subr.mxu0 0.0
  %2277 = vmatpush1.msra.mxu0 0.0
  %2278 = vmatprep.subr.mxu0 0.0
  %2279 = vmatpush1.msra.mxu0 0.0
  %2280 = vmatprep.subr.mxu0 0.0
  %2281 = vmatpush1.msra.mxu0 0.0
  %2282 = vmatprep.subr.mxu0 0.0
  %2283 = vmatpush1.msra.mxu0 0.0
  %2284 = vmatprep.subr.mxu0 0.0
  %2285 = vmatpush1.msra.mxu0 0.0
  %2286 = vmatprep.subr.mxu0 0.0
  %2287 = vmatpush1.msra.mxu0 0.0
  %2288 = vmatprep.subr.mxu0 0.0
  %2289 = vmatpush1.msra.mxu0 0.0
  %2290 = vmatprep.subr.mxu0 0.0
  %2291 = vmatpush1.msra.mxu0 0.0
  %2292 = vmatprep.subr.mxu0 0.0
  %2293 = vmatpush1.msra.mxu0 0.0
  %2294 = vmatprep.subr.mxu0 0.0
  %2295 = vmatpush1.msra.mxu0 0.0
  %2296 = vmatprep.subr.mxu0 0.0
  %2297 = vmatpush1.msra.mxu0 0.0
  %2298 = vmatprep.subr.mxu0 0.0
  %2299 = vmatpush1.msra.mxu0 0.0
  %2300 = vmatprep.subr.mxu0 0.0
  %2301 = vmatpush1.msra.mxu0 0.0
  %2302 = vmatprep.subr.mxu0 0.0
  %2303 = vmatpush1.msra.mxu0 0.0
  %2304 = vmatprep.subr.mxu0 0.0
  %2305 = vmatpush1.msra.mxu0 0.0
  %2306 = vmatprep.subr.mxu0 0.0
  %2307 = vmatpush1.msra.mxu0 0.0
  %2308 = vmatprep.subr.mxu0 0.0
  %2309 = vmatpush1.msra.mxu0 0.0
  %2310 = vmatprep.subr.mxu0 0.0
  %2311 = vmatpush1.msra.mxu0 0.0
  %2312 = vmatprep.subr.mxu0 0.0
  %2313 = vmatpush1.msra.mxu0 0.0
  %2314 = vmatprep.subr.mxu0 0.0
  %2315 = vmatpush1.msra.mxu0 0.0
  %2316 = vmatprep.subr.mxu0 0.0
  %2317 = vmatpush1.msra.mxu0 0.0
  %2318 = vmatprep.subr.mxu0 0.0
  %2319 = vmatpush1.msra.mxu0 0.0
  %2320 = vmatprep.subr.mxu0 0.0
  %2321 = vmatpush1.msra.mxu0 0.0
  %2322 = vmatprep.subr.mxu0 0.0
  %2323 = vmatpush1.msra.mxu0 0.0
  %2324 = vmatprep.subr.mxu0 0.0
  %2325 = vmatpush1.msra.mxu0 0.0
  %2326 = vmatprep.subr.mxu0 0.0
  %2327 = vmatpush1.msra.mxu0 0.0
  %2328 = vmatprep.subr.mxu0 0.0
  %2329 = vmatpush1.msra.mxu0 0.0
  %2330 = vmatprep.mubr.f32.mxu0 0.0
  %2331 = vmatmul.mubr.f32.gmra.mrb[0].mxu0 %v2264
  %v2332 = vpop.f32.mrb[0].mxu0
  %v2333 = vadd.f32 0.0, %v2332
  %v2334 = vpop.f32.mrb[0].mxu0
  %2335 = vdwg.mxu0
  %v2337 = vsel %vm1809, %v1895, 0
  %2339 = vmatprep.subr.mxu0 0.0
  %2340 = vmatpush1.msra.mxu0 %v1134
  %2341 = vmatprep.subr.mxu0 0.0
  %2342 = vmatpush1.msra.mxu0 0.0
  %2343 = vmatprep.subr.mxu0 0.0
  %2344 = vmatpush1.msra.mxu0 0.0
  %2345 = vmatprep.subr.mxu0 0.0
  %2346 = vmatpush1.msra.mxu0 0.0
  %2347 = vmatprep.subr.mxu0 0.0
  %2348 = vmatpush1.msra.mxu0 0.0
  %2349 = vmatprep.subr.mxu0 0.0
  %2350 = vmatpush1.msra.mxu0 0.0
  %2351 = vmatprep.subr.mxu0 0.0
  %2352 = vmatpush1.msra.mxu0 0.0
  %2353 = vmatprep.subr.mxu0 0.0
  %2354 = vmatpush1.msra.mxu0 0.0
  %2355 = vmatprep.subr.mxu0 0.0
  %2356 = vmatpush1.msra.mxu0 0.0
  %2357 = vmatprep.subr.mxu0 0.0
  %2358 = vmatpush1.msra.mxu0 0.0
  %2359 = vmatprep.subr.mxu0 0.0
  %2360 = vmatpush1.msra.mxu0 0.0
  %2361 = vmatprep.subr.mxu0 0.0
  %2362 = vmatpush1.msra.mxu0 0.0
  %2363 = vmatprep.subr.mxu0 0.0
  %2364 = vmatpush1.msra.mxu0 0.0
  %2365 = vmatprep.subr.mxu0 0.0
  %2366 = vmatpush1.msra.mxu0 0.0
  %2367 = vmatprep.subr.mxu0 0.0
  %2368 = vmatpush1.msra.mxu0 0.0
  %2369 = vmatprep.subr.mxu0 0.0
  %2370 = vmatpush1.msra.mxu0 0.0
  %2371 = vmatprep.subr.mxu0 0.0
  %2372 = vmatpush1.msra.mxu0 0.0
  %2373 = vmatprep.subr.mxu0 0.0
  %2374 = vmatpush1.msra.mxu0 0.0
  %2375 = vmatprep.subr.mxu0 0.0
  %2376 = vmatpush1.msra.mxu0 0.0
  %2377 = vmatprep.subr.mxu0 0.0
  %2378 = vmatpush1.msra.mxu0 0.0
  %2379 = vmatprep.subr.mxu0 0.0
  %2380 = vmatpush1.msra.mxu0 0.0
  %2381 = vmatprep.subr.mxu0 0.0
  %2382 = vmatpush1.msra.mxu0 0.0
  %2383 = vmatprep.subr.mxu0 0.0
  %2384 = vmatpush1.msra.mxu0 0.0
  %2385 = vmatprep.subr.mxu0 0.0
  %2386 = vmatpush1.msra.mxu0 0.0
  %2387 = vmatprep.subr.mxu0 0.0
  %2388 = vmatpush1.msra.mxu0 0.0
  %2389 = vmatprep.subr.mxu0 0.0
  %2390 = vmatpush1.msra.mxu0 0.0
  %2391 = vmatprep.subr.mxu0 0.0
  %2392 = vmatpush1.msra.mxu0 0.0
  %2393 = vmatprep.subr.mxu0 0.0
  %2394 = vmatpush1.msra.mxu0 0.0
  %2395 = vmatprep.subr.mxu0 0.0
  %2396 = vmatpush1.msra.mxu0 0.0
  %2397 = vmatprep.subr.mxu0 0.0
  %2398 = vmatpush1.msra.mxu0 0.0
  %2399 = vmatprep.subr.mxu0 0.0
  %2400 = vmatpush1.msra.mxu0 0.0
  %2401 = vmatprep.subr.mxu0 0.0
  %2402 = vmatpush1.msra.mxu0 0.0
  %2403 = vmatprep.mubr.f32.mxu0 0.0
  %2404 = vmatmul.mubr.f32.gmra.mrb[0].mxu0 %v2337
  %v2405 = vpop.f32.mrb[0].mxu0
  %v2406 = vadd.f32 0.0, %v2405
  %v2407 = vpop.f32.mrb[0].mxu0
  %2408 = vdwg.mxu0
  %v2410 = vsel %vm1809, %v1897, 0
  %2412 = vmatprep.subr.mxu0 0.0
  %2413 = vmatpush1.msra.mxu0 %v1135
  %2414 = vmatprep.subr.mxu0 0.0
  %2415 = vmatpush1.msra.mxu0 0.0
  %2416 = vmatprep.subr.mxu0 0.0
  %2417 = vmatpush1.msra.mxu0 0.0
  %2418 = vmatprep.subr.mxu0 0.0
  %2419 = vmatpush1.msra.mxu0 0.0
  %2420 = vmatprep.subr.mxu0 0.0
  %2421 = vmatpush1.msra.mxu0 0.0
  %2422 = vmatprep.subr.mxu0 0.0
  %2423 = vmatpush1.msra.mxu0 0.0
  %2424 = vmatprep.subr.mxu0 0.0
  %2425 = vmatpush1.msra.mxu0 0.0
  %2426 = vmatprep.subr.mxu0 0.0
  %2427 = vmatpush1.msra.mxu0 0.0
  %2428 = vmatprep.subr.mxu0 0.0
  %2429 = vmatpush1.msra.mxu0 0.0
  %2430 = vmatprep.subr.mxu0 0.0
  %2431 = vmatpush1.msra.mxu0 0.0
  %2432 = vmatprep.subr.mxu0 0.0
  %2433 = vmatpush1.msra.mxu0 0.0
  %2434 = vmatprep.subr.mxu0 0.0
  %2435 = vmatpush1.msra.mxu0 0.0
  %2436 = vmatprep.subr.mxu0 0.0
  %2437 = vmatpush1.msra.mxu0 0.0
  %2438 = vmatprep.subr.mxu0 0.0
  %2439 = vmatpush1.msra.mxu0 0.0
  %2440 = vmatprep.subr.mxu0 0.0
  %2441 = vmatpush1.msra.mxu0 0.0
  %2442 = vmatprep.subr.mxu0 0.0
  %2443 = vmatpush1.msra.mxu0 0.0
  %2444 = vmatprep.subr.mxu0 0.0
  %2445 = vmatpush1.msra.mxu0 0.0
  %2446 = vmatprep.subr.mxu0 0.0
  %2447 = vmatpush1.msra.mxu0 0.0
  %2448 = vmatprep.subr.mxu0 0.0
  %2449 = vmatpush1.msra.mxu0 0.0
  %2450 = vmatprep.subr.mxu0 0.0
  %2451 = vmatpush1.msra.mxu0 0.0
  %2452 = vmatprep.subr.mxu0 0.0
  %2453 = vmatpush1.msra.mxu0 0.0
  %2454 = vmatprep.subr.mxu0 0.0
  %2455 = vmatpush1.msra.mxu0 0.0
  %2456 = vmatprep.subr.mxu0 0.0
  %2457 = vmatpush1.msra.mxu0 0.0
  %2458 = vmatprep.subr.mxu0 0.0
  %2459 = vmatpush1.msra.mxu0 0.0
  %2460 = vmatprep.subr.mxu0 0.0
  %2461 = vmatpush1.msra.mxu0 0.0
  %2462 = vmatprep.subr.mxu0 0.0
  %2463 = vmatpush1.msra.mxu0 0.0
  %2464 = vmatprep.subr.mxu0 0.0
  %2465 = vmatpush1.msra.mxu0 0.0
  %2466 = vmatprep.subr.mxu0 0.0
  %2467 = vmatpush1.msra.mxu0 0.0
  %2468 = vmatprep.subr.mxu0 0.0
  %2469 = vmatpush1.msra.mxu0 0.0
  %2470 = vmatprep.subr.mxu0 0.0
  %2471 = vmatpush1.msra.mxu0 0.0
  %2472 = vmatprep.subr.mxu0 0.0
  %2473 = vmatpush1.msra.mxu0 0.0
  %2474 = vmatprep.subr.mxu0 0.0
  %2475 = vmatpush1.msra.mxu0 0.0
  %2476 = vmatprep.mubr.f32.mxu0 0.0
  %2477 = vmatmul.mubr.f32.gmra.mrb[0].mxu0 %v2410
  %v2478 = vpop.f32.mrb[0].mxu0
  %v2479 = vadd.f32 0.0, %v2478
  %v2480 = vpop.f32.mrb[0].mxu0
  %2481 = vdwg.mxu0
  %2482 = vrot.lane.b32.xlu0 %v361, 112
  %v2483 = vpop.permute.xlu0 %2482
  %v2484 = vsel %vm1200, %v2483, 0
  %2486 = vmatprep.subr.mxu0 0.0
  %2487 = vmatpush1.xpose.msra.mxu0 %v1205
  %2488 = vmatprep.subr.mxu0 0.0
  %2489 = vmatpush1.xpose.msra.mxu0 0.0
  %2490 = vmatprep.subr.mxu0 0.0
  %2491 = vmatpush1.xpose.msra.mxu0 0.0
  %2492 = vmatprep.subr.mxu0 0.0
  %2493 = vmatpush1.xpose.msra.mxu0 0.0
  %2494 = vmatprep.subr.mxu0 0.0
  %2495 = vmatpush1.xpose.msra.mxu0 0.0
  %2496 = vmatprep.subr.mxu0 0.0
  %2497 = vmatpush1.xpose.msra.mxu0 0.0
  %2498 = vmatprep.subr.mxu0 0.0
  %2499 = vmatpush1.xpose.msra.mxu0 0.0
  %2500 = vmatprep.subr.mxu0 0.0
  %2501 = vmatpush1.xpose.msra.mxu0 0.0
  %2502 = vmatprep.subr.mxu0 0.0
  %2503 = vmatpush1.xpose.msra.mxu0 0.0
  %2504 = vmatprep.subr.mxu0 0.0
  %2505 = vmatpush1.xpose.msra.mxu0 0.0
  %2506 = vmatprep.subr.mxu0 0.0
  %2507 = vmatpush1.xpose.msra.mxu0 0.0
  %2508 = vmatprep.subr.mxu0 0.0
  %2509 = vmatpush1.xpose.msra.mxu0 0.0
  %2510 = vmatprep.subr.mxu0 0.0
  %2511 = vmatpush1.xpose.msra.mxu0 0.0
  %2512 = vmatprep.subr.mxu0 0.0
  %2513 = vmatpush1.xpose.msra.mxu0 0.0
  %2514 = vmatprep.subr.mxu0 0.0
  %2515 = vmatpush1.xpose.msra.mxu0 0.0
  %2516 = vmatprep.subr.mxu0 0.0
  %2517 = vmatpush1.xpose.msra.mxu0 0.0
  %2518 = vmatprep.subr.mxu0 0.0
  %2519 = vmatpush1.xpose.msra.mxu0 0.0
  %2520 = vmatprep.subr.mxu0 0.0
  %2521 = vmatpush1.xpose.msra.mxu0 0.0
  %2522 = vmatprep.subr.mxu0 0.0
  %2523 = vmatpush1.xpose.msra.mxu0 0.0
  %2524 = vmatprep.subr.mxu0 0.0
  %2525 = vmatpush1.xpose.msra.mxu0 0.0
  %2526 = vmatprep.subr.mxu0 0.0
  %2527 = vmatpush1.xpose.msra.mxu0 0.0
  %2528 = vmatprep.subr.mxu0 0.0
  %2529 = vmatpush1.xpose.msra.mxu0 0.0
  %2530 = vmatprep.subr.mxu0 0.0
  %2531 = vmatpush1.xpose.msra.mxu0 0.0
  %2532 = vmatprep.subr.mxu0 0.0
  %2533 = vmatpush1.xpose.msra.mxu0 0.0
  %2534 = vmatprep.subr.mxu0 0.0
  %2535 = vmatpush1.xpose.msra.mxu0 0.0
  %2536 = vmatprep.subr.mxu0 0.0
  %2537 = vmatpush1.xpose.msra.mxu0 0.0
  %2538 = vmatprep.subr.mxu0 0.0
  %2539 = vmatpush1.xpose.msra.mxu0 0.0
  %2540 = vmatprep.subr.mxu0 0.0
  %2541 = vmatpush1.xpose.msra.mxu0 0.0
  %2542 = vmatprep.subr.mxu0 0.0
  %2543 = vmatpush1.xpose.msra.mxu0 0.0
  %2544 = vmatprep.subr.mxu0 0.0
  %2545 = vmatpush1.xpose.msra.mxu0 0.0
  %2546 = vmatprep.subr.mxu0 0.0
  %2547 = vmatpush1.xpose.msra.mxu0 0.0
  %2548 = vmatprep.subr.mxu0 0.0
  %2549 = vmatpush1.xpose.msra.mxu0 0.0
  %2550 = vmatprep.mubr.f32.mxu0 0.0
  %2551 = vmatmul.mubr.f32.gmra.mrb[0].mxu0 %v2484
  %v2552 = vpop.f32.mrb[0].mxu0
  %v2553 = vadd.f32 %v1163, %v2552
  %v2554 = vpop.f32.mrb[0].mxu0
  %2555 = vdwg.mxu0
  %2556 = vrot.lane.b32.xlu0 %v366, 112
  %v2557 = vpop.permute.xlu0 %2556
  %v2558 = vsel %vm1200, %v2557, 0
  %2560 = vmatprep.subr.mxu0 0.0
  %2561 = vmatpush1.xpose.msra.mxu0 %v1281
  %2562 = vmatprep.subr.mxu0 0.0
  %2563 = vmatpush1.xpose.msra.mxu0 0.0
  %2564 = vmatprep.subr.mxu0 0.0
  %2565 = vmatpush1.xpose.msra.mxu0 0.0
  %2566 = vmatprep.subr.mxu0 0.0
  %2567 = vmatpush1.xpose.msra.mxu0 0.0
  %2568 = vmatprep.subr.mxu0 0.0
  %2569 = vmatpush1.xpose.msra.mxu0 0.0
  %2570 = vmatprep.subr.mxu0 0.0
  %2571 = vmatpush1.xpose.msra.mxu0 0.0
  %2572 = vmatprep.subr.mxu0 0.0
  %2573 = vmatpush1.xpose.msra.mxu0 0.0
  %2574 = vmatprep.subr.mxu0 0.0
  %2575 = vmatpush1.xpose.msra.mxu0 0.0
  %2576 = vmatprep.subr.mxu0 0.0
  %2577 = vmatpush1.xpose.msra.mxu0 0.0
  %2578 = vmatprep.subr.mxu0 0.0
  %2579 = vmatpush1.xpose.msra.mxu0 0.0
  %2580 = vmatprep.subr.mxu0 0.0
  %2581 = vmatpush1.xpose.msra.mxu0 0.0
  %2582 = vmatprep.subr.mxu0 0.0
  %2583 = vmatpush1.xpose.msra.mxu0 0.0
  %2584 = vmatprep.subr.mxu0 0.0
  %2585 = vmatpush1.xpose.msra.mxu0 0.0
  %2586 = vmatprep.subr.mxu0 0.0
  %2587 = vmatpush1.xpose.msra.mxu0 0.0
  %2588 = vmatprep.subr.mxu0 0.0
  %2589 = vmatpush1.xpose.msra.mxu0 0.0
  %2590 = vmatprep.subr.mxu0 0.0
  %2591 = vmatpush1.xpose.msra.mxu0 0.0
  %2592 = vmatprep.subr.mxu0 0.0
  %2593 = vmatpush1.xpose.msra.mxu0 0.0
  %2594 = vmatprep.subr.mxu0 0.0
  %2595 = vmatpush1.xpose.msra.mxu0 0.0
  %2596 = vmatprep.subr.mxu0 0.0
  %2597 = vmatpush1.xpose.msra.mxu0 0.0
  %2598 = vmatprep.subr.mxu0 0.0
  %2599 = vmatpush1.xpose.msra.mxu0 0.0
  %2600 = vmatprep.subr.mxu0 0.0
  %2601 = vmatpush1.xpose.msra.mxu0 0.0
  %2602 = vmatprep.subr.mxu0 0.0
  %2603 = vmatpush1.xpose.msra.mxu0 0.0
  %2604 = vmatprep.subr.mxu0 0.0
  %2605 = vmatpush1.xpose.msra.mxu0 0.0
  %2606 = vmatprep.subr.mxu0 0.0
  %2607 = vmatpush1.xpose.msra.mxu0 0.0
  %2608 = vmatprep.subr.mxu0 0.0
  %2609 = vmatpush1.xpose.msra.mxu0 0.0
  %2610 = vmatprep.subr.mxu0 0.0
  %2611 = vmatpush1.xpose.msra.mxu0 0.0
  %2612 = vmatprep.subr.mxu0 0.0
  %2613 = vmatpush1.xpose.msra.mxu0 0.0
  %2614 = vmatprep.subr.mxu0 0.0
  %2615 = vmatpush1.xpose.msra.mxu0 0.0
  %2616 = vmatprep.subr.mxu0 0.0
  %2617 = vmatpush1.xpose.msra.mxu0 0.0
  %2618 = vmatprep.subr.mxu0 0.0
  %2619 = vmatpush1.xpose.msra.mxu0 0.0
  %2620 = vmatprep.subr.mxu0 0.0
  %2621 = vmatpush1.xpose.msra.mxu0 0.0
  %2622 = vmatprep.subr.mxu0 0.0
  %2623 = vmatpush1.xpose.msra.mxu0 0.0
  %2624 = vmatprep.mubr.f32.mxu0 0.0
  %2625 = vmatmul.mubr.f32.gmra.mrb[0].mxu0 %v2558
  %v2626 = vpop.f32.mrb[0].mxu0
  %v2627 = vadd.f32 %v1167, %v2626
  %v2628 = vpop.f32.mrb[0].mxu0
  %2629 = vdwg.mxu0
  %2630 = vrot.lane.b32.xlu0 %v371, 112
  %v2631 = vpop.permute.xlu0 %2630
  %v2632 = vsel %vm1200, %v2631, 0
  %2634 = vmatprep.subr.mxu0 0.0
  %2635 = vmatpush1.xpose.msra.mxu0 %v1357
  %2636 = vmatprep.subr.mxu0 0.0
  %2637 = vmatpush1.xpose.msra.mxu0 0.0
  %2638 = vmatprep.subr.mxu0 0.0
  %2639 = vmatpush1.xpose.msra.mxu0 0.0
  %2640 = vmatprep.subr.mxu0 0.0
  %2641 = vmatpush1.xpose.msra.mxu0 0.0
  %2642 = vmatprep.subr.mxu0 0.0
  %2643 = vmatpush1.xpose.msra.mxu0 0.0
  %2644 = vmatprep.subr.mxu0 0.0
  %2645 = vmatpush1.xpose.msra.mxu0 0.0
  %2646 = vmatprep.subr.mxu0 0.0
  %2647 = vmatpush1.xpose.msra.mxu0 0.0
  %2648 = vmatprep.subr.mxu0 0.0
  %2649 = vmatpush1.xpose.msra.mxu0 0.0
  %2650 = vmatprep.subr.mxu0 0.0
  %2651 = vmatpush1.xpose.msra.mxu0 0.0
  %2652 = vmatprep.subr.mxu0 0.0
  %2653 = vmatpush1.xpose.msra.mxu0 0.0
  %2654 = vmatprep.subr.mxu0 0.0
  %2655 = vmatpush1.xpose.msra.mxu0 0.0
  %2656 = vmatprep.subr.mxu0 0.0
  %2657 = vmatpush1.xpose.msra.mxu0 0.0
  %2658 = vmatprep.subr.mxu0 0.0
  %2659 = vmatpush1.xpose.msra.mxu0 0.0
  %2660 = vmatprep.subr.mxu0 0.0
  %2661 = vmatpush1.xpose.msra.mxu0 0.0
  %2662 = vmatprep.subr.mxu0 0.0
  %2663 = vmatpush1.xpose.msra.mxu0 0.0
  %2664 = vmatprep.subr.mxu0 0.0
  %2665 = vmatpush1.xpose.msra.mxu0 0.0
  %2666 = vmatprep.subr.mxu0 0.0
  %2667 = vmatpush1.xpose.msra.mxu0 0.0
  %2668 = vmatprep.subr.mxu0 0.0
  %2669 = vmatpush1.xpose.msra.mxu0 0.0
  %2670 = vmatprep.subr.mxu0 0.0
  %2671 = vmatpush1.xpose.msra.mxu0 0.0
  %2672 = vmatprep.subr.mxu0 0.0
  %2673 = vmatpush1.xpose.msra.mxu0 0.0
  %2674 = vmatprep.subr.mxu0 0.0
  %2675 = vmatpush1.xpose.msra.mxu0 0.0
  %2676 = vmatprep.subr.mxu0 0.0
  %2677 = vmatpush1.xpose.msra.mxu0 0.0
  %2678 = vmatprep.subr.mxu0 0.0
  %2679 = vmatpush1.xpose.msra.mxu0 0.0
  %2680 = vmatprep.subr.mxu0 0.0
  %2681 = vmatpush1.xpose.msra.mxu0 0.0
  %2682 = vmatprep.subr.mxu0 0.0
  %2683 = vmatpush1.xpose.msra.mxu0 0.0
  %2684 = vmatprep.subr.mxu0 0.0
  %2685 = vmatpush1.xpose.msra.mxu0 0.0
  %2686 = vmatprep.subr.mxu0 0.0
  %2687 = vmatpush1.xpose.msra.mxu0 0.0
  %2688 = vmatprep.subr.mxu0 0.0
  %2689 = vmatpush1.xpose.msra.mxu0 0.0
  %2690 = vmatprep.subr.mxu0 0.0
  %2691 = vmatpush1.xpose.msra.mxu0 0.0
  %2692 = vmatprep.subr.mxu0 0.0
  %2693 = vmatpush1.xpose.msra.mxu0 0.0
  %2694 = vmatprep.subr.mxu0 0.0
  %2695 = vmatpush1.xpose.msra.mxu0 0.0
  %2696 = vmatprep.subr.mxu0 0.0
  %2697 = vmatpush1.xpose.msra.mxu0 0.0
  %2698 = vmatprep.mubr.f32.mxu0 0.0
  %2699 = vmatmul.mubr.f32.gmra.mrb[0].mxu0 %v2632
  %v2700 = vpop.f32.mrb[0].mxu0
  %v2701 = vadd.f32 %v1171, %v2700
  %v2702 = vpop.f32.mrb[0].mxu0
  %2703 = vdwg.mxu0
  %2704 = vrot.lane.b32.xlu0 %v376, 112
  %v2705 = vpop.permute.xlu0 %2704
  %v2706 = vsel %vm1200, %v2705, 0
  %2708 = vmatprep.subr.mxu0 0.0
  %2709 = vmatpush1.xpose.msra.mxu0 %v1433
  %2710 = vmatprep.subr.mxu0 0.0
  %2711 = vmatpush1.xpose.msra.mxu0 0.0
  %2712 = vmatprep.subr.mxu0 0.0
  %2713 = vmatpush1.xpose.msra.mxu0 0.0
  %2714 = vmatprep.subr.mxu0 0.0
  %2715 = vmatpush1.xpose.msra.mxu0 0.0
  %2716 = vmatprep.subr.mxu0 0.0
  %2717 = vmatpush1.xpose.msra.mxu0 0.0
  %2718 = vmatprep.subr.mxu0 0.0
  %2719 = vmatpush1.xpose.msra.mxu0 0.0
  %2720 = vmatprep.subr.mxu0 0.0
  %2721 = vmatpush1.xpose.msra.mxu0 0.0
  %2722 = vmatprep.subr.mxu0 0.0
  %2723 = vmatpush1.xpose.msra.mxu0 0.0
  %2724 = vmatprep.subr.mxu0 0.0
  %2725 = vmatpush1.xpose.msra.mxu0 0.0
  %2726 = vmatprep.subr.mxu0 0.0
  %2727 = vmatpush1.xpose.msra.mxu0 0.0
  %2728 = vmatprep.subr.mxu0 0.0
  %2729 = vmatpush1.xpose.msra.mxu0 0.0
  %2730 = vmatprep.subr.mxu0 0.0
  %2731 = vmatpush1.xpose.msra.mxu0 0.0
  %2732 = vmatprep.subr.mxu0 0.0
  %2733 = vmatpush1.xpose.msra.mxu0 0.0
  %2734 = vmatprep.subr.mxu0 0.0
  %2735 = vmatpush1.xpose.msra.mxu0 0.0
  %2736 = vmatprep.subr.mxu0 0.0
  %2737 = vmatpush1.xpose.msra.mxu0 0.0
  %2738 = vmatprep.subr.mxu0 0.0
  %2739 = vmatpush1.xpose.msra.mxu0 0.0
  %2740 = vmatprep.subr.mxu0 0.0
  %2741 = vmatpush1.xpose.msra.mxu0 0.0
  %2742 = vmatprep.subr.mxu0 0.0
  %2743 = vmatpush1.xpose.msra.mxu0 0.0
  %2744 = vmatprep.subr.mxu0 0.0
  %2745 = vmatpush1.xpose.msra.mxu0 0.0
  %2746 = vmatprep.subr.mxu0 0.0
  %2747 = vmatpush1.xpose.msra.mxu0 0.0
  %2748 = vmatprep.subr.mxu0 0.0
  %2749 = vmatpush1.xpose.msra.mxu0 0.0
  %2750 = vmatprep.subr.mxu0 0.0
  %2751 = vmatpush1.xpose.msra.mxu0 0.0
  %2752 = vmatprep.subr.mxu0 0.0
  %2753 = vmatpush1.xpose.msra.mxu0 0.0
  %2754 = vmatprep.subr.mxu0 0.0
  %2755 = vmatpush1.xpose.msra.mxu0 0.0
  %2756 = vmatprep.subr.mxu0 0.0
  %2757 = vmatpush1.xpose.msra.mxu0 0.0
  %2758 = vmatprep.subr.mxu0 0.0
  %2759 = vmatpush1.xpose.msra.mxu0 0.0
  %2760 = vmatprep.subr.mxu0 0.0
  %2761 = vmatpush1.xpose.msra.mxu0 0.0
  %2762 = vmatprep.subr.mxu0 0.0
  %2763 = vmatpush1.xpose.msra.mxu0 0.0
  %2764 = vmatprep.subr.mxu0 0.0
  %2765 = vmatpush1.xpose.msra.mxu0 0.0
  %2766 = vmatprep.subr.mxu0 0.0
  %2767 = vmatpush1.xpose.msra.mxu0 0.0
  %2768 = vmatprep.subr.mxu0 0.0
  %2769 = vmatpush1.xpose.msra.mxu0 0.0
  %2770 = vmatprep.subr.mxu0 0.0
  %2771 = vmatpush1.xpose.msra.mxu0 0.0
  %2772 = vmatprep.mubr.f32.mxu0 0.0
  %2773 = vmatmul.mubr.f32.gmra.mrb[0].mxu0 %v2706
  %v2774 = vpop.f32.mrb[0].mxu0
  %v2775 = vadd.f32 %v1175, %v2774
  %v2776 = vpop.f32.mrb[0].mxu0
  %2777 = vdwg.mxu0
  %2778 = vrot.lane.b32.xlu0 %v381, 112
  %v2779 = vpop.permute.xlu0 %2778
  %v2780 = vsel %vm1200, %v2779, 0
  %2782 = vmatprep.subr.mxu0 0.0
  %2783 = vmatpush1.xpose.msra.mxu0 %v1509
  %2784 = vmatprep.subr.mxu0 0.0
  %2785 = vmatpush1.xpose.msra.mxu0 0.0
  %2786 = vmatprep.subr.mxu0 0.0
  %2787 = vmatpush1.xpose.msra.mxu0 0.0
  %2788 = vmatprep.subr.mxu0 0.0
  %2789 = vmatpush1.xpose.msra.mxu0 0.0
  %2790 = vmatprep.subr.mxu0 0.0
  %2791 = vmatpush1.xpose.msra.mxu0 0.0
  %2792 = vmatprep.subr.mxu0 0.0
  %2793 = vmatpush1.xpose.msra.mxu0 0.0
  %2794 = vmatprep.subr.mxu0 0.0
  %2795 = vmatpush1.xpose.msra.mxu0 0.0
  %2796 = vmatprep.subr.mxu0 0.0
  %2797 = vmatpush1.xpose.msra.mxu0 0.0
  %2798 = vmatprep.subr.mxu0 0.0
  %2799 = vmatpush1.xpose.msra.mxu0 0.0
  %2800 = vmatprep.subr.mxu0 0.0
  %2801 = vmatpush1.xpose.msra.mxu0 0.0
  %2802 = vmatprep.subr.mxu0 0.0
  %2803 = vmatpush1.xpose.msra.mxu0 0.0
  %2804 = vmatprep.subr.mxu0 0.0
  %2805 = vmatpush1.xpose.msra.mxu0 0.0
  %2806 = vmatprep.subr.mxu0 0.0
  %2807 = vmatpush1.xpose.msra.mxu0 0.0
  %2808 = vmatprep.subr.mxu0 0.0
  %2809 = vmatpush1.xpose.msra.mxu0 0.0
  %2810 = vmatprep.subr.mxu0 0.0
  %2811 = vmatpush1.xpose.msra.mxu0 0.0
  %2812 = vmatprep.subr.mxu0 0.0
  %2813 = vmatpush1.xpose.msra.mxu0 0.0
  %2814 = vmatprep.subr.mxu0 0.0
  %2815 = vmatpush1.xpose.msra.mxu0 0.0
  %2816 = vmatprep.subr.mxu0 0.0
  %2817 = vmatpush1.xpose.msra.mxu0 0.0
  %2818 = vmatprep.subr.mxu0 0.0
  %2819 = vmatpush1.xpose.msra.mxu0 0.0
  %2820 = vmatprep.subr.mxu0 0.0
  %2821 = vmatpush1.xpose.msra.mxu0 0.0
  %2822 = vmatprep.subr.mxu0 0.0
  %2823 = vmatpush1.xpose.msra.mxu0 0.0
  %2824 = vmatprep.subr.mxu0 0.0
  %2825 = vmatpush1.xpose.msra.mxu0 0.0
  %2826 = vmatprep.subr.mxu0 0.0
  %2827 = vmatpush1.xpose.msra.mxu0 0.0
  %2828 = vmatprep.subr.mxu0 0.0
  %2829 = vmatpush1.xpose.msra.mxu0 0.0
  %2830 = vmatprep.subr.mxu0 0.0
  %2831 = vmatpush1.xpose.msra.mxu0 0.0
  %2832 = vmatprep.subr.mxu0 0.0
  %2833 = vmatpush1.xpose.msra.mxu0 0.0
  %2834 = vmatprep.subr.mxu0 0.0
  %2835 = vmatpush1.xpose.msra.mxu0 0.0
  %2836 = vmatprep.subr.mxu0 0.0
  %2837 = vmatpush1.xpose.msra.mxu0 0.0
  %2838 = vmatprep.subr.mxu0 0.0
  %2839 = vmatpush1.xpose.msra.mxu0 0.0
  %2840 = vmatprep.subr.mxu0 0.0
  %2841 = vmatpush1.xpose.msra.mxu0 0.0
  %2842 = vmatprep.subr.mxu0 0.0
  %2843 = vmatpush1.xpose.msra.mxu0 0.0
  %2844 = vmatprep.subr.mxu0 0.0
  %2845 = vmatpush1.xpose.msra.mxu0 0.0
  %2846 = vmatprep.mubr.f32.mxu0 0.0
  %2847 = vmatmul.mubr.f32.gmra.mrb[0].mxu0 %v2780
  %v2848 = vpop.f32.mrb[0].mxu0
  %v2849 = vadd.f32 %v1179, %v2848
  %v2850 = vpop.f32.mrb[0].mxu0
  %2851 = vdwg.mxu0
  %2852 = vrot.lane.b32.xlu0 %v386, 112
  %v2853 = vpop.permute.xlu0 %2852
  %v2854 = vsel %vm1200, %v2853, 0
  %2856 = vmatprep.subr.mxu0 0.0
  %2857 = vmatpush1.xpose.msra.mxu0 %v1585
  %2858 = vmatprep.subr.mxu0 0.0
  %2859 = vmatpush1.xpose.msra.mxu0 0.0
  %2860 = vmatprep.subr.mxu0 0.0
  %2861 = vmatpush1.xpose.msra.mxu0 0.0
  %2862 = vmatprep.subr.mxu0 0.0
  %2863 = vmatpush1.xpose.msra.mxu0 0.0
  %2864 = vmatprep.subr.mxu0 0.0
  %2865 = vmatpush1.xpose.msra.mxu0 0.0
  %2866 = vmatprep.subr.mxu0 0.0
  %2867 = vmatpush1.xpose.msra.mxu0 0.0
  %2868 = vmatprep.subr.mxu0 0.0
  %2869 = vmatpush1.xpose.msra.mxu0 0.0
  %2870 = vmatprep.subr.mxu0 0.0
  %2871 = vmatpush1.xpose.msra.mxu0 0.0
  %2872 = vmatprep.subr.mxu0 0.0
  %2873 = vmatpush1.xpose.msra.mxu0 0.0
  %2874 = vmatprep.subr.mxu0 0.0
  %2875 = vmatpush1.xpose.msra.mxu0 0.0
  %2876 = vmatprep.subr.mxu0 0.0
  %2877 = vmatpush1.xpose.msra.mxu0 0.0
  %2878 = vmatprep.subr.mxu0 0.0
  %2879 = vmatpush1.xpose.msra.mxu0 0.0
  %2880 = vmatprep.subr.mxu0 0.0
  %2881 = vmatpush1.xpose.msra.mxu0 0.0
  %2882 = vmatprep.subr.mxu0 0.0
  %2883 = vmatpush1.xpose.msra.mxu0 0.0
  %2884 = vmatprep.subr.mxu0 0.0
  %2885 = vmatpush1.xpose.msra.mxu0 0.0
  %2886 = vmatprep.subr.mxu0 0.0
  %2887 = vmatpush1.xpose.msra.mxu0 0.0
  %2888 = vmatprep.subr.mxu0 0.0
  %2889 = vmatpush1.xpose.msra.mxu0 0.0
  %2890 = vmatprep.subr.mxu0 0.0
  %2891 = vmatpush1.xpose.msra.mxu0 0.0
  %2892 = vmatprep.subr.mxu0 0.0
  %2893 = vmatpush1.xpose.msra.mxu0 0.0
  %2894 = vmatprep.subr.mxu0 0.0
  %2895 = vmatpush1.xpose.msra.mxu0 0.0
  %2896 = vmatprep.subr.mxu0 0.0
  %2897 = vmatpush1.xpose.msra.mxu0 0.0
  %2898 = vmatprep.subr.mxu0 0.0
  %2899 = vmatpush1.xpose.msra.mxu0 0.0
  %2900 = vmatprep.subr.mxu0 0.0
  %2901 = vmatpush1.xpose.msra.mxu0 0.0
  %2902 = vmatprep.subr.mxu0 0.0
  %2903 = vmatpush1.xpose.msra.mxu0 0.0
  %2904 = vmatprep.subr.mxu0 0.0
  %2905 = vmatpush1.xpose.msra.mxu0 0.0
  %2906 = vmatprep.subr.mxu0 0.0
  %2907 = vmatpush1.xpose.msra.mxu0 0.0
  %2908 = vmatprep.subr.mxu0 0.0
  %2909 = vmatpush1.xpose.msra.mxu0 0.0
  %2910 = vmatprep.subr.mxu0 0.0
  %2911 = vmatpush1.xpose.msra.mxu0 0.0
  %2912 = vmatprep.subr.mxu0 0.0
  %2913 = vmatpush1.xpose.msra.mxu0 0.0
  %2914 = vmatprep.subr.mxu0 0.0
  %2915 = vmatpush1.xpose.msra.mxu0 0.0
  %2916 = vmatprep.subr.mxu0 0.0
  %2917 = vmatpush1.xpose.msra.mxu0 0.0
  %2918 = vmatprep.subr.mxu0 0.0
  %2919 = vmatpush1.xpose.msra.mxu0 0.0
  %2920 = vmatprep.mubr.f32.mxu0 0.0
  %2921 = vmatmul.mubr.f32.gmra.mrb[0].mxu0 %v2854
  %v2922 = vpop.f32.mrb[0].mxu0
  %v2923 = vadd.f32 %v1183, %v2922
  %v2924 = vpop.f32.mrb[0].mxu0
  %2925 = vdwg.mxu0
  %2926 = vrot.lane.b32.xlu0 %v391, 112
  %v2927 = vpop.permute.xlu0 %2926
  %v2928 = vsel %vm1200, %v2927, 0
  %2930 = vmatprep.subr.mxu0 0.0
  %2931 = vmatpush1.xpose.msra.mxu0 %v1661
  %2932 = vmatprep.subr.mxu0 0.0
  %2933 = vmatpush1.xpose.msra.mxu0 0.0
  %2934 = vmatprep.subr.mxu0 0.0
  %2935 = vmatpush1.xpose.msra.mxu0 0.0
  %2936 = vmatprep.subr.mxu0 0.0
  %2937 = vmatpush1.xpose.msra.mxu0 0.0
  %2938 = vmatprep.subr.mxu0 0.0
  %2939 = vmatpush1.xpose.msra.mxu0 0.0
  %2940 = vmatprep.subr.mxu0 0.0
  %2941 = vmatpush1.xpose.msra.mxu0 0.0
  %2942 = vmatprep.subr.mxu0 0.0
  %2943 = vmatpush1.xpose.msra.mxu0 0.0
  %2944 = vmatprep.subr.mxu0 0.0
  %2945 = vmatpush1.xpose.msra.mxu0 0.0
  %2946 = vmatprep.subr.mxu0 0.0
  %2947 = vmatpush1.xpose.msra.mxu0 0.0
  %2948 = vmatprep.subr.mxu0 0.0
  %2949 = vmatpush1.xpose.msra.mxu0 0.0
  %2950 = vmatprep.subr.mxu0 0.0
  %2951 = vmatpush1.xpose.msra.mxu0 0.0
  %2952 = vmatprep.subr.mxu0 0.0
  %2953 = vmatpush1.xpose.msra.mxu0 0.0
  %2954 = vmatprep.subr.mxu0 0.0
  %2955 = vmatpush1.xpose.msra.mxu0 0.0
  %2956 = vmatprep.subr.mxu0 0.0
  %2957 = vmatpush1.xpose.msra.mxu0 0.0
  %2958 = vmatprep.subr.mxu0 0.0
  %2959 = vmatpush1.xpose.msra.mxu0 0.0
  %2960 = vmatprep.subr.mxu0 0.0
  %2961 = vmatpush1.xpose.msra.mxu0 0.0
  %2962 = vmatprep.subr.mxu0 0.0
  %2963 = vmatpush1.xpose.msra.mxu0 0.0
  %2964 = vmatprep.subr.mxu0 0.0
  %2965 = vmatpush1.xpose.msra.mxu0 0.0
  %2966 = vmatprep.subr.mxu0 0.0
  %2967 = vmatpush1.xpose.msra.mxu0 0.0
  %2968 = vmatprep.subr.mxu0 0.0
  %2969 = vmatpush1.xpose.msra.mxu0 0.0
  %2970 = vmatprep.subr.mxu0 0.0
  %2971 = vmatpush1.xpose.msra.mxu0 0.0
  %2972 = vmatprep.subr.mxu0 0.0
  %2973 = vmatpush1.xpose.msra.mxu0 0.0
  %2974 = vmatprep.subr.mxu0 0.0
  %2975 = vmatpush1.xpose.msra.mxu0 0.0
  %2976 = vmatprep.subr.mxu0 0.0
  %2977 = vmatpush1.xpose.msra.mxu0 0.0
  %2978 = vmatprep.subr.mxu0 0.0
  %2979 = vmatpush1.xpose.msra.mxu0 0.0
  %2980 = vmatprep.subr.mxu0 0.0
  %2981 = vmatpush1.xpose.msra.mxu0 0.0
  %2982 = vmatprep.subr.mxu0 0.0
  %2983 = vmatpush1.xpose.msra.mxu0 0.0
  %2984 = vmatprep.subr.mxu0 0.0
  %2985 = vmatpush1.xpose.msra.mxu0 0.0
  %2986 = vmatprep.subr.mxu0 0.0
  %2987 = vmatpush1.xpose.msra.mxu0 0.0
  %2988 = vmatprep.subr.mxu0 0.0
  %2989 = vmatpush1.xpose.msra.mxu0 0.0
  %2990 = vmatprep.subr.mxu0 0.0
  %2991 = vmatpush1.xpose.msra.mxu0 0.0
  %2992 = vmatprep.subr.mxu0 0.0
  %2993 = vmatpush1.xpose.msra.mxu0 0.0
  %2994 = vmatprep.mubr.f32.mxu0 0.0
  %2995 = vmatmul.mubr.f32.gmra.mrb[0].mxu0 %v2928
  %v2996 = vpop.f32.mrb[0].mxu0
  %v2997 = vadd.f32 %v1187, %v2996
  %v2998 = vpop.f32.mrb[0].mxu0
  %2999 = vdwg.mxu0
  %3000 = vrot.lane.b32.xlu0 %v396, 112
  %v3001 = vpop.permute.xlu0 %3000
  %v3002 = vsel %vm1200, %v3001, 0
  %3004 = vmatprep.subr.mxu0 0.0
  %3005 = vmatpush1.xpose.msra.mxu0 %v1737
  %3006 = vmatprep.subr.mxu0 0.0
  %3007 = vmatpush1.xpose.msra.mxu0 0.0
  %3008 = vmatprep.subr.mxu0 0.0
  %3009 = vmatpush1.xpose.msra.mxu0 0.0
  %3010 = vmatprep.subr.mxu0 0.0
  %3011 = vmatpush1.xpose.msra.mxu0 0.0
  %3012 = vmatprep.subr.mxu0 0.0
  %3013 = vmatpush1.xpose.msra.mxu0 0.0
  %3014 = vmatprep.subr.mxu0 0.0
  %3015 = vmatpush1.xpose.msra.mxu0 0.0
  %3016 = vmatprep.subr.mxu0 0.0
  %3017 = vmatpush1.xpose.msra.mxu0 0.0
  %3018 = vmatprep.subr.mxu0 0.0
  %3019 = vmatpush1.xpose.msra.mxu0 0.0
  %3020 = vmatprep.subr.mxu0 0.0
  %3021 = vmatpush1.xpose.msra.mxu0 0.0
  %3022 = vmatprep.subr.mxu0 0.0
  %3023 = vmatpush1.xpose.msra.mxu0 0.0
  %3024 = vmatprep.subr.mxu0 0.0
  %3025 = vmatpush1.xpose.msra.mxu0 0.0
  %3026 = vmatprep.subr.mxu0 0.0
  %3027 = vmatpush1.xpose.msra.mxu0 0.0
  %3028 = vmatprep.subr.mxu0 0.0
  %3029 = vmatpush1.xpose.msra.mxu0 0.0
  %3030 = vmatprep.subr.mxu0 0.0
  %3031 = vmatpush1.xpose.msra.mxu0 0.0
  %3032 = vmatprep.subr.mxu0 0.0
  %3033 = vmatpush1.xpose.msra.mxu0 0.0
  %3034 = vmatprep.subr.mxu0 0.0
  %3035 = vmatpush1.xpose.msra.mxu0 0.0
  %3036 = vmatprep.subr.mxu0 0.0
  %3037 = vmatpush1.xpose.msra.mxu0 0.0
  %3038 = vmatprep.subr.mxu0 0.0
  %3039 = vmatpush1.xpose.msra.mxu0 0.0
  %3040 = vmatprep.subr.mxu0 0.0
  %3041 = vmatpush1.xpose.msra.mxu0 0.0
  %3042 = vmatprep.subr.mxu0 0.0
  %3043 = vmatpush1.xpose.msra.mxu0 0.0
  %3044 = vmatprep.subr.mxu0 0.0
  %3045 = vmatpush1.xpose.msra.mxu0 0.0
  %3046 = vmatprep.subr.mxu0 0.0
  %3047 = vmatpush1.xpose.msra.mxu0 0.0
  %3048 = vmatprep.subr.mxu0 0.0
  %3049 = vmatpush1.xpose.msra.mxu0 0.0
  %3050 = vmatprep.subr.mxu0 0.0
  %3051 = vmatpush1.xpose.msra.mxu0 0.0
  %3052 = vmatprep.subr.mxu0 0.0
  %3053 = vmatpush1.xpose.msra.mxu0 0.0
  %3054 = vmatprep.subr.mxu0 0.0
  %3055 = vmatpush1.xpose.msra.mxu0 0.0
  %3056 = vmatprep.subr.mxu0 0.0
  %3057 = vmatpush1.xpose.msra.mxu0 0.0
  %3058 = vmatprep.subr.mxu0 0.0
  %3059 = vmatpush1.xpose.msra.mxu0 0.0
  %3060 = vmatprep.subr.mxu0 0.0
  %3061 = vmatpush1.xpose.msra.mxu0 0.0
  %3062 = vmatprep.subr.mxu0 0.0
  %3063 = vmatpush1.xpose.msra.mxu0 0.0
  %3064 = vmatprep.subr.mxu0 0.0
  %3065 = vmatpush1.xpose.msra.mxu0 0.0
  %3066 = vmatprep.subr.mxu0 0.0
  %3067 = vmatpush1.xpose.msra.mxu0 0.0
  %3068 = vmatprep.mubr.f32.mxu0 0.0
  %3069 = vmatmul.mubr.f32.gmra.mrb[0].mxu0 %v3002
  %v3070 = vpop.f32.mrb[0].mxu0
  %v3071 = vadd.f32 %v1191, %v3070
  %v3072 = vpop.f32.mrb[0].mxu0
  %3073 = vdwg.mxu0
  %v3074 = vsel %vm1809, %v2553, -inf
  %3075 = vmax.xlane.f32.xlu0 %v3074
  %v3076 = vpop.xlane.xlu0 %3075
  %v3077 = vsel %vm1809, %v2627, -inf
  %3078 = vmax.xlane.f32.xlu0 %v3077
  %v3079 = vpop.xlane.xlu0 %3078
  %v3080 = vsel %vm1809, %v2701, -inf
  %3081 = vmax.xlane.f32.xlu0 %v3080
  %v3082 = vpop.xlane.xlu0 %3081
  %v3083 = vsel %vm1809, %v2775, -inf
  %3084 = vmax.xlane.f32.xlu0 %v3083
  %v3085 = vpop.xlane.xlu0 %3084
  %v3086 = vsel %vm1809, %v2849, -inf
  %3087 = vmax.xlane.f32.xlu0 %v3086
  %v3088 = vpop.xlane.xlu0 %3087
  %v3089 = vsel %vm1809, %v2923, -inf
  %3090 = vmax.xlane.f32.xlu0 %v3089
  %v3091 = vpop.xlane.xlu0 %3090
  %v3092 = vsel %vm1809, %v2997, -inf
  %3093 = vmax.xlane.f32.xlu0 %v3092
  %v3094 = vpop.xlane.xlu0 %3093
  %v3095 = vsel %vm1809, %v3071, -inf
  %3096 = vmax.xlane.f32.xlu0 %v3095
  %v3097 = vpop.xlane.xlu0 %3096
  %v3098 = vsub.f32 %v2553, %v3076
  %v3099 = vsub.f32 %v2627, %v3079
  %v3100 = vsub.f32 %v2701, %v3082
  %v3101 = vsub.f32 %v2775, %v3085
  %v3102 = vsub.f32 %v2849, %v3088
  %v3103 = vsub.f32 %v2923, %v3091
  %v3104 = vsub.f32 %v2997, %v3094
  %v3105 = vsub.f32 %v3071, %v3097
  %v3106 = vmul.f32 %v3098, 1.442695
  %v3107 = vpow.pop %v3106
  %v3108 = vmul.f32 %v3099, 1.442695
  %v3109 = vpow.pop %v3108
  %v3110 = vmul.f32 %v3100, 1.442695
  %v3111 = vpow.pop %v3110
  %v3112 = vmul.f32 %v3101, 1.442695
  %v3113 = vpow.pop %v3112
  %v3114 = vmul.f32 %v3102, 1.442695
  %v3115 = vpow.pop %v3114
  %v3116 = vmul.f32 %v3103, 1.442695
  %v3117 = vpow.pop %v3116
  %v3118 = vmul.f32 %v3104, 1.442695
  %v3119 = vpow.pop %v3118
  %v3120 = vmul.f32 %v3105, 1.442695
  %v3121 = vpow.pop %v3120
  %v3122 = vsel %vm1809, %v3107, 0.0
  %3123 = vadd.xlane.f32.xlu0 %v3122
  %v3124 = vpop.xlane.xlu0 %3123
  %v3125 = vsel %vm1809, %v3109, 0.0
  %3126 = vadd.xlane.f32.xlu0 %v3125
  %v3127 = vpop.xlane.xlu0 %3126
  %v3128 = vsel %vm1809, %v3111, 0.0
  %3129 = vadd.xlane.f32.xlu0 %v3128
  %v3130 = vpop.xlane.xlu0 %3129
  %v3131 = vsel %vm1809, %v3113, 0.0
  %3132 = vadd.xlane.f32.xlu0 %v3131
  %v3133 = vpop.xlane.xlu0 %3132
  %v3134 = vsel %vm1809, %v3115, 0.0
  %3135 = vadd.xlane.f32.xlu0 %v3134
  %v3136 = vpop.xlane.xlu0 %3135
  %v3137 = vsel %vm1809, %v3117, 0.0
  %3138 = vadd.xlane.f32.xlu0 %v3137
  %v3139 = vpop.xlane.xlu0 %3138
  %v3140 = vsel %vm1809, %v3119, 0.0
  %3141 = vadd.xlane.f32.xlu0 %v3140
  %v3142 = vpop.xlane.xlu0 %3141
  %v3143 = vsel %vm1809, %v3121, 0.0
  %3144 = vadd.xlane.f32.xlu0 %v3143
  %v3145 = vpop.xlane.xlu0 %3144
  %v3146 = vrcp.pop %v3124
  %v3147 = vmul.f32 %v3107, %v3146
  %v3148 = vrcp.pop %v3127
  %v3149 = vmul.f32 %v3109, %v3148
  %v3150 = vrcp.pop %v3130
  %v3151 = vmul.f32 %v3111, %v3150
  %v3152 = vrcp.pop %v3133
  %v3153 = vmul.f32 %v3113, %v3152
  %v3154 = vrcp.pop %v3136
  %v3155 = vmul.f32 %v3115, %v3154
  %v3156 = vrcp.pop %v3139
  %v3157 = vmul.f32 %v3117, %v3156
  %v3158 = vrcp.pop %v3142
  %v3159 = vmul.f32 %v3119, %v3158
  %v3160 = vrcp.pop %v3145
  %v3161 = vmul.f32 %v3121, %v3160
  %v3163 = vsel %vm1809, %v3147, 0
  %3165 = vmatprep.subr.mxu0 0.0
  %3166 = vmatpush1.msra.mxu0 %v1128
  %3167 = vmatprep.subr.mxu0 0.0
  %3168 = vmatpush1.msra.mxu0 0.0
  %3169 = vmatprep.subr.mxu0 0.0
  %3170 = vmatpush1.msra.mxu0 0.0
  %3171 = vmatprep.subr.mxu0 0.0
  %3172 = vmatpush1.msra.mxu0 0.0
  %3173 = vmatprep.subr.mxu0 0.0
  %3174 = vmatpush1.msra.mxu0 0.0
  %3175 = vmatprep.subr.mxu0 0.0
  %3176 = vmatpush1.msra.mxu0 0.0
  %3177 = vmatprep.subr.mxu0 0.0
  %3178 = vmatpush1.msra.mxu0 0.0
  %3179 = vmatprep.subr.mxu0 0.0
  %3180 = vmatpush1.msra.mxu0 0.0
  %3181 = vmatprep.subr.mxu0 0.0
  %3182 = vmatpush1.msra.mxu0 0.0
  %3183 = vmatprep.subr.mxu0 0.0
  %3184 = vmatpush1.msra.mxu0 0.0
  %3185 = vmatprep.subr.mxu0 0.0
  %3186 = vmatpush1.msra.mxu0 0.0
  %3187 = vmatprep.subr.mxu0 0.0
  %3188 = vmatpush1.msra.mxu0 0.0
  %3189 = vmatprep.subr.mxu0 0.0
  %3190 = vmatpush1.msra.mxu0 0.0
  %3191 = vmatprep.subr.mxu0 0.0
  %3192 = vmatpush1.msra.mxu0 0.0
  %3193 = vmatprep.subr.mxu0 0.0
  %3194 = vmatpush1.msra.mxu0 0.0
  %3195 = vmatprep.subr.mxu0 0.0
  %3196 = vmatpush1.msra.mxu0 0.0
  %3197 = vmatprep.subr.mxu0 0.0
  %3198 = vmatpush1.msra.mxu0 0.0
  %3199 = vmatprep.subr.mxu0 0.0
  %3200 = vmatpush1.msra.mxu0 0.0
  %3201 = vmatprep.subr.mxu0 0.0
  %3202 = vmatpush1.msra.mxu0 0.0
  %3203 = vmatprep.subr.mxu0 0.0
  %3204 = vmatpush1.msra.mxu0 0.0
  %3205 = vmatprep.subr.mxu0 0.0
  %3206 = vmatpush1.msra.mxu0 0.0
  %3207 = vmatprep.subr.mxu0 0.0
  %3208 = vmatpush1.msra.mxu0 0.0
  %3209 = vmatprep.subr.mxu0 0.0
  %3210 = vmatpush1.msra.mxu0 0.0
  %3211 = vmatprep.subr.mxu0 0.0
  %3212 = vmatpush1.msra.mxu0 0.0
  %3213 = vmatprep.subr.mxu0 0.0
  %3214 = vmatpush1.msra.mxu0 0.0
  %3215 = vmatprep.subr.mxu0 0.0
  %3216 = vmatpush1.msra.mxu0 0.0
  %3217 = vmatprep.subr.mxu0 0.0
  %3218 = vmatpush1.msra.mxu0 0.0
  %3219 = vmatprep.subr.mxu0 0.0
  %3220 = vmatpush1.msra.mxu0 0.0
  %3221 = vmatprep.subr.mxu0 0.0
  %3222 = vmatpush1.msra.mxu0 0.0
  %3223 = vmatprep.subr.mxu0 0.0
  %3224 = vmatpush1.msra.mxu0 0.0
  %3225 = vmatprep.subr.mxu0 0.0
  %3226 = vmatpush1.msra.mxu0 0.0
  %3227 = vmatprep.subr.mxu0 0.0
  %3228 = vmatpush1.msra.mxu0 0.0
  %3229 = vmatprep.mubr.f32.mxu0 0.0
  %3230 = vmatmul.mubr.f32.gmra.mrb[0].mxu0 %v3163
  %v3231 = vpop.f32.mrb[0].mxu0
  %v3232 = vadd.f32 0.0, %v3231
  %v3233 = vpop.f32.mrb[0].mxu0
  %3234 = vdwg.mxu0
  %v3236 = vsel %vm1809, %v3149, 0
  %3238 = vmatprep.subr.mxu0 0.0
  %3239 = vmatpush1.msra.mxu0 %v1129
  %3240 = vmatprep.subr.mxu0 0.0
  %3241 = vmatpush1.msra.mxu0 0.0
  %3242 = vmatprep.subr.mxu0 0.0
  %3243 = vmatpush1.msra.mxu0 0.0
  %3244 = vmatprep.subr.mxu0 0.0
  %3245 = vmatpush1.msra.mxu0 0.0
  %3246 = vmatprep.subr.mxu0 0.0
  %3247 = vmatpush1.msra.mxu0 0.0
  %3248 = vmatprep.subr.mxu0 0.0
  %3249 = vmatpush1.msra.mxu0 0.0
  %3250 = vmatprep.subr.mxu0 0.0
  %3251 = vmatpush1.msra.mxu0 0.0
  %3252 = vmatprep.subr.mxu0 0.0
  %3253 = vmatpush1.msra.mxu0 0.0
  %3254 = vmatprep.subr.mxu0 0.0
  %3255 = vmatpush1.msra.mxu0 0.0
  %3256 = vmatprep.subr.mxu0 0.0
  %3257 = vmatpush1.msra.mxu0 0.0
  %3258 = vmatprep.subr.mxu0 0.0
  %3259 = vmatpush1.msra.mxu0 0.0
  %3260 = vmatprep.subr.mxu0 0.0
  %3261 = vmatpush1.msra.mxu0 0.0
  %3262 = vmatprep.subr.mxu0 0.0
  %3263 = vmatpush1.msra.mxu0 0.0
  %3264 = vmatprep.subr.mxu0 0.0
  %3265 = vmatpush1.msra.mxu0 0.0
  %3266 = vmatprep.subr.mxu0 0.0
  %3267 = vmatpush1.msra.mxu0 0.0
  %3268 = vmatprep.subr.mxu0 0.0
  %3269 = vmatpush1.msra.mxu0 0.0
  %3270 = vmatprep.subr.mxu0 0.0
  %3271 = vmatpush1.msra.mxu0 0.0
  %3272 = vmatprep.subr.mxu0 0.0
  %3273 = vmatpush1.msra.mxu0 0.0
  %3274 = vmatprep.subr.mxu0 0.0
  %3275 = vmatpush1.msra.mxu0 0.0
  %3276 = vmatprep.subr.mxu0 0.0
  %3277 = vmatpush1.msra.mxu0 0.0
  %3278 = vmatprep.subr.mxu0 0.0
  %3279 = vmatpush1.msra.mxu0 0.0
  %3280 = vmatprep.subr.mxu0 0.0
  %3281 = vmatpush1.msra.mxu0 0.0
  %3282 = vmatprep.subr.mxu0 0.0
  %3283 = vmatpush1.msra.mxu0 0.0
  %3284 = vmatprep.subr.mxu0 0.0
  %3285 = vmatpush1.msra.mxu0 0.0
  %3286 = vmatprep.subr.mxu0 0.0
  %3287 = vmatpush1.msra.mxu0 0.0
  %3288 = vmatprep.subr.mxu0 0.0
  %3289 = vmatpush1.msra.mxu0 0.0
  %3290 = vmatprep.subr.mxu0 0.0
  %3291 = vmatpush1.msra.mxu0 0.0
  %3292 = vmatprep.subr.mxu0 0.0
  %3293 = vmatpush1.msra.mxu0 0.0
  %3294 = vmatprep.subr.mxu0 0.0
  %3295 = vmatpush1.msra.mxu0 0.0
  %3296 = vmatprep.subr.mxu0 0.0
  %3297 = vmatpush1.msra.mxu0 0.0
  %3298 = vmatprep.subr.mxu0 0.0
  %3299 = vmatpush1.msra.mxu0 0.0
  %3300 = vmatprep.subr.mxu0 0.0
  %3301 = vmatpush1.msra.mxu0 0.0
  %3302 = vmatprep.mubr.f32.mxu0 0.0
  %3303 = vmatmul.mubr.f32.gmra.mrb[0].mxu0 %v3236
  %v3304 = vpop.f32.mrb[0].mxu0
  %v3305 = vadd.f32 0.0, %v3304
  %v3306 = vpop.f32.mrb[0].mxu0
  %3307 = vdwg.mxu0
  %v3309 = vsel %vm1809, %v3151, 0
  %3311 = vmatprep.subr.mxu0 0.0
  %3312 = vmatpush1.msra.mxu0 %v1130
  %3313 = vmatprep.subr.mxu0 0.0
  %3314 = vmatpush1.msra.mxu0 0.0
  %3315 = vmatprep.subr.mxu0 0.0
  %3316 = vmatpush1.msra.mxu0 0.0
  %3317 = vmatprep.subr.mxu0 0.0
  %3318 = vmatpush1.msra.mxu0 0.0
  %3319 = vmatprep.subr.mxu0 0.0
  %3320 = vmatpush1.msra.mxu0 0.0
  %3321 = vmatprep.subr.mxu0 0.0
  %3322 = vmatpush1.msra.mxu0 0.0
  %3323 = vmatprep.subr.mxu0 0.0
  %3324 = vmatpush1.msra.mxu0 0.0
  %3325 = vmatprep.subr.mxu0 0.0
  %3326 = vmatpush1.msra.mxu0 0.0
  %3327 = vmatprep.subr.mxu0 0.0
  %3328 = vmatpush1.msra.mxu0 0.0
  %3329 = vmatprep.subr.mxu0 0.0
  %3330 = vmatpush1.msra.mxu0 0.0
  %3331 = vmatprep.subr.mxu0 0.0
  %3332 = vmatpush1.msra.mxu0 0.0
  %3333 = vmatprep.subr.mxu0 0.0
  %3334 = vmatpush1.msra.mxu0 0.0
  %3335 = vmatprep.subr.mxu0 0.0
  %3336 = vmatpush1.msra.mxu0 0.0
  %3337 = vmatprep.subr.mxu0 0.0
  %3338 = vmatpush1.msra.mxu0 0.0
  %3339 = vmatprep.subr.mxu0 0.0
  %3340 = vmatpush1.msra.mxu0 0.0
  %3341 = vmatprep.subr.mxu0 0.0
  %3342 = vmatpush1.msra.mxu0 0.0
  %3343 = vmatprep.subr.mxu0 0.0
  %3344 = vmatpush1.msra.mxu0 0.0
  %3345 = vmatprep.subr.mxu0 0.0
  %3346 = vmatpush1.msra.mxu0 0.0
  %3347 = vmatprep.subr.mxu0 0.0
  %3348 = vmatpush1.msra.mxu0 0.0
  %3349 = vmatprep.subr.mxu0 0.0
  %3350 = vmatpush1.msra.mxu0 0.0
  %3351 = vmatprep.subr.mxu0 0.0
  %3352 = vmatpush1.msra.mxu0 0.0
  %3353 = vmatprep.subr.mxu0 0.0
  %3354 = vmatpush1.msra.mxu0 0.0
  %3355 = vmatprep.subr.mxu0 0.0
  %3356 = vmatpush1.msra.mxu0 0.0
  %3357 = vmatprep.subr.mxu0 0.0
  %3358 = vmatpush1.msra.mxu0 0.0
  %3359 = vmatprep.subr.mxu0 0.0
  %3360 = vmatpush1.msra.mxu0 0.0
  %3361 = vmatprep.subr.mxu0 0.0
  %3362 = vmatpush1.msra.mxu0 0.0
  %3363 = vmatprep.subr.mxu0 0.0
  %3364 = vmatpush1.msra.mxu0 0.0
  %3365 = vmatprep.subr.mxu0 0.0
  %3366 = vmatpush1.msra.mxu0 0.0
  %3367 = vmatprep.subr.mxu0 0.0
  %3368 = vmatpush1.msra.mxu0 0.0
  %3369 = vmatprep.subr.mxu0 0.0
  %3370 = vmatpush1.msra.mxu0 0.0
  %3371 = vmatprep.subr.mxu0 0.0
  %3372 = vmatpush1.msra.mxu0 0.0
  %3373 = vmatprep.subr.mxu0 0.0
  %3374 = vmatpush1.msra.mxu0 0.0
  %3375 = vmatprep.mubr.f32.mxu0 0.0
  %3376 = vmatmul.mubr.f32.gmra.mrb[0].mxu0 %v3309
  %v3377 = vpop.f32.mrb[0].mxu0
  %v3378 = vadd.f32 0.0, %v3377
  %v3379 = vpop.f32.mrb[0].mxu0
  %3380 = vdwg.mxu0
  %v3382 = vsel %vm1809, %v3153, 0
  %3384 = vmatprep.subr.mxu0 0.0
  %3385 = vmatpush1.msra.mxu0 %v1131
  %3386 = vmatprep.subr.mxu0 0.0
  %3387 = vmatpush1.msra.mxu0 0.0
  %3388 = vmatprep.subr.mxu0 0.0
  %3389 = vmatpush1.msra.mxu0 0.0
  %3390 = vmatprep.subr.mxu0 0.0
  %3391 = vmatpush1.msra.mxu0 0.0
  %3392 = vmatprep.subr.mxu0 0.0
  %3393 = vmatpush1.msra.mxu0 0.0
  %3394 = vmatprep.subr.mxu0 0.0
  %3395 = vmatpush1.msra.mxu0 0.0
  %3396 = vmatprep.subr.mxu0 0.0
  %3397 = vmatpush1.msra.mxu0 0.0
  %3398 = vmatprep.subr.mxu0 0.0
  %3399 = vmatpush1.msra.mxu0 0.0
  %3400 = vmatprep.subr.mxu0 0.0
  %3401 = vmatpush1.msra.mxu0 0.0
  %3402 = vmatprep.subr.mxu0 0.0
  %3403 = vmatpush1.msra.mxu0 0.0
  %3404 = vmatprep.subr.mxu0 0.0
  %3405 = vmatpush1.msra.mxu0 0.0
  %3406 = vmatprep.subr.mxu0 0.0
  %3407 = vmatpush1.msra.mxu0 0.0
  %3408 = vmatprep.subr.mxu0 0.0
  %3409 = vmatpush1.msra.mxu0 0.0
  %3410 = vmatprep.subr.mxu0 0.0
  %3411 = vmatpush1.msra.mxu0 0.0
  %3412 = vmatprep.subr.mxu0 0.0
  %3413 = vmatpush1.msra.mxu0 0.0
  %3414 = vmatprep.subr.mxu0 0.0
  %3415 = vmatpush1.msra.mxu0 0.0
  %3416 = vmatprep.subr.mxu0 0.0
  %3417 = vmatpush1.msra.mxu0 0.0
  %3418 = vmatprep.subr.mxu0 0.0
  %3419 = vmatpush1.msra.mxu0 0.0
  %3420 = vmatprep.subr.mxu0 0.0
  %3421 = vmatpush1.msra.mxu0 0.0
  %3422 = vmatprep.subr.mxu0 0.0
  %3423 = vmatpush1.msra.mxu0 0.0
  %3424 = vmatprep.subr.mxu0 0.0
  %3425 = vmatpush1.msra.mxu0 0.0
  %3426 = vmatprep.subr.mxu0 0.0
  %3427 = vmatpush1.msra.mxu0 0.0
  %3428 = vmatprep.subr.mxu0 0.0
  %3429 = vmatpush1.msra.mxu0 0.0
  %3430 = vmatprep.subr.mxu0 0.0
  %3431 = vmatpush1.msra.mxu0 0.0
  %3432 = vmatprep.subr.mxu0 0.0
  %3433 = vmatpush1.msra.mxu0 0.0
  %3434 = vmatprep.subr.mxu0 0.0
  %3435 = vmatpush1.msra.mxu0 0.0
  %3436 = vmatprep.subr.mxu0 0.0
  %3437 = vmatpush1.msra.mxu0 0.0
  %3438 = vmatprep.subr.mxu0 0.0
  %3439 = vmatpush1.msra.mxu0 0.0
  %3440 = vmatprep.subr.mxu0 0.0
  %3441 = vmatpush1.msra.mxu0 0.0
  %3442 = vmatprep.subr.mxu0 0.0
  %3443 = vmatpush1.msra.mxu0 0.0
  %3444 = vmatprep.subr.mxu0 0.0
  %3445 = vmatpush1.msra.mxu0 0.0
  %3446 = vmatprep.subr.mxu0 0.0
  %3447 = vmatpush1.msra.mxu0 0.0
  %3448 = vmatprep.mubr.f32.mxu0 0.0
  %3449 = vmatmul.mubr.f32.gmra.mrb[0].mxu0 %v3382
  %v3450 = vpop.f32.mrb[0].mxu0
  %v3451 = vadd.f32 0.0, %v3450
  %v3452 = vpop.f32.mrb[0].mxu0
  %3453 = vdwg.mxu0
  %v3455 = vsel %vm1809, %v3155, 0
  %3457 = vmatprep.subr.mxu0 0.0
  %3458 = vmatpush1.msra.mxu0 %v1132
  %3459 = vmatprep.subr.mxu0 0.0
  %3460 = vmatpush1.msra.mxu0 0.0
  %3461 = vmatprep.subr.mxu0 0.0
  %3462 = vmatpush1.msra.mxu0 0.0
  %3463 = vmatprep.subr.mxu0 0.0
  %3464 = vmatpush1.msra.mxu0 0.0
  %3465 = vmatprep.subr.mxu0 0.0
  %3466 = vmatpush1.msra.mxu0 0.0
  %3467 = vmatprep.subr.mxu0 0.0
  %3468 = vmatpush1.msra.mxu0 0.0
  %3469 = vmatprep.subr.mxu0 0.0
  %3470 = vmatpush1.msra.mxu0 0.0
  %3471 = vmatprep.subr.mxu0 0.0
  %3472 = vmatpush1.msra.mxu0 0.0
  %3473 = vmatprep.subr.mxu0 0.0
  %3474 = vmatpush1.msra.mxu0 0.0
  %3475 = vmatprep.subr.mxu0 0.0
  %3476 = vmatpush1.msra.mxu0 0.0
  %3477 = vmatprep.subr.mxu0 0.0
  %3478 = vmatpush1.msra.mxu0 0.0
  %3479 = vmatprep.subr.mxu0 0.0
  %3480 = vmatpush1.msra.mxu0 0.0
  %3481 = vmatprep.subr.mxu0 0.0
  %3482 = vmatpush1.msra.mxu0 0.0
  %3483 = vmatprep.subr.mxu0 0.0
  %3484 = vmatpush1.msra.mxu0 0.0
  %3485 = vmatprep.subr.mxu0 0.0
  %3486 = vmatpush1.msra.mxu0 0.0
  %3487 = vmatprep.subr.mxu0 0.0
  %3488 = vmatpush1.msra.mxu0 0.0
  %3489 = vmatprep.subr.mxu0 0.0
  %3490 = vmatpush1.msra.mxu0 0.0
  %3491 = vmatprep.subr.mxu0 0.0
  %3492 = vmatpush1.msra.mxu0 0.0
  %3493 = vmatprep.subr.mxu0 0.0
  %3494 = vmatpush1.msra.mxu0 0.0
  %3495 = vmatprep.subr.mxu0 0.0
  %3496 = vmatpush1.msra.mxu0 0.0
  %3497 = vmatprep.subr.mxu0 0.0
  %3498 = vmatpush1.msra.mxu0 0.0
  %3499 = vmatprep.subr.mxu0 0.0
  %3500 = vmatpush1.msra.mxu0 0.0
  %3501 = vmatprep.subr.mxu0 0.0
  %3502 = vmatpush1.msra.mxu0 0.0
  %3503 = vmatprep.subr.mxu0 0.0
  %3504 = vmatpush1.msra.mxu0 0.0
  %3505 = vmatprep.subr.mxu0 0.0
  %3506 = vmatpush1.msra.mxu0 0.0
  %3507 = vmatprep.subr.mxu0 0.0
  %3508 = vmatpush1.msra.mxu0 0.0
  %3509 = vmatprep.subr.mxu0 0.0
  %3510 = vmatpush1.msra.mxu0 0.0
  %3511 = vmatprep.subr.mxu0 0.0
  %3512 = vmatpush1.msra.mxu0 0.0
  %3513 = vmatprep.subr.mxu0 0.0
  %3514 = vmatpush1.msra.mxu0 0.0
  %3515 = vmatprep.subr.mxu0 0.0
  %3516 = vmatpush1.msra.mxu0 0.0
  %3517 = vmatprep.subr.mxu0 0.0
  %3518 = vmatpush1.msra.mxu0 0.0
  %3519 = vmatprep.subr.mxu0 0.0
  %3520 = vmatpush1.msra.mxu0 0.0
  %3521 = vmatprep.mubr.f32.mxu0 0.0
  %3522 = vmatmul.mubr.f32.gmra.mrb[0].mxu0 %v3455
  %v3523 = vpop.f32.mrb[0].mxu0
  %v3524 = vadd.f32 0.0, %v3523
  %v3525 = vpop.f32.mrb[0].mxu0
  %3526 = vdwg.mxu0
  %v3528 = vsel %vm1809, %v3157, 0
  %3530 = vmatprep.subr.mxu0 0.0
  %3531 = vmatpush1.msra.mxu0 %v1133
  %3532 = vmatprep.subr.mxu0 0.0
  %3533 = vmatpush1.msra.mxu0 0.0
  %3534 = vmatprep.subr.mxu0 0.0
  %3535 = vmatpush1.msra.mxu0 0.0
  %3536 = vmatprep.subr.mxu0 0.0
  %3537 = vmatpush1.msra.mxu0 0.0
  %3538 = vmatprep.subr.mxu0 0.0
  %3539 = vmatpush1.msra.mxu0 0.0
  %3540 = vmatprep.subr.mxu0 0.0
  %3541 = vmatpush1.msra.mxu0 0.0
  %3542 = vmatprep.subr.mxu0 0.0
  %3543 = vmatpush1.msra.mxu0 0.0
  %3544 = vmatprep.subr.mxu0 0.0
  %3545 = vmatpush1.msra.mxu0 0.0
  %3546 = vmatprep.subr.mxu0 0.0
  %3547 = vmatpush1.msra.mxu0 0.0
  %3548 = vmatprep.subr.mxu0 0.0
  %3549 = vmatpush1.msra.mxu0 0.0
  %3550 = vmatprep.subr.mxu0 0.0
  %3551 = vmatpush1.msra.mxu0 0.0
  %3552 = vmatprep.subr.mxu0 0.0
  %3553 = vmatpush1.msra.mxu0 0.0
  %3554 = vmatprep.subr.mxu0 0.0
  %3555 = vmatpush1.msra.mxu0 0.0
  %3556 = vmatprep.subr.mxu0 0.0
  %3557 = vmatpush1.msra.mxu0 0.0
  %3558 = vmatprep.subr.mxu0 0.0
  %3559 = vmatpush1.msra.mxu0 0.0
  %3560 = vmatprep.subr.mxu0 0.0
  %3561 = vmatpush1.msra.mxu0 0.0
  %3562 = vmatprep.subr.mxu0 0.0
  %3563 = vmatpush1.msra.mxu0 0.0
  %3564 = vmatprep.subr.mxu0 0.0
  %3565 = vmatpush1.msra.mxu0 0.0
  %3566 = vmatprep.subr.mxu0 0.0
  %3567 = vmatpush1.msra.mxu0 0.0
  %3568 = vmatprep.subr.mxu0 0.0
  %3569 = vmatpush1.msra.mxu0 0.0
  %3570 = vmatprep.subr.mxu0 0.0
  %3571 = vmatpush1.msra.mxu0 0.0
  %3572 = vmatprep.subr.mxu0 0.0
  %3573 = vmatpush1.msra.mxu0 0.0
  %3574 = vmatprep.subr.mxu0 0.0
  %3575 = vmatpush1.msra.mxu0 0.0
  %3576 = vmatprep.subr.mxu0 0.0
  %3577 = vmatpush1.msra.mxu0 0.0
  %3578 = vmatprep.subr.mxu0 0.0
  %3579 = vmatpush1.msra.mxu0 0.0
  %3580 = vmatprep.subr.mxu0 0.0
  %3581 = vmatpush1.msra.mxu0 0.0
  %3582 = vmatprep.subr.mxu0 0.0
  %3583 = vmatpush1.msra.mxu0 0.0
  %3584 = vmatprep.subr.mxu0 0.0
  %3585 = vmatpush1.msra.mxu0 0.0
  %3586 = vmatprep.subr.mxu0 0.0
  %3587 = vmatpush1.msra.mxu0 0.0
  %3588 = vmatprep.subr.mxu0 0.0
  %3589 = vmatpush1.msra.mxu0 0.0
  %3590 = vmatprep.subr.mxu0 0.0
  %3591 = vmatpush1.msra.mxu0 0.0
  %3592 = vmatprep.subr.mxu0 0.0
  %3593 = vmatpush1.msra.mxu0 0.0
  %3594 = vmatprep.mubr.f32.mxu0 0.0
  %3595 = vmatmul.mubr.f32.gmra.mrb[0].mxu0 %v3528
  %v3596 = vpop.f32.mrb[0].mxu0
  %v3597 = vadd.f32 0.0, %v3596
  %v3598 = vpop.f32.mrb[0].mxu0
  %3599 = vdwg.mxu0
  %v3601 = vsel %vm1809, %v3159, 0
  %3603 = vmatprep.subr.mxu0 0.0
  %3604 = vmatpush1.msra.mxu0 %v1134
  %3605 = vmatprep.subr.mxu0 0.0
  %3606 = vmatpush1.msra.mxu0 0.0
  %3607 = vmatprep.subr.mxu0 0.0
  %3608 = vmatpush1.msra.mxu0 0.0
  %3609 = vmatprep.subr.mxu0 0.0
  %3610 = vmatpush1.msra.mxu0 0.0
  %3611 = vmatprep.subr.mxu0 0.0
  %3612 = vmatpush1.msra.mxu0 0.0
  %3613 = vmatprep.subr.mxu0 0.0
  %3614 = vmatpush1.msra.mxu0 0.0
  %3615 = vmatprep.subr.mxu0 0.0
  %3616 = vmatpush1.msra.mxu0 0.0
  %3617 = vmatprep.subr.mxu0 0.0
  %3618 = vmatpush1.msra.mxu0 0.0
  %3619 = vmatprep.subr.mxu0 0.0
  %3620 = vmatpush1.msra.mxu0 0.0
  %3621 = vmatprep.subr.mxu0 0.0
  %3622 = vmatpush1.msra.mxu0 0.0
  %3623 = vmatprep.subr.mxu0 0.0
  %3624 = vmatpush1.msra.mxu0 0.0
  %3625 = vmatprep.subr.mxu0 0.0
  %3626 = vmatpush1.msra.mxu0 0.0
  %3627 = vmatprep.subr.mxu0 0.0
  %3628 = vmatpush1.msra.mxu0 0.0
  %3629 = vmatprep.subr.mxu0 0.0
  %3630 = vmatpush1.msra.mxu0 0.0
  %3631 = vmatprep.subr.mxu0 0.0
  %3632 = vmatpush1.msra.mxu0 0.0
  %3633 = vmatprep.subr.mxu0 0.0
  %3634 = vmatpush1.msra.mxu0 0.0
  %3635 = vmatprep.subr.mxu0 0.0
  %3636 = vmatpush1.msra.mxu0 0.0
  %3637 = vmatprep.subr.mxu0 0.0
  %3638 = vmatpush1.msra.mxu0 0.0
  %3639 = vmatprep.subr.mxu0 0.0
  %3640 = vmatpush1.msra.mxu0 0.0
  %3641 = vmatprep.subr.mxu0 0.0
  %3642 = vmatpush1.msra.mxu0 0.0
  %3643 = vmatprep.subr.mxu0 0.0
  %3644 = vmatpush1.msra.mxu0 0.0
  %3645 = vmatprep.subr.mxu0 0.0
  %3646 = vmatpush1.msra.mxu0 0.0
  %3647 = vmatprep.subr.mxu0 0.0
  %3648 = vmatpush1.msra.mxu0 0.0
  %3649 = vmatprep.subr.mxu0 0.0
  %3650 = vmatpush1.msra.mxu0 0.0
  %3651 = vmatprep.subr.mxu0 0.0
  %3652 = vmatpush1.msra.mxu0 0.0
  %3653 = vmatprep.subr.mxu0 0.0
  %3654 = vmatpush1.msra.mxu0 0.0
  %3655 = vmatprep.subr.mxu0 0.0
  %3656 = vmatpush1.msra.mxu0 0.0
  %3657 = vmatprep.subr.mxu0 0.0
  %3658 = vmatpush1.msra.mxu0 0.0
  %3659 = vmatprep.subr.mxu0 0.0
  %3660 = vmatpush1.msra.mxu0 0.0
  %3661 = vmatprep.subr.mxu0 0.0
  %3662 = vmatpush1.msra.mxu0 0.0
  %3663 = vmatprep.subr.mxu0 0.0
  %3664 = vmatpush1.msra.mxu0 0.0
  %3665 = vmatprep.subr.mxu0 0.0
  %3666 = vmatpush1.msra.mxu0 0.0
  %3667 = vmatprep.mubr.f32.mxu0 0.0
  %3668 = vmatmul.mubr.f32.gmra.mrb[0].mxu0 %v3601
  %v3669 = vpop.f32.mrb[0].mxu0
  %v3670 = vadd.f32 0.0, %v3669
  %v3671 = vpop.f32.mrb[0].mxu0
  %3672 = vdwg.mxu0
  %v3674 = vsel %vm1809, %v3161, 0
  %3676 = vmatprep.subr.mxu0 0.0
  %3677 = vmatpush1.msra.mxu0 %v1135
  %3678 = vmatprep.subr.mxu0 0.0
  %3679 = vmatpush1.msra.mxu0 0.0
  %3680 = vmatprep.subr.mxu0 0.0
  %3681 = vmatpush1.msra.mxu0 0.0
  %3682 = vmatprep.subr.mxu0 0.0
  %3683 = vmatpush1.msra.mxu0 0.0
  %3684 = vmatprep.subr.mxu0 0.0
  %3685 = vmatpush1.msra.mxu0 0.0
  %3686 = vmatprep.subr.mxu0 0.0
  %3687 = vmatpush1.msra.mxu0 0.0
  %3688 = vmatprep.subr.mxu0 0.0
  %3689 = vmatpush1.msra.mxu0 0.0
  %3690 = vmatprep.subr.mxu0 0.0
  %3691 = vmatpush1.msra.mxu0 0.0
  %3692 = vmatprep.subr.mxu0 0.0
  %3693 = vmatpush1.msra.mxu0 0.0
  %3694 = vmatprep.subr.mxu0 0.0
  %3695 = vmatpush1.msra.mxu0 0.0
  %3696 = vmatprep.subr.mxu0 0.0
  %3697 = vmatpush1.msra.mxu0 0.0
  %3698 = vmatprep.subr.mxu0 0.0
  %3699 = vmatpush1.msra.mxu0 0.0
  %3700 = vmatprep.subr.mxu0 0.0
  %3701 = vmatpush1.msra.mxu0 0.0
  %3702 = vmatprep.subr.mxu0 0.0
  %3703 = vmatpush1.msra.mxu0 0.0
  %3704 = vmatprep.subr.mxu0 0.0
  %3705 = vmatpush1.msra.mxu0 0.0
  %3706 = vmatprep.subr.mxu0 0.0
  %3707 = vmatpush1.msra.mxu0 0.0
  %3708 = vmatprep.subr.mxu0 0.0
  %3709 = vmatpush1.msra.mxu0 0.0
  %3710 = vmatprep.subr.mxu0 0.0
  %3711 = vmatpush1.msra.mxu0 0.0
  %3712 = vmatprep.subr.mxu0 0.0
  %3713 = vmatpush1.msra.mxu0 0.0
  %3714 = vmatprep.subr.mxu0 0.0
  %3715 = vmatpush1.msra.mxu0 0.0
  %3716 = vmatprep.subr.mxu0 0.0
  %3717 = vmatpush1.msra.mxu0 0.0
  %3718 = vmatprep.subr.mxu0 0.0
  %3719 = vmatpush1.msra.mxu0 0.0
  %3720 = vmatprep.subr.mxu0 0.0
  %3721 = vmatpush1.msra.mxu0 0.0
  %3722 = vmatprep.subr.mxu0 0.0
  %3723 = vmatpush1.msra.mxu0 0.0
  %3724 = vmatprep.subr.mxu0 0.0
  %3725 = vmatpush1.msra.mxu0 0.0
  %3726 = vmatprep.subr.mxu0 0.0
  %3727 = vmatpush1.msra.mxu0 0.0
  %3728 = vmatprep.subr.mxu0 0.0
  %3729 = vmatpush1.msra.mxu0 0.0
  %3730 = vmatprep.subr.mxu0 0.0
  %3731 = vmatpush1.msra.mxu0 0.0
  %3732 = vmatprep.subr.mxu0 0.0
  %3733 = vmatpush1.msra.mxu0 0.0
  %3734 = vmatprep.subr.mxu0 0.0
  %3735 = vmatpush1.msra.mxu0 0.0
  %3736 = vmatprep.subr.mxu0 0.0
  %3737 = vmatpush1.msra.mxu0 0.0
  %3738 = vmatprep.subr.mxu0 0.0
  %3739 = vmatpush1.msra.mxu0 0.0
  %3740 = vmatprep.mubr.f32.mxu0 0.0
  %3741 = vmatmul.mubr.f32.gmra.mrb[0].mxu0 %v3674
  %v3742 = vpop.f32.mrb[0].mxu0
  %v3743 = vadd.f32 0.0, %v3742
  %v3744 = vpop.f32.mrb[0].mxu0
  %3745 = vdwg.mxu0
  %v3747 = vsel %vm1200, %v3232, 0
  %v3750 = vsel %vm1200, %v3305, 0
  %v3753 = vsel %vm1200, %v3378, 0
  %v3756 = vsel %vm1200, %v3451, 0
  %v3759 = vsel %vm1200, %v3524, 0
  %v3762 = vsel %vm1200, %v3597, 0
  %v3765 = vsel %vm1200, %v3670, 0
  %v3768 = vsel %vm1200, %v3743, 0
  %3770 = vmatprep.subr.mxu0 0.0
  %3771 = vmatpush1.msra.mxu0 %v1146
  %3772 = vmatprep.subr.mxu0 0.0
  %3773 = vmatpush1.msra.mxu0 %v1147
  %3774 = vmatprep.subr.mxu0 0.0
  %3775 = vmatpush1.msra.mxu0 0.0
  %3776 = vmatprep.subr.mxu0 0.0
  %3777 = vmatpush1.msra.mxu0 0.0
  %3778 = vmatprep.subr.mxu0 0.0
  %3779 = vmatpush1.msra.mxu0 0.0
  %3780 = vmatprep.subr.mxu0 0.0
  %3781 = vmatpush1.msra.mxu0 0.0
  %3782 = vmatprep.subr.mxu0 0.0
  %3783 = vmatpush1.msra.mxu0 0.0
  %3784 = vmatprep.subr.mxu0 0.0
  %3785 = vmatpush1.msra.mxu0 0.0
  %3786 = vmatprep.subr.mxu0 0.0
  %3787 = vmatpush1.msra.mxu0 0.0
  %3788 = vmatprep.subr.mxu0 0.0
  %3789 = vmatpush1.msra.mxu0 0.0
  %3790 = vmatprep.subr.mxu0 0.0
  %3791 = vmatpush1.msra.mxu0 0.0
  %3792 = vmatprep.subr.mxu0 0.0
  %3793 = vmatpush1.msra.mxu0 0.0
  %3794 = vmatprep.subr.mxu0 0.0
  %3795 = vmatpush1.msra.mxu0 0.0
  %3796 = vmatprep.subr.mxu0 0.0
  %3797 = vmatpush1.msra.mxu0 0.0
  %3798 = vmatprep.subr.mxu0 0.0
  %3799 = vmatpush1.msra.mxu0 0.0
  %3800 = vmatprep.subr.mxu0 0.0
  %3801 = vmatpush1.msra.mxu0 0.0
  %3802 = vmatprep.subr.mxu0 0.0
  %3803 = vmatpush1.msra.mxu0 0.0
  %3804 = vmatprep.subr.mxu0 0.0
  %3805 = vmatpush1.msra.mxu0 0.0
  %3806 = vmatprep.subr.mxu0 0.0
  %3807 = vmatpush1.msra.mxu0 0.0
  %3808 = vmatprep.subr.mxu0 0.0
  %3809 = vmatpush1.msra.mxu0 0.0
  %3810 = vmatprep.subr.mxu0 0.0
  %3811 = vmatpush1.msra.mxu0 0.0
  %3812 = vmatprep.subr.mxu0 0.0
  %3813 = vmatpush1.msra.mxu0 0.0
  %3814 = vmatprep.subr.mxu0 0.0
  %3815 = vmatpush1.msra.mxu0 0.0
  %3816 = vmatprep.subr.mxu0 0.0
  %3817 = vmatpush1.msra.mxu0 0.0
  %3818 = vmatprep.subr.mxu0 0.0
  %3819 = vmatpush1.msra.mxu0 0.0
  %3820 = vmatprep.subr.mxu0 0.0
  %3821 = vmatpush1.msra.mxu0 0.0
  %3822 = vmatprep.subr.mxu0 0.0
  %3823 = vmatpush1.msra.mxu0 0.0
  %3824 = vmatprep.subr.mxu0 0.0
  %3825 = vmatpush1.msra.mxu0 0.0
  %3826 = vmatprep.subr.mxu0 0.0
  %3827 = vmatpush1.msra.mxu0 0.0
  %3828 = vmatprep.subr.mxu0 0.0
  %3829 = vmatpush1.msra.mxu0 0.0
  %3830 = vmatprep.subr.mxu0 0.0
  %3831 = vmatpush1.msra.mxu0 0.0
  %3832 = vmatprep.subr.mxu0 0.0
  %3833 = vmatpush1.msra.mxu0 0.0
  %3834 = vmatprep.mubr.f32.mxu0 0.0
  %3835 = vmatmul.mubr.f32.gmra.mrb[0].mxu0 %v3747
  %v3836 = vpop.f32.mrb[0].mxu0
  %v3837 = vadd.f32 0.0, %v3836
  %v3838 = vpop.f32.mrb[0].mxu0
  %3839 = vmatprep.mubr.f32.mxu0 0.0
  %3840 = vmatmul.mubr.f32.gmra.mrb[0].mxu0 %v3750
  %v3841 = vpop.f32.mrb[0].mxu0
  %v3842 = vadd.f32 0.0, %v3841
  %v3843 = vpop.f32.mrb[0].mxu0
  %3844 = vmatprep.mubr.f32.mxu0 0.0
  %3845 = vmatmul.mubr.f32.gmra.mrb[0].mxu0 %v3753
  %v3846 = vpop.f32.mrb[0].mxu0
  %v3847 = vadd.f32 0.0, %v3846
  %v3848 = vpop.f32.mrb[0].mxu0
  %3849 = vmatprep.mubr.f32.mxu0 0.0
  %3850 = vmatmul.mubr.f32.gmra.mrb[0].mxu0 %v3756
  %v3851 = vpop.f32.mrb[0].mxu0
  %v3852 = vadd.f32 0.0, %v3851
  %v3853 = vpop.f32.mrb[0].mxu0
  %3854 = vmatprep.mubr.f32.mxu0 0.0
  %3855 = vmatmul.mubr.f32.gmra.mrb[0].mxu0 %v3759
  %v3856 = vpop.f32.mrb[0].mxu0
  %v3857 = vadd.f32 0.0, %v3856
  %v3858 = vpop.f32.mrb[0].mxu0
  %3859 = vmatprep.mubr.f32.mxu0 0.0
  %3860 = vmatmul.mubr.f32.gmra.mrb[0].mxu0 %v3762
  %v3861 = vpop.f32.mrb[0].mxu0
  %v3862 = vadd.f32 0.0, %v3861
  %v3863 = vpop.f32.mrb[0].mxu0
  %3864 = vmatprep.mubr.f32.mxu0 0.0
  %3865 = vmatmul.mubr.f32.gmra.mrb[0].mxu0 %v3765
  %v3866 = vpop.f32.mrb[0].mxu0
  %v3867 = vadd.f32 0.0, %v3866
  %v3868 = vpop.f32.mrb[0].mxu0
  %3869 = vmatprep.mubr.f32.mxu0 0.0
  %3870 = vmatmul.mubr.f32.gmra.mrb[0].mxu0 %v3768
  %v3871 = vpop.f32.mrb[0].mxu0
  %v3872 = vadd.f32 0.0, %v3871
  %v3873 = vpop.f32.mrb[0].mxu0
  %3874 = vdwg.mxu0
  %v3876 = vsel %vm1200, %v1968, 0
  %v3879 = vsel %vm1200, %v2041, 0
  %v3882 = vsel %vm1200, %v2114, 0
  %v3885 = vsel %vm1200, %v2187, 0
  %v3888 = vsel %vm1200, %v2260, 0
  %v3891 = vsel %vm1200, %v2333, 0
  %v3894 = vsel %vm1200, %v2406, 0
  %v3897 = vsel %vm1200, %v2479, 0
  %3899 = vmatprep.subr.mxu0 0.0
  %3900 = vmatpush1.msra.mxu0 %v1144
  %3901 = vmatprep.subr.mxu0 0.0
  %3902 = vmatpush1.msra.mxu0 %v1145
  %3903 = vmatprep.subr.mxu0 0.0
  %3904 = vmatpush1.msra.mxu0 0.0
  %3905 = vmatprep.subr.mxu0 0.0
  %3906 = vmatpush1.msra.mxu0 0.0
  %3907 = vmatprep.subr.mxu0 0.0
  %3908 = vmatpush1.msra.mxu0 0.0
  %3909 = vmatprep.subr.mxu0 0.0
  %3910 = vmatpush1.msra.mxu0 0.0
  %3911 = vmatprep.subr.mxu0 0.0
  %3912 = vmatpush1.msra.mxu0 0.0
  %3913 = vmatprep.subr.mxu0 0.0
  %3914 = vmatpush1.msra.mxu0 0.0
  %3915 = vmatprep.subr.mxu0 0.0
  %3916 = vmatpush1.msra.mxu0 0.0
  %3917 = vmatprep.subr.mxu0 0.0
  %3918 = vmatpush1.msra.mxu0 0.0
  %3919 = vmatprep.subr.mxu0 0.0
  %3920 = vmatpush1.msra.mxu0 0.0
  %3921 = vmatprep.subr.mxu0 0.0
  %3922 = vmatpush1.msra.mxu0 0.0
  %3923 = vmatprep.subr.mxu0 0.0
  %3924 = vmatpush1.msra.mxu0 0.0
  %3925 = vmatprep.subr.mxu0 0.0
  %3926 = vmatpush1.msra.mxu0 0.0
  %3927 = vmatprep.subr.mxu0 0.0
  %3928 = vmatpush1.msra.mxu0 0.0
  %3929 = vmatprep.subr.mxu0 0.0
  %3930 = vmatpush1.msra.mxu0 0.0
  %3931 = vmatprep.subr.mxu0 0.0
  %3932 = vmatpush1.msra.mxu0 0.0
  %3933 = vmatprep.subr.mxu0 0.0
  %3934 = vmatpush1.msra.mxu0 0.0
  %3935 = vmatprep.subr.mxu0 0.0
  %3936 = vmatpush1.msra.mxu0 0.0
  %3937 = vmatprep.subr.mxu0 0.0
  %3938 = vmatpush1.msra.mxu0 0.0
  %3939 = vmatprep.subr.mxu0 0.0
  %3940 = vmatpush1.msra.mxu0 0.0
  %3941 = vmatprep.subr.mxu0 0.0
  %3942 = vmatpush1.msra.mxu0 0.0
  %3943 = vmatprep.subr.mxu0 0.0
  %3944 = vmatpush1.msra.mxu0 0.0
  %3945 = vmatprep.subr.mxu0 0.0
  %3946 = vmatpush1.msra.mxu0 0.0
  %3947 = vmatprep.subr.mxu0 0.0
  %3948 = vmatpush1.msra.mxu0 0.0
  %3949 = vmatprep.subr.mxu0 0.0
  %3950 = vmatpush1.msra.mxu0 0.0
  %3951 = vmatprep.subr.mxu0 0.0
  %3952 = vmatpush1.msra.mxu0 0.0
  %3953 = vmatprep.subr.mxu0 0.0
  %3954 = vmatpush1.msra.mxu0 0.0
  %3955 = vmatprep.subr.mxu0 0.0
  %3956 = vmatpush1.msra.mxu0 0.0
  %3957 = vmatprep.subr.mxu0 0.0
  %3958 = vmatpush1.msra.mxu0 0.0
  %3959 = vmatprep.subr.mxu0 0.0
  %3960 = vmatpush1.msra.mxu0 0.0
  %3961 = vmatprep.subr.mxu0 0.0
  %3962 = vmatpush1.msra.mxu0 0.0
  %3963 = vmatprep.mubr.f32.mxu0 0.0
  %3964 = vmatmul.mubr.f32.gmra.mrb[0].mxu0 %v3876
  %v3965 = vpop.f32.mrb[0].mxu0
  %v3966 = vadd.f32 %v3837, %v3965
  %v3967 = vpop.f32.mrb[0].mxu0
  %3968 = vmatprep.mubr.f32.mxu0 0.0
  %3969 = vmatmul.mubr.f32.gmra.mrb[0].mxu0 %v3879
  %v3970 = vpop.f32.mrb[0].mxu0
  %v3971 = vadd.f32 %v3842, %v3970
  %v3972 = vpop.f32.mrb[0].mxu0
  %3973 = vmatprep.mubr.f32.mxu0 0.0
  %3974 = vmatmul.mubr.f32.gmra.mrb[0].mxu0 %v3882
  %v3975 = vpop.f32.mrb[0].mxu0
  %v3976 = vadd.f32 %v3847, %v3975
  %v3977 = vpop.f32.mrb[0].mxu0
  %3978 = vmatprep.mubr.f32.mxu0 0.0
  %3979 = vmatmul.mubr.f32.gmra.mrb[0].mxu0 %v3885
  %v3980 = vpop.f32.mrb[0].mxu0
  %v3981 = vadd.f32 %v3852, %v3980
  %v3982 = vpop.f32.mrb[0].mxu0
  %3983 = vmatprep.mubr.f32.mxu0 0.0
  %3984 = vmatmul.mubr.f32.gmra.mrb[0].mxu0 %v3888
  %v3985 = vpop.f32.mrb[0].mxu0
  %v3986 = vadd.f32 %v3857, %v3985
  %v3987 = vpop.f32.mrb[0].mxu0
  %3988 = vmatprep.mubr.f32.mxu0 0.0
  %3989 = vmatmul.mubr.f32.gmra.mrb[0].mxu0 %v3891
  %v3990 = vpop.f32.mrb[0].mxu0
  %v3991 = vadd.f32 %v3862, %v3990
  %v3992 = vpop.f32.mrb[0].mxu0
  %3993 = vmatprep.mubr.f32.mxu0 0.0
  %3994 = vmatmul.mubr.f32.gmra.mrb[0].mxu0 %v3894
  %v3995 = vpop.f32.mrb[0].mxu0
  %v3996 = vadd.f32 %v3867, %v3995
  %v3997 = vpop.f32.mrb[0].mxu0
  %3998 = vmatprep.mubr.f32.mxu0 0.0
  %3999 = vmatmul.mubr.f32.gmra.mrb[0].mxu0 %v3897
  %v4000 = vpop.f32.mrb[0].mxu0
  %v4001 = vadd.f32 %v3872, %v4000
  %v4002 = vpop.f32.mrb[0].mxu0
  %4003 = vdwg.mxu0
  %4004 = vrot.lane.b32.xlu0 %v361, 96
  %v4005 = vpop.permute.xlu0 %4004
  %v4006 = vsel %vm1200, %v4005, 0
  %4008 = vmatprep.subr.mxu0 0.0
  %4009 = vmatpush1.xpose.msra.mxu0 %v1205
  %4010 = vmatprep.subr.mxu0 0.0
  %4011 = vmatpush1.xpose.msra.mxu0 0.0
  %4012 = vmatprep.subr.mxu0 0.0
  %4013 = vmatpush1.xpose.msra.mxu0 0.0
  %4014 = vmatprep.subr.mxu0 0.0
  %4015 = vmatpush1.xpose.msra.mxu0 0.0
  %4016 = vmatprep.subr.mxu0 0.0
  %4017 = vmatpush1.xpose.msra.mxu0 0.0
  %4018 = vmatprep.subr.mxu0 0.0
  %4019 = vmatpush1.xpose.msra.mxu0 0.0
  %4020 = vmatprep.subr.mxu0 0.0
  %4021 = vmatpush1.xpose.msra.mxu0 0.0
  %4022 = vmatprep.subr.mxu0 0.0
  %4023 = vmatpush1.xpose.msra.mxu0 0.0
  %4024 = vmatprep.subr.mxu0 0.0
  %4025 = vmatpush1.xpose.msra.mxu0 0.0
  %4026 = vmatprep.subr.mxu0 0.0
  %4027 = vmatpush1.xpose.msra.mxu0 0.0
  %4028 = vmatprep.subr.mxu0 0.0
  %4029 = vmatpush1.xpose.msra.mxu0 0.0
  %4030 = vmatprep.subr.mxu0 0.0
  %4031 = vmatpush1.xpose.msra.mxu0 0.0
  %4032 = vmatprep.subr.mxu0 0.0
  %4033 = vmatpush1.xpose.msra.mxu0 0.0
  %4034 = vmatprep.subr.mxu0 0.0
  %4035 = vmatpush1.xpose.msra.mxu0 0.0
  %4036 = vmatprep.subr.mxu0 0.0
  %4037 = vmatpush1.xpose.msra.mxu0 0.0
  %4038 = vmatprep.subr.mxu0 0.0
  %4039 = vmatpush1.xpose.msra.mxu0 0.0
  %4040 = vmatprep.subr.mxu0 0.0
  %4041 = vmatpush1.xpose.msra.mxu0 0.0
  %4042 = vmatprep.subr.mxu0 0.0
  %4043 = vmatpush1.xpose.msra.mxu0 0.0
  %4044 = vmatprep.subr.mxu0 0.0
  %4045 = vmatpush1.xpose.msra.mxu0 0.0
  %4046 = vmatprep.subr.mxu0 0.0
  %4047 = vmatpush1.xpose.msra.mxu0 0.0
  %4048 = vmatprep.subr.mxu0 0.0
  %4049 = vmatpush1.xpose.msra.mxu0 0.0
  %4050 = vmatprep.subr.mxu0 0.0
  %4051 = vmatpush1.xpose.msra.mxu0 0.0
  %4052 = vmatprep.subr.mxu0 0.0
  %4053 = vmatpush1.xpose.msra.mxu0 0.0
  %4054 = vmatprep.subr.mxu0 0.0
  %4055 = vmatpush1.xpose.msra.mxu0 0.0
  %4056 = vmatprep.subr.mxu0 0.0
  %4057 = vmatpush1.xpose.msra.mxu0 0.0
  %4058 = vmatprep.subr.mxu0 0.0
  %4059 = vmatpush1.xpose.msra.mxu0 0.0
  %4060 = vmatprep.subr.mxu0 0.0
  %4061 = vmatpush1.xpose.msra.mxu0 0.0
  %4062 = vmatprep.subr.mxu0 0.0
  %4063 = vmatpush1.xpose.msra.mxu0 0.0
  %4064 = vmatprep.subr.mxu0 0.0
  %4065 = vmatpush1.xpose.msra.mxu0 0.0
  %4066 = vmatprep.subr.mxu0 0.0
  %4067 = vmatpush1.xpose.msra.mxu0 0.0
  %4068 = vmatprep.subr.mxu0 0.0
  %4069 = vmatpush1.xpose.msra.mxu0 0.0
  %4070 = vmatprep.subr.mxu0 0.0
  %4071 = vmatpush1.xpose.msra.mxu0 0.0
  %4072 = vmatprep.mubr.f32.mxu0 0.0
  %4073 = vmatmul.mubr.f32.gmra.mrb[0].mxu0 %v4006
  %v4074 = vpop.f32.mrb[0].mxu0
  %v4075 = vadd.f32 %v1163, %v4074
  %v4076 = vpop.f32.mrb[0].mxu0
  %4077 = vdwg.mxu0
  %4078 = vrot.lane.b32.xlu0 %v366, 96
  %v4079 = vpop.permute.xlu0 %4078
  %v4080 = vsel %vm1200, %v4079, 0
  %4082 = vmatprep.subr.mxu0 0.0
  %4083 = vmatpush1.xpose.msra.mxu0 %v1281
  %4084 = vmatprep.subr.mxu0 0.0
  %4085 = vmatpush1.xpose.msra.mxu0 0.0
  %4086 = vmatprep.subr.mxu0 0.0
  %4087 = vmatpush1.xpose.msra.mxu0 0.0
  %4088 = vmatprep.subr.mxu0 0.0
  %4089 = vmatpush1.xpose.msra.mxu0 0.0
  %4090 = vmatprep.subr.mxu0 0.0
  %4091 = vmatpush1.xpose.msra.mxu0 0.0
  %4092 = vmatprep.subr.mxu0 0.0
  %4093 = vmatpush1.xpose.msra.mxu0 0.0
  %4094 = vmatprep.subr.mxu0 0.0
  %4095 = vmatpush1.xpose.msra.mxu0 0.0
  %4096 = vmatprep.subr.mxu0 0.0
  %4097 = vmatpush1.xpose.msra.mxu0 0.0
  %4098 = vmatprep.subr.mxu0 0.0
  %4099 = vmatpush1.xpose.msra.mxu0 0.0
  %4100 = vmatprep.subr.mxu0 0.0
  %4101 = vmatpush1.xpose.msra.mxu0 0.0
  %4102 = vmatprep.subr.mxu0 0.0
  %4103 = vmatpush1.xpose.msra.mxu0 0.0
  %4104 = vmatprep.subr.mxu0 0.0
  %4105 = vmatpush1.xpose.msra.mxu0 0.0
  %4106 = vmatprep.subr.mxu0 0.0
  %4107 = vmatpush1.xpose.msra.mxu0 0.0
  %4108 = vmatprep.subr.mxu0 0.0
  %4109 = vmatpush1.xpose.msra.mxu0 0.0
  %4110 = vmatprep.subr.mxu0 0.0
  %4111 = vmatpush1.xpose.msra.mxu0 0.0
  %4112 = vmatprep.subr.mxu0 0.0
  %4113 = vmatpush1.xpose.msra.mxu0 0.0
  %4114 = vmatprep.subr.mxu0 0.0
  %4115 = vmatpush1.xpose.msra.mxu0 0.0
  %4116 = vmatprep.subr.mxu0 0.0
  %4117 = vmatpush1.xpose.msra.mxu0 0.0
  %4118 = vmatprep.subr.mxu0 0.0
  %4119 = vmatpush1.xpose.msra.mxu0 0.0
  %4120 = vmatprep.subr.mxu0 0.0
  %4121 = vmatpush1.xpose.msra.mxu0 0.0
  %4122 = vmatprep.subr.mxu0 0.0
  %4123 = vmatpush1.xpose.msra.mxu0 0.0
  %4124 = vmatprep.subr.mxu0 0.0
  %4125 = vmatpush1.xpose.msra.mxu0 0.0
  %4126 = vmatprep.subr.mxu0 0.0
  %4127 = vmatpush1.xpose.msra.mxu0 0.0
  %4128 = vmatprep.subr.mxu0 0.0
  %4129 = vmatpush1.xpose.msra.mxu0 0.0
  %4130 = vmatprep.subr.mxu0 0.0
  %4131 = vmatpush1.xpose.msra.mxu0 0.0
  %4132 = vmatprep.subr.mxu0 0.0
  %4133 = vmatpush1.xpose.msra.mxu0 0.0
  %4134 = vmatprep.subr.mxu0 0.0
  %4135 = vmatpush1.xpose.msra.mxu0 0.0
  %4136 = vmatprep.subr.mxu0 0.0
  %4137 = vmatpush1.xpose.msra.mxu0 0.0
  %4138 = vmatprep.subr.mxu0 0.0
  %4139 = vmatpush1.xpose.msra.mxu0 0.0
  %4140 = vmatprep.subr.mxu0 0.0
  %4141 = vmatpush1.xpose.msra.mxu0 0.0
  %4142 = vmatprep.subr.mxu0 0.0
  %4143 = vmatpush1.xpose.msra.mxu0 0.0
  %4144 = vmatprep.subr.mxu0 0.0
  %4145 = vmatpush1.xpose.msra.mxu0 0.0
  %4146 = vmatprep.mubr.f32.mxu0 0.0
  %4147 = vmatmul.mubr.f32.gmra.mrb[0].mxu0 %v4080
  %v4148 = vpop.f32.mrb[0].mxu0
  %v4149 = vadd.f32 %v1167, %v4148
  %v4150 = vpop.f32.mrb[0].mxu0
  %4151 = vdwg.mxu0
  %4152 = vrot.lane.b32.xlu0 %v371, 96
  %v4153 = vpop.permute.xlu0 %4152
  %v4154 = vsel %vm1200, %v4153, 0
  %4156 = vmatprep.subr.mxu0 0.0
  %4157 = vmatpush1.xpose.msra.mxu0 %v1357
  %4158 = vmatprep.subr.mxu0 0.0
  %4159 = vmatpush1.xpose.msra.mxu0 0.0
  %4160 = vmatprep.subr.mxu0 0.0
  %4161 = vmatpush1.xpose.msra.mxu0 0.0
  %4162 = vmatprep.subr.mxu0 0.0
  %4163 = vmatpush1.xpose.msra.mxu0 0.0
  %4164 = vmatprep.subr.mxu0 0.0
  %4165 = vmatpush1.xpose.msra.mxu0 0.0
  %4166 = vmatprep.subr.mxu0 0.0
  %4167 = vmatpush1.xpose.msra.mxu0 0.0
  %4168 = vmatprep.subr.mxu0 0.0
  %4169 = vmatpush1.xpose.msra.mxu0 0.0
  %4170 = vmatprep.subr.mxu0 0.0
  %4171 = vmatpush1.xpose.msra.mxu0 0.0
  %4172 = vmatprep.subr.mxu0 0.0
  %4173 = vmatpush1.xpose.msra.mxu0 0.0
  %4174 = vmatprep.subr.mxu0 0.0
  %4175 = vmatpush1.xpose.msra.mxu0 0.0
  %4176 = vmatprep.subr.mxu0 0.0
  %4177 = vmatpush1.xpose.msra.mxu0 0.0
  %4178 = vmatprep.subr.mxu0 0.0
  %4179 = vmatpush1.xpose.msra.mxu0 0.0
  %4180 = vmatprep.subr.mxu0 0.0
  %4181 = vmatpush1.xpose.msra.mxu0 0.0
  %4182 = vmatprep.subr.mxu0 0.0
  %4183 = vmatpush1.xpose.msra.mxu0 0.0
  %4184 = vmatprep.subr.mxu0 0.0
  %4185 = vmatpush1.xpose.msra.mxu0 0.0
  %4186 = vmatprep.subr.mxu0 0.0
  %4187 = vmatpush1.xpose.msra.mxu0 0.0
  %4188 = vmatprep.subr.mxu0 0.0
  %4189 = vmatpush1.xpose.msra.mxu0 0.0
  %4190 = vmatprep.subr.mxu0 0.0
  %4191 = vmatpush1.xpose.msra.mxu0 0.0
  %4192 = vmatprep.subr.mxu0 0.0
  %4193 = vmatpush1.xpose.msra.mxu0 0.0
  %4194 = vmatprep.subr.mxu0 0.0
  %4195 = vmatpush1.xpose.msra.mxu0 0.0
  %4196 = vmatprep.subr.mxu0 0.0
  %4197 = vmatpush1.xpose.msra.mxu0 0.0
  %4198 = vmatprep.subr.mxu0 0.0
  %4199 = vmatpush1.xpose.msra.mxu0 0.0
  %4200 = vmatprep.subr.mxu0 0.0
  %4201 = vmatpush1.xpose.msra.mxu0 0.0
  %4202 = vmatprep.subr.mxu0 0.0
  %4203 = vmatpush1.xpose.msra.mxu0 0.0
  %4204 = vmatprep.subr.mxu0 0.0
  %4205 = vmatpush1.xpose.msra.mxu0 0.0
  %4206 = vmatprep.subr.mxu0 0.0
  %4207 = vmatpush1.xpose.msra.mxu0 0.0
  %4208 = vmatprep.subr.mxu0 0.0
  %4209 = vmatpush1.xpose.msra.mxu0 0.0
  %4210 = vmatprep.subr.mxu0 0.0
  %4211 = vmatpush1.xpose.msra.mxu0 0.0
  %4212 = vmatprep.subr.mxu0 0.0
  %4213 = vmatpush1.xpose.msra.mxu0 0.0
  %4214 = vmatprep.subr.mxu0 0.0
  %4215 = vmatpush1.xpose.msra.mxu0 0.0
  %4216 = vmatprep.subr.mxu0 0.0
  %4217 = vmatpush1.xpose.msra.mxu0 0.0
  %4218 = vmatprep.subr.mxu0 0.0
  %4219 = vmatpush1.xpose.msra.mxu0 0.0
  %4220 = vmatprep.mubr.f32.mxu0 0.0
  %4221 = vmatmul.mubr.f32.gmra.mrb[0].mxu0 %v4154
  %v4222 = vpop.f32.mrb[0].mxu0
  %v4223 = vadd.f32 %v1171, %v4222
  %v4224 = vpop.f32.mrb[0].mxu0
  %4225 = vdwg.mxu0
  %4226 = vrot.lane.b32.xlu0 %v376, 96
  %v4227 = vpop.permute.xlu0 %4226
  %v4228 = vsel %vm1200, %v4227, 0
  %4230 = vmatprep.subr.mxu0 0.0
  %4231 = vmatpush1.xpose.msra.mxu0 %v1433
  %4232 = vmatprep.subr.mxu0 0.0
  %4233 = vmatpush1.xpose.msra.mxu0 0.0
  %4234 = vmatprep.subr.mxu0 0.0
  %4235 = vmatpush1.xpose.msra.mxu0 0.0
  %4236 = vmatprep.subr.mxu0 0.0
  %4237 = vmatpush1.xpose.msra.mxu0 0.0
  %4238 = vmatprep.subr.mxu0 0.0
  %4239 = vmatpush1.xpose.msra.mxu0 0.0
  %4240 = vmatprep.subr.mxu0 0.0
  %4241 = vmatpush1.xpose.msra.mxu0 0.0
  %4242 = vmatprep.subr.mxu0 0.0
  %4243 = vmatpush1.xpose.msra.mxu0 0.0
  %4244 = vmatprep.subr.mxu0 0.0
  %4245 = vmatpush1.xpose.msra.mxu0 0.0
  %4246 = vmatprep.subr.mxu0 0.0
  %4247 = vmatpush1.xpose.msra.mxu0 0.0
  %4248 = vmatprep.subr.mxu0 0.0
  %4249 = vmatpush1.xpose.msra.mxu0 0.0
  %4250 = vmatprep.subr.mxu0 0.0
  %4251 = vmatpush1.xpose.msra.mxu0 0.0
  %4252 = vmatprep.subr.mxu0 0.0
  %4253 = vmatpush1.xpose.msra.mxu0 0.0
  %4254 = vmatprep.subr.mxu0 0.0
  %4255 = vmatpush1.xpose.msra.mxu0 0.0
  %4256 = vmatprep.subr.mxu0 0.0
  %4257 = vmatpush1.xpose.msra.mxu0 0.0
  %4258 = vmatprep.subr.mxu0 0.0
  %4259 = vmatpush1.xpose.msra.mxu0 0.0
  %4260 = vmatprep.subr.mxu0 0.0
  %4261 = vmatpush1.xpose.msra.mxu0 0.0
  %4262 = vmatprep.subr.mxu0 0.0
  %4263 = vmatpush1.xpose.msra.mxu0 0.0
  %4264 = vmatprep.subr.mxu0 0.0
  %4265 = vmatpush1.xpose.msra.mxu0 0.0
  %4266 = vmatprep.subr.mxu0 0.0
  %4267 = vmatpush1.xpose.msra.mxu0 0.0
  %4268 = vmatprep.subr.mxu0 0.0
  %4269 = vmatpush1.xpose.msra.mxu0 0.0
  %4270 = vmatprep.subr.mxu0 0.0
  %4271 = vmatpush1.xpose.msra.mxu0 0.0
  %4272 = vmatprep.subr.mxu0 0.0
  %4273 = vmatpush1.xpose.msra.mxu0 0.0
  %4274 = vmatprep.subr.mxu0 0.0
  %4275 = vmatpush1.xpose.msra.mxu0 0.0
  %4276 = vmatprep.subr.mxu0 0.0
  %4277 = vmatpush1.xpose.msra.mxu0 0.0
  %4278 = vmatprep.subr.mxu0 0.0
  %4279 = vmatpush1.xpose.msra.mxu0 0.0
  %4280 = vmatprep.subr.mxu0 0.0
  %4281 = vmatpush1.xpose.msra.mxu0 0.0
  %4282 = vmatprep.subr.mxu0 0.0
  %4283 = vmatpush1.xpose.msra.mxu0 0.0
  %4284 = vmatprep.subr.mxu0 0.0
  %4285 = vmatpush1.xpose.msra.mxu0 0.0
  %4286 = vmatprep.subr.mxu0 0.0
  %4287 = vmatpush1.xpose.msra.mxu0 0.0
  %4288 = vmatprep.subr.mxu0 0.0
  %4289 = vmatpush1.xpose.msra.mxu0 0.0
  %4290 = vmatprep.subr.mxu0 0.0
  %4291 = vmatpush1.xpose.msra.mxu0 0.0
  %4292 = vmatprep.subr.mxu0 0.0
  %4293 = vmatpush1.xpose.msra.mxu0 0.0
  %4294 = vmatprep.mubr.f32.mxu0 0.0
  %4295 = vmatmul.mubr.f32.gmra.mrb[0].mxu0 %v4228
  %v4296 = vpop.f32.mrb[0].mxu0
  %v4297 = vadd.f32 %v1175, %v4296
  %v4298 = vpop.f32.mrb[0].mxu0
  %4299 = vdwg.mxu0
  %4300 = vrot.lane.b32.xlu0 %v381, 96
  %v4301 = vpop.permute.xlu0 %4300
  %v4302 = vsel %vm1200, %v4301, 0
  %4304 = vmatprep.subr.mxu0 0.0
  %4305 = vmatpush1.xpose.msra.mxu0 %v1509
  %4306 = vmatprep.subr.mxu0 0.0
  %4307 = vmatpush1.xpose.msra.mxu0 0.0
  %4308 = vmatprep.subr.mxu0 0.0
  %4309 = vmatpush1.xpose.msra.mxu0 0.0
  %4310 = vmatprep.subr.mxu0 0.0
  %4311 = vmatpush1.xpose.msra.mxu0 0.0
  %4312 = vmatprep.subr.mxu0 0.0
  %4313 = vmatpush1.xpose.msra.mxu0 0.0
  %4314 = vmatprep.subr.mxu0 0.0
  %4315 = vmatpush1.xpose.msra.mxu0 0.0
  %4316 = vmatprep.subr.mxu0 0.0
  %4317 = vmatpush1.xpose.msra.mxu0 0.0
  %4318 = vmatprep.subr.mxu0 0.0
  %4319 = vmatpush1.xpose.msra.mxu0 0.0
  %4320 = vmatprep.subr.mxu0 0.0
  %4321 = vmatpush1.xpose.msra.mxu0 0.0
  %4322 = vmatprep.subr.mxu0 0.0
  %4323 = vmatpush1.xpose.msra.mxu0 0.0
  %4324 = vmatprep.subr.mxu0 0.0
  %4325 = vmatpush1.xpose.msra.mxu0 0.0
  %4326 = vmatprep.subr.mxu0 0.0
  %4327 = vmatpush1.xpose.msra.mxu0 0.0
  %4328 = vmatprep.subr.mxu0 0.0
  %4329 = vmatpush1.xpose.msra.mxu0 0.0
  %4330 = vmatprep.subr.mxu0 0.0
  %4331 = vmatpush1.xpose.msra.mxu0 0.0
  %4332 = vmatprep.subr.mxu0 0.0
  %4333 = vmatpush1.xpose.msra.mxu0 0.0
  %4334 = vmatprep.subr.mxu0 0.0
  %4335 = vmatpush1.xpose.msra.mxu0 0.0
  %4336 = vmatprep.subr.mxu0 0.0
  %4337 = vmatpush1.xpose.msra.mxu0 0.0
  %4338 = vmatprep.subr.mxu0 0.0
  %4339 = vmatpush1.xpose.msra.mxu0 0.0
  %4340 = vmatprep.subr.mxu0 0.0
  %4341 = vmatpush1.xpose.msra.mxu0 0.0
  %4342 = vmatprep.subr.mxu0 0.0
  %4343 = vmatpush1.xpose.msra.mxu0 0.0
  %4344 = vmatprep.subr.mxu0 0.0
  %4345 = vmatpush1.xpose.msra.mxu0 0.0
  %4346 = vmatprep.subr.mxu0 0.0
  %4347 = vmatpush1.xpose.msra.mxu0 0.0
  %4348 = vmatprep.subr.mxu0 0.0
  %4349 = vmatpush1.xpose.msra.mxu0 0.0
  %4350 = vmatprep.subr.mxu0 0.0
  %4351 = vmatpush1.xpose.msra.mxu0 0.0
  %4352 = vmatprep.subr.mxu0 0.0
  %4353 = vmatpush1.xpose.msra.mxu0 0.0
  %4354 = vmatprep.subr.mxu0 0.0
  %4355 = vmatpush1.xpose.msra.mxu0 0.0
  %4356 = vmatprep.subr.mxu0 0.0
  %4357 = vmatpush1.xpose.msra.mxu0 0.0
  %4358 = vmatprep.subr.mxu0 0.0
  %4359 = vmatpush1.xpose.msra.mxu0 0.0
  %4360 = vmatprep.subr.mxu0 0.0
  %4361 = vmatpush1.xpose.msra.mxu0 0.0
  %4362 = vmatprep.subr.mxu0 0.0
  %4363 = vmatpush1.xpose.msra.mxu0 0.0
  %4364 = vmatprep.subr.mxu0 0.0
  %4365 = vmatpush1.xpose.msra.mxu0 0.0
  %4366 = vmatprep.subr.mxu0 0.0
  %4367 = vmatpush1.xpose.msra.mxu0 0.0
  %4368 = vmatprep.mubr.f32.mxu0 0.0
  %4369 = vmatmul.mubr.f32.gmra.mrb[0].mxu0 %v4302
  %v4370 = vpop.f32.mrb[0].mxu0
  %v4371 = vadd.f32 %v1179, %v4370
  %v4372 = vpop.f32.mrb[0].mxu0
  %4373 = vdwg.mxu0
  %4374 = vrot.lane.b32.xlu0 %v386, 96
  %v4375 = vpop.permute.xlu0 %4374
  %v4376 = vsel %vm1200, %v4375, 0
  %4378 = vmatprep.subr.mxu0 0.0
  %4379 = vmatpush1.xpose.msra.mxu0 %v1585
  %4380 = vmatprep.subr.mxu0 0.0
  %4381 = vmatpush1.xpose.msra.mxu0 0.0
  %4382 = vmatprep.subr.mxu0 0.0
  %4383 = vmatpush1.xpose.msra.mxu0 0.0
  %4384 = vmatprep.subr.mxu0 0.0
  %4385 = vmatpush1.xpose.msra.mxu0 0.0
  %4386 = vmatprep.subr.mxu0 0.0
  %4387 = vmatpush1.xpose.msra.mxu0 0.0
  %4388 = vmatprep.subr.mxu0 0.0
  %4389 = vmatpush1.xpose.msra.mxu0 0.0
  %4390 = vmatprep.subr.mxu0 0.0
  %4391 = vmatpush1.xpose.msra.mxu0 0.0
  %4392 = vmatprep.subr.mxu0 0.0
  %4393 = vmatpush1.xpose.msra.mxu0 0.0
  %4394 = vmatprep.subr.mxu0 0.0
  %4395 = vmatpush1.xpose.msra.mxu0 0.0
  %4396 = vmatprep.subr.mxu0 0.0
  %4397 = vmatpush1.xpose.msra.mxu0 0.0
  %4398 = vmatprep.subr.mxu0 0.0
  %4399 = vmatpush1.xpose.msra.mxu0 0.0
  %4400 = vmatprep.subr.mxu0 0.0
  %4401 = vmatpush1.xpose.msra.mxu0 0.0
  %4402 = vmatprep.subr.mxu0 0.0
  %4403 = vmatpush1.xpose.msra.mxu0 0.0
  %4404 = vmatprep.subr.mxu0 0.0
  %4405 = vmatpush1.xpose.msra.mxu0 0.0
  %4406 = vmatprep.subr.mxu0 0.0
  %4407 = vmatpush1.xpose.msra.mxu0 0.0
  %4408 = vmatprep.subr.mxu0 0.0
  %4409 = vmatpush1.xpose.msra.mxu0 0.0
  %4410 = vmatprep.subr.mxu0 0.0
  %4411 = vmatpush1.xpose.msra.mxu0 0.0
  %4412 = vmatprep.subr.mxu0 0.0
  %4413 = vmatpush1.xpose.msra.mxu0 0.0
  %4414 = vmatprep.subr.mxu0 0.0
  %4415 = vmatpush1.xpose.msra.mxu0 0.0
  %4416 = vmatprep.subr.mxu0 0.0
  %4417 = vmatpush1.xpose.msra.mxu0 0.0
  %4418 = vmatprep.subr.mxu0 0.0
  %4419 = vmatpush1.xpose.msra.mxu0 0.0
  %4420 = vmatprep.subr.mxu0 0.0
  %4421 = vmatpush1.xpose.msra.mxu0 0.0
  %4422 = vmatprep.subr.mxu0 0.0
  %4423 = vmatpush1.xpose.msra.mxu0 0.0
  %4424 = vmatprep.subr.mxu0 0.0
  %4425 = vmatpush1.xpose.msra.mxu0 0.0
  %4426 = vmatprep.subr.mxu0 0.0
  %4427 = vmatpush1.xpose.msra.mxu0 0.0
  %4428 = vmatprep.subr.mxu0 0.0
  %4429 = vmatpush1.xpose.msra.mxu0 0.0
  %4430 = vmatprep.subr.mxu0 0.0
  %4431 = vmatpush1.xpose.msra.mxu0 0.0
  %4432 = vmatprep.subr.mxu0 0.0
  %4433 = vmatpush1.xpose.msra.mxu0 0.0
  %4434 = vmatprep.subr.mxu0 0.0
  %4435 = vmatpush1.xpose.msra.mxu0 0.0
  %4436 = vmatprep.subr.mxu0 0.0
  %4437 = vmatpush1.xpose.msra.mxu0 0.0
  %4438 = vmatprep.subr.mxu0 0.0
  %4439 = vmatpush1.xpose.msra.mxu0 0.0
  %4440 = vmatprep.subr.mxu0 0.0
  %4441 = vmatpush1.xpose.msra.mxu0 0.0
  %4442 = vmatprep.mubr.f32.mxu0 0.0
  %4443 = vmatmul.mubr.f32.gmra.mrb[0].mxu0 %v4376
  %v4444 = vpop.f32.mrb[0].mxu0
  %v4445 = vadd.f32 %v1183, %v4444
  %v4446 = vpop.f32.mrb[0].mxu0
  %4447 = vdwg.mxu0
  %4448 = vrot.lane.b32.xlu0 %v391, 96
  %v4449 = vpop.permute.xlu0 %4448
  %v4450 = vsel %vm1200, %v4449, 0
  %4452 = vmatprep.subr.mxu0 0.0
  %4453 = vmatpush1.xpose.msra.mxu0 %v1661
  %4454 = vmatprep.subr.mxu0 0.0
  %4455 = vmatpush1.xpose.msra.mxu0 0.0
  %4456 = vmatprep.subr.mxu0 0.0
  %4457 = vmatpush1.xpose.msra.mxu0 0.0
  %4458 = vmatprep.subr.mxu0 0.0
  %4459 = vmatpush1.xpose.msra.mxu0 0.0
  %4460 = vmatprep.subr.mxu0 0.0
  %4461 = vmatpush1.xpose.msra.mxu0 0.0
  %4462 = vmatprep.subr.mxu0 0.0
  %4463 = vmatpush1.xpose.msra.mxu0 0.0
  %4464 = vmatprep.subr.mxu0 0.0
  %4465 = vmatpush1.xpose.msra.mxu0 0.0
  %4466 = vmatprep.subr.mxu0 0.0
  %4467 = vmatpush1.xpose.msra.mxu0 0.0
  %4468 = vmatprep.subr.mxu0 0.0
  %4469 = vmatpush1.xpose.msra.mxu0 0.0
  %4470 = vmatprep.subr.mxu0 0.0
  %4471 = vmatpush1.xpose.msra.mxu0 0.0
  %4472 = vmatprep.subr.mxu0 0.0
  %4473 = vmatpush1.xpose.msra.mxu0 0.0
  %4474 = vmatprep.subr.mxu0 0.0
  %4475 = vmatpush1.xpose.msra.mxu0 0.0
  %4476 = vmatprep.subr.mxu0 0.0
  %4477 = vmatpush1.xpose.msra.mxu0 0.0
  %4478 = vmatprep.subr.mxu0 0.0
  %4479 = vmatpush1.xpose.msra.mxu0 0.0
  %4480 = vmatprep.subr.mxu0 0.0
  %4481 = vmatpush1.xpose.msra.mxu0 0.0
  %4482 = vmatprep.subr.mxu0 0.0
  %4483 = vmatpush1.xpose.msra.mxu0 0.0
  %4484 = vmatprep.subr.mxu0 0.0
  %4485 = vmatpush1.xpose.msra.mxu0 0.0
  %4486 = vmatprep.subr.mxu0 0.0
  %4487 = vmatpush1.xpose.msra.mxu0 0.0
  %4488 = vmatprep.subr.mxu0 0.0
  %4489 = vmatpush1.xpose.msra.mxu0 0.0
  %4490 = vmatprep.subr.mxu0 0.0
  %4491 = vmatpush1.xpose.msra.mxu0 0.0
  %4492 = vmatprep.subr.mxu0 0.0
  %4493 = vmatpush1.xpose.msra.mxu0 0.0
  %4494 = vmatprep.subr.mxu0 0.0
  %4495 = vmatpush1.xpose.msra.mxu0 0.0
  %4496 = vmatprep.subr.mxu0 0.0
  %4497 = vmatpush1.xpose.msra.mxu0 0.0
  %4498 = vmatprep.subr.mxu0 0.0
  %4499 = vmatpush1.xpose.msra.mxu0 0.0
  %4500 = vmatprep.subr.mxu0 0.0
  %4501 = vmatpush1.xpose.msra.mxu0 0.0
  %4502 = vmatprep.subr.mxu0 0.0
  %4503 = vmatpush1.xpose.msra.mxu0 0.0
  %4504 = vmatprep.subr.mxu0 0.0
  %4505 = vmatpush1.xpose.msra.mxu0 0.0
  %4506 = vmatprep.subr.mxu0 0.0
  %4507 = vmatpush1.xpose.msra.mxu0 0.0
  %4508 = vmatprep.subr.mxu0 0.0
  %4509 = vmatpush1.xpose.msra.mxu0 0.0
  %4510 = vmatprep.subr.mxu0 0.0
  %4511 = vmatpush1.xpose.msra.mxu0 0.0
  %4512 = vmatprep.subr.mxu0 0.0
  %4513 = vmatpush1.xpose.msra.mxu0 0.0
  %4514 = vmatprep.subr.mxu0 0.0
  %4515 = vmatpush1.xpose.msra.mxu0 0.0
  %4516 = vmatprep.mubr.f32.mxu0 0.0
  %4517 = vmatmul.mubr.f32.gmra.mrb[0].mxu0 %v4450
  %v4518 = vpop.f32.mrb[0].mxu0
  %v4519 = vadd.f32 %v1187, %v4518
  %v4520 = vpop.f32.mrb[0].mxu0
  %4521 = vdwg.mxu0
  %4522 = vrot.lane.b32.xlu0 %v396, 96
  %v4523 = vpop.permute.xlu0 %4522
  %v4524 = vsel %vm1200, %v4523, 0
  %4526 = vmatprep.subr.mxu0 0.0
  %4527 = vmatpush1.xpose.msra.mxu0 %v1737
  %4528 = vmatprep.subr.mxu0 0.0
  %4529 = vmatpush1.xpose.msra.mxu0 0.0
  %4530 = vmatprep.subr.mxu0 0.0
  %4531 = vmatpush1.xpose.msra.mxu0 0.0
  %4532 = vmatprep.subr.mxu0 0.0
  %4533 = vmatpush1.xpose.msra.mxu0 0.0
  %4534 = vmatprep.subr.mxu0 0.0
  %4535 = vmatpush1.xpose.msra.mxu0 0.0
  %4536 = vmatprep.subr.mxu0 0.0
  %4537 = vmatpush1.xpose.msra.mxu0 0.0
  %4538 = vmatprep.subr.mxu0 0.0
  %4539 = vmatpush1.xpose.msra.mxu0 0.0
  %4540 = vmatprep.subr.mxu0 0.0
  %4541 = vmatpush1.xpose.msra.mxu0 0.0
  %4542 = vmatprep.subr.mxu0 0.0
  %4543 = vmatpush1.xpose.msra.mxu0 0.0
  %4544 = vmatprep.subr.mxu0 0.0
  %4545 = vmatpush1.xpose.msra.mxu0 0.0
  %4546 = vmatprep.subr.mxu0 0.0
  %4547 = vmatpush1.xpose.msra.mxu0 0.0
  %4548 = vmatprep.subr.mxu0 0.0
  %4549 = vmatpush1.xpose.msra.mxu0 0.0
  %4550 = vmatprep.subr.mxu0 0.0
  %4551 = vmatpush1.xpose.msra.mxu0 0.0
  %4552 = vmatprep.subr.mxu0 0.0
  %4553 = vmatpush1.xpose.msra.mxu0 0.0
  %4554 = vmatprep.subr.mxu0 0.0
  %4555 = vmatpush1.xpose.msra.mxu0 0.0
  %4556 = vmatprep.subr.mxu0 0.0
  %4557 = vmatpush1.xpose.msra.mxu0 0.0
  %4558 = vmatprep.subr.mxu0 0.0
  %4559 = vmatpush1.xpose.msra.mxu0 0.0
  %4560 = vmatprep.subr.mxu0 0.0
  %4561 = vmatpush1.xpose.msra.mxu0 0.0
  %4562 = vmatprep.subr.mxu0 0.0
  %4563 = vmatpush1.xpose.msra.mxu0 0.0
  %4564 = vmatprep.subr.mxu0 0.0
  %4565 = vmatpush1.xpose.msra.mxu0 0.0
  %4566 = vmatprep.subr.mxu0 0.0
  %4567 = vmatpush1.xpose.msra.mxu0 0.0
  %4568 = vmatprep.subr.mxu0 0.0
  %4569 = vmatpush1.xpose.msra.mxu0 0.0
  %4570 = vmatprep.subr.mxu0 0.0
  %4571 = vmatpush1.xpose.msra.mxu0 0.0
  %4572 = vmatprep.subr.mxu0 0.0
  %4573 = vmatpush1.xpose.msra.mxu0 0.0
  %4574 = vmatprep.subr.mxu0 0.0
  %4575 = vmatpush1.xpose.msra.mxu0 0.0
  %4576 = vmatprep.subr.mxu0 0.0
  %4577 = vmatpush1.xpose.msra.mxu0 0.0
  %4578 = vmatprep.subr.mxu0 0.0
  %4579 = vmatpush1.xpose.msra.mxu0 0.0
  %4580 = vmatprep.subr.mxu0 0.0
  %4581 = vmatpush1.xpose.msra.mxu0 0.0
  %4582 = vmatprep.subr.mxu0 0.0
  %4583 = vmatpush1.xpose.msra.mxu0 0.0
  %4584 = vmatprep.subr.mxu0 0.0
  %4585 = vmatpush1.xpose.msra.mxu0 0.0
  %4586 = vmatprep.subr.mxu0 0.0
  %4587 = vmatpush1.xpose.msra.mxu0 0.0
  %4588 = vmatprep.subr.mxu0 0.0
  %4589 = vmatpush1.xpose.msra.mxu0 0.0
  %4590 = vmatprep.mubr.f32.mxu0 0.0
  %4591 = vmatmul.mubr.f32.gmra.mrb[0].mxu0 %v4524
  %v4592 = vpop.f32.mrb[0].mxu0
  %v4593 = vadd.f32 %v1191, %v4592
  %v4594 = vpop.f32.mrb[0].mxu0
  %4595 = vdwg.mxu0
  %v4596 = vsel %vm1809, %v4075, -inf
  %4597 = vmax.xlane.f32.xlu0 %v4596
  %v4598 = vpop.xlane.xlu0 %4597
  %v4599 = vsel %vm1809, %v4149, -inf
  %4600 = vmax.xlane.f32.xlu0 %v4599
  %v4601 = vpop.xlane.xlu0 %4600
  %v4602 = vsel %vm1809, %v4223, -inf
  %4603 = vmax.xlane.f32.xlu0 %v4602
  %v4604 = vpop.xlane.xlu0 %4603
  %v4605 = vsel %vm1809, %v4297, -inf
  %4606 = vmax.xlane.f32.xlu0 %v4605
  %v4607 = vpop.xlane.xlu0 %4606
  %v4608 = vsel %vm1809, %v4371, -inf
  %4609 = vmax.xlane.f32.xlu0 %v4608
  %v4610 = vpop.xlane.xlu0 %4609
  %v4611 = vsel %vm1809, %v4445, -inf
  %4612 = vmax.xlane.f32.xlu0 %v4611
  %v4613 = vpop.xlane.xlu0 %4612
  %v4614 = vsel %vm1809, %v4519, -inf
  %4615 = vmax.xlane.f32.xlu0 %v4614
  %v4616 = vpop.xlane.xlu0 %4615
  %v4617 = vsel %vm1809, %v4593, -inf
  %4618 = vmax.xlane.f32.xlu0 %v4617
  %v4619 = vpop.xlane.xlu0 %4618
  %v4620 = vsub.f32 %v4075, %v4598
  %v4621 = vsub.f32 %v4149, %v4601
  %v4622 = vsub.f32 %v4223, %v4604
  %v4623 = vsub.f32 %v4297, %v4607
  %v4624 = vsub.f32 %v4371, %v4610
  %v4625 = vsub.f32 %v4445, %v4613
  %v4626 = vsub.f32 %v4519, %v4616
  %v4627 = vsub.f32 %v4593, %v4619
  %v4628 = vmul.f32 %v4620, 1.442695
  %v4629 = vpow.pop %v4628
  %v4630 = vmul.f32 %v4621, 1.442695
  %v4631 = vpow.pop %v4630
  %v4632 = vmul.f32 %v4622, 1.442695
  %v4633 = vpow.pop %v4632
  %v4634 = vmul.f32 %v4623, 1.442695
  %v4635 = vpow.pop %v4634
  %v4636 = vmul.f32 %v4624, 1.442695
  %v4637 = vpow.pop %v4636
  %v4638 = vmul.f32 %v4625, 1.442695
  %v4639 = vpow.pop %v4638
  %v4640 = vmul.f32 %v4626, 1.442695
  %v4641 = vpow.pop %v4640
  %v4642 = vmul.f32 %v4627, 1.442695
  %v4643 = vpow.pop %v4642
  %v4644 = vsel %vm1809, %v4629, 0.0
  %4645 = vadd.xlane.f32.xlu0 %v4644
  %v4646 = vpop.xlane.xlu0 %4645
  %v4647 = vsel %vm1809, %v4631, 0.0
  %4648 = vadd.xlane.f32.xlu0 %v4647
  %v4649 = vpop.xlane.xlu0 %4648
  %v4650 = vsel %vm1809, %v4633, 0.0
  %4651 = vadd.xlane.f32.xlu0 %v4650
  %v4652 = vpop.xlane.xlu0 %4651
  %v4653 = vsel %vm1809, %v4635, 0.0
  %4654 = vadd.xlane.f32.xlu0 %v4653
  %v4655 = vpop.xlane.xlu0 %4654
  %v4656 = vsel %vm1809, %v4637, 0.0
  %4657 = vadd.xlane.f32.xlu0 %v4656
  %v4658 = vpop.xlane.xlu0 %4657
  %v4659 = vsel %vm1809, %v4639, 0.0
  %4660 = vadd.xlane.f32.xlu0 %v4659
  %v4661 = vpop.xlane.xlu0 %4660
  %v4662 = vsel %vm1809, %v4641, 0.0
  %4663 = vadd.xlane.f32.xlu0 %v4662
  %v4664 = vpop.xlane.xlu0 %4663
  %v4665 = vsel %vm1809, %v4643, 0.0
  %4666 = vadd.xlane.f32.xlu0 %v4665
  %v4667 = vpop.xlane.xlu0 %4666
  %v4668 = vrcp.pop %v4646
  %v4669 = vmul.f32 %v4629, %v4668
  %v4670 = vrcp.pop %v4649
  %v4671 = vmul.f32 %v4631, %v4670
  %v4672 = vrcp.pop %v4652
  %v4673 = vmul.f32 %v4633, %v4672
  %v4674 = vrcp.pop %v4655
  %v4675 = vmul.f32 %v4635, %v4674
  %v4676 = vrcp.pop %v4658
  %v4677 = vmul.f32 %v4637, %v4676
  %v4678 = vrcp.pop %v4661
  %v4679 = vmul.f32 %v4639, %v4678
  %v4680 = vrcp.pop %v4664
  %v4681 = vmul.f32 %v4641, %v4680
  %v4682 = vrcp.pop %v4667
  %v4683 = vmul.f32 %v4643, %v4682
  %v4685 = vsel %vm1809, %v4669, 0
  %4687 = vmatprep.subr.mxu0 0.0
  %4688 = vmatpush1.msra.mxu0 %v1128
  %4689 = vmatprep.subr.mxu0 0.0
  %4690 = vmatpush1.msra.mxu0 0.0
  %4691 = vmatprep.subr.mxu0 0.0
  %4692 = vmatpush1.msra.mxu0 0.0
  %4693 = vmatprep.subr.mxu0 0.0
  %4694 = vmatpush1.msra.mxu0 0.0
  %4695 = vmatprep.subr.mxu0 0.0
  %4696 = vmatpush1.msra.mxu0 0.0
  %4697 = vmatprep.subr.mxu0 0.0
  %4698 = vmatpush1.msra.mxu0 0.0
  %4699 = vmatprep.subr.mxu0 0.0
  %4700 = vmatpush1.msra.mxu0 0.0
  %4701 = vmatprep.subr.mxu0 0.0
  %4702 = vmatpush1.msra.mxu0 0.0
  %4703 = vmatprep.subr.mxu0 0.0
  %4704 = vmatpush1.msra.mxu0 0.0
  %4705 = vmatprep.subr.mxu0 0.0
  %4706 = vmatpush1.msra.mxu0 0.0
  %4707 = vmatprep.subr.mxu0 0.0
  %4708 = vmatpush1.msra.mxu0 0.0
  %4709 = vmatprep.subr.mxu0 0.0
  %4710 = vmatpush1.msra.mxu0 0.0
  %4711 = vmatprep.subr.mxu0 0.0
  %4712 = vmatpush1.msra.mxu0 0.0
  %4713 = vmatprep.subr.mxu0 0.0
  %4714 = vmatpush1.msra.mxu0 0.0
  %4715 = vmatprep.subr.mxu0 0.0
  %4716 = vmatpush1.msra.mxu0 0.0
  %4717 = vmatprep.subr.mxu0 0.0
  %4718 = vmatpush1.msra.mxu0 0.0
  %4719 = vmatprep.subr.mxu0 0.0
  %4720 = vmatpush1.msra.mxu0 0.0
  %4721 = vmatprep.subr.mxu0 0.0
  %4722 = vmatpush1.msra.mxu0 0.0
  %4723 = vmatprep.subr.mxu0 0.0
  %4724 = vmatpush1.msra.mxu0 0.0
  %4725 = vmatprep.subr.mxu0 0.0
  %4726 = vmatpush1.msra.mxu0 0.0
  %4727 = vmatprep.subr.mxu0 0.0
  %4728 = vmatpush1.msra.mxu0 0.0
  %4729 = vmatprep.subr.mxu0 0.0
  %4730 = vmatpush1.msra.mxu0 0.0
  %4731 = vmatprep.subr.mxu0 0.0
  %4732 = vmatpush1.msra.mxu0 0.0
  %4733 = vmatprep.subr.mxu0 0.0
  %4734 = vmatpush1.msra.mxu0 0.0
  %4735 = vmatprep.subr.mxu0 0.0
  %4736 = vmatpush1.msra.mxu0 0.0
  %4737 = vmatprep.subr.mxu0 0.0
  %4738 = vmatpush1.msra.mxu0 0.0
  %4739 = vmatprep.subr.mxu0 0.0
  %4740 = vmatpush1.msra.mxu0 0.0
  %4741 = vmatprep.subr.mxu0 0.0
  %4742 = vmatpush1.msra.mxu0 0.0
  %4743 = vmatprep.subr.mxu0 0.0
  %4744 = vmatpush1.msra.mxu0 0.0
  %4745 = vmatprep.subr.mxu0 0.0
  %4746 = vmatpush1.msra.mxu0 0.0
  %4747 = vmatprep.subr.mxu0 0.0
  %4748 = vmatpush1.msra.mxu0 0.0
  %4749 = vmatprep.subr.mxu0 0.0
  %4750 = vmatpush1.msra.mxu0 0.0
  %4751 = vmatprep.mubr.f32.mxu0 0.0
  %4752 = vmatmul.mubr.f32.gmra.mrb[0].mxu0 %v4685
  %v4753 = vpop.f32.mrb[0].mxu0
  %v4754 = vadd.f32 0.0, %v4753
  %v4755 = vpop.f32.mrb[0].mxu0
  %4756 = vdwg.mxu0
  %v4758 = vsel %vm1809, %v4671, 0
  %4760 = vmatprep.subr.mxu0 0.0
  %4761 = vmatpush1.msra.mxu0 %v1129
  %4762 = vmatprep.subr.mxu0 0.0
  %4763 = vmatpush1.msra.mxu0 0.0
  %4764 = vmatprep.subr.mxu0 0.0
  %4765 = vmatpush1.msra.mxu0 0.0
  %4766 = vmatprep.subr.mxu0 0.0
  %4767 = vmatpush1.msra.mxu0 0.0
  %4768 = vmatprep.subr.mxu0 0.0
  %4769 = vmatpush1.msra.mxu0 0.0
  %4770 = vmatprep.subr.mxu0 0.0
  %4771 = vmatpush1.msra.mxu0 0.0
  %4772 = vmatprep.subr.mxu0 0.0
  %4773 = vmatpush1.msra.mxu0 0.0
  %4774 = vmatprep.subr.mxu0 0.0
  %4775 = vmatpush1.msra.mxu0 0.0
  %4776 = vmatprep.subr.mxu0 0.0
  %4777 = vmatpush1.msra.mxu0 0.0
  %4778 = vmatprep.subr.mxu0 0.0
  %4779 = vmatpush1.msra.mxu0 0.0
  %4780 = vmatprep.subr.mxu0 0.0
  %4781 = vmatpush1.msra.mxu0 0.0
  %4782 = vmatprep.subr.mxu0 0.0
  %4783 = vmatpush1.msra.mxu0 0.0
  %4784 = vmatprep.subr.mxu0 0.0
  %4785 = vmatpush1.msra.mxu0 0.0
  %4786 = vmatprep.subr.mxu0 0.0
  %4787 = vmatpush1.msra.mxu0 0.0
  %4788 = vmatprep.subr.mxu0 0.0
  %4789 = vmatpush1.msra.mxu0 0.0
  %4790 = vmatprep.subr.mxu0 0.0
  %4791 = vmatpush1.msra.mxu0 0.0
  %4792 = vmatprep.subr.mxu0 0.0
  %4793 = vmatpush1.msra.mxu0 0.0
  %4794 = vmatprep.subr.mxu0 0.0
  %4795 = vmatpush1.msra.mxu0 0.0
  %4796 = vmatprep.subr.mxu0 0.0
  %4797 = vmatpush1.msra.mxu0 0.0
  %4798 = vmatprep.subr.mxu0 0.0
  %4799 = vmatpush1.msra.mxu0 0.0
  %4800 = vmatprep.subr.mxu0 0.0
  %4801 = vmatpush1.msra.mxu0 0.0
  %4802 = vmatprep.subr.mxu0 0.0
  %4803 = vmatpush1.msra.mxu0 0.0
  %4804 = vmatprep.subr.mxu0 0.0
  %4805 = vmatpush1.msra.mxu0 0.0
  %4806 = vmatprep.subr.mxu0 0.0
  %4807 = vmatpush1.msra.mxu0 0.0
  %4808 = vmatprep.subr.mxu0 0.0
  %4809 = vmatpush1.msra.mxu0 0.0
  %4810 = vmatprep.subr.mxu0 0.0
  %4811 = vmatpush1.msra.mxu0 0.0
  %4812 = vmatprep.subr.mxu0 0.0
  %4813 = vmatpush1.msra.mxu0 0.0
  %4814 = vmatprep.subr.mxu0 0.0
  %4815 = vmatpush1.msra.mxu0 0.0
  %4816 = vmatprep.subr.mxu0 0.0
  %4817 = vmatpush1.msra.mxu0 0.0
  %4818 = vmatprep.subr.mxu0 0.0
  %4819 = vmatpush1.msra.mxu0 0.0
  %4820 = vmatprep.subr.mxu0 0.0
  %4821 = vmatpush1.msra.mxu0 0.0
  %4822 = vmatprep.subr.mxu0 0.0
  %4823 = vmatpush1.msra.mxu0 0.0
  %4824 = vmatprep.mubr.f32.mxu0 0.0
  %4825 = vmatmul.mubr.f32.gmra.mrb[0].mxu0 %v4758
  %v4826 = vpop.f32.mrb[0].mxu0
  %v4827 = vadd.f32 0.0, %v4826
  %v4828 = vpop.f32.mrb[0].mxu0
  %4829 = vdwg.mxu0
  %v4831 = vsel %vm1809, %v4673, 0
  %4833 = vmatprep.subr.mxu0 0.0
  %4834 = vmatpush1.msra.mxu0 %v1130
  %4835 = vmatprep.subr.mxu0 0.0
  %4836 = vmatpush1.msra.mxu0 0.0
  %4837 = vmatprep.subr.mxu0 0.0
  %4838 = vmatpush1.msra.mxu0 0.0
  %4839 = vmatprep.subr.mxu0 0.0
  %4840 = vmatpush1.msra.mxu0 0.0
  %4841 = vmatprep.subr.mxu0 0.0
  %4842 = vmatpush1.msra.mxu0 0.0
  %4843 = vmatprep.subr.mxu0 0.0
  %4844 = vmatpush1.msra.mxu0 0.0
  %4845 = vmatprep.subr.mxu0 0.0
  %4846 = vmatpush1.msra.mxu0 0.0
  %4847 = vmatprep.subr.mxu0 0.0
  %4848 = vmatpush1.msra.mxu0 0.0
  %4849 = vmatprep.subr.mxu0 0.0
  %4850 = vmatpush1.msra.mxu0 0.0
  %4851 = vmatprep.subr.mxu0 0.0
  %4852 = vmatpush1.msra.mxu0 0.0
  %4853 = vmatprep.subr.mxu0 0.0
  %4854 = vmatpush1.msra.mxu0 0.0
  %4855 = vmatprep.subr.mxu0 0.0
  %4856 = vmatpush1.msra.mxu0 0.0
  %4857 = vmatprep.subr.mxu0 0.0
  %4858 = vmatpush1.msra.mxu0 0.0
  %4859 = vmatprep.subr.mxu0 0.0
  %4860 = vmatpush1.msra.mxu0 0.0
  %4861 = vmatprep.subr.mxu0 0.0
  %4862 = vmatpush1.msra.mxu0 0.0
  %4863 = vmatprep.subr.mxu0 0.0
  %4864 = vmatpush1.msra.mxu0 0.0
  %4865 = vmatprep.subr.mxu0 0.0
  %4866 = vmatpush1.msra.mxu0 0.0
  %4867 = vmatprep.subr.mxu0 0.0
  %4868 = vmatpush1.msra.mxu0 0.0
  %4869 = vmatprep.subr.mxu0 0.0
  %4870 = vmatpush1.msra.mxu0 0.0
  %4871 = vmatprep.subr.mxu0 0.0
  %4872 = vmatpush1.msra.mxu0 0.0
  %4873 = vmatprep.subr.mxu0 0.0
  %4874 = vmatpush1.msra.mxu0 0.0
  %4875 = vmatprep.subr.mxu0 0.0
  %4876 = vmatpush1.msra.mxu0 0.0
  %4877 = vmatprep.subr.mxu0 0.0
  %4878 = vmatpush1.msra.mxu0 0.0
  %4879 = vmatprep.subr.mxu0 0.0
  %4880 = vmatpush1.msra.mxu0 0.0
  %4881 = vmatprep.subr.mxu0 0.0
  %4882 = vmatpush1.msra.mxu0 0.0
  %4883 = vmatprep.subr.mxu0 0.0
  %4884 = vmatpush1.msra.mxu0 0.0
  %4885 = vmatprep.subr.mxu0 0.0
  %4886 = vmatpush1.msra.mxu0 0.0
  %4887 = vmatprep.subr.mxu0 0.0
  %4888 = vmatpush1.msra.mxu0 0.0
  %4889 = vmatprep.subr.mxu0 0.0
  %4890 = vmatpush1.msra.mxu0 0.0
  %4891 = vmatprep.subr.mxu0 0.0
  %4892 = vmatpush1.msra.mxu0 0.0
  %4893 = vmatprep.subr.mxu0 0.0
  %4894 = vmatpush1.msra.mxu0 0.0
  %4895 = vmatprep.subr.mxu0 0.0
  %4896 = vmatpush1.msra.mxu0 0.0
  %4897 = vmatprep.mubr.f32.mxu0 0.0
  %4898 = vmatmul.mubr.f32.gmra.mrb[0].mxu0 %v4831
  %v4899 = vpop.f32.mrb[0].mxu0
  %v4900 = vadd.f32 0.0, %v4899
  %v4901 = vpop.f32.mrb[0].mxu0
  %4902 = vdwg.mxu0
  %v4904 = vsel %vm1809, %v4675, 0
  %4906 = vmatprep.subr.mxu0 0.0
  %4907 = vmatpush1.msra.mxu0 %v1131
  %4908 = vmatprep.subr.mxu0 0.0
  %4909 = vmatpush1.msra.mxu0 0.0
  %4910 = vmatprep.subr.mxu0 0.0
  %4911 = vmatpush1.msra.mxu0 0.0
  %4912 = vmatprep.subr.mxu0 0.0
  %4913 = vmatpush1.msra.mxu0 0.0
  %4914 = vmatprep.subr.mxu0 0.0
  %4915 = vmatpush1.msra.mxu0 0.0
  %4916 = vmatprep.subr.mxu0 0.0
  %4917 = vmatpush1.msra.mxu0 0.0
  %4918 = vmatprep.subr.mxu0 0.0
  %4919 = vmatpush1.msra.mxu0 0.0
  %4920 = vmatprep.subr.mxu0 0.0
  %4921 = vmatpush1.msra.mxu0 0.0
  %4922 = vmatprep.subr.mxu0 0.0
  %4923 = vmatpush1.msra.mxu0 0.0
  %4924 = vmatprep.subr.mxu0 0.0
  %4925 = vmatpush1.msra.mxu0 0.0
  %4926 = vmatprep.subr.mxu0 0.0
  %4927 = vmatpush1.msra.mxu0 0.0
  %4928 = vmatprep.subr.mxu0 0.0
  %4929 = vmatpush1.msra.mxu0 0.0
  %4930 = vmatprep.subr.mxu0 0.0
  %4931 = vmatpush1.msra.mxu0 0.0
  %4932 = vmatprep.subr.mxu0 0.0
  %4933 = vmatpush1.msra.mxu0 0.0
  %4934 = vmatprep.subr.mxu0 0.0
  %4935 = vmatpush1.msra.mxu0 0.0
  %4936 = vmatprep.subr.mxu0 0.0
  %4937 = vmatpush1.msra.mxu0 0.0
  %4938 = vmatprep.subr.mxu0 0.0
  %4939 = vmatpush1.msra.mxu0 0.0
  %4940 = vmatprep.subr.mxu0 0.0
  %4941 = vmatpush1.msra.mxu0 0.0
  %4942 = vmatprep.subr.mxu0 0.0
  %4943 = vmatpush1.msra.mxu0 0.0
  %4944 = vmatprep.subr.mxu0 0.0
  %4945 = vmatpush1.msra.mxu0 0.0
  %4946 = vmatprep.subr.mxu0 0.0
  %4947 = vmatpush1.msra.mxu0 0.0
  %4948 = vmatprep.subr.mxu0 0.0
  %4949 = vmatpush1.msra.mxu0 0.0
  %4950 = vmatprep.subr.mxu0 0.0
  %4951 = vmatpush1.msra.mxu0 0.0
  %4952 = vmatprep.subr.mxu0 0.0
  %4953 = vmatpush1.msra.mxu0 0.0
  %4954 = vmatprep.subr.mxu0 0.0
  %4955 = vmatpush1.msra.mxu0 0.0
  %4956 = vmatprep.subr.mxu0 0.0
  %4957 = vmatpush1.msra.mxu0 0.0
  %4958 = vmatprep.subr.mxu0 0.0
  %4959 = vmatpush1.msra.mxu0 0.0
  %4960 = vmatprep.subr.mxu0 0.0
  %4961 = vmatpush1.msra.mxu0 0.0
  %4962 = vmatprep.subr.mxu0 0.0
  %4963 = vmatpush1.msra.mxu0 0.0
  %4964 = vmatprep.subr.mxu0 0.0
  %4965 = vmatpush1.msra.mxu0 0.0
  %4966 = vmatprep.subr.mxu0 0.0
  %4967 = vmatpush1.msra.mxu0 0.0
  %4968 = vmatprep.subr.mxu0 0.0
  %4969 = vmatpush1.msra.mxu0 0.0
  %4970 = vmatprep.mubr.f32.mxu0 0.0
  %4971 = vmatmul.mubr.f32.gmra.mrb[0].mxu0 %v4904
  %v4972 = vpop.f32.mrb[0].mxu0
  %v4973 = vadd.f32 0.0, %v4972
  %v4974 = vpop.f32.mrb[0].mxu0
  %4975 = vdwg.mxu0
  %v4977 = vsel %vm1809, %v4677, 0
  %4979 = vmatprep.subr.mxu0 0.0
  %4980 = vmatpush1.msra.mxu0 %v1132
  %4981 = vmatprep.subr.mxu0 0.0
  %4982 = vmatpush1.msra.mxu0 0.0
  %4983 = vmatprep.subr.mxu0 0.0
  %4984 = vmatpush1.msra.mxu0 0.0
  %4985 = vmatprep.subr.mxu0 0.0
  %4986 = vmatpush1.msra.mxu0 0.0
  %4987 = vmatprep.subr.mxu0 0.0
  %4988 = vmatpush1.msra.mxu0 0.0
  %4989 = vmatprep.subr.mxu0 0.0
  %4990 = vmatpush1.msra.mxu0 0.0
  %4991 = vmatprep.subr.mxu0 0.0
  %4992 = vmatpush1.msra.mxu0 0.0
  %4993 = vmatprep.subr.mxu0 0.0
  %4994 = vmatpush1.msra.mxu0 0.0
  %4995 = vmatprep.subr.mxu0 0.0
  %4996 = vmatpush1.msra.mxu0 0.0
  %4997 = vmatprep.subr.mxu0 0.0
  %4998 = vmatpush1.msra.mxu0 0.0
  %4999 = vmatprep.subr.mxu0 0.0
  %5000 = vmatpush1.msra.mxu0 0.0
  %5001 = vmatprep.subr.mxu0 0.0
  %5002 = vmatpush1.msra.mxu0 0.0
  %5003 = vmatprep.subr.mxu0 0.0
  %5004 = vmatpush1.msra.mxu0 0.0
  %5005 = vmatprep.subr.mxu0 0.0
  %5006 = vmatpush1.msra.mxu0 0.0
  %5007 = vmatprep.subr.mxu0 0.0
  %5008 = vmatpush1.msra.mxu0 0.0
  %5009 = vmatprep.subr.mxu0 0.0
  %5010 = vmatpush1.msra.mxu0 0.0
  %5011 = vmatprep.subr.mxu0 0.0
  %5012 = vmatpush1.msra.mxu0 0.0
  %5013 = vmatprep.subr.mxu0 0.0
  %5014 = vmatpush1.msra.mxu0 0.0
  %5015 = vmatprep.subr.mxu0 0.0
  %5016 = vmatpush1.msra.mxu0 0.0
  %5017 = vmatprep.subr.mxu0 0.0
  %5018 = vmatpush1.msra.mxu0 0.0
  %5019 = vmatprep.subr.mxu0 0.0
  %5020 = vmatpush1.msra.mxu0 0.0
  %5021 = vmatprep.subr.mxu0 0.0
  %5022 = vmatpush1.msra.mxu0 0.0
  %5023 = vmatprep.subr.mxu0 0.0
  %5024 = vmatpush1.msra.mxu0 0.0
  %5025 = vmatprep.subr.mxu0 0.0
  %5026 = vmatpush1.msra.mxu0 0.0
  %5027 = vmatprep.subr.mxu0 0.0
  %5028 = vmatpush1.msra.mxu0 0.0
  %5029 = vmatprep.subr.mxu0 0.0
  %5030 = vmatpush1.msra.mxu0 0.0
  %5031 = vmatprep.subr.mxu0 0.0
  %5032 = vmatpush1.msra.mxu0 0.0
  %5033 = vmatprep.subr.mxu0 0.0
  %5034 = vmatpush1.msra.mxu0 0.0
  %5035 = vmatprep.subr.mxu0 0.0
  %5036 = vmatpush1.msra.mxu0 0.0
  %5037 = vmatprep.subr.mxu0 0.0
  %5038 = vmatpush1.msra.mxu0 0.0
  %5039 = vmatprep.subr.mxu0 0.0
  %5040 = vmatpush1.msra.mxu0 0.0
  %5041 = vmatprep.subr.mxu0 0.0
  %5042 = vmatpush1.msra.mxu0 0.0
  %5043 = vmatprep.mubr.f32.mxu0 0.0
  %5044 = vmatmul.mubr.f32.gmra.mrb[0].mxu0 %v4977
  %v5045 = vpop.f32.mrb[0].mxu0
  %v5046 = vadd.f32 0.0, %v5045
  %v5047 = vpop.f32.mrb[0].mxu0
  %5048 = vdwg.mxu0
  %v5050 = vsel %vm1809, %v4679, 0
  %5052 = vmatprep.subr.mxu0 0.0
  %5053 = vmatpush1.msra.mxu0 %v1133
  %5054 = vmatprep.subr.mxu0 0.0
  %5055 = vmatpush1.msra.mxu0 0.0
  %5056 = vmatprep.subr.mxu0 0.0
  %5057 = vmatpush1.msra.mxu0 0.0
  %5058 = vmatprep.subr.mxu0 0.0
  %5059 = vmatpush1.msra.mxu0 0.0
  %5060 = vmatprep.subr.mxu0 0.0
  %5061 = vmatpush1.msra.mxu0 0.0
  %5062 = vmatprep.subr.mxu0 0.0
  %5063 = vmatpush1.msra.mxu0 0.0
  %5064 = vmatprep.subr.mxu0 0.0
  %5065 = vmatpush1.msra.mxu0 0.0
  %5066 = vmatprep.subr.mxu0 0.0
  %5067 = vmatpush1.msra.mxu0 0.0
  %5068 = vmatprep.subr.mxu0 0.0
  %5069 = vmatpush1.msra.mxu0 0.0
  %5070 = vmatprep.subr.mxu0 0.0
  %5071 = vmatpush1.msra.mxu0 0.0
  %5072 = vmatprep.subr.mxu0 0.0
  %5073 = vmatpush1.msra.mxu0 0.0
  %5074 = vmatprep.subr.mxu0 0.0
  %5075 = vmatpush1.msra.mxu0 0.0
  %5076 = vmatprep.subr.mxu0 0.0
  %5077 = vmatpush1.msra.mxu0 0.0
  %5078 = vmatprep.subr.mxu0 0.0
  %5079 = vmatpush1.msra.mxu0 0.0
  %5080 = vmatprep.subr.mxu0 0.0
  %5081 = vmatpush1.msra.mxu0 0.0
  %5082 = vmatprep.subr.mxu0 0.0
  %5083 = vmatpush1.msra.mxu0 0.0
  %5084 = vmatprep.subr.mxu0 0.0
  %5085 = vmatpush1.msra.mxu0 0.0
  %5086 = vmatprep.subr.mxu0 0.0
  %5087 = vmatpush1.msra.mxu0 0.0
  %5088 = vmatprep.subr.mxu0 0.0
  %5089 = vmatpush1.msra.mxu0 0.0
  %5090 = vmatprep.subr.mxu0 0.0
  %5091 = vmatpush1.msra.mxu0 0.0
  %5092 = vmatprep.subr.mxu0 0.0
  %5093 = vmatpush1.msra.mxu0 0.0
  %5094 = vmatprep.subr.mxu0 0.0
  %5095 = vmatpush1.msra.mxu0 0.0
  %5096 = vmatprep.subr.mxu0 0.0
  %5097 = vmatpush1.msra.mxu0 0.0
  %5098 = vmatprep.subr.mxu0 0.0
  %5099 = vmatpush1.msra.mxu0 0.0
  %5100 = vmatprep.subr.mxu0 0.0
  %5101 = vmatpush1.msra.mxu0 0.0
  %5102 = vmatprep.subr.mxu0 0.0
  %5103 = vmatpush1.msra.mxu0 0.0
  %5104 = vmatprep.subr.mxu0 0.0
  %5105 = vmatpush1.msra.mxu0 0.0
  %5106 = vmatprep.subr.mxu0 0.0
  %5107 = vmatpush1.msra.mxu0 0.0
  %5108 = vmatprep.subr.mxu0 0.0
  %5109 = vmatpush1.msra.mxu0 0.0
  %5110 = vmatprep.subr.mxu0 0.0
  %5111 = vmatpush1.msra.mxu0 0.0
  %5112 = vmatprep.subr.mxu0 0.0
  %5113 = vmatpush1.msra.mxu0 0.0
  %5114 = vmatprep.subr.mxu0 0.0
  %5115 = vmatpush1.msra.mxu0 0.0
  %5116 = vmatprep.mubr.f32.mxu0 0.0
  %5117 = vmatmul.mubr.f32.gmra.mrb[0].mxu0 %v5050
  %v5118 = vpop.f32.mrb[0].mxu0
  %v5119 = vadd.f32 0.0, %v5118
  %v5120 = vpop.f32.mrb[0].mxu0
  %5121 = vdwg.mxu0
  %v5123 = vsel %vm1809, %v4681, 0
  %5125 = vmatprep.subr.mxu0 0.0
  %5126 = vmatpush1.msra.mxu0 %v1134
  %5127 = vmatprep.subr.mxu0 0.0
  %5128 = vmatpush1.msra.mxu0 0.0
  %5129 = vmatprep.subr.mxu0 0.0
  %5130 = vmatpush1.msra.mxu0 0.0
  %5131 = vmatprep.subr.mxu0 0.0
  %5132 = vmatpush1.msra.mxu0 0.0
  %5133 = vmatprep.subr.mxu0 0.0
  %5134 = vmatpush1.msra.mxu0 0.0
  %5135 = vmatprep.subr.mxu0 0.0
  %5136 = vmatpush1.msra.mxu0 0.0
  %5137 = vmatprep.subr.mxu0 0.0
  %5138 = vmatpush1.msra.mxu0 0.0
  %5139 = vmatprep.subr.mxu0 0.0
  %5140 = vmatpush1.msra.mxu0 0.0
  %5141 = vmatprep.subr.mxu0 0.0
  %5142 = vmatpush1.msra.mxu0 0.0
  %5143 = vmatprep.subr.mxu0 0.0
  %5144 = vmatpush1.msra.mxu0 0.0
  %5145 = vmatprep.subr.mxu0 0.0
  %5146 = vmatpush1.msra.mxu0 0.0
  %5147 = vmatprep.subr.mxu0 0.0
  %5148 = vmatpush1.msra.mxu0 0.0
  %5149 = vmatprep.subr.mxu0 0.0
  %5150 = vmatpush1.msra.mxu0 0.0
  %5151 = vmatprep.subr.mxu0 0.0
  %5152 = vmatpush1.msra.mxu0 0.0
  %5153 = vmatprep.subr.mxu0 0.0
  %5154 = vmatpush1.msra.mxu0 0.0
  %5155 = vmatprep.subr.mxu0 0.0
  %5156 = vmatpush1.msra.mxu0 0.0
  %5157 = vmatprep.subr.mxu0 0.0
  %5158 = vmatpush1.msra.mxu0 0.0
  %5159 = vmatprep.subr.mxu0 0.0
  %5160 = vmatpush1.msra.mxu0 0.0
  %5161 = vmatprep.subr.mxu0 0.0
  %5162 = vmatpush1.msra.mxu0 0.0
  %5163 = vmatprep.subr.mxu0 0.0
  %5164 = vmatpush1.msra.mxu0 0.0
  %5165 = vmatprep.subr.mxu0 0.0
  %5166 = vmatpush1.msra.mxu0 0.0
  %5167 = vmatprep.subr.mxu0 0.0
  %5168 = vmatpush1.msra.mxu0 0.0
  %5169 = vmatprep.subr.mxu0 0.0
  %5170 = vmatpush1.msra.mxu0 0.0
  %5171 = vmatprep.subr.mxu0 0.0
  %5172 = vmatpush1.msra.mxu0 0.0
  %5173 = vmatprep.subr.mxu0 0.0
  %5174 = vmatpush1.msra.mxu0 0.0
  %5175 = vmatprep.subr.mxu0 0.0
  %5176 = vmatpush1.msra.mxu0 0.0
  %5177 = vmatprep.subr.mxu0 0.0
  %5178 = vmatpush1.msra.mxu0 0.0
  %5179 = vmatprep.subr.mxu0 0.0
  %5180 = vmatpush1.msra.mxu0 0.0
  %5181 = vmatprep.subr.mxu0 0.0
  %5182 = vmatpush1.msra.mxu0 0.0
  %5183 = vmatprep.subr.mxu0 0.0
  %5184 = vmatpush1.msra.mxu0 0.0
  %5185 = vmatprep.subr.mxu0 0.0
  %5186 = vmatpush1.msra.mxu0 0.0
  %5187 = vmatprep.subr.mxu0 0.0
  %5188 = vmatpush1.msra.mxu0 0.0
  %5189 = vmatprep.mubr.f32.mxu0 0.0
  %5190 = vmatmul.mubr.f32.gmra.mrb[0].mxu0 %v5123
  %v5191 = vpop.f32.mrb[0].mxu0
  %v5192 = vadd.f32 0.0, %v5191
  %v5193 = vpop.f32.mrb[0].mxu0
  %5194 = vdwg.mxu0
  %v5196 = vsel %vm1809, %v4683, 0
  %5198 = vmatprep.subr.mxu0 0.0
  %5199 = vmatpush1.msra.mxu0 %v1135
  %5200 = vmatprep.subr.mxu0 0.0
  %5201 = vmatpush1.msra.mxu0 0.0
  %5202 = vmatprep.subr.mxu0 0.0
  %5203 = vmatpush1.msra.mxu0 0.0
  %5204 = vmatprep.subr.mxu0 0.0
  %5205 = vmatpush1.msra.mxu0 0.0
  %5206 = vmatprep.subr.mxu0 0.0
  %5207 = vmatpush1.msra.mxu0 0.0
  %5208 = vmatprep.subr.mxu0 0.0
  %5209 = vmatpush1.msra.mxu0 0.0
  %5210 = vmatprep.subr.mxu0 0.0
  %5211 = vmatpush1.msra.mxu0 0.0
  %5212 = vmatprep.subr.mxu0 0.0
  %5213 = vmatpush1.msra.mxu0 0.0
  %5214 = vmatprep.subr.mxu0 0.0
  %5215 = vmatpush1.msra.mxu0 0.0
  %5216 = vmatprep.subr.mxu0 0.0
  %5217 = vmatpush1.msra.mxu0 0.0
  %5218 = vmatprep.subr.mxu0 0.0
  %5219 = vmatpush1.msra.mxu0 0.0
  %5220 = vmatprep.subr.mxu0 0.0
  %5221 = vmatpush1.msra.mxu0 0.0
  %5222 = vmatprep.subr.mxu0 0.0
  %5223 = vmatpush1.msra.mxu0 0.0
  %5224 = vmatprep.subr.mxu0 0.0
  %5225 = vmatpush1.msra.mxu0 0.0
  %5226 = vmatprep.subr.mxu0 0.0
  %5227 = vmatpush1.msra.mxu0 0.0
  %5228 = vmatprep.subr.mxu0 0.0
  %5229 = vmatpush1.msra.mxu0 0.0
  %5230 = vmatprep.subr.mxu0 0.0
  %5231 = vmatpush1.msra.mxu0 0.0
  %5232 = vmatprep.subr.mxu0 0.0
  %5233 = vmatpush1.msra.mxu0 0.0
  %5234 = vmatprep.subr.mxu0 0.0
  %5235 = vmatpush1.msra.mxu0 0.0
  %5236 = vmatprep.subr.mxu0 0.0
  %5237 = vmatpush1.msra.mxu0 0.0
  %5238 = vmatprep.subr.mxu0 0.0
  %5239 = vmatpush1.msra.mxu0 0.0
  %5240 = vmatprep.subr.mxu0 0.0
  %5241 = vmatpush1.msra.mxu0 0.0
  %5242 = vmatprep.subr.mxu0 0.0
  %5243 = vmatpush1.msra.mxu0 0.0
  %5244 = vmatprep.subr.mxu0 0.0
  %5245 = vmatpush1.msra.mxu0 0.0
  %5246 = vmatprep.subr.mxu0 0.0
  %5247 = vmatpush1.msra.mxu0 0.0
  %5248 = vmatprep.subr.mxu0 0.0
  %5249 = vmatpush1.msra.mxu0 0.0
  %5250 = vmatprep.subr.mxu0 0.0
  %5251 = vmatpush1.msra.mxu0 0.0
  %5252 = vmatprep.subr.mxu0 0.0
  %5253 = vmatpush1.msra.mxu0 0.0
  %5254 = vmatprep.subr.mxu0 0.0
  %5255 = vmatpush1.msra.mxu0 0.0
  %5256 = vmatprep.subr.mxu0 0.0
  %5257 = vmatpush1.msra.mxu0 0.0
  %5258 = vmatprep.subr.mxu0 0.0
  %5259 = vmatpush1.msra.mxu0 0.0
  %5260 = vmatprep.subr.mxu0 0.0
  %5261 = vmatpush1.msra.mxu0 0.0
  %5262 = vmatprep.mubr.f32.mxu0 0.0
  %5263 = vmatmul.mubr.f32.gmra.mrb[0].mxu0 %v5196
  %v5264 = vpop.f32.mrb[0].mxu0
  %v5265 = vadd.f32 0.0, %v5264
  %v5266 = vpop.f32.mrb[0].mxu0
  %5267 = vdwg.mxu0
  %v5269 = vsel %vm1200, %v4754, 0
  %v5272 = vsel %vm1200, %v4827, 0
  %v5275 = vsel %vm1200, %v4900, 0
  %v5278 = vsel %vm1200, %v4973, 0
  %v5281 = vsel %vm1200, %v5046, 0
  %v5284 = vsel %vm1200, %v5119, 0
  %v5287 = vsel %vm1200, %v5192, 0
  %v5290 = vsel %vm1200, %v5265, 0
  %5292 = vmatprep.subr.mxu0 0.0
  %5293 = vmatpush1.msra.mxu0 %v1148
  %5294 = vmatprep.subr.mxu0 0.0
  %5295 = vmatpush1.msra.mxu0 %v1149
  %5296 = vmatprep.subr.mxu0 0.0
  %5297 = vmatpush1.msra.mxu0 0.0
  %5298 = vmatprep.subr.mxu0 0.0
  %5299 = vmatpush1.msra.mxu0 0.0
  %5300 = vmatprep.subr.mxu0 0.0
  %5301 = vmatpush1.msra.mxu0 0.0
  %5302 = vmatprep.subr.mxu0 0.0
  %5303 = vmatpush1.msra.mxu0 0.0
  %5304 = vmatprep.subr.mxu0 0.0
  %5305 = vmatpush1.msra.mxu0 0.0
  %5306 = vmatprep.subr.mxu0 0.0
  %5307 = vmatpush1.msra.mxu0 0.0
  %5308 = vmatprep.subr.mxu0 0.0
  %5309 = vmatpush1.msra.mxu0 0.0
  %5310 = vmatprep.subr.mxu0 0.0
  %5311 = vmatpush1.msra.mxu0 0.0
  %5312 = vmatprep.subr.mxu0 0.0
  %5313 = vmatpush1.msra.mxu0 0.0
  %5314 = vmatprep.subr.mxu0 0.0
  %5315 = vmatpush1.msra.mxu0 0.0
  %5316 = vmatprep.subr.mxu0 0.0
  %5317 = vmatpush1.msra.mxu0 0.0
  %5318 = vmatprep.subr.mxu0 0.0
  %5319 = vmatpush1.msra.mxu0 0.0
  %5320 = vmatprep.subr.mxu0 0.0
  %5321 = vmatpush1.msra.mxu0 0.0
  %5322 = vmatprep.subr.mxu0 0.0
  %5323 = vmatpush1.msra.mxu0 0.0
  %5324 = vmatprep.subr.mxu0 0.0
  %5325 = vmatpush1.msra.mxu0 0.0
  %5326 = vmatprep.subr.mxu0 0.0
  %5327 = vmatpush1.msra.mxu0 0.0
  %5328 = vmatprep.subr.mxu0 0.0
  %5329 = vmatpush1.msra.mxu0 0.0
  %5330 = vmatprep.subr.mxu0 0.0
  %5331 = vmatpush1.msra.mxu0 0.0
  %5332 = vmatprep.subr.mxu0 0.0
  %5333 = vmatpush1.msra.mxu0 0.0
  %5334 = vmatprep.subr.mxu0 0.0
  %5335 = vmatpush1.msra.mxu0 0.0
  %5336 = vmatprep.subr.mxu0 0.0
  %5337 = vmatpush1.msra.mxu0 0.0
  %5338 = vmatprep.subr.mxu0 0.0
  %5339 = vmatpush1.msra.mxu0 0.0
  %5340 = vmatprep.subr.mxu0 0.0
  %5341 = vmatpush1.msra.mxu0 0.0
  %5342 = vmatprep.subr.mxu0 0.0
  %5343 = vmatpush1.msra.mxu0 0.0
  %5344 = vmatprep.subr.mxu0 0.0
  %5345 = vmatpush1.msra.mxu0 0.0
  %5346 = vmatprep.subr.mxu0 0.0
  %5347 = vmatpush1.msra.mxu0 0.0
  %5348 = vmatprep.subr.mxu0 0.0
  %5349 = vmatpush1.msra.mxu0 0.0
  %5350 = vmatprep.subr.mxu0 0.0
  %5351 = vmatpush1.msra.mxu0 0.0
  %5352 = vmatprep.subr.mxu0 0.0
  %5353 = vmatpush1.msra.mxu0 0.0
  %5354 = vmatprep.subr.mxu0 0.0
  %5355 = vmatpush1.msra.mxu0 0.0
  %5356 = vmatprep.mubr.f32.mxu0 0.0
  %5357 = vmatmul.mubr.f32.gmra.mrb[0].mxu0 %v5269
  %v5358 = vpop.f32.mrb[0].mxu0
  %v5359 = vadd.f32 0.0, %v5358
  %v5360 = vpop.f32.mrb[0].mxu0
  %5361 = vmatprep.mubr.f32.mxu0 0.0
  %5362 = vmatmul.mubr.f32.gmra.mrb[0].mxu0 %v5272
  %v5363 = vpop.f32.mrb[0].mxu0
  %v5364 = vadd.f32 0.0, %v5363
  %v5365 = vpop.f32.mrb[0].mxu0
  %5366 = vmatprep.mubr.f32.mxu0 0.0
  %5367 = vmatmul.mubr.f32.gmra.mrb[0].mxu0 %v5275
  %v5368 = vpop.f32.mrb[0].mxu0
  %v5369 = vadd.f32 0.0, %v5368
  %v5370 = vpop.f32.mrb[0].mxu0
  %5371 = vmatprep.mubr.f32.mxu0 0.0
  %5372 = vmatmul.mubr.f32.gmra.mrb[0].mxu0 %v5278
  %v5373 = vpop.f32.mrb[0].mxu0
  %v5374 = vadd.f32 0.0, %v5373
  %v5375 = vpop.f32.mrb[0].mxu0
  %5376 = vmatprep.mubr.f32.mxu0 0.0
  %5377 = vmatmul.mubr.f32.gmra.mrb[0].mxu0 %v5281
  %v5378 = vpop.f32.mrb[0].mxu0
  %v5379 = vadd.f32 0.0, %v5378
  %v5380 = vpop.f32.mrb[0].mxu0
  %5381 = vmatprep.mubr.f32.mxu0 0.0
  %5382 = vmatmul.mubr.f32.gmra.mrb[0].mxu0 %v5284
  %v5383 = vpop.f32.mrb[0].mxu0
  %v5384 = vadd.f32 0.0, %v5383
  %v5385 = vpop.f32.mrb[0].mxu0
  %5386 = vmatprep.mubr.f32.mxu0 0.0
  %5387 = vmatmul.mubr.f32.gmra.mrb[0].mxu0 %v5287
  %v5388 = vpop.f32.mrb[0].mxu0
  %v5389 = vadd.f32 0.0, %v5388
  %v5390 = vpop.f32.mrb[0].mxu0
  %5391 = vmatprep.mubr.f32.mxu0 0.0
  %5392 = vmatmul.mubr.f32.gmra.mrb[0].mxu0 %v5290
  %v5393 = vpop.f32.mrb[0].mxu0
  %v5394 = vadd.f32 0.0, %v5393
  %v5395 = vpop.f32.mrb[0].mxu0
  %5396 = vdwg.mxu0
  %v5397 = vadd.f32 %v3966, %v5359
  %v5398 = vadd.f32 %v3971, %v5364
  %v5399 = vadd.f32 %v3976, %v5369
  %v5400 = vadd.f32 %v3981, %v5374
  %v5401 = vadd.f32 %v3986, %v5379
  %v5402 = vadd.f32 %v3991, %v5384
  %v5403 = vadd.f32 %v3996, %v5389
  %v5404 = vadd.f32 %v4001, %v5394
  %5405 = vrot.lane.b32.xlu0 %v361, 80
  %v5406 = vpop.permute.xlu0 %5405
  %v5407 = vsel %vm1200, %v5406, 0
  %5409 = vmatprep.subr.mxu0 0.0
  %5410 = vmatpush1.xpose.msra.mxu0 %v1205
  %5411 = vmatprep.subr.mxu0 0.0
  %5412 = vmatpush1.xpose.msra.mxu0 0.0
  %5413 = vmatprep.subr.mxu0 0.0
  %5414 = vmatpush1.xpose.msra.mxu0 0.0
  %5415 = vmatprep.subr.mxu0 0.0
  %5416 = vmatpush1.xpose.msra.mxu0 0.0
  %5417 = vmatprep.subr.mxu0 0.0
  %5418 = vmatpush1.xpose.msra.mxu0 0.0
  %5419 = vmatprep.subr.mxu0 0.0
  %5420 = vmatpush1.xpose.msra.mxu0 0.0
  %5421 = vmatprep.subr.mxu0 0.0
  %5422 = vmatpush1.xpose.msra.mxu0 0.0
  %5423 = vmatprep.subr.mxu0 0.0
  %5424 = vmatpush1.xpose.msra.mxu0 0.0
  %5425 = vmatprep.subr.mxu0 0.0
  %5426 = vmatpush1.xpose.msra.mxu0 0.0
  %5427 = vmatprep.subr.mxu0 0.0
  %5428 = vmatpush1.xpose.msra.mxu0 0.0
  %5429 = vmatprep.subr.mxu0 0.0
  %5430 = vmatpush1.xpose.msra.mxu0 0.0
  %5431 = vmatprep.subr.mxu0 0.0
  %5432 = vmatpush1.xpose.msra.mxu0 0.0
  %5433 = vmatprep.subr.mxu0 0.0
  %5434 = vmatpush1.xpose.msra.mxu0 0.0
  %5435 = vmatprep.subr.mxu0 0.0
  %5436 = vmatpush1.xpose.msra.mxu0 0.0
  %5437 = vmatprep.subr.mxu0 0.0
  %5438 = vmatpush1.xpose.msra.mxu0 0.0
  %5439 = vmatprep.subr.mxu0 0.0
  %5440 = vmatpush1.xpose.msra.mxu0 0.0
  %5441 = vmatprep.subr.mxu0 0.0
  %5442 = vmatpush1.xpose.msra.mxu0 0.0
  %5443 = vmatprep.subr.mxu0 0.0
  %5444 = vmatpush1.xpose.msra.mxu0 0.0
  %5445 = vmatprep.subr.mxu0 0.0
  %5446 = vmatpush1.xpose.msra.mxu0 0.0
  %5447 = vmatprep.subr.mxu0 0.0
  %5448 = vmatpush1.xpose.msra.mxu0 0.0
  %5449 = vmatprep.subr.mxu0 0.0
  %5450 = vmatpush1.xpose.msra.mxu0 0.0
  %5451 = vmatprep.subr.mxu0 0.0
  %5452 = vmatpush1.xpose.msra.mxu0 0.0
  %5453 = vmatprep.subr.mxu0 0.0
  %5454 = vmatpush1.xpose.msra.mxu0 0.0
  %5455 = vmatprep.subr.mxu0 0.0
  %5456 = vmatpush1.xpose.msra.mxu0 0.0
  %5457 = vmatprep.subr.mxu0 0.0
  %5458 = vmatpush1.xpose.msra.mxu0 0.0
  %5459 = vmatprep.subr.mxu0 0.0
  %5460 = vmatpush1.xpose.msra.mxu0 0.0
  %5461 = vmatprep.subr.mxu0 0.0
  %5462 = vmatpush1.xpose.msra.mxu0 0.0
  %5463 = vmatprep.subr.mxu0 0.0
  %5464 = vmatpush1.xpose.msra.mxu0 0.0
  %5465 = vmatprep.subr.mxu0 0.0
  %5466 = vmatpush1.xpose.msra.mxu0 0.0
  %5467 = vmatprep.subr.mxu0 0.0
  %5468 = vmatpush1.xpose.msra.mxu0 0.0
  %5469 = vmatprep.subr.mxu0 0.0
  %5470 = vmatpush1.xpose.msra.mxu0 0.0
  %5471 = vmatprep.subr.mxu0 0.0
  %5472 = vmatpush1.xpose.msra.mxu0 0.0
  %5473 = vmatprep.mubr.f32.mxu0 0.0
  %5474 = vmatmul.mubr.f32.gmra.mrb[0].mxu0 %v5407
  %v5475 = vpop.f32.mrb[0].mxu0
  %v5476 = vadd.f32 %v1163, %v5475
  %v5477 = vpop.f32.mrb[0].mxu0
  %5478 = vdwg.mxu0
  %5479 = vrot.lane.b32.xlu0 %v366, 80
  %v5480 = vpop.permute.xlu0 %5479
  %v5481 = vsel %vm1200, %v5480, 0
  %5483 = vmatprep.subr.mxu0 0.0
  %5484 = vmatpush1.xpose.msra.mxu0 %v1281
  %5485 = vmatprep.subr.mxu0 0.0
  %5486 = vmatpush1.xpose.msra.mxu0 0.0
  %5487 = vmatprep.subr.mxu0 0.0
  %5488 = vmatpush1.xpose.msra.mxu0 0.0
  %5489 = vmatprep.subr.mxu0 0.0
  %5490 = vmatpush1.xpose.msra.mxu0 0.0
  %5491 = vmatprep.subr.mxu0 0.0
  %5492 = vmatpush1.xpose.msra.mxu0 0.0
  %5493 = vmatprep.subr.mxu0 0.0
  %5494 = vmatpush1.xpose.msra.mxu0 0.0
  %5495 = vmatprep.subr.mxu0 0.0
  %5496 = vmatpush1.xpose.msra.mxu0 0.0
  %5497 = vmatprep.subr.mxu0 0.0
  %5498 = vmatpush1.xpose.msra.mxu0 0.0
  %5499 = vmatprep.subr.mxu0 0.0
  %5500 = vmatpush1.xpose.msra.mxu0 0.0
  %5501 = vmatprep.subr.mxu0 0.0
  %5502 = vmatpush1.xpose.msra.mxu0 0.0
  %5503 = vmatprep.subr.mxu0 0.0
  %5504 = vmatpush1.xpose.msra.mxu0 0.0
  %5505 = vmatprep.subr.mxu0 0.0
  %5506 = vmatpush1.xpose.msra.mxu0 0.0
  %5507 = vmatprep.subr.mxu0 0.0
  %5508 = vmatpush1.xpose.msra.mxu0 0.0
  %5509 = vmatprep.subr.mxu0 0.0
  %5510 = vmatpush1.xpose.msra.mxu0 0.0
  %5511 = vmatprep.subr.mxu0 0.0
  %5512 = vmatpush1.xpose.msra.mxu0 0.0
  %5513 = vmatprep.subr.mxu0 0.0
  %5514 = vmatpush1.xpose.msra.mxu0 0.0
  %5515 = vmatprep.subr.mxu0 0.0
  %5516 = vmatpush1.xpose.msra.mxu0 0.0
  %5517 = vmatprep.subr.mxu0 0.0
  %5518 = vmatpush1.xpose.msra.mxu0 0.0
  %5519 = vmatprep.subr.mxu0 0.0
  %5520 = vmatpush1.xpose.msra.mxu0 0.0
  %5521 = vmatprep.subr.mxu0 0.0
  %5522 = vmatpush1.xpose.msra.mxu0 0.0
  %5523 = vmatprep.subr.mxu0 0.0
  %5524 = vmatpush1.xpose.msra.mxu0 0.0
  %5525 = vmatprep.subr.mxu0 0.0
  %5526 = vmatpush1.xpose.msra.mxu0 0.0
  %5527 = vmatprep.subr.mxu0 0.0
  %5528 = vmatpush1.xpose.msra.mxu0 0.0
  %5529 = vmatprep.subr.mxu0 0.0
  %5530 = vmatpush1.xpose.msra.mxu0 0.0
  %5531 = vmatprep.subr.mxu0 0.0
  %5532 = vmatpush1.xpose.msra.mxu0 0.0
  %5533 = vmatprep.subr.mxu0 0.0
  %5534 = vmatpush1.xpose.msra.mxu0 0.0
  %5535 = vmatprep.subr.mxu0 0.0
  %5536 = vmatpush1.xpose.msra.mxu0 0.0
  %5537 = vmatprep.subr.mxu0 0.0
  %5538 = vmatpush1.xpose.msra.mxu0 0.0
  %5539 = vmatprep.subr.mxu0 0.0
  %5540 = vmatpush1.xpose.msra.mxu0 0.0
  %5541 = vmatprep.subr.mxu0 0.0
  %5542 = vmatpush1.xpose.msra.mxu0 0.0
  %5543 = vmatprep.subr.mxu0 0.0
  %5544 = vmatpush1.xpose.msra.mxu0 0.0
  %5545 = vmatprep.subr.mxu0 0.0
  %5546 = vmatpush1.xpose.msra.mxu0 0.0
  %5547 = vmatprep.mubr.f32.mxu0 0.0
  %5548 = vmatmul.mubr.f32.gmra.mrb[0].mxu0 %v5481
  %v5549 = vpop.f32.mrb[0].mxu0
  %v5550 = vadd.f32 %v1167, %v5549
  %v5551 = vpop.f32.mrb[0].mxu0
  %5552 = vdwg.mxu0
  %5553 = vrot.lane.b32.xlu0 %v371, 80
  %v5554 = vpop.permute.xlu0 %5553
  %v5555 = vsel %vm1200, %v5554, 0
  %5557 = vmatprep.subr.mxu0 0.0
  %5558 = vmatpush1.xpose.msra.mxu0 %v1357
  %5559 = vmatprep.subr.mxu0 0.0
  %5560 = vmatpush1.xpose.msra.mxu0 0.0
  %5561 = vmatprep.subr.mxu0 0.0
  %5562 = vmatpush1.xpose.msra.mxu0 0.0
  %5563 = vmatprep.subr.mxu0 0.0
  %5564 = vmatpush1.xpose.msra.mxu0 0.0
  %5565 = vmatprep.subr.mxu0 0.0
  %5566 = vmatpush1.xpose.msra.mxu0 0.0
  %5567 = vmatprep.subr.mxu0 0.0
  %5568 = vmatpush1.xpose.msra.mxu0 0.0
  %5569 = vmatprep.subr.mxu0 0.0
  %5570 = vmatpush1.xpose.msra.mxu0 0.0
  %5571 = vmatprep.subr.mxu0 0.0
  %5572 = vmatpush1.xpose.msra.mxu0 0.0
  %5573 = vmatprep.subr.mxu0 0.0
  %5574 = vmatpush1.xpose.msra.mxu0 0.0
  %5575 = vmatprep.subr.mxu0 0.0
  %5576 = vmatpush1.xpose.msra.mxu0 0.0
  %5577 = vmatprep.subr.mxu0 0.0
  %5578 = vmatpush1.xpose.msra.mxu0 0.0
  %5579 = vmatprep.subr.mxu0 0.0
  %5580 = vmatpush1.xpose.msra.mxu0 0.0
  %5581 = vmatprep.subr.mxu0 0.0
  %5582 = vmatpush1.xpose.msra.mxu0 0.0
  %5583 = vmatprep.subr.mxu0 0.0
  %5584 = vmatpush1.xpose.msra.mxu0 0.0
  %5585 = vmatprep.subr.mxu0 0.0
  %5586 = vmatpush1.xpose.msra.mxu0 0.0
  %5587 = vmatprep.subr.mxu0 0.0
  %5588 = vmatpush1.xpose.msra.mxu0 0.0
  %5589 = vmatprep.subr.mxu0 0.0
  %5590 = vmatpush1.xpose.msra.mxu0 0.0
  %5591 = vmatprep.subr.mxu0 0.0
  %5592 = vmatpush1.xpose.msra.mxu0 0.0
  %5593 = vmatprep.subr.mxu0 0.0
  %5594 = vmatpush1.xpose.msra.mxu0 0.0
  %5595 = vmatprep.subr.mxu0 0.0
  %5596 = vmatpush1.xpose.msra.mxu0 0.0
  %5597 = vmatprep.subr.mxu0 0.0
  %5598 = vmatpush1.xpose.msra.mxu0 0.0
  %5599 = vmatprep.subr.mxu0 0.0
  %5600 = vmatpush1.xpose.msra.mxu0 0.0
  %5601 = vmatprep.subr.mxu0 0.0
  %5602 = vmatpush1.xpose.msra.mxu0 0.0
  %5603 = vmatprep.subr.mxu0 0.0
  %5604 = vmatpush1.xpose.msra.mxu0 0.0
  %5605 = vmatprep.subr.mxu0 0.0
  %5606 = vmatpush1.xpose.msra.mxu0 0.0
  %5607 = vmatprep.subr.mxu0 0.0
  %5608 = vmatpush1.xpose.msra.mxu0 0.0
  %5609 = vmatprep.subr.mxu0 0.0
  %5610 = vmatpush1.xpose.msra.mxu0 0.0
  %5611 = vmatprep.subr.mxu0 0.0
  %5612 = vmatpush1.xpose.msra.mxu0 0.0
  %5613 = vmatprep.subr.mxu0 0.0
  %5614 = vmatpush1.xpose.msra.mxu0 0.0
  %5615 = vmatprep.subr.mxu0 0.0
  %5616 = vmatpush1.xpose.msra.mxu0 0.0
  %5617 = vmatprep.subr.mxu0 0.0
  %5618 = vmatpush1.xpose.msra.mxu0 0.0
  %5619 = vmatprep.subr.mxu0 0.0
  %5620 = vmatpush1.xpose.msra.mxu0 0.0
  %5621 = vmatprep.mubr.f32.mxu0 0.0
  %5622 = vmatmul.mubr.f32.gmra.mrb[0].mxu0 %v5555
  %v5623 = vpop.f32.mrb[0].mxu0
  %v5624 = vadd.f32 %v1171, %v5623
  %v5625 = vpop.f32.mrb[0].mxu0
  %5626 = vdwg.mxu0
  %5627 = vrot.lane.b32.xlu0 %v376, 80
  %v5628 = vpop.permute.xlu0 %5627
  %v5629 = vsel %vm1200, %v5628, 0
  %5631 = vmatprep.subr.mxu0 0.0
  %5632 = vmatpush1.xpose.msra.mxu0 %v1433
  %5633 = vmatprep.subr.mxu0 0.0
  %5634 = vmatpush1.xpose.msra.mxu0 0.0
  %5635 = vmatprep.subr.mxu0 0.0
  %5636 = vmatpush1.xpose.msra.mxu0 0.0
  %5637 = vmatprep.subr.mxu0 0.0
  %5638 = vmatpush1.xpose.msra.mxu0 0.0
  %5639 = vmatprep.subr.mxu0 0.0
  %5640 = vmatpush1.xpose.msra.mxu0 0.0
  %5641 = vmatprep.subr.mxu0 0.0
  %5642 = vmatpush1.xpose.msra.mxu0 0.0
  %5643 = vmatprep.subr.mxu0 0.0
  %5644 = vmatpush1.xpose.msra.mxu0 0.0
  %5645 = vmatprep.subr.mxu0 0.0
  %5646 = vmatpush1.xpose.msra.mxu0 0.0
  %5647 = vmatprep.subr.mxu0 0.0
  %5648 = vmatpush1.xpose.msra.mxu0 0.0
  %5649 = vmatprep.subr.mxu0 0.0
  %5650 = vmatpush1.xpose.msra.mxu0 0.0
  %5651 = vmatprep.subr.mxu0 0.0
  %5652 = vmatpush1.xpose.msra.mxu0 0.0
  %5653 = vmatprep.subr.mxu0 0.0
  %5654 = vmatpush1.xpose.msra.mxu0 0.0
  %5655 = vmatprep.subr.mxu0 0.0
  %5656 = vmatpush1.xpose.msra.mxu0 0.0
  %5657 = vmatprep.subr.mxu0 0.0
  %5658 = vmatpush1.xpose.msra.mxu0 0.0
  %5659 = vmatprep.subr.mxu0 0.0
  %5660 = vmatpush1.xpose.msra.mxu0 0.0
  %5661 = vmatprep.subr.mxu0 0.0
  %5662 = vmatpush1.xpose.msra.mxu0 0.0
  %5663 = vmatprep.subr.mxu0 0.0
  %5664 = vmatpush1.xpose.msra.mxu0 0.0
  %5665 = vmatprep.subr.mxu0 0.0
  %5666 = vmatpush1.xpose.msra.mxu0 0.0
  %5667 = vmatprep.subr.mxu0 0.0
  %5668 = vmatpush1.xpose.msra.mxu0 0.0
  %5669 = vmatprep.subr.mxu0 0.0
  %5670 = vmatpush1.xpose.msra.mxu0 0.0
  %5671 = vmatprep.subr.mxu0 0.0
  %5672 = vmatpush1.xpose.msra.mxu0 0.0
  %5673 = vmatprep.subr.mxu0 0.0
  %5674 = vmatpush1.xpose.msra.mxu0 0.0
  %5675 = vmatprep.subr.mxu0 0.0
  %5676 = vmatpush1.xpose.msra.mxu0 0.0
  %5677 = vmatprep.subr.mxu0 0.0
  %5678 = vmatpush1.xpose.msra.mxu0 0.0
  %5679 = vmatprep.subr.mxu0 0.0
  %5680 = vmatpush1.xpose.msra.mxu0 0.0
  %5681 = vmatprep.subr.mxu0 0.0
  %5682 = vmatpush1.xpose.msra.mxu0 0.0
  %5683 = vmatprep.subr.mxu0 0.0
  %5684 = vmatpush1.xpose.msra.mxu0 0.0
  %5685 = vmatprep.subr.mxu0 0.0
  %5686 = vmatpush1.xpose.msra.mxu0 0.0
  %5687 = vmatprep.subr.mxu0 0.0
  %5688 = vmatpush1.xpose.msra.mxu0 0.0
  %5689 = vmatprep.subr.mxu0 0.0
  %5690 = vmatpush1.xpose.msra.mxu0 0.0
  %5691 = vmatprep.subr.mxu0 0.0
  %5692 = vmatpush1.xpose.msra.mxu0 0.0
  %5693 = vmatprep.subr.mxu0 0.0
  %5694 = vmatpush1.xpose.msra.mxu0 0.0
  %5695 = vmatprep.mubr.f32.mxu0 0.0
  %5696 = vmatmul.mubr.f32.gmra.mrb[0].mxu0 %v5629
  %v5697 = vpop.f32.mrb[0].mxu0
  %v5698 = vadd.f32 %v1175, %v5697
  %v5699 = vpop.f32.mrb[0].mxu0
  %5700 = vdwg.mxu0
  %5701 = vrot.lane.b32.xlu0 %v381, 80
  %v5702 = vpop.permute.xlu0 %5701
  %v5703 = vsel %vm1200, %v5702, 0
  %5705 = vmatprep.subr.mxu0 0.0
  %5706 = vmatpush1.xpose.msra.mxu0 %v1509
  %5707 = vmatprep.subr.mxu0 0.0
  %5708 = vmatpush1.xpose.msra.mxu0 0.0
  %5709 = vmatprep.subr.mxu0 0.0
  %5710 = vmatpush1.xpose.msra.mxu0 0.0
  %5711 = vmatprep.subr.mxu0 0.0
  %5712 = vmatpush1.xpose.msra.mxu0 0.0
  %5713 = vmatprep.subr.mxu0 0.0
  %5714 = vmatpush1.xpose.msra.mxu0 0.0
  %5715 = vmatprep.subr.mxu0 0.0
  %5716 = vmatpush1.xpose.msra.mxu0 0.0
  %5717 = vmatprep.subr.mxu0 0.0
  %5718 = vmatpush1.xpose.msra.mxu0 0.0
  %5719 = vmatprep.subr.mxu0 0.0
  %5720 = vmatpush1.xpose.msra.mxu0 0.0
  %5721 = vmatprep.subr.mxu0 0.0
  %5722 = vmatpush1.xpose.msra.mxu0 0.0
  %5723 = vmatprep.subr.mxu0 0.0
  %5724 = vmatpush1.xpose.msra.mxu0 0.0
  %5725 = vmatprep.subr.mxu0 0.0
  %5726 = vmatpush1.xpose.msra.mxu0 0.0
  %5727 = vmatprep.subr.mxu0 0.0
  %5728 = vmatpush1.xpose.msra.mxu0 0.0
  %5729 = vmatprep.subr.mxu0 0.0
  %5730 = vmatpush1.xpose.msra.mxu0 0.0
  %5731 = vmatprep.subr.mxu0 0.0
  %5732 = vmatpush1.xpose.msra.mxu0 0.0
  %5733 = vmatprep.subr.mxu0 0.0
  %5734 = vmatpush1.xpose.msra.mxu0 0.0
  %5735 = vmatprep.subr.mxu0 0.0
  %5736 = vmatpush1.xpose.msra.mxu0 0.0
  %5737 = vmatprep.subr.mxu0 0.0
  %5738 = vmatpush1.xpose.msra.mxu0 0.0
  %5739 = vmatprep.subr.mxu0 0.0
  %5740 = vmatpush1.xpose.msra.mxu0 0.0
  %5741 = vmatprep.subr.mxu0 0.0
  %5742 = vmatpush1.xpose.msra.mxu0 0.0
  %5743 = vmatprep.subr.mxu0 0.0
  %5744 = vmatpush1.xpose.msra.mxu0 0.0
  %5745 = vmatprep.subr.mxu0 0.0
  %5746 = vmatpush1.xpose.msra.mxu0 0.0
  %5747 = vmatprep.subr.mxu0 0.0
  %5748 = vmatpush1.xpose.msra.mxu0 0.0
  %5749 = vmatprep.subr.mxu0 0.0
  %5750 = vmatpush1.xpose.msra.mxu0 0.0
  %5751 = vmatprep.subr.mxu0 0.0
  %5752 = vmatpush1.xpose.msra.mxu0 0.0
  %5753 = vmatprep.subr.mxu0 0.0
  %5754 = vmatpush1.xpose.msra.mxu0 0.0
  %5755 = vmatprep.subr.mxu0 0.0
  %5756 = vmatpush1.xpose.msra.mxu0 0.0
  %5757 = vmatprep.subr.mxu0 0.0
  %5758 = vmatpush1.xpose.msra.mxu0 0.0
  %5759 = vmatprep.subr.mxu0 0.0
  %5760 = vmatpush1.xpose.msra.mxu0 0.0
  %5761 = vmatprep.subr.mxu0 0.0
  %5762 = vmatpush1.xpose.msra.mxu0 0.0
  %5763 = vmatprep.subr.mxu0 0.0
  %5764 = vmatpush1.xpose.msra.mxu0 0.0
  %5765 = vmatprep.subr.mxu0 0.0
  %5766 = vmatpush1.xpose.msra.mxu0 0.0
  %5767 = vmatprep.subr.mxu0 0.0
  %5768 = vmatpush1.xpose.msra.mxu0 0.0
  %5769 = vmatprep.mubr.f32.mxu0 0.0
  %5770 = vmatmul.mubr.f32.gmra.mrb[0].mxu0 %v5703
  %v5771 = vpop.f32.mrb[0].mxu0
  %v5772 = vadd.f32 %v1179, %v5771
  %v5773 = vpop.f32.mrb[0].mxu0
  %5774 = vdwg.mxu0
  %5775 = vrot.lane.b32.xlu0 %v386, 80
  %v5776 = vpop.permute.xlu0 %5775
  %v5777 = vsel %vm1200, %v5776, 0
  %5779 = vmatprep.subr.mxu0 0.0
  %5780 = vmatpush1.xpose.msra.mxu0 %v1585
  %5781 = vmatprep.subr.mxu0 0.0
  %5782 = vmatpush1.xpose.msra.mxu0 0.0
  %5783 = vmatprep.subr.mxu0 0.0
  %5784 = vmatpush1.xpose.msra.mxu0 0.0
  %5785 = vmatprep.subr.mxu0 0.0
  %5786 = vmatpush1.xpose.msra.mxu0 0.0
  %5787 = vmatprep.subr.mxu0 0.0
  %5788 = vmatpush1.xpose.msra.mxu0 0.0
  %5789 = vmatprep.subr.mxu0 0.0
  %5790 = vmatpush1.xpose.msra.mxu0 0.0
  %5791 = vmatprep.subr.mxu0 0.0
  %5792 = vmatpush1.xpose.msra.mxu0 0.0
  %5793 = vmatprep.subr.mxu0 0.0
  %5794 = vmatpush1.xpose.msra.mxu0 0.0
  %5795 = vmatprep.subr.mxu0 0.0
  %5796 = vmatpush1.xpose.msra.mxu0 0.0
  %5797 = vmatprep.subr.mxu0 0.0
  %5798 = vmatpush1.xpose.msra.mxu0 0.0
  %5799 = vmatprep.subr.mxu0 0.0
  %5800 = vmatpush1.xpose.msra.mxu0 0.0
  %5801 = vmatprep.subr.mxu0 0.0
  %5802 = vmatpush1.xpose.msra.mxu0 0.0
  %5803 = vmatprep.subr.mxu0 0.0
  %5804 = vmatpush1.xpose.msra.mxu0 0.0
  %5805 = vmatprep.subr.mxu0 0.0
  %5806 = vmatpush1.xpose.msra.mxu0 0.0
  %5807 = vmatprep.subr.mxu0 0.0
  %5808 = vmatpush1.xpose.msra.mxu0 0.0
  %5809 = vmatprep.subr.mxu0 0.0
  %5810 = vmatpush1.xpose.msra.mxu0 0.0
  %5811 = vmatprep.subr.mxu0 0.0
  %5812 = vmatpush1.xpose.msra.mxu0 0.0
  %5813 = vmatprep.subr.mxu0 0.0
  %5814 = vmatpush1.xpose.msra.mxu0 0.0
  %5815 = vmatprep.subr.mxu0 0.0
  %5816 = vmatpush1.xpose.msra.mxu0 0.0
  %5817 = vmatprep.subr.mxu0 0.0
  %5818 = vmatpush1.xpose.msra.mxu0 0.0
  %5819 = vmatprep.subr.mxu0 0.0
  %5820 = vmatpush1.xpose.msra.mxu0 0.0
  %5821 = vmatprep.subr.mxu0 0.0
  %5822 = vmatpush1.xpose.msra.mxu0 0.0
  %5823 = vmatprep.subr.mxu0 0.0
  %5824 = vmatpush1.xpose.msra.mxu0 0.0
  %5825 = vmatprep.subr.mxu0 0.0
  %5826 = vmatpush1.xpose.msra.mxu0 0.0
  %5827 = vmatprep.subr.mxu0 0.0
  %5828 = vmatpush1.xpose.msra.mxu0 0.0
  %5829 = vmatprep.subr.mxu0 0.0
  %5830 = vmatpush1.xpose.msra.mxu0 0.0
  %5831 = vmatprep.subr.mxu0 0.0
  %5832 = vmatpush1.xpose.msra.mxu0 0.0
  %5833 = vmatprep.subr.mxu0 0.0
  %5834 = vmatpush1.xpose.msra.mxu0 0.0
  %5835 = vmatprep.subr.mxu0 0.0
  %5836 = vmatpush1.xpose.msra.mxu0 0.0
  %5837 = vmatprep.subr.mxu0 0.0
  %5838 = vmatpush1.xpose.msra.mxu0 0.0
  %5839 = vmatprep.subr.mxu0 0.0
  %5840 = vmatpush1.xpose.msra.mxu0 0.0
  %5841 = vmatprep.subr.mxu0 0.0
  %5842 = vmatpush1.xpose.msra.mxu0 0.0
  %5843 = vmatprep.mubr.f32.mxu0 0.0
  %5844 = vmatmul.mubr.f32.gmra.mrb[0].mxu0 %v5777
  %v5845 = vpop.f32.mrb[0].mxu0
  %v5846 = vadd.f32 %v1183, %v5845
  %v5847 = vpop.f32.mrb[0].mxu0
  %5848 = vdwg.mxu0
  %5849 = vrot.lane.b32.xlu0 %v391, 80
  %v5850 = vpop.permute.xlu0 %5849
  %v5851 = vsel %vm1200, %v5850, 0
  %5853 = vmatprep.subr.mxu0 0.0
  %5854 = vmatpush1.xpose.msra.mxu0 %v1661
  %5855 = vmatprep.subr.mxu0 0.0
  %5856 = vmatpush1.xpose.msra.mxu0 0.0
  %5857 = vmatprep.subr.mxu0 0.0
  %5858 = vmatpush1.xpose.msra.mxu0 0.0
  %5859 = vmatprep.subr.mxu0 0.0
  %5860 = vmatpush1.xpose.msra.mxu0 0.0
  %5861 = vmatprep.subr.mxu0 0.0
  %5862 = vmatpush1.xpose.msra.mxu0 0.0
  %5863 = vmatprep.subr.mxu0 0.0
  %5864 = vmatpush1.xpose.msra.mxu0 0.0
  %5865 = vmatprep.subr.mxu0 0.0
  %5866 = vmatpush1.xpose.msra.mxu0 0.0
  %5867 = vmatprep.subr.mxu0 0.0
  %5868 = vmatpush1.xpose.msra.mxu0 0.0
  %5869 = vmatprep.subr.mxu0 0.0
  %5870 = vmatpush1.xpose.msra.mxu0 0.0
  %5871 = vmatprep.subr.mxu0 0.0
  %5872 = vmatpush1.xpose.msra.mxu0 0.0
  %5873 = vmatprep.subr.mxu0 0.0
  %5874 = vmatpush1.xpose.msra.mxu0 0.0
  %5875 = vmatprep.subr.mxu0 0.0
  %5876 = vmatpush1.xpose.msra.mxu0 0.0
  %5877 = vmatprep.subr.mxu0 0.0
  %5878 = vmatpush1.xpose.msra.mxu0 0.0
  %5879 = vmatprep.subr.mxu0 0.0
  %5880 = vmatpush1.xpose.msra.mxu0 0.0
  %5881 = vmatprep.subr.mxu0 0.0
  %5882 = vmatpush1.xpose.msra.mxu0 0.0
  %5883 = vmatprep.subr.mxu0 0.0
  %5884 = vmatpush1.xpose.msra.mxu0 0.0
  %5885 = vmatprep.subr.mxu0 0.0
  %5886 = vmatpush1.xpose.msra.mxu0 0.0
  %5887 = vmatprep.subr.mxu0 0.0
  %5888 = vmatpush1.xpose.msra.mxu0 0.0
  %5889 = vmatprep.subr.mxu0 0.0
  %5890 = vmatpush1.xpose.msra.mxu0 0.0
  %5891 = vmatprep.subr.mxu0 0.0
  %5892 = vmatpush1.xpose.msra.mxu0 0.0
  %5893 = vmatprep.subr.mxu0 0.0
  %5894 = vmatpush1.xpose.msra.mxu0 0.0
  %5895 = vmatprep.subr.mxu0 0.0
  %5896 = vmatpush1.xpose.msra.mxu0 0.0
  %5897 = vmatprep.subr.mxu0 0.0
  %5898 = vmatpush1.xpose.msra.mxu0 0.0
  %5899 = vmatprep.subr.mxu0 0.0
  %5900 = vmatpush1.xpose.msra.mxu0 0.0
  %5901 = vmatprep.subr.mxu0 0.0
  %5902 = vmatpush1.xpose.msra.mxu0 0.0
  %5903 = vmatprep.subr.mxu0 0.0
  %5904 = vmatpush1.xpose.msra.mxu0 0.0
  %5905 = vmatprep.subr.mxu0 0.0
  %5906 = vmatpush1.xpose.msra.mxu0 0.0
  %5907 = vmatprep.subr.mxu0 0.0
  %5908 = vmatpush1.xpose.msra.mxu0 0.0
  %5909 = vmatprep.subr.mxu0 0.0
  %5910 = vmatpush1.xpose.msra.mxu0 0.0
  %5911 = vmatprep.subr.mxu0 0.0
  %5912 = vmatpush1.xpose.msra.mxu0 0.0
  %5913 = vmatprep.subr.mxu0 0.0
  %5914 = vmatpush1.xpose.msra.mxu0 0.0
  %5915 = vmatprep.subr.mxu0 0.0
  %5916 = vmatpush1.xpose.msra.mxu0 0.0
  %5917 = vmatprep.mubr.f32.mxu0 0.0
  %5918 = vmatmul.mubr.f32.gmra.mrb[0].mxu0 %v5851
  %v5919 = vpop.f32.mrb[0].mxu0
  %v5920 = vadd.f32 %v1187, %v5919
  %v5921 = vpop.f32.mrb[0].mxu0
  %5922 = vdwg.mxu0
  %5923 = vrot.lane.b32.xlu0 %v396, 80
  %v5924 = vpop.permute.xlu0 %5923
  %v5925 = vsel %vm1200, %v5924, 0
  %5927 = vmatprep.subr.mxu0 0.0
  %5928 = vmatpush1.xpose.msra.mxu0 %v1737
  %5929 = vmatprep.subr.mxu0 0.0
  %5930 = vmatpush1.xpose.msra.mxu0 0.0
  %5931 = vmatprep.subr.mxu0 0.0
  %5932 = vmatpush1.xpose.msra.mxu0 0.0
  %5933 = vmatprep.subr.mxu0 0.0
  %5934 = vmatpush1.xpose.msra.mxu0 0.0
  %5935 = vmatprep.subr.mxu0 0.0
  %5936 = vmatpush1.xpose.msra.mxu0 0.0
  %5937 = vmatprep.subr.mxu0 0.0
  %5938 = vmatpush1.xpose.msra.mxu0 0.0
  %5939 = vmatprep.subr.mxu0 0.0
  %5940 = vmatpush1.xpose.msra.mxu0 0.0
  %5941 = vmatprep.subr.mxu0 0.0
  %5942 = vmatpush1.xpose.msra.mxu0 0.0
  %5943 = vmatprep.subr.mxu0 0.0
  %5944 = vmatpush1.xpose.msra.mxu0 0.0
  %5945 = vmatprep.subr.mxu0 0.0
  %5946 = vmatpush1.xpose.msra.mxu0 0.0
  %5947 = vmatprep.subr.mxu0 0.0
  %5948 = vmatpush1.xpose.msra.mxu0 0.0
  %5949 = vmatprep.subr.mxu0 0.0
  %5950 = vmatpush1.xpose.msra.mxu0 0.0
  %5951 = vmatprep.subr.mxu0 0.0
  %5952 = vmatpush1.xpose.msra.mxu0 0.0
  %5953 = vmatprep.subr.mxu0 0.0
  %5954 = vmatpush1.xpose.msra.mxu0 0.0
  %5955 = vmatprep.subr.mxu0 0.0
  %5956 = vmatpush1.xpose.msra.mxu0 0.0
  %5957 = vmatprep.subr.mxu0 0.0
  %5958 = vmatpush1.xpose.msra.mxu0 0.0
  %5959 = vmatprep.subr.mxu0 0.0
  %5960 = vmatpush1.xpose.msra.mxu0 0.0
  %5961 = vmatprep.subr.mxu0 0.0
  %5962 = vmatpush1.xpose.msra.mxu0 0.0
  %5963 = vmatprep.subr.mxu0 0.0
  %5964 = vmatpush1.xpose.msra.mxu0 0.0
  %5965 = vmatprep.subr.mxu0 0.0
  %5966 = vmatpush1.xpose.msra.mxu0 0.0
  %5967 = vmatprep.subr.mxu0 0.0
  %5968 = vmatpush1.xpose.msra.mxu0 0.0
  %5969 = vmatprep.subr.mxu0 0.0
  %5970 = vmatpush1.xpose.msra.mxu0 0.0
  %5971 = vmatprep.subr.mxu0 0.0
  %5972 = vmatpush1.xpose.msra.mxu0 0.0
  %5973 = vmatprep.subr.mxu0 0.0
  %5974 = vmatpush1.xpose.msra.mxu0 0.0
  %5975 = vmatprep.subr.mxu0 0.0
  %5976 = vmatpush1.xpose.msra.mxu0 0.0
  %5977 = vmatprep.subr.mxu0 0.0
  %5978 = vmatpush1.xpose.msra.mxu0 0.0
  %5979 = vmatprep.subr.mxu0 0.0
  %5980 = vmatpush1.xpose.msra.mxu0 0.0
  %5981 = vmatprep.subr.mxu0 0.0
  %5982 = vmatpush1.xpose.msra.mxu0 0.0
  %5983 = vmatprep.subr.mxu0 0.0
  %5984 = vmatpush1.xpose.msra.mxu0 0.0
  %5985 = vmatprep.subr.mxu0 0.0
  %5986 = vmatpush1.xpose.msra.mxu0 0.0
  %5987 = vmatprep.subr.mxu0 0.0
  %5988 = vmatpush1.xpose.msra.mxu0 0.0
  %5989 = vmatprep.subr.mxu0 0.0
  %5990 = vmatpush1.xpose.msra.mxu0 0.0
  %5991 = vmatprep.mubr.f32.mxu0 0.0
  %5992 = vmatmul.mubr.f32.gmra.mrb[0].mxu0 %v5925
  %v5993 = vpop.f32.mrb[0].mxu0
  %v5994 = vadd.f32 %v1191, %v5993
  %v5995 = vpop.f32.mrb[0].mxu0
  %5996 = vdwg.mxu0
  %v5997 = vsel %vm1809, %v5476, -inf
  %5998 = vmax.xlane.f32.xlu0 %v5997
  %v5999 = vpop.xlane.xlu0 %5998
  %v6000 = vsel %vm1809, %v5550, -inf
  %6001 = vmax.xlane.f32.xlu0 %v6000
  %v6002 = vpop.xlane.xlu0 %6001
  %v6003 = vsel %vm1809, %v5624, -inf
  %6004 = vmax.xlane.f32.xlu0 %v6003
  %v6005 = vpop.xlane.xlu0 %6004
  %v6006 = vsel %vm1809, %v5698, -inf
  %6007 = vmax.xlane.f32.xlu0 %v6006
  %v6008 = vpop.xlane.xlu0 %6007
  %v6009 = vsel %vm1809, %v5772, -inf
  %6010 = vmax.xlane.f32.xlu0 %v6009
  %v6011 = vpop.xlane.xlu0 %6010
  %v6012 = vsel %vm1809, %v5846, -inf
  %6013 = vmax.xlane.f32.xlu0 %v6012
  %v6014 = vpop.xlane.xlu0 %6013
  %v6015 = vsel %vm1809, %v5920, -inf
  %6016 = vmax.xlane.f32.xlu0 %v6015
  %v6017 = vpop.xlane.xlu0 %6016
  %v6018 = vsel %vm1809, %v5994, -inf
  %6019 = vmax.xlane.f32.xlu0 %v6018
  %v6020 = vpop.xlane.xlu0 %6019
  %v6021 = vsub.f32 %v5476, %v5999
  %v6022 = vsub.f32 %v5550, %v6002
  %v6023 = vsub.f32 %v5624, %v6005
  %v6024 = vsub.f32 %v5698, %v6008
  %v6025 = vsub.f32 %v5772, %v6011
  %v6026 = vsub.f32 %v5846, %v6014
  %v6027 = vsub.f32 %v5920, %v6017
  %v6028 = vsub.f32 %v5994, %v6020
  %v6029 = vmul.f32 %v6021, 1.442695
  %v6030 = vpow.pop %v6029
  %v6031 = vmul.f32 %v6022, 1.442695
  %v6032 = vpow.pop %v6031
  %v6033 = vmul.f32 %v6023, 1.442695
  %v6034 = vpow.pop %v6033
  %v6035 = vmul.f32 %v6024, 1.442695
  %v6036 = vpow.pop %v6035
  %v6037 = vmul.f32 %v6025, 1.442695
  %v6038 = vpow.pop %v6037
  %v6039 = vmul.f32 %v6026, 1.442695
  %v6040 = vpow.pop %v6039
  %v6041 = vmul.f32 %v6027, 1.442695
  %v6042 = vpow.pop %v6041
  %v6043 = vmul.f32 %v6028, 1.442695
  %v6044 = vpow.pop %v6043
  %v6045 = vsel %vm1809, %v6030, 0.0
  %6046 = vadd.xlane.f32.xlu0 %v6045
  %v6047 = vpop.xlane.xlu0 %6046
  %v6048 = vsel %vm1809, %v6032, 0.0
  %6049 = vadd.xlane.f32.xlu0 %v6048
  %v6050 = vpop.xlane.xlu0 %6049
  %v6051 = vsel %vm1809, %v6034, 0.0
  %6052 = vadd.xlane.f32.xlu0 %v6051
  %v6053 = vpop.xlane.xlu0 %6052
  %v6054 = vsel %vm1809, %v6036, 0.0
  %6055 = vadd.xlane.f32.xlu0 %v6054
  %v6056 = vpop.xlane.xlu0 %6055
  %v6057 = vsel %vm1809, %v6038, 0.0
  %6058 = vadd.xlane.f32.xlu0 %v6057
  %v6059 = vpop.xlane.xlu0 %6058
  %v6060 = vsel %vm1809, %v6040, 0.0
  %6061 = vadd.xlane.f32.xlu0 %v6060
  %v6062 = vpop.xlane.xlu0 %6061
  %v6063 = vsel %vm1809, %v6042, 0.0
  %6064 = vadd.xlane.f32.xlu0 %v6063
  %v6065 = vpop.xlane.xlu0 %6064
  %v6066 = vsel %vm1809, %v6044, 0.0
  %6067 = vadd.xlane.f32.xlu0 %v6066
  %v6068 = vpop.xlane.xlu0 %6067
  %v6069 = vrcp.pop %v6047
  %v6070 = vmul.f32 %v6030, %v6069
  %v6071 = vrcp.pop %v6050
  %v6072 = vmul.f32 %v6032, %v6071
  %v6073 = vrcp.pop %v6053
  %v6074 = vmul.f32 %v6034, %v6073
  %v6075 = vrcp.pop %v6056
  %v6076 = vmul.f32 %v6036, %v6075
  %v6077 = vrcp.pop %v6059
  %v6078 = vmul.f32 %v6038, %v6077
  %v6079 = vrcp.pop %v6062
  %v6080 = vmul.f32 %v6040, %v6079
  %v6081 = vrcp.pop %v6065
  %v6082 = vmul.f32 %v6042, %v6081
  %v6083 = vrcp.pop %v6068
  %v6084 = vmul.f32 %v6044, %v6083
  %v6086 = vsel %vm1809, %v6070, 0
  %6088 = vmatprep.subr.mxu0 0.0
  %6089 = vmatpush1.msra.mxu0 %v1128
  %6090 = vmatprep.subr.mxu0 0.0
  %6091 = vmatpush1.msra.mxu0 0.0
  %6092 = vmatprep.subr.mxu0 0.0
  %6093 = vmatpush1.msra.mxu0 0.0
  %6094 = vmatprep.subr.mxu0 0.0
  %6095 = vmatpush1.msra.mxu0 0.0
  %6096 = vmatprep.subr.mxu0 0.0
  %6097 = vmatpush1.msra.mxu0 0.0
  %6098 = vmatprep.subr.mxu0 0.0
  %6099 = vmatpush1.msra.mxu0 0.0
  %6100 = vmatprep.subr.mxu0 0.0
  %6101 = vmatpush1.msra.mxu0 0.0
  %6102 = vmatprep.subr.mxu0 0.0
  %6103 = vmatpush1.msra.mxu0 0.0
  %6104 = vmatprep.subr.mxu0 0.0
  %6105 = vmatpush1.msra.mxu0 0.0
  %6106 = vmatprep.subr.mxu0 0.0
  %6107 = vmatpush1.msra.mxu0 0.0
  %6108 = vmatprep.subr.mxu0 0.0
  %6109 = vmatpush1.msra.mxu0 0.0
  %6110 = vmatprep.subr.mxu0 0.0
  %6111 = vmatpush1.msra.mxu0 0.0
  %6112 = vmatprep.subr.mxu0 0.0
  %6113 = vmatpush1.msra.mxu0 0.0
  %6114 = vmatprep.subr.mxu0 0.0
  %6115 = vmatpush1.msra.mxu0 0.0
  %6116 = vmatprep.subr.mxu0 0.0
  %6117 = vmatpush1.msra.mxu0 0.0
  %6118 = vmatprep.subr.mxu0 0.0
  %6119 = vmatpush1.msra.mxu0 0.0
  %6120 = vmatprep.subr.mxu0 0.0
  %6121 = vmatpush1.msra.mxu0 0.0
  %6122 = vmatprep.subr.mxu0 0.0
  %6123 = vmatpush1.msra.mxu0 0.0
  %6124 = vmatprep.subr.mxu0 0.0
  %6125 = vmatpush1.msra.mxu0 0.0
  %6126 = vmatprep.subr.mxu0 0.0
  %6127 = vmatpush1.msra.mxu0 0.0
  %6128 = vmatprep.subr.mxu0 0.0
  %6129 = vmatpush1.msra.mxu0 0.0
  %6130 = vmatprep.subr.mxu0 0.0
  %6131 = vmatpush1.msra.mxu0 0.0
  %6132 = vmatprep.subr.mxu0 0.0
  %6133 = vmatpush1.msra.mxu0 0.0
  %6134 = vmatprep.subr.mxu0 0.0
  %6135 = vmatpush1.msra.mxu0 0.0
  %6136 = vmatprep.subr.mxu0 0.0
  %6137 = vmatpush1.msra.mxu0 0.0
  %6138 = vmatprep.subr.mxu0 0.0
  %6139 = vmatpush1.msra.mxu0 0.0
  %6140 = vmatprep.subr.mxu0 0.0
  %6141 = vmatpush1.msra.mxu0 0.0
  %6142 = vmatprep.subr.mxu0 0.0
  %6143 = vmatpush1.msra.mxu0 0.0
  %6144 = vmatprep.subr.mxu0 0.0
  %6145 = vmatpush1.msra.mxu0 0.0
  %6146 = vmatprep.subr.mxu0 0.0
  %6147 = vmatpush1.msra.mxu0 0.0
  %6148 = vmatprep.subr.mxu0 0.0
  %6149 = vmatpush1.msra.mxu0 0.0
  %6150 = vmatprep.subr.mxu0 0.0
  %6151 = vmatpush1.msra.mxu0 0.0
  %6152 = vmatprep.mubr.f32.mxu0 0.0
  %6153 = vmatmul.mubr.f32.gmra.mrb[0].mxu0 %v6086
  %v6154 = vpop.f32.mrb[0].mxu0
  %v6155 = vadd.f32 0.0, %v6154
  %v6156 = vpop.f32.mrb[0].mxu0
  %6157 = vdwg.mxu0
  %v6159 = vsel %vm1809, %v6072, 0
  %6161 = vmatprep.subr.mxu0 0.0
  %6162 = vmatpush1.msra.mxu0 %v1129
  %6163 = vmatprep.subr.mxu0 0.0
  %6164 = vmatpush1.msra.mxu0 0.0
  %6165 = vmatprep.subr.mxu0 0.0
  %6166 = vmatpush1.msra.mxu0 0.0
  %6167 = vmatprep.subr.mxu0 0.0
  %6168 = vmatpush1.msra.mxu0 0.0
  %6169 = vmatprep.subr.mxu0 0.0
  %6170 = vmatpush1.msra.mxu0 0.0
  %6171 = vmatprep.subr.mxu0 0.0
  %6172 = vmatpush1.msra.mxu0 0.0
  %6173 = vmatprep.subr.mxu0 0.0
  %6174 = vmatpush1.msra.mxu0 0.0
  %6175 = vmatprep.subr.mxu0 0.0
  %6176 = vmatpush1.msra.mxu0 0.0
  %6177 = vmatprep.subr.mxu0 0.0
  %6178 = vmatpush1.msra.mxu0 0.0
  %6179 = vmatprep.subr.mxu0 0.0
  %6180 = vmatpush1.msra.mxu0 0.0
  %6181 = vmatprep.subr.mxu0 0.0
  %6182 = vmatpush1.msra.mxu0 0.0
  %6183 = vmatprep.subr.mxu0 0.0
  %6184 = vmatpush1.msra.mxu0 0.0
  %6185 = vmatprep.subr.mxu0 0.0
  %6186 = vmatpush1.msra.mxu0 0.0
  %6187 = vmatprep.subr.mxu0 0.0
  %6188 = vmatpush1.msra.mxu0 0.0
  %6189 = vmatprep.subr.mxu0 0.0
  %6190 = vmatpush1.msra.mxu0 0.0
  %6191 = vmatprep.subr.mxu0 0.0
  %6192 = vmatpush1.msra.mxu0 0.0
  %6193 = vmatprep.subr.mxu0 0.0
  %6194 = vmatpush1.msra.mxu0 0.0
  %6195 = vmatprep.subr.mxu0 0.0
  %6196 = vmatpush1.msra.mxu0 0.0
  %6197 = vmatprep.subr.mxu0 0.0
  %6198 = vmatpush1.msra.mxu0 0.0
  %6199 = vmatprep.subr.mxu0 0.0
  %6200 = vmatpush1.msra.mxu0 0.0
  %6201 = vmatprep.subr.mxu0 0.0
  %6202 = vmatpush1.msra.mxu0 0.0
  %6203 = vmatprep.subr.mxu0 0.0
  %6204 = vmatpush1.msra.mxu0 0.0
  %6205 = vmatprep.subr.mxu0 0.0
  %6206 = vmatpush1.msra.mxu0 0.0
  %6207 = vmatprep.subr.mxu0 0.0
  %6208 = vmatpush1.msra.mxu0 0.0
  %6209 = vmatprep.subr.mxu0 0.0
  %6210 = vmatpush1.msra.mxu0 0.0
  %6211 = vmatprep.subr.mxu0 0.0
  %6212 = vmatpush1.msra.mxu0 0.0
  %6213 = vmatprep.subr.mxu0 0.0
  %6214 = vmatpush1.msra.mxu0 0.0
  %6215 = vmatprep.subr.mxu0 0.0
  %6216 = vmatpush1.msra.mxu0 0.0
  %6217 = vmatprep.subr.mxu0 0.0
  %6218 = vmatpush1.msra.mxu0 0.0
  %6219 = vmatprep.subr.mxu0 0.0
  %6220 = vmatpush1.msra.mxu0 0.0
  %6221 = vmatprep.subr.mxu0 0.0
  %6222 = vmatpush1.msra.mxu0 0.0
  %6223 = vmatprep.subr.mxu0 0.0
  %6224 = vmatpush1.msra.mxu0 0.0
  %6225 = vmatprep.mubr.f32.mxu0 0.0
  %6226 = vmatmul.mubr.f32.gmra.mrb[0].mxu0 %v6159
  %v6227 = vpop.f32.mrb[0].mxu0
  %v6228 = vadd.f32 0.0, %v6227
  %v6229 = vpop.f32.mrb[0].mxu0
  %6230 = vdwg.mxu0
  %v6232 = vsel %vm1809, %v6074, 0
  %6234 = vmatprep.subr.mxu0 0.0
  %6235 = vmatpush1.msra.mxu0 %v1130
  %6236 = vmatprep.subr.mxu0 0.0
  %6237 = vmatpush1.msra.mxu0 0.0
  %6238 = vmatprep.subr.mxu0 0.0
  %6239 = vmatpush1.msra.mxu0 0.0
  %6240 = vmatprep.subr.mxu0 0.0
  %6241 = vmatpush1.msra.mxu0 0.0
  %6242 = vmatprep.subr.mxu0 0.0
  %6243 = vmatpush1.msra.mxu0 0.0
  %6244 = vmatprep.subr.mxu0 0.0
  %6245 = vmatpush1.msra.mxu0 0.0
  %6246 = vmatprep.subr.mxu0 0.0
  %6247 = vmatpush1.msra.mxu0 0.0
  %6248 = vmatprep.subr.mxu0 0.0
  %6249 = vmatpush1.msra.mxu0 0.0
  %6250 = vmatprep.subr.mxu0 0.0
  %6251 = vmatpush1.msra.mxu0 0.0
  %6252 = vmatprep.subr.mxu0 0.0
  %6253 = vmatpush1.msra.mxu0 0.0
  %6254 = vmatprep.subr.mxu0 0.0
  %6255 = vmatpush1.msra.mxu0 0.0
  %6256 = vmatprep.subr.mxu0 0.0
  %6257 = vmatpush1.msra.mxu0 0.0
  %6258 = vmatprep.subr.mxu0 0.0
  %6259 = vmatpush1.msra.mxu0 0.0
  %6260 = vmatprep.subr.mxu0 0.0
  %6261 = vmatpush1.msra.mxu0 0.0
  %6262 = vmatprep.subr.mxu0 0.0
  %6263 = vmatpush1.msra.mxu0 0.0
  %6264 = vmatprep.subr.mxu0 0.0
  %6265 = vmatpush1.msra.mxu0 0.0
  %6266 = vmatprep.subr.mxu0 0.0
  %6267 = vmatpush1.msra.mxu0 0.0
  %6268 = vmatprep.subr.mxu0 0.0
  %6269 = vmatpush1.msra.mxu0 0.0
  %6270 = vmatprep.subr.mxu0 0.0
  %6271 = vmatpush1.msra.mxu0 0.0
  %6272 = vmatprep.subr.mxu0 0.0
  %6273 = vmatpush1.msra.mxu0 0.0
  %6274 = vmatprep.subr.mxu0 0.0
  %6275 = vmatpush1.msra.mxu0 0.0
  %6276 = vmatprep.subr.mxu0 0.0
  %6277 = vmatpush1.msra.mxu0 0.0
  %6278 = vmatprep.subr.mxu0 0.0
  %6279 = vmatpush1.msra.mxu0 0.0
  %6280 = vmatprep.subr.mxu0 0.0
  %6281 = vmatpush1.msra.mxu0 0.0
  %6282 = vmatprep.subr.mxu0 0.0
  %6283 = vmatpush1.msra.mxu0 0.0
  %6284 = vmatprep.subr.mxu0 0.0
  %6285 = vmatpush1.msra.mxu0 0.0
  %6286 = vmatprep.subr.mxu0 0.0
  %6287 = vmatpush1.msra.mxu0 0.0
  %6288 = vmatprep.subr.mxu0 0.0
  %6289 = vmatpush1.msra.mxu0 0.0
  %6290 = vmatprep.subr.mxu0 0.0
  %6291 = vmatpush1.msra.mxu0 0.0
  %6292 = vmatprep.subr.mxu0 0.0
  %6293 = vmatpush1.msra.mxu0 0.0
  %6294 = vmatprep.subr.mxu0 0.0
  %6295 = vmatpush1.msra.mxu0 0.0
  %6296 = vmatprep.subr.mxu0 0.0
  %6297 = vmatpush1.msra.mxu0 0.0
  %6298 = vmatprep.mubr.f32.mxu0 0.0
  %6299 = vmatmul.mubr.f32.gmra.mrb[0].mxu0 %v6232
  %v6300 = vpop.f32.mrb[0].mxu0
  %v6301 = vadd.f32 0.0, %v6300
  %v6302 = vpop.f32.mrb[0].mxu0
  %6303 = vdwg.mxu0
  %v6305 = vsel %vm1809, %v6076, 0
  %6307 = vmatprep.subr.mxu0 0.0
  %6308 = vmatpush1.msra.mxu0 %v1131
  %6309 = vmatprep.subr.mxu0 0.0
  %6310 = vmatpush1.msra.mxu0 0.0
  %6311 = vmatprep.subr.mxu0 0.0
  %6312 = vmatpush1.msra.mxu0 0.0
  %6313 = vmatprep.subr.mxu0 0.0
  %6314 = vmatpush1.msra.mxu0 0.0
  %6315 = vmatprep.subr.mxu0 0.0
  %6316 = vmatpush1.msra.mxu0 0.0
  %6317 = vmatprep.subr.mxu0 0.0
  %6318 = vmatpush1.msra.mxu0 0.0
  %6319 = vmatprep.subr.mxu0 0.0
  %6320 = vmatpush1.msra.mxu0 0.0
  %6321 = vmatprep.subr.mxu0 0.0
  %6322 = vmatpush1.msra.mxu0 0.0
  %6323 = vmatprep.subr.mxu0 0.0
  %6324 = vmatpush1.msra.mxu0 0.0
  %6325 = vmatprep.subr.mxu0 0.0
  %6326 = vmatpush1.msra.mxu0 0.0
  %6327 = vmatprep.subr.mxu0 0.0
  %6328 = vmatpush1.msra.mxu0 0.0
  %6329 = vmatprep.subr.mxu0 0.0
  %6330 = vmatpush1.msra.mxu0 0.0
  %6331 = vmatprep.subr.mxu0 0.0
  %6332 = vmatpush1.msra.mxu0 0.0
  %6333 = vmatprep.subr.mxu0 0.0
  %6334 = vmatpush1.msra.mxu0 0.0
  %6335 = vmatprep.subr.mxu0 0.0
  %6336 = vmatpush1.msra.mxu0 0.0
  %6337 = vmatprep.subr.mxu0 0.0
  %6338 = vmatpush1.msra.mxu0 0.0
  %6339 = vmatprep.subr.mxu0 0.0
  %6340 = vmatpush1.msra.mxu0 0.0
  %6341 = vmatprep.subr.mxu0 0.0
  %6342 = vmatpush1.msra.mxu0 0.0
  %6343 = vmatprep.subr.mxu0 0.0
  %6344 = vmatpush1.msra.mxu0 0.0
  %6345 = vmatprep.subr.mxu0 0.0
  %6346 = vmatpush1.msra.mxu0 0.0
  %6347 = vmatprep.subr.mxu0 0.0
  %6348 = vmatpush1.msra.mxu0 0.0
  %6349 = vmatprep.subr.mxu0 0.0
  %6350 = vmatpush1.msra.mxu0 0.0
  %6351 = vmatprep.subr.mxu0 0.0
  %6352 = vmatpush1.msra.mxu0 0.0
  %6353 = vmatprep.subr.mxu0 0.0
  %6354 = vmatpush1.msra.mxu0 0.0
  %6355 = vmatprep.subr.mxu0 0.0
  %6356 = vmatpush1.msra.mxu0 0.0
  %6357 = vmatprep.subr.mxu0 0.0
  %6358 = vmatpush1.msra.mxu0 0.0
  %6359 = vmatprep.subr.mxu0 0.0
  %6360 = vmatpush1.msra.mxu0 0.0
  %6361 = vmatprep.subr.mxu0 0.0
  %6362 = vmatpush1.msra.mxu0 0.0
  %6363 = vmatprep.subr.mxu0 0.0
  %6364 = vmatpush1.msra.mxu0 0.0
  %6365 = vmatprep.subr.mxu0 0.0
  %6366 = vmatpush1.msra.mxu0 0.0
  %6367 = vmatprep.subr.mxu0 0.0
  %6368 = vmatpush1.msra.mxu0 0.0
  %6369 = vmatprep.subr.mxu0 0.0
  %6370 = vmatpush1.msra.mxu0 0.0
  %6371 = vmatprep.mubr.f32.mxu0 0.0
  %6372 = vmatmul.mubr.f32.gmra.mrb[0].mxu0 %v6305
  %v6373 = vpop.f32.mrb[0].mxu0
  %v6374 = vadd.f32 0.0, %v6373
  %v6375 = vpop.f32.mrb[0].mxu0
  %6376 = vdwg.mxu0
  %v6378 = vsel %vm1809, %v6078, 0
  %6380 = vmatprep.subr.mxu0 0.0
  %6381 = vmatpush1.msra.mxu0 %v1132
  %6382 = vmatprep.subr.mxu0 0.0
  %6383 = vmatpush1.msra.mxu0 0.0
  %6384 = vmatprep.subr.mxu0 0.0
  %6385 = vmatpush1.msra.mxu0 0.0
  %6386 = vmatprep.subr.mxu0 0.0
  %6387 = vmatpush1.msra.mxu0 0.0
  %6388 = vmatprep.subr.mxu0 0.0
  %6389 = vmatpush1.msra.mxu0 0.0
  %6390 = vmatprep.subr.mxu0 0.0
  %6391 = vmatpush1.msra.mxu0 0.0
  %6392 = vmatprep.subr.mxu0 0.0
  %6393 = vmatpush1.msra.mxu0 0.0
  %6394 = vmatprep.subr.mxu0 0.0
  %6395 = vmatpush1.msra.mxu0 0.0
  %6396 = vmatprep.subr.mxu0 0.0
  %6397 = vmatpush1.msra.mxu0 0.0
  %6398 = vmatprep.subr.mxu0 0.0
  %6399 = vmatpush1.msra.mxu0 0.0
  %6400 = vmatprep.subr.mxu0 0.0
  %6401 = vmatpush1.msra.mxu0 0.0
  %6402 = vmatprep.subr.mxu0 0.0
  %6403 = vmatpush1.msra.mxu0 0.0
  %6404 = vmatprep.subr.mxu0 0.0
  %6405 = vmatpush1.msra.mxu0 0.0
  %6406 = vmatprep.subr.mxu0 0.0
  %6407 = vmatpush1.msra.mxu0 0.0
  %6408 = vmatprep.subr.mxu0 0.0
  %6409 = vmatpush1.msra.mxu0 0.0
  %6410 = vmatprep.subr.mxu0 0.0
  %6411 = vmatpush1.msra.mxu0 0.0
  %6412 = vmatprep.subr.mxu0 0.0
  %6413 = vmatpush1.msra.mxu0 0.0
  %6414 = vmatprep.subr.mxu0 0.0
  %6415 = vmatpush1.msra.mxu0 0.0
  %6416 = vmatprep.subr.mxu0 0.0
  %6417 = vmatpush1.msra.mxu0 0.0
  %6418 = vmatprep.subr.mxu0 0.0
  %6419 = vmatpush1.msra.mxu0 0.0
  %6420 = vmatprep.subr.mxu0 0.0
  %6421 = vmatpush1.msra.mxu0 0.0
  %6422 = vmatprep.subr.mxu0 0.0
  %6423 = vmatpush1.msra.mxu0 0.0
  %6424 = vmatprep.subr.mxu0 0.0
  %6425 = vmatpush1.msra.mxu0 0.0
  %6426 = vmatprep.subr.mxu0 0.0
  %6427 = vmatpush1.msra.mxu0 0.0
  %6428 = vmatprep.subr.mxu0 0.0
  %6429 = vmatpush1.msra.mxu0 0.0
  %6430 = vmatprep.subr.mxu0 0.0
  %6431 = vmatpush1.msra.mxu0 0.0
  %6432 = vmatprep.subr.mxu0 0.0
  %6433 = vmatpush1.msra.mxu0 0.0
  %6434 = vmatprep.subr.mxu0 0.0
  %6435 = vmatpush1.msra.mxu0 0.0
  %6436 = vmatprep.subr.mxu0 0.0
  %6437 = vmatpush1.msra.mxu0 0.0
  %6438 = vmatprep.subr.mxu0 0.0
  %6439 = vmatpush1.msra.mxu0 0.0
  %6440 = vmatprep.subr.mxu0 0.0
  %6441 = vmatpush1.msra.mxu0 0.0
  %6442 = vmatprep.subr.mxu0 0.0
  %6443 = vmatpush1.msra.mxu0 0.0
  %6444 = vmatprep.mubr.f32.mxu0 0.0
  %6445 = vmatmul.mubr.f32.gmra.mrb[0].mxu0 %v6378
  %v6446 = vpop.f32.mrb[0].mxu0
  %v6447 = vadd.f32 0.0, %v6446
  %v6448 = vpop.f32.mrb[0].mxu0
  %6449 = vdwg.mxu0
  %v6451 = vsel %vm1809, %v6080, 0
  %6453 = vmatprep.subr.mxu0 0.0
  %6454 = vmatpush1.msra.mxu0 %v1133
  %6455 = vmatprep.subr.mxu0 0.0
  %6456 = vmatpush1.msra.mxu0 0.0
  %6457 = vmatprep.subr.mxu0 0.0
  %6458 = vmatpush1.msra.mxu0 0.0
  %6459 = vmatprep.subr.mxu0 0.0
  %6460 = vmatpush1.msra.mxu0 0.0
  %6461 = vmatprep.subr.mxu0 0.0
  %6462 = vmatpush1.msra.mxu0 0.0
  %6463 = vmatprep.subr.mxu0 0.0
  %6464 = vmatpush1.msra.mxu0 0.0
  %6465 = vmatprep.subr.mxu0 0.0
  %6466 = vmatpush1.msra.mxu0 0.0
  %6467 = vmatprep.subr.mxu0 0.0
  %6468 = vmatpush1.msra.mxu0 0.0
  %6469 = vmatprep.subr.mxu0 0.0
  %6470 = vmatpush1.msra.mxu0 0.0
  %6471 = vmatprep.subr.mxu0 0.0
  %6472 = vmatpush1.msra.mxu0 0.0
  %6473 = vmatprep.subr.mxu0 0.0
  %6474 = vmatpush1.msra.mxu0 0.0
  %6475 = vmatprep.subr.mxu0 0.0
  %6476 = vmatpush1.msra.mxu0 0.0
  %6477 = vmatprep.subr.mxu0 0.0
  %6478 = vmatpush1.msra.mxu0 0.0
  %6479 = vmatprep.subr.mxu0 0.0
  %6480 = vmatpush1.msra.mxu0 0.0
  %6481 = vmatprep.subr.mxu0 0.0
  %6482 = vmatpush1.msra.mxu0 0.0
  %6483 = vmatprep.subr.mxu0 0.0
  %6484 = vmatpush1.msra.mxu0 0.0
  %6485 = vmatprep.subr.mxu0 0.0
  %6486 = vmatpush1.msra.mxu0 0.0
  %6487 = vmatprep.subr.mxu0 0.0
  %6488 = vmatpush1.msra.mxu0 0.0
  %6489 = vmatprep.subr.mxu0 0.0
  %6490 = vmatpush1.msra.mxu0 0.0
  %6491 = vmatprep.subr.mxu0 0.0
  %6492 = vmatpush1.msra.mxu0 0.0
  %6493 = vmatprep.subr.mxu0 0.0
  %6494 = vmatpush1.msra.mxu0 0.0
  %6495 = vmatprep.subr.mxu0 0.0
  %6496 = vmatpush1.msra.mxu0 0.0
  %6497 = vmatprep.subr.mxu0 0.0
  %6498 = vmatpush1.msra.mxu0 0.0
  %6499 = vmatprep.subr.mxu0 0.0
  %6500 = vmatpush1.msra.mxu0 0.0
  %6501 = vmatprep.subr.mxu0 0.0
  %6502 = vmatpush1.msra.mxu0 0.0
  %6503 = vmatprep.subr.mxu0 0.0
  %6504 = vmatpush1.msra.mxu0 0.0
  %6505 = vmatprep.subr.mxu0 0.0
  %6506 = vmatpush1.msra.mxu0 0.0
  %6507 = vmatprep.subr.mxu0 0.0
  %6508 = vmatpush1.msra.mxu0 0.0
  %6509 = vmatprep.subr.mxu0 0.0
  %6510 = vmatpush1.msra.mxu0 0.0
  %6511 = vmatprep.subr.mxu0 0.0
  %6512 = vmatpush1.msra.mxu0 0.0
  %6513 = vmatprep.subr.mxu0 0.0
  %6514 = vmatpush1.msra.mxu0 0.0
  %6515 = vmatprep.subr.mxu0 0.0
  %6516 = vmatpush1.msra.mxu0 0.0
  %6517 = vmatprep.mubr.f32.mxu0 0.0
  %6518 = vmatmul.mubr.f32.gmra.mrb[0].mxu0 %v6451
  %v6519 = vpop.f32.mrb[0].mxu0
  %v6520 = vadd.f32 0.0, %v6519
  %v6521 = vpop.f32.mrb[0].mxu0
  %6522 = vdwg.mxu0
  %v6524 = vsel %vm1809, %v6082, 0
  %6526 = vmatprep.subr.mxu0 0.0
  %6527 = vmatpush1.msra.mxu0 %v1134
  %6528 = vmatprep.subr.mxu0 0.0
  %6529 = vmatpush1.msra.mxu0 0.0
  %6530 = vmatprep.subr.mxu0 0.0
  %6531 = vmatpush1.msra.mxu0 0.0
  %6532 = vmatprep.subr.mxu0 0.0
  %6533 = vmatpush1.msra.mxu0 0.0
  %6534 = vmatprep.subr.mxu0 0.0
  %6535 = vmatpush1.msra.mxu0 0.0
  %6536 = vmatprep.subr.mxu0 0.0
  %6537 = vmatpush1.msra.mxu0 0.0
  %6538 = vmatprep.subr.mxu0 0.0
  %6539 = vmatpush1.msra.mxu0 0.0
  %6540 = vmatprep.subr.mxu0 0.0
  %6541 = vmatpush1.msra.mxu0 0.0
  %6542 = vmatprep.subr.mxu0 0.0
  %6543 = vmatpush1.msra.mxu0 0.0
  %6544 = vmatprep.subr.mxu0 0.0
  %6545 = vmatpush1.msra.mxu0 0.0
  %6546 = vmatprep.subr.mxu0 0.0
  %6547 = vmatpush1.msra.mxu0 0.0
  %6548 = vmatprep.subr.mxu0 0.0
  %6549 = vmatpush1.msra.mxu0 0.0
  %6550 = vmatprep.subr.mxu0 0.0
  %6551 = vmatpush1.msra.mxu0 0.0
  %6552 = vmatprep.subr.mxu0 0.0
  %6553 = vmatpush1.msra.mxu0 0.0
  %6554 = vmatprep.subr.mxu0 0.0
  %6555 = vmatpush1.msra.mxu0 0.0
  %6556 = vmatprep.subr.mxu0 0.0
  %6557 = vmatpush1.msra.mxu0 0.0
  %6558 = vmatprep.subr.mxu0 0.0
  %6559 = vmatpush1.msra.mxu0 0.0
  %6560 = vmatprep.subr.mxu0 0.0
  %6561 = vmatpush1.msra.mxu0 0.0
  %6562 = vmatprep.subr.mxu0 0.0
  %6563 = vmatpush1.msra.mxu0 0.0
  %6564 = vmatprep.subr.mxu0 0.0
  %6565 = vmatpush1.msra.mxu0 0.0
  %6566 = vmatprep.subr.mxu0 0.0
  %6567 = vmatpush1.msra.mxu0 0.0
  %6568 = vmatprep.subr.mxu0 0.0
  %6569 = vmatpush1.msra.mxu0 0.0
  %6570 = vmatprep.subr.mxu0 0.0
  %6571 = vmatpush1.msra.mxu0 0.0
  %6572 = vmatprep.subr.mxu0 0.0
  %6573 = vmatpush1.msra.mxu0 0.0
  %6574 = vmatprep.subr.mxu0 0.0
  %6575 = vmatpush1.msra.mxu0 0.0
  %6576 = vmatprep.subr.mxu0 0.0
  %6577 = vmatpush1.msra.mxu0 0.0
  %6578 = vmatprep.subr.mxu0 0.0
  %6579 = vmatpush1.msra.mxu0 0.0
  %6580 = vmatprep.subr.mxu0 0.0
  %6581 = vmatpush1.msra.mxu0 0.0
  %6582 = vmatprep.subr.mxu0 0.0
  %6583 = vmatpush1.msra.mxu0 0.0
  %6584 = vmatprep.subr.mxu0 0.0
  %6585 = vmatpush1.msra.mxu0 0.0
  %6586 = vmatprep.subr.mxu0 0.0
  %6587 = vmatpush1.msra.mxu0 0.0
  %6588 = vmatprep.subr.mxu0 0.0
  %6589 = vmatpush1.msra.mxu0 0.0
  %6590 = vmatprep.mubr.f32.mxu0 0.0
  %6591 = vmatmul.mubr.f32.gmra.mrb[0].mxu0 %v6524
  %v6592 = vpop.f32.mrb[0].mxu0
  %v6593 = vadd.f32 0.0, %v6592
  %v6594 = vpop.f32.mrb[0].mxu0
  %6595 = vdwg.mxu0
  %v6597 = vsel %vm1809, %v6084, 0
  %6599 = vmatprep.subr.mxu0 0.0
  %6600 = vmatpush1.msra.mxu0 %v1135
  %6601 = vmatprep.subr.mxu0 0.0
  %6602 = vmatpush1.msra.mxu0 0.0
  %6603 = vmatprep.subr.mxu0 0.0
  %6604 = vmatpush1.msra.mxu0 0.0
  %6605 = vmatprep.subr.mxu0 0.0
  %6606 = vmatpush1.msra.mxu0 0.0
  %6607 = vmatprep.subr.mxu0 0.0
  %6608 = vmatpush1.msra.mxu0 0.0
  %6609 = vmatprep.subr.mxu0 0.0
  %6610 = vmatpush1.msra.mxu0 0.0
  %6611 = vmatprep.subr.mxu0 0.0
  %6612 = vmatpush1.msra.mxu0 0.0
  %6613 = vmatprep.subr.mxu0 0.0
  %6614 = vmatpush1.msra.mxu0 0.0
  %6615 = vmatprep.subr.mxu0 0.0
  %6616 = vmatpush1.msra.mxu0 0.0
  %6617 = vmatprep.subr.mxu0 0.0
  %6618 = vmatpush1.msra.mxu0 0.0
  %6619 = vmatprep.subr.mxu0 0.0
  %6620 = vmatpush1.msra.mxu0 0.0
  %6621 = vmatprep.subr.mxu0 0.0
  %6622 = vmatpush1.msra.mxu0 0.0
  %6623 = vmatprep.subr.mxu0 0.0
  %6624 = vmatpush1.msra.mxu0 0.0
  %6625 = vmatprep.subr.mxu0 0.0
  %6626 = vmatpush1.msra.mxu0 0.0
  %6627 = vmatprep.subr.mxu0 0.0
  %6628 = vmatpush1.msra.mxu0 0.0
  %6629 = vmatprep.subr.mxu0 0.0
  %6630 = vmatpush1.msra.mxu0 0.0
  %6631 = vmatprep.subr.mxu0 0.0
  %6632 = vmatpush1.msra.mxu0 0.0
  %6633 = vmatprep.subr.mxu0 0.0
  %6634 = vmatpush1.msra.mxu0 0.0
  %6635 = vmatprep.subr.mxu0 0.0
  %6636 = vmatpush1.msra.mxu0 0.0
  %6637 = vmatprep.subr.mxu0 0.0
  %6638 = vmatpush1.msra.mxu0 0.0
  %6639 = vmatprep.subr.mxu0 0.0
  %6640 = vmatpush1.msra.mxu0 0.0
  %6641 = vmatprep.subr.mxu0 0.0
  %6642 = vmatpush1.msra.mxu0 0.0
  %6643 = vmatprep.subr.mxu0 0.0
  %6644 = vmatpush1.msra.mxu0 0.0
  %6645 = vmatprep.subr.mxu0 0.0
  %6646 = vmatpush1.msra.mxu0 0.0
  %6647 = vmatprep.subr.mxu0 0.0
  %6648 = vmatpush1.msra.mxu0 0.0
  %6649 = vmatprep.subr.mxu0 0.0
  %6650 = vmatpush1.msra.mxu0 0.0
  %6651 = vmatprep.subr.mxu0 0.0
  %6652 = vmatpush1.msra.mxu0 0.0
  %6653 = vmatprep.subr.mxu0 0.0
  %6654 = vmatpush1.msra.mxu0 0.0
  %6655 = vmatprep.subr.mxu0 0.0
  %6656 = vmatpush1.msra.mxu0 0.0
  %6657 = vmatprep.subr.mxu0 0.0
  %6658 = vmatpush1.msra.mxu0 0.0
  %6659 = vmatprep.subr.mxu0 0.0
  %6660 = vmatpush1.msra.mxu0 0.0
  %6661 = vmatprep.subr.mxu0 0.0
  %6662 = vmatpush1.msra.mxu0 0.0
  %6663 = vmatprep.mubr.f32.mxu0 0.0
  %6664 = vmatmul.mubr.f32.gmra.mrb[0].mxu0 %v6597
  %v6665 = vpop.f32.mrb[0].mxu0
  %v6666 = vadd.f32 0.0, %v6665
  %v6667 = vpop.f32.mrb[0].mxu0
  %6668 = vdwg.mxu0
  %v6670 = vsel %vm1200, %v6155, 0
  %v6673 = vsel %vm1200, %v6228, 0
  %v6676 = vsel %vm1200, %v6301, 0
  %v6679 = vsel %vm1200, %v6374, 0
  %v6682 = vsel %vm1200, %v6447, 0
  %v6685 = vsel %vm1200, %v6520, 0
  %v6688 = vsel %vm1200, %v6593, 0
  %v6691 = vsel %vm1200, %v6666, 0
  %6693 = vmatprep.subr.mxu0 0.0
  %6694 = vmatpush1.msra.mxu0 %v1150
  %6695 = vmatprep.subr.mxu0 0.0
  %6696 = vmatpush1.msra.mxu0 %v1151
  %6697 = vmatprep.subr.mxu0 0.0
  %6698 = vmatpush1.msra.mxu0 0.0
  %6699 = vmatprep.subr.mxu0 0.0
  %6700 = vmatpush1.msra.mxu0 0.0
  %6701 = vmatprep.subr.mxu0 0.0
  %6702 = vmatpush1.msra.mxu0 0.0
  %6703 = vmatprep.subr.mxu0 0.0
  %6704 = vmatpush1.msra.mxu0 0.0
  %6705 = vmatprep.subr.mxu0 0.0
  %6706 = vmatpush1.msra.mxu0 0.0
  %6707 = vmatprep.subr.mxu0 0.0
  %6708 = vmatpush1.msra.mxu0 0.0
  %6709 = vmatprep.subr.mxu0 0.0
  %6710 = vmatpush1.msra.mxu0 0.0
  %6711 = vmatprep.subr.mxu0 0.0
  %6712 = vmatpush1.msra.mxu0 0.0
  %6713 = vmatprep.subr.mxu0 0.0
  %6714 = vmatpush1.msra.mxu0 0.0
  %6715 = vmatprep.subr.mxu0 0.0
  %6716 = vmatpush1.msra.mxu0 0.0
  %6717 = vmatprep.subr.mxu0 0.0
  %6718 = vmatpush1.msra.mxu0 0.0
  %6719 = vmatprep.subr.mxu0 0.0
  %6720 = vmatpush1.msra.mxu0 0.0
  %6721 = vmatprep.subr.mxu0 0.0
  %6722 = vmatpush1.msra.mxu0 0.0
  %6723 = vmatprep.subr.mxu0 0.0
  %6724 = vmatpush1.msra.mxu0 0.0
  %6725 = vmatprep.subr.mxu0 0.0
  %6726 = vmatpush1.msra.mxu0 0.0
  %6727 = vmatprep.subr.mxu0 0.0
  %6728 = vmatpush1.msra.mxu0 0.0
  %6729 = vmatprep.subr.mxu0 0.0
  %6730 = vmatpush1.msra.mxu0 0.0
  %6731 = vmatprep.subr.mxu0 0.0
  %6732 = vmatpush1.msra.mxu0 0.0
  %6733 = vmatprep.subr.mxu0 0.0
  %6734 = vmatpush1.msra.mxu0 0.0
  %6735 = vmatprep.subr.mxu0 0.0
  %6736 = vmatpush1.msra.mxu0 0.0
  %6737 = vmatprep.subr.mxu0 0.0
  %6738 = vmatpush1.msra.mxu0 0.0
  %6739 = vmatprep.subr.mxu0 0.0
  %6740 = vmatpush1.msra.mxu0 0.0
  %6741 = vmatprep.subr.mxu0 0.0
  %6742 = vmatpush1.msra.mxu0 0.0
  %6743 = vmatprep.subr.mxu0 0.0
  %6744 = vmatpush1.msra.mxu0 0.0
  %6745 = vmatprep.subr.mxu0 0.0
  %6746 = vmatpush1.msra.mxu0 0.0
  %6747 = vmatprep.subr.mxu0 0.0
  %6748 = vmatpush1.msra.mxu0 0.0
  %6749 = vmatprep.subr.mxu0 0.0
  %6750 = vmatpush1.msra.mxu0 0.0
  %6751 = vmatprep.subr.mxu0 0.0
  %6752 = vmatpush1.msra.mxu0 0.0
  %6753 = vmatprep.subr.mxu0 0.0
  %6754 = vmatpush1.msra.mxu0 0.0
  %6755 = vmatprep.subr.mxu0 0.0
  %6756 = vmatpush1.msra.mxu0 0.0
  %6757 = vmatprep.mubr.f32.mxu0 0.0
  %6758 = vmatmul.mubr.f32.gmra.mrb[0].mxu0 %v6670
  %v6759 = vpop.f32.mrb[0].mxu0
  %v6760 = vadd.f32 0.0, %v6759
  %v6761 = vpop.f32.mrb[0].mxu0
  %6762 = vmatprep.mubr.f32.mxu0 0.0
  %6763 = vmatmul.mubr.f32.gmra.mrb[0].mxu0 %v6673
  %v6764 = vpop.f32.mrb[0].mxu0
  %v6765 = vadd.f32 0.0, %v6764
  %v6766 = vpop.f32.mrb[0].mxu0
  %6767 = vmatprep.mubr.f32.mxu0 0.0
  %6768 = vmatmul.mubr.f32.gmra.mrb[0].mxu0 %v6676
  %v6769 = vpop.f32.mrb[0].mxu0
  %v6770 = vadd.f32 0.0, %v6769
  %v6771 = vpop.f32.mrb[0].mxu0
  %6772 = vmatprep.mubr.f32.mxu0 0.0
  %6773 = vmatmul.mubr.f32.gmra.mrb[0].mxu0 %v6679
  %v6774 = vpop.f32.mrb[0].mxu0
  %v6775 = vadd.f32 0.0, %v6774
  %v6776 = vpop.f32.mrb[0].mxu0
  %6777 = vmatprep.mubr.f32.mxu0 0.0
  %6778 = vmatmul.mubr.f32.gmra.mrb[0].mxu0 %v6682
  %v6779 = vpop.f32.mrb[0].mxu0
  %v6780 = vadd.f32 0.0, %v6779
  %v6781 = vpop.f32.mrb[0].mxu0
  %6782 = vmatprep.mubr.f32.mxu0 0.0
  %6783 = vmatmul.mubr.f32.gmra.mrb[0].mxu0 %v6685
  %v6784 = vpop.f32.mrb[0].mxu0
  %v6785 = vadd.f32 0.0, %v6784
  %v6786 = vpop.f32.mrb[0].mxu0
  %6787 = vmatprep.mubr.f32.mxu0 0.0
  %6788 = vmatmul.mubr.f32.gmra.mrb[0].mxu0 %v6688
  %v6789 = vpop.f32.mrb[0].mxu0
  %v6790 = vadd.f32 0.0, %v6789
  %v6791 = vpop.f32.mrb[0].mxu0
  %6792 = vmatprep.mubr.f32.mxu0 0.0
  %6793 = vmatmul.mubr.f32.gmra.mrb[0].mxu0 %v6691
  %v6794 = vpop.f32.mrb[0].mxu0
  %v6795 = vadd.f32 0.0, %v6794
  %v6796 = vpop.f32.mrb[0].mxu0
  %6797 = vdwg.mxu0
  %v6798 = vadd.f32 %v5397, %v6760
  %v6799 = vadd.f32 %v5398, %v6765
  %v6800 = vadd.f32 %v5399, %v6770
  %v6801 = vadd.f32 %v5400, %v6775
  %v6802 = vadd.f32 %v5401, %v6780
  %v6803 = vadd.f32 %v5402, %v6785
  %v6804 = vadd.f32 %v5403, %v6790
  %v6805 = vadd.f32 %v5404, %v6795
  %6806 = vst.msk [vmem:[%s11] sm:$0xff] %vm47, %v6798
  %6807 = vst.msk [vmem:[%s11 + $0x8] sm:$0xff] %vm47, %v6799
  %6808 = vst.msk [vmem:[%s11 + $0x10] sm:$0xff] %vm47, %v6800
  %6809 = vst.msk [vmem:[%s11 + $0x18] sm:$0xff] %vm47, %v6801
  %6810 = vst.msk [vmem:[%s11 + $0x20] sm:$0xff] %vm47, %v6802
  %6811 = vst.msk [vmem:[%s11 + $0x28] sm:$0xff] %vm47, %v6803
  %6812 = vst.msk [vmem:[%s11 + $0x30] sm:$0xff] %vm47, %v6804
  %6813 = vst.msk [vmem:[%s11 + $0x38] sm:$0xff] %vm47, %v6805
  // Predicated region
  $region46: #{tpu_custom_call.1} parent=0 // pred_check
    _
  $region47: #{tpu_custom_call.1} parent=0 // pred_check_branch
    %6815 = sbr.rel (0) target = $region49
  $region48: #{tpu_custom_call.1} parent=0 // pred_region
    _
  $region49: #{tpu_custom_call.1} parent=0 // pred_fallthru
    _
  // Predicated region
  $region50: #{tpu_custom_call.1} parent=0 // pred_check
    _
  $region51: #{tpu_custom_call.1} parent=0 // pred_check_branch
    %6817 = sbr.rel (0) target = $region53
  $region52: #{tpu_custom_call.1} parent=0 // pred_region
    _
  $region53: #{tpu_custom_call.1} parent=0 // pred_fallthru
    _

</llo_original>
